<compile_context>
chip_gen: v7x
topology: tpu7x:2x2x1
jax: 0.10.0
libtpu: 0.0.40
codegen_flags: <defaults>
</compile_context>

<pallas_src>
import jax
import jax.numpy as jnp
from jax.experimental import pallas as pl
from jax.experimental.pallas import tpu as pltpu

# --- small synthetic base_model config (deterministic init, no checkpoint load) ---
VOCAB = 50
MAX_POS = 16
HIDDEN = 32
NUM_HEADS = 4
HEAD_DIM = HIDDEN // NUM_HEADS
FFN = 64
NUM_LAYERS = 2
PAD_TOKEN_ID = 1
LN_EPS = 1e-12

# lane-dense padded widths (128-lane vregs)
HP = 128          # padded hidden width
FP = 128          # padded FFN width
VOCAB_P = 128     # padded vocab (one-hot lane width)
NH_P = HP // HEAD_DIM   # padded head count (4 real heads + 12 all-zero heads)


# ----------------------------- in-kernel math helpers -----------------------------
def _masked_layer_norm(x, g, b, lane_mask):
    """LayerNorm over the real HIDDEN lanes of a (rows, HP) array.

    Mean/variance are computed from the masked lanes only; g/b are zero in padded lanes so
    the output stays exactly zero there (required by downstream zero-padded weights)."""
    xm = x * lane_mask
    mu = jnp.sum(xm, axis=-1, keepdims=True) * (1.0 / HIDDEN)
    d = (xm - mu) * lane_mask
    var = jnp.sum(d * d, axis=-1, keepdims=True) * (1.0 / HIDDEN)
    return d * jax.lax.rsqrt(var + LN_EPS) * g + b


def _gelu(x):
    # TODO(synk): HF BERT uses exact erf GELU; tanh approximation deviates at ~1e-3 level.
    c = 0.7978845608028654  # sqrt(2/pi)
    return 0.5 * x * (1.0 + jnp.tanh(c * (x + 0.044715 * x * x * x)))


# ----------------------------------- fused kernel ----------------------------------
def encoder_stack_kernel(ids_ref, mask_ref, wemb_ref, posx_ref, emb_ln_ref,
                         wqkv_ref, bqkv_ref, wo_ref,
                         w1_ref, b1_ref, w2_ref, vec_ref, o_ref):
    S = o_ref.shape[1]
    f32 = jnp.float32
    bf16 = jnp.bfloat16

    lane_mask = (jax.lax.broadcasted_iota(jnp.int32, (1, HP), 1) < HIDDEN).astype(f32)

    # ---- fused embedding gather: one-hot (S, VOCAB_P) @ (VOCAB_P, HP) on the MXU ----
    ids = ids_ref[0]                                            # (S, 1) int32
    vocab_iota = jax.lax.broadcasted_iota(jnp.int32, (S, VOCAB_P), 1)
    one_hot = (vocab_iota == ids).astype(f32)                   # (S, VOCAB_P)
    x = jnp.dot(one_hot, wemb_ref[...], preferred_element_type=f32)   # (S, HP)
    x = x + posx_ref[0:S, :]                                    # position + token-type embedding

    # embedding LayerNorm
    emb_ln = emb_ln_ref[...]                                    # (2, HP): [gamma; beta]
    x = _masked_layer_norm(x, emb_ln[0:1], emb_ln[1:2], lane_mask)

    # additive key-padding bias, broadcast ONCE and reused across all layers / heads
    bias = jnp.broadcast_to(((1.0 - mask_ref[0]) * -1e9).reshape(1, 1, S), (NH_P, S, S))

    for l in range(NUM_LAYERS):                                 # all layers fused in one call
        vec = vec_ref[l]                                        # (6, HP): bo, b2, ln1g, ln1b, ln2g, ln2b

        # fused QKV projection (softmax scale pre-folded into the Q columns at pack time)
        x_bf = x.astype(bf16)
        qkv = jnp.dot(x_bf, wqkv_ref[l], preferred_element_type=f32) + bqkv_ref[l]   # (S, 3*HP)

        # lane-tile-aligned slices (offsets 0 / 128 / 256), heads = contiguous 8-lane groups
        q = qkv[:, 0:HP].astype(bf16).reshape(S, NH_P, HEAD_DIM)
        k = qkv[:, HP:2 * HP].astype(bf16).reshape(S, NH_P, HEAD_DIM)
        v = qkv[:, 2 * HP:3 * HP].astype(bf16).reshape(S, NH_P, HEAD_DIM)

        # one batched score matmul over all heads (padded heads give exactly-zero context)
        s = jnp.einsum('qhd,khd->hqk', q, k, preferred_element_type=f32) + bias       # (NH_P,S,S)
        s = s - jnp.max(s, axis=-1, keepdims=True)              # stable softmax
        p = jnp.exp(s)
        p = p * pl.reciprocal(jnp.sum(p, axis=-1, keepdims=True), approx=True)
        ctx = jnp.einsum('hqk,khd->qhd', p.astype(bf16), v,
                         preferred_element_type=f32)            # (S, NH_P, HEAD_DIM)

        # single output projection (Wo rows 32..127 are zero -> padded heads contribute nothing)
        attn = jnp.dot(ctx.reshape(S, HP).astype(bf16), wo_ref[l],
                       preferred_element_type=f32) + vec[0:1]

        h1 = _masked_layer_norm(x + attn, vec[2:3], vec[3:4], lane_mask)

        # FFN (lane-dense padded widths; GELU in f32)
        f = jnp.dot(h1.astype(bf16), w1_ref[l], preferred_element_type=f32) + b1_ref[l]
        f = _gelu(f)
        f = jnp.dot(f.astype(bf16), w2_ref[l], preferred_element_type=f32) + vec[1:2]

        x = _masked_layer_norm(h1 + f, vec[4:5], vec[5:6], lane_mask)

    o_ref[...] = x.reshape(1, S, HP).astype(o_ref.dtype)


# ----------------------------------- wrappers ---------------------------------------
def _pallas_encoder(ids3, mask3, p):
    B, S, _ = ids3.shape
    L = NUM_LAYERS

    def c2(b):
        return (0, 0)

    def c3(b):
        return (0, 0, 0)

    in_specs = [
        pl.BlockSpec((1, S, 1), lambda b: (b, 0, 0)),        # input_ids   (B, S, 1) int32
        pl.BlockSpec((1, 1, S), lambda b: (b, 0, 0)),        # key mask    (B, 1, S) f32
        pl.BlockSpec((VOCAB_P, HP), c2),                     # word_emb
        pl.BlockSpec((MAX_POS, HP), c2),                     # pos + type emb
        pl.BlockSpec((2, HP), c2),                           # emb LayerNorm gamma/beta
        pl.BlockSpec((L, HP, 3 * HP), c3),                   # fused QKV weights (Q pre-scaled)
        pl.BlockSpec((L, 1, 3 * HP), c3),                    # fused QKV bias
        pl.BlockSpec((L, HP, HP), c3),                       # Wo
        pl.BlockSpec((L, HP, FP), c3),                       # W1
        pl.BlockSpec((L, 1, FP), c3),                        # b1
        pl.BlockSpec((L, FP, HP), c3),                       # W2
        pl.BlockSpec((L, 6, HP), c3),                        # bo, b2, ln1g, ln1b, ln2g, ln2b
    ]
    out_specs = pl.BlockSpec((1, S, HP), lambda b: (b, 0, 0))

    return pl.pallas_call(
        encoder_stack_kernel,
        out_shape=jax.ShapeDtypeStruct((B, S, HP), jnp.float32),
        grid=(B,),                                           # shards batch across TCs on v7x
        in_specs=in_specs,
        out_specs=out_specs,
        compiler_params=pltpu.CompilerParams(dimension_semantics=("parallel",)),
    )(ids3, mask3, p["word_emb"], p["posx_emb"], p["emb_ln"],
      p["wqkv"], p["bqkv"], p["wo"], p["w1"], p["b1"], p["w2"], p["vec"])


@jax.jit
def _forward(params, input_ids, mask_f):
    ids3 = input_ids.astype(jnp.int32)[:, :, None]           # (B, S, 1) ids on sublane axis
    mask3 = mask_f[:, None, :]                                # (B, 1, S)
    out = _pallas_encoder(ids3, mask3, params)
    return out[:, :, :HIDDEN]                                 # drop lane padding


def syncobert_forward(params, input_ids, attention_mask=None):
    """SyncoBert.forward -> last_hidden_state [B, S, HIDDEN]."""
    if attention_mask is None:
        attention_mask = input_ids != PAD_TOKEN_ID            # input_ids.ne(1)
    return _forward(params, input_ids, attention_mask.astype(jnp.float32))


def get_cls_embedding(params, input_ids, attention_mask=None):
    return syncobert_forward(params, input_ids, attention_mask)[:, 0, :]


# ----------------------------- deterministic parameter init --------------------------
def init_params(key):
    """Logical (unpadded, f32) synthetic base_model parameters."""
    def normal(k, shape, std=0.02):
        return std * jax.random.normal(k, shape, dtype=jnp.float32)

    keys = jax.random.split(key, 3 + NUM_LAYERS)
    params = {
        "word_emb": normal(keys[0], (VOCAB, HIDDEN)),
        "pos_emb": normal(keys[1], (MAX_POS, HIDDEN)),
        "type_emb": normal(keys[2], (2, HIDDEN)),
        "emb_ln_g": jnp.ones((HIDDEN,), jnp.float32),
        "emb_ln_b": jnp.zeros((HIDDEN,), jnp.float32),
        "layers": [],
    }
    for l in range(NUM_LAYERS):
        lk = jax.random.split(keys[3 + l], 6)
        params["layers"].append({
            "wq": normal(lk[0], (HIDDEN, HIDDEN)), "bq": jnp.zeros((HIDDEN,), jnp.float32),
            "wk": normal(lk[1], (HIDDEN, HIDDEN)), "bk": jnp.zeros((HIDDEN,), jnp.float32),
            "wv": normal(lk[2], (HIDDEN, HIDDEN)), "bv": jnp.zeros((HIDDEN,), jnp.float32),
            "wo": normal(lk[3], (HIDDEN, HIDDEN)), "bo": jnp.zeros((HIDDEN,), jnp.float32),
            "ln1_g": jnp.ones((HIDDEN,), jnp.float32), "ln1_b": jnp.zeros((HIDDEN,), jnp.float32),
            "w1": normal(lk[4], (HIDDEN, FFN)), "b1": jnp.zeros((FFN,), jnp.float32),
            "w2": normal(lk[5], (FFN, HIDDEN)), "b2": jnp.zeros((HIDDEN,), jnp.float32),
            "ln2_g": jnp.ones((HIDDEN,), jnp.float32), "ln2_b": jnp.zeros((HIDDEN,), jnp.float32),
        })
    return params


def pack_params(params):
    """Zero-pad to lane-dense widths, fuse QKV (with softmax scale folded into Q), fold the
    token-type embedding into the position table, stack per-layer weights, cast matmul
    weights to bf16."""
    def pm(w, r, c):   # pad 2D matrix to (r, c)
        return jnp.pad(w, ((0, r - w.shape[0]), (0, c - w.shape[1])))

    def pv(v, n):      # pad 1D vector to (n,)
        return jnp.pad(v, (0, n - v.shape[0]))

    scale = 1.0 / (HEAD_DIM ** 0.5)
    L = params["layers"]
    posx = pm(params["pos_emb"], MAX_POS, HP) + pv(params["type_emb"][0], HP)[None, :]
    return {
        "word_emb": pm(params["word_emb"], VOCAB_P, HP),                                 # (128, HP) f32
        "posx_emb": posx,                                                                # (MAX_POS, HP) f32
        "emb_ln": jnp.stack([pv(params["emb_ln_g"], HP), pv(params["emb_ln_b"], HP)]),   # (2, HP)
        "wqkv": jnp.stack([jnp.concatenate(
            [pm(l["wq"] * scale, HP, HP), pm(l["wk"], HP, HP), pm(l["wv"], HP, HP)], axis=1)
            for l in L]).astype(jnp.bfloat16),                                           # (L, HP, 3HP)
        "bqkv": jnp.stack([jnp.concatenate(
            [pv(l["bq"] * scale, HP), pv(l["bk"], HP), pv(l["bv"], HP)])[None, :]
            for l in L]),                                                                # (L, 1, 3HP)
        "wo": jnp.stack([pm(l["wo"], HP, HP) for l in L]).astype(jnp.bfloat16),          # (L, HP, HP)
        "w1": jnp.stack([pm(l["w1"], HP, FP) for l in L]).astype(jnp.bfloat16),          # (L, HP, FP)
        "b1": jnp.stack([pv(l["b1"], FP)[None, :] for l in L]),                          # (L, 1, FP)
        "w2": jnp.stack([pm(l["w2"], FP, HP) for l in L]).astype(jnp.bfloat16),          # (L, FP, HP)
        "vec": jnp.stack([jnp.stack([pv(l["bo"], HP), pv(l["b2"], HP),
                                     pv(l["ln1_g"], HP), pv(l["ln1_b"], HP),
                                     pv(l["ln2_g"], HP), pv(l["ln2_b"], HP)])
                          for l in L]),                                                  # (L, 6, HP)
    }


if __name__ == "__main__":
    key = jax.random.PRNGKey(0)
    pkey, ikey = jax.random.split(key)
    params = pack_params(init_params(pkey))

    B, S = 2, 8
    input_ids = jax.random.randint(ikey, (B, S), 0, VOCAB, dtype=jnp.int32)
    # make sure a pad token (id=1) appears so the attention_mask=None path is exercised
    input_ids = input_ids.at[0, -1].set(PAD_TOKEN_ID)

    out = jax.block_until_ready(syncobert_forward(params, input_ids))   # attention_mask=None path
    cls = jax.block_until_ready(get_cls_embedding(params, input_ids))

    assert out.shape == (B, S, HIDDEN) and out.dtype == jnp.float32
    assert cls.shape == (B, HIDDEN)
    assert bool(jnp.all(jnp.isfinite(out)))
    print("KERNEL_OK")
</pallas_src>

<mosaic_0001>
module attributes {stable_mosaic.version = 11 : i64} {
  func.func @encoder_stack_kernel(%arg0: i32, %arg1: memref<1x8x1xi32, #tpu.memory_space<vmem>>, %arg2: memref<1x1x8xf32, #tpu.memory_space<vmem>>, %arg3: memref<128x128xf32, #tpu.memory_space<vmem>>, %arg4: memref<16x128xf32, #tpu.memory_space<vmem>>, %arg5: memref<2x128xf32, #tpu.memory_space<vmem>>, %arg6: memref<2x128x384xbf16, #tpu.memory_space<vmem>>, %arg7: memref<2x1x384xf32, #tpu.memory_space<vmem>>, %arg8: memref<2x128x128xbf16, #tpu.memory_space<vmem>>, %arg9: memref<2x128x128xbf16, #tpu.memory_space<vmem>>, %arg10: memref<2x1x128xf32, #tpu.memory_space<vmem>>, %arg11: memref<2x128x128xbf16, #tpu.memory_space<vmem>>, %arg12: memref<2x6x128xf32, #tpu.memory_space<vmem>>, %arg13: memref<1x8x128xf32, #tpu.memory_space<vmem>>) attributes {dimension_semantics = [#tpu.dimension_semantics<parallel>], iteration_bounds = array<i64: 2>, scalar_prefetch = 0 : i64, scratch_operands = 0 : i64, tpu.core_type = #tpu.core_type<tc>, window_params = [{transform_indices = @transform_0, window_bounds = array<i64: 1, 8, 1>}, {transform_indices = @transform_1, window_bounds = array<i64: 1, 1, 8>}, {pipeline_mode = #tpu.pipeline_mode<synchronous>, transform_indices = @transform_2, window_bounds = array<i64: 128, 128>}, {pipeline_mode = #tpu.pipeline_mode<synchronous>, transform_indices = @transform_3, window_bounds = array<i64: 16, 128>}, {pipeline_mode = #tpu.pipeline_mode<synchronous>, transform_indices = @transform_4, window_bounds = array<i64: 2, 128>}, {pipeline_mode = #tpu.pipeline_mode<synchronous>, transform_indices = @transform_5, window_bounds = array<i64: 2, 128, 384>}, {pipeline_mode = #tpu.pipeline_mode<synchronous>, transform_indices = @transform_6, window_bounds = array<i64: 2, 1, 384>}, {pipeline_mode = #tpu.pipeline_mode<synchronous>, transform_indices = @transform_7, window_bounds = array<i64: 2, 128, 128>}, {pipeline_mode = #tpu.pipeline_mode<synchronous>, transform_indices = @transform_8, window_bounds = array<i64: 2, 128, 128>}, {pipeline_mode = #tpu.pipeline_mode<synchronous>, transform_indices = @transform_9, window_bounds = array<i64: 2, 1, 128>}, {pipeline_mode = #tpu.pipeline_mode<synchronous>, transform_indices = @transform_10, window_bounds = array<i64: 2, 128, 128>}, {pipeline_mode = #tpu.pipeline_mode<synchronous>, transform_indices = @transform_11, window_bounds = array<i64: 2, 6, 128>}, {transform_indices = @transform_12, window_bounds = array<i64: 1, 8, 128>}]} {
    %0 = tpu.iota {dimensions = array<i32: 1>} : vector<1x128xi32>
    %c32_i32 = arith.constant 32 : i32
    %1 = vector.broadcast %c32_i32 : i32 to vector<1x128xi32>
    %2 = arith.cmpi slt, %0, %1 : vector<1x128xi32>
    %3 = arith.extui %2 : vector<1x128xi1> to vector<1x128xi32>
    %4 = arith.sitofp %3 : vector<1x128xi32> to vector<1x128xf32>
    %c0 = arith.constant 0 : index
    %c0_0 = arith.constant 0 : index
    %c0_1 = arith.constant 0 : index
    %5 = vector.load %arg1[%c0, %c0_0, %c0_1] : memref<1x8x1xi32, #tpu.memory_space<vmem>>, vector<1x8x1xi32>
    %6 = vector.shape_cast %5 : vector<1x8x1xi32> to vector<8x1xi32>
    %7 = tpu.iota {dimensions = array<i32: 1>} : vector<8x128xi32>
    %8 = vector.broadcast %6 : vector<8x1xi32> to vector<8x128xi32>
    %9 = arith.cmpi eq, %7, %8 : vector<8x128xi32>
    %10 = arith.extui %9 : vector<8x128xi1> to vector<8x128xi32>
    %11 = arith.sitofp %10 : vector<8x128xi32> to vector<8x128xf32>
    %c0_2 = arith.constant 0 : index
    %c0_3 = arith.constant 0 : index
    %12 = vector.load %arg3[%c0_2, %c0_3] : memref<128x128xf32, #tpu.memory_space<vmem>>, vector<128x128xf32>
    %cst = arith.constant dense<0.000000e+00> : vector<8x128xf32>
    %13 = tpu.matmul %11, %12, %cst {dimension_numbers = #tpu.dot_dimension_numbers<[1], [0], [0], [1], [0, 0, 1, 1], [], []>} : vector<8x128xf32>, vector<128x128xf32>, vector<8x128xf32> -> vector<8x128xf32>
    %c0_4 = arith.constant 0 : index
    %c0_5 = arith.constant 0 : index
    %14 = vector.load %arg4[%c0_4, %c0_5] : memref<16x128xf32, #tpu.memory_space<vmem>>, vector<8x128xf32>
    %15 = arith.addf %13, %14 : vector<8x128xf32>
    %c0_6 = arith.constant 0 : index
    %c0_7 = arith.constant 0 : index
    %16 = vector.load %arg5[%c0_6, %c0_7] : memref<2x128xf32, #tpu.memory_space<vmem>>, vector<2x128xf32>
    %17 = vector.extract_strided_slice %16 {offsets = [0, 0], sizes = [1, 128], strides = [1, 1]} : vector<2x128xf32> to vector<1x128xf32>
    %18 = vector.extract_strided_slice %16 {offsets = [1, 0], sizes = [1, 128], strides = [1, 1]} : vector<2x128xf32> to vector<1x128xf32>
    %19 = vector.broadcast %4 : vector<1x128xf32> to vector<8x128xf32>
    %20 = arith.mulf %15, %19 : vector<8x128xf32>
    %cst_8 = arith.constant dense<0.000000e+00> : vector<8xf32>
    %21 = vector.multi_reduction <add>, %20, %cst_8 [1] : vector<8x128xf32> to vector<8xf32>
    %22 = vector.shape_cast %21 : vector<8xf32> to vector<8x1xf32>
    %cst_9 = arith.constant 3.125000e-02 : f32
    %23 = vector.broadcast %cst_9 : f32 to vector<8x1xf32>
    %24 = arith.mulf %22, %23 : vector<8x1xf32>
    %25 = vector.broadcast %24 : vector<8x1xf32> to vector<8x128xf32>
    %26 = arith.subf %20, %25 : vector<8x128xf32>
    %27 = vector.broadcast %4 : vector<1x128xf32> to vector<8x128xf32>
    %28 = arith.mulf %26, %27 : vector<8x128xf32>
    %29 = arith.mulf %28, %28 : vector<8x128xf32>
    %cst_10 = arith.constant dense<0.000000e+00> : vector<8xf32>
    %30 = vector.multi_reduction <add>, %29, %cst_10 [1] : vector<8x128xf32> to vector<8xf32>
    %31 = vector.shape_cast %30 : vector<8xf32> to vector<8x1xf32>
    %cst_11 = arith.constant 3.125000e-02 : f32
    %32 = vector.broadcast %cst_11 : f32 to vector<8x1xf32>
    %33 = arith.mulf %31, %32 : vector<8x1xf32>
    %cst_12 = arith.constant 9.99999996E-13 : f32
    %34 = vector.broadcast %cst_12 : f32 to vector<8x1xf32>
    %35 = arith.addf %33, %34 : vector<8x1xf32>
    %36 = math.rsqrt %35 : vector<8x1xf32>
    %37 = vector.broadcast %36 : vector<8x1xf32> to vector<8x128xf32>
    %38 = arith.mulf %28, %37 : vector<8x128xf32>
    %39 = vector.broadcast %17 : vector<1x128xf32> to vector<8x128xf32>
    %40 = arith.mulf %38, %39 : vector<8x128xf32>
    %41 = vector.broadcast %18 : vector<1x128xf32> to vector<8x128xf32>
    %42 = arith.addf %40, %41 : vector<8x128xf32>
    %c0_13 = arith.constant 0 : index
    %c0_14 = arith.constant 0 : index
    %c0_15 = arith.constant 0 : index
    %43 = vector.load %arg2[%c0_13, %c0_14, %c0_15] : memref<1x1x8xf32, #tpu.memory_space<vmem>>, vector<1x1x8xf32>
    %44 = vector.shape_cast %43 : vector<1x1x8xf32> to vector<1x8xf32>
    %cst_16 = arith.constant 1.000000e+00 : f32
    %45 = vector.broadcast %cst_16 : f32 to vector<1x8xf32>
    %46 = arith.subf %45, %44 : vector<1x8xf32>
    %cst_17 = arith.constant -1.000000e+09 : f32
    %47 = vector.broadcast %cst_17 : f32 to vector<1x8xf32>
    %48 = arith.mulf %46, %47 : vector<1x8xf32>
    %49 = vector.shape_cast %48 : vector<1x8xf32> to vector<1x1x8xf32>
    %50 = vector.shape_cast %49 : vector<1x1x8xf32> to vector<1x1x8xf32>
    %51 = vector.broadcast %50 : vector<1x1x8xf32> to vector<16x8x8xf32>
    %c0_18 = arith.constant 0 : index
    %c0_19 = arith.constant 0 : index
    %c0_20 = arith.constant 0 : index
    %52 = vector.load %arg12[%c0_18, %c0_19, %c0_20] : memref<2x6x128xf32, #tpu.memory_space<vmem>>, vector<1x6x128xf32>
    %53 = vector.shape_cast %52 : vector<1x6x128xf32> to vector<6x128xf32>
    %54 = arith.truncf %42 : vector<8x128xf32> to vector<8x128xbf16>
    %c0_21 = arith.constant 0 : index
    %c0_22 = arith.constant 0 : index
    %c0_23 = arith.constant 0 : index
    %55 = vector.load %arg6[%c0_21, %c0_22, %c0_23] : memref<2x128x384xbf16, #tpu.memory_space<vmem>>, vector<1x128x384xbf16>
    %56 = vector.shape_cast %55 : vector<1x128x384xbf16> to vector<128x384xbf16>
    %cst_24 = arith.constant dense<0.000000e+00> : vector<8x384xf32>
    %57 = tpu.matmul %54, %56, %cst_24 {dimension_numbers = #tpu.dot_dimension_numbers<[1], [0], [0], [1], [0, 0, 1, 1], [], []>} : vector<8x128xbf16>, vector<128x384xbf16>, vector<8x384xf32> -> vector<8x384xf32>
    %c0_25 = arith.constant 0 : index
    %c0_26 = arith.constant 0 : index
    %c0_27 = arith.constant 0 : index
    %58 = vector.load %arg7[%c0_25, %c0_26, %c0_27] : memref<2x1x384xf32, #tpu.memory_space<vmem>>, vector<1x1x384xf32>
    %59 = vector.shape_cast %58 : vector<1x1x384xf32> to vector<1x384xf32>
    %60 = vector.broadcast %59 : vector<1x384xf32> to vector<8x384xf32>
    %61 = arith.addf %57, %60 : vector<8x384xf32>
    %62 = vector.extract_strided_slice %61 {offsets = [0, 0], sizes = [8, 128], strides = [1, 1]} : vector<8x384xf32> to vector<8x128xf32>
    %63 = arith.truncf %62 : vector<8x128xf32> to vector<8x128xbf16>
    %64 = vector.shape_cast %63 : vector<8x128xbf16> to vector<8x16x8xbf16>
    %65 = vector.extract_strided_slice %61 {offsets = [0, 128], sizes = [8, 128], strides = [1, 1]} : vector<8x384xf32> to vector<8x128xf32>
    %66 = arith.truncf %65 : vector<8x128xf32> to vector<8x128xbf16>
    %67 = vector.shape_cast %66 : vector<8x128xbf16> to vector<8x16x8xbf16>
    %68 = vector.extract_strided_slice %61 {offsets = [0, 256], sizes = [8, 128], strides = [1, 1]} : vector<8x384xf32> to vector<8x128xf32>
    %69 = arith.truncf %68 : vector<8x128xf32> to vector<8x128xbf16>
    %70 = vector.shape_cast %69 : vector<8x128xbf16> to vector<8x16x8xbf16>
    "tpu.trace_start"() <{level = 10 : i32, message = "qhd,khd->hqk"}> : () -> ()
    %cst_28 = arith.constant dense<0.000000e+00> : vector<16x8x8xf32>
    %71 = tpu.matmul %64, %67, %cst_28 {dimension_numbers = #tpu.dot_dimension_numbers<[2], [2], [0], [0], [0, 1, 0, 0, 1, 0], [1], [1]>} : vector<8x16x8xbf16>, vector<8x16x8xbf16>, vector<16x8x8xf32> -> vector<16x8x8xf32>
    "tpu.trace_stop"() : () -> ()
    %72 = arith.addf %71, %51 : vector<16x8x8xf32>
    %cst_29 = arith.constant dense<0xFF800000> : vector<16x8xf32>
    %73 = vector.multi_reduction <maximumf>, %72, %cst_29 [2] : vector<16x8x8xf32> to vector<16x8xf32>
    %74 = vector.shape_cast %73 : vector<16x8xf32> to vector<16x8x1xf32>
    %75 = vector.broadcast %74 : vector<16x8x1xf32> to vector<16x8x8xf32>
    %76 = arith.subf %72, %75 : vector<16x8x8xf32>
    %77 = math.exp %76 : vector<16x8x8xf32>
    %cst_30 = arith.constant dense<0.000000e+00> : vector<16x8xf32>
    %78 = vector.multi_reduction <add>, %77, %cst_30 [2] : vector<16x8x8xf32> to vector<16x8xf32>
    %79 = vector.shape_cast %78 : vector<16x8xf32> to vector<16x8x1xf32>
    %80 = tpu.reciprocal %79 {approx = true} : vector<16x8x1xf32> -> vector<16x8x1xf32>
    %81 = vector.broadcast %80 : vector<16x8x1xf32> to vector<16x8x8xf32>
    %82 = arith.mulf %77, %81 : vector<16x8x8xf32>
    %83 = arith.truncf %82 : vector<16x8x8xf32> to vector<16x8x8xbf16>
    "tpu.trace_start"() <{level = 10 : i32, message = "hqk,khd->qhd"}> : () -> ()
    %cst_31 = arith.constant dense<0.000000e+00> : vector<16x8x8xf32>
    %84 = tpu.matmul %70, %83, %cst_31 {dimension_numbers = #tpu.dot_dimension_numbers<[0], [2], [2], [1], [0, 1, 0, 2, 1, 1], [1], [0]>} : vector<8x16x8xbf16>, vector<16x8x8xbf16>, vector<16x8x8xf32> -> vector<16x8x8xf32>
    %85 = tpu.transpose %84, [2, 0, 1] : vector<16x8x8xf32> -> vector<8x16x8xf32>
    "tpu.trace_stop"() : () -> ()
    %86 = vector.shape_cast %85 : vector<8x16x8xf32> to vector<8x128xf32>
    %87 = arith.truncf %86 : vector<8x128xf32> to vector<8x128xbf16>
    %c0_32 = arith.constant 0 : index
    %c0_33 = arith.constant 0 : index
    %c0_34 = arith.constant 0 : index
    %88 = vector.load %arg8[%c0_32, %c0_33, %c0_34] : memref<2x128x128xbf16, #tpu.memory_space<vmem>>, vector<1x128x128xbf16>
    %89 = vector.shape_cast %88 : vector<1x128x128xbf16> to vector<128x128xbf16>
    %cst_35 = arith.constant dense<0.000000e+00> : vector<8x128xf32>
    %90 = tpu.matmul %87, %89, %cst_35 {dimension_numbers = #tpu.dot_dimension_numbers<[1], [0], [0], [1], [0, 0, 1, 1], [], []>} : vector<8x128xbf16>, vector<128x128xbf16>, vector<8x128xf32> -> vector<8x128xf32>
    %91 = vector.extract_strided_slice %53 {offsets = [0, 0], sizes = [1, 128], strides = [1, 1]} : vector<6x128xf32> to vector<1x128xf32>
    %92 = vector.broadcast %91 : vector<1x128xf32> to vector<8x128xf32>
    %93 = arith.addf %90, %92 : vector<8x128xf32>
    %94 = arith.addf %42, %93 : vector<8x128xf32>
    %95 = vector.extract_strided_slice %53 {offsets = [2, 0], sizes = [1, 128], strides = [1, 1]} : vector<6x128xf32> to vector<1x128xf32>
    %96 = vector.extract_strided_slice %53 {offsets = [3, 0], sizes = [1, 128], strides = [1, 1]} : vector<6x128xf32> to vector<1x128xf32>
    %97 = vector.broadcast %4 : vector<1x128xf32> to vector<8x128xf32>
    %98 = arith.mulf %94, %97 : vector<8x128xf32>
    %cst_36 = arith.constant dense<0.000000e+00> : vector<8xf32>
    %99 = vector.multi_reduction <add>, %98, %cst_36 [1] : vector<8x128xf32> to vector<8xf32>
    %100 = vector.shape_cast %99 : vector<8xf32> to vector<8x1xf32>
    %cst_37 = arith.constant 3.125000e-02 : f32
    %101 = vector.broadcast %cst_37 : f32 to vector<8x1xf32>
    %102 = arith.mulf %100, %101 : vector<8x1xf32>
    %103 = vector.broadcast %102 : vector<8x1xf32> to vector<8x128xf32>
    %104 = arith.subf %98, %103 : vector<8x128xf32>
    %105 = vector.broadcast %4 : vector<1x128xf32> to vector<8x128xf32>
    %106 = arith.mulf %104, %105 : vector<8x128xf32>
    %107 = arith.mulf %106, %106 : vector<8x128xf32>
    %cst_38 = arith.constant dense<0.000000e+00> : vector<8xf32>
    %108 = vector.multi_reduction <add>, %107, %cst_38 [1] : vector<8x128xf32> to vector<8xf32>
    %109 = vector.shape_cast %108 : vector<8xf32> to vector<8x1xf32>
    %cst_39 = arith.constant 3.125000e-02 : f32
    %110 = vector.broadcast %cst_39 : f32 to vector<8x1xf32>
    %111 = arith.mulf %109, %110 : vector<8x1xf32>
    %cst_40 = arith.constant 9.99999996E-13 : f32
    %112 = vector.broadcast %cst_40 : f32 to vector<8x1xf32>
    %113 = arith.addf %111, %112 : vector<8x1xf32>
    %114 = math.rsqrt %113 : vector<8x1xf32>
    %115 = vector.broadcast %114 : vector<8x1xf32> to vector<8x128xf32>
    %116 = arith.mulf %106, %115 : vector<8x128xf32>
    %117 = vector.broadcast %95 : vector<1x128xf32> to vector<8x128xf32>
    %118 = arith.mulf %116, %117 : vector<8x128xf32>
    %119 = vector.broadcast %96 : vector<1x128xf32> to vector<8x128xf32>
    %120 = arith.addf %118, %119 : vector<8x128xf32>
    %121 = arith.truncf %120 : vector<8x128xf32> to vector<8x128xbf16>
    %c0_41 = arith.constant 0 : index
    %c0_42 = arith.constant 0 : index
    %c0_43 = arith.constant 0 : index
    %122 = vector.load %arg9[%c0_41, %c0_42, %c0_43] : memref<2x128x128xbf16, #tpu.memory_space<vmem>>, vector<1x128x128xbf16>
    %123 = vector.shape_cast %122 : vector<1x128x128xbf16> to vector<128x128xbf16>
    %cst_44 = arith.constant dense<0.000000e+00> : vector<8x128xf32>
    %124 = tpu.matmul %121, %123, %cst_44 {dimension_numbers = #tpu.dot_dimension_numbers<[1], [0], [0], [1], [0, 0, 1, 1], [], []>} : vector<8x128xbf16>, vector<128x128xbf16>, vector<8x128xf32> -> vector<8x128xf32>
    %c0_45 = arith.constant 0 : index
    %c0_46 = arith.constant 0 : index
    %c0_47 = arith.constant 0 : index
    %125 = vector.load %arg10[%c0_45, %c0_46, %c0_47] : memref<2x1x128xf32, #tpu.memory_space<vmem>>, vector<1x1x128xf32>
    %126 = vector.shape_cast %125 : vector<1x1x128xf32> to vector<1x128xf32>
    %127 = vector.broadcast %126 : vector<1x128xf32> to vector<8x128xf32>
    %128 = arith.addf %124, %127 : vector<8x128xf32>
    %cst_48 = arith.constant 5.000000e-01 : f32
    %129 = vector.broadcast %cst_48 : f32 to vector<8x128xf32>
    %130 = arith.mulf %129, %128 : vector<8x128xf32>
    %cst_49 = arith.constant 4.471500e-02 : f32
    %131 = vector.broadcast %cst_49 : f32 to vector<8x128xf32>
    %132 = arith.mulf %131, %128 : vector<8x128xf32>
    %133 = arith.mulf %132, %128 : vector<8x128xf32>
    %134 = arith.mulf %133, %128 : vector<8x128xf32>
    %135 = arith.addf %128, %134 : vector<8x128xf32>
    %cst_50 = arith.constant 0.797884583 : f32
    %136 = vector.broadcast %cst_50 : f32 to vector<8x128xf32>
    %137 = arith.mulf %136, %135 : vector<8x128xf32>
    %138 = math.tanh %137 : vector<8x128xf32>
    %cst_51 = arith.constant 1.000000e+00 : f32
    %139 = vector.broadcast %cst_51 : f32 to vector<8x128xf32>
    %140 = arith.addf %139, %138 : vector<8x128xf32>
    %141 = arith.mulf %130, %140 : vector<8x128xf32>
    %142 = arith.truncf %141 : vector<8x128xf32> to vector<8x128xbf16>
    %c0_52 = arith.constant 0 : index
    %c0_53 = arith.constant 0 : index
    %c0_54 = arith.constant 0 : index
    %143 = vector.load %arg11[%c0_52, %c0_53, %c0_54] : memref<2x128x128xbf16, #tpu.memory_space<vmem>>, vector<1x128x128xbf16>
    %144 = vector.shape_cast %143 : vector<1x128x128xbf16> to vector<128x128xbf16>
    %cst_55 = arith.constant dense<0.000000e+00> : vector<8x128xf32>
    %145 = tpu.matmul %142, %144, %cst_55 {dimension_numbers = #tpu.dot_dimension_numbers<[1], [0], [0], [1], [0, 0, 1, 1], [], []>} : vector<8x128xbf16>, vector<128x128xbf16>, vector<8x128xf32> -> vector<8x128xf32>
    %146 = vector.extract_strided_slice %53 {offsets = [1, 0], sizes = [1, 128], strides = [1, 1]} : vector<6x128xf32> to vector<1x128xf32>
    %147 = vector.broadcast %146 : vector<1x128xf32> to vector<8x128xf32>
    %148 = arith.addf %145, %147 : vector<8x128xf32>
    %149 = arith.addf %120, %148 : vector<8x128xf32>
    %150 = vector.extract_strided_slice %53 {offsets = [4, 0], sizes = [1, 128], strides = [1, 1]} : vector<6x128xf32> to vector<1x128xf32>
    %151 = vector.extract_strided_slice %53 {offsets = [5, 0], sizes = [1, 128], strides = [1, 1]} : vector<6x128xf32> to vector<1x128xf32>
    %152 = vector.broadcast %4 : vector<1x128xf32> to vector<8x128xf32>
    %153 = arith.mulf %149, %152 : vector<8x128xf32>
    %cst_56 = arith.constant dense<0.000000e+00> : vector<8xf32>
    %154 = vector.multi_reduction <add>, %153, %cst_56 [1] : vector<8x128xf32> to vector<8xf32>
    %155 = vector.shape_cast %154 : vector<8xf32> to vector<8x1xf32>
    %cst_57 = arith.constant 3.125000e-02 : f32
    %156 = vector.broadcast %cst_57 : f32 to vector<8x1xf32>
    %157 = arith.mulf %155, %156 : vector<8x1xf32>
    %158 = vector.broadcast %157 : vector<8x1xf32> to vector<8x128xf32>
    %159 = arith.subf %153, %158 : vector<8x128xf32>
    %160 = vector.broadcast %4 : vector<1x128xf32> to vector<8x128xf32>
    %161 = arith.mulf %159, %160 : vector<8x128xf32>
    %162 = arith.mulf %161, %161 : vector<8x128xf32>
    %cst_58 = arith.constant dense<0.000000e+00> : vector<8xf32>
    %163 = vector.multi_reduction <add>, %162, %cst_58 [1] : vector<8x128xf32> to vector<8xf32>
    %164 = vector.shape_cast %163 : vector<8xf32> to vector<8x1xf32>
    %cst_59 = arith.constant 3.125000e-02 : f32
    %165 = vector.broadcast %cst_59 : f32 to vector<8x1xf32>
    %166 = arith.mulf %164, %165 : vector<8x1xf32>
    %cst_60 = arith.constant 9.99999996E-13 : f32
    %167 = vector.broadcast %cst_60 : f32 to vector<8x1xf32>
    %168 = arith.addf %166, %167 : vector<8x1xf32>
    %169 = math.rsqrt %168 : vector<8x1xf32>
    %170 = vector.broadcast %169 : vector<8x1xf32> to vector<8x128xf32>
    %171 = arith.mulf %161, %170 : vector<8x128xf32>
    %172 = vector.broadcast %150 : vector<1x128xf32> to vector<8x128xf32>
    %173 = arith.mulf %171, %172 : vector<8x128xf32>
    %174 = vector.broadcast %151 : vector<1x128xf32> to vector<8x128xf32>
    %175 = arith.addf %173, %174 : vector<8x128xf32>
    %c1 = arith.constant 1 : index
    %c0_61 = arith.constant 0 : index
    %c0_62 = arith.constant 0 : index
    %176 = vector.load %arg12[%c1, %c0_61, %c0_62] : memref<2x6x128xf32, #tpu.memory_space<vmem>>, vector<1x6x128xf32>
    %177 = vector.shape_cast %176 : vector<1x6x128xf32> to vector<6x128xf32>
    %178 = arith.truncf %175 : vector<8x128xf32> to vector<8x128xbf16>
    %c1_63 = arith.constant 1 : index
    %c0_64 = arith.constant 0 : index
    %c0_65 = arith.constant 0 : index
    %179 = vector.load %arg6[%c1_63, %c0_64, %c0_65] : memref<2x128x384xbf16, #tpu.memory_space<vmem>>, vector<1x128x384xbf16>
    %180 = vector.shape_cast %179 : vector<1x128x384xbf16> to vector<128x384xbf16>
    %cst_66 = arith.constant dense<0.000000e+00> : vector<8x384xf32>
    %181 = tpu.matmul %178, %180, %cst_66 {dimension_numbers = #tpu.dot_dimension_numbers<[1], [0], [0], [1], [0, 0, 1, 1], [], []>} : vector<8x128xbf16>, vector<128x384xbf16>, vector<8x384xf32> -> vector<8x384xf32>
    %c1_67 = arith.constant 1 : index
    %c0_68 = arith.constant 0 : index
    %c0_69 = arith.constant 0 : index
    %182 = vector.load %arg7[%c1_67, %c0_68, %c0_69] : memref<2x1x384xf32, #tpu.memory_space<vmem>>, vector<1x1x384xf32>
    %183 = vector.shape_cast %182 : vector<1x1x384xf32> to vector<1x384xf32>
    %184 = vector.broadcast %183 : vector<1x384xf32> to vector<8x384xf32>
    %185 = arith.addf %181, %184 : vector<8x384xf32>
    %186 = vector.extract_strided_slice %185 {offsets = [0, 0], sizes = [8, 128], strides = [1, 1]} : vector<8x384xf32> to vector<8x128xf32>
    %187 = arith.truncf %186 : vector<8x128xf32> to vector<8x128xbf16>
    %188 = vector.shape_cast %187 : vector<8x128xbf16> to vector<8x16x8xbf16>
    %189 = vector.extract_strided_slice %185 {offsets = [0, 128], sizes = [8, 128], strides = [1, 1]} : vector<8x384xf32> to vector<8x128xf32>
    %190 = arith.truncf %189 : vector<8x128xf32> to vector<8x128xbf16>
    %191 = vector.shape_cast %190 : vector<8x128xbf16> to vector<8x16x8xbf16>
    %192 = vector.extract_strided_slice %185 {offsets = [0, 256], sizes = [8, 128], strides = [1, 1]} : vector<8x384xf32> to vector<8x128xf32>
    %193 = arith.truncf %192 : vector<8x128xf32> to vector<8x128xbf16>
    %194 = vector.shape_cast %193 : vector<8x128xbf16> to vector<8x16x8xbf16>
    "tpu.trace_start"() <{level = 10 : i32, message = "qhd,khd->hqk"}> : () -> ()
    %cst_70 = arith.constant dense<0.000000e+00> : vector<16x8x8xf32>
    %195 = tpu.matmul %188, %191, %cst_70 {dimension_numbers = #tpu.dot_dimension_numbers<[2], [2], [0], [0], [0, 1, 0, 0, 1, 0], [1], [1]>} : vector<8x16x8xbf16>, vector<8x16x8xbf16>, vector<16x8x8xf32> -> vector<16x8x8xf32>
    "tpu.trace_stop"() : () -> ()
    %196 = arith.addf %195, %51 : vector<16x8x8xf32>
    %cst_71 = arith.constant dense<0xFF800000> : vector<16x8xf32>
    %197 = vector.multi_reduction <maximumf>, %196, %cst_71 [2] : vector<16x8x8xf32> to vector<16x8xf32>
    %198 = vector.shape_cast %197 : vector<16x8xf32> to vector<16x8x1xf32>
    %199 = vector.broadcast %198 : vector<16x8x1xf32> to vector<16x8x8xf32>
    %200 = arith.subf %196, %199 : vector<16x8x8xf32>
    %201 = math.exp %200 : vector<16x8x8xf32>
    %cst_72 = arith.constant dense<0.000000e+00> : vector<16x8xf32>
    %202 = vector.multi_reduction <add>, %201, %cst_72 [2] : vector<16x8x8xf32> to vector<16x8xf32>
    %203 = vector.shape_cast %202 : vector<16x8xf32> to vector<16x8x1xf32>
    %204 = tpu.reciprocal %203 {approx = true} : vector<16x8x1xf32> -> vector<16x8x1xf32>
    %205 = vector.broadcast %204 : vector<16x8x1xf32> to vector<16x8x8xf32>
    %206 = arith.mulf %201, %205 : vector<16x8x8xf32>
    %207 = arith.truncf %206 : vector<16x8x8xf32> to vector<16x8x8xbf16>
    "tpu.trace_start"() <{level = 10 : i32, message = "hqk,khd->qhd"}> : () -> ()
    %cst_73 = arith.constant dense<0.000000e+00> : vector<16x8x8xf32>
    %208 = tpu.matmul %194, %207, %cst_73 {dimension_numbers = #tpu.dot_dimension_numbers<[0], [2], [2], [1], [0, 1, 0, 2, 1, 1], [1], [0]>} : vector<8x16x8xbf16>, vector<16x8x8xbf16>, vector<16x8x8xf32> -> vector<16x8x8xf32>
    %209 = tpu.transpose %208, [2, 0, 1] : vector<16x8x8xf32> -> vector<8x16x8xf32>
    "tpu.trace_stop"() : () -> ()
    %210 = vector.shape_cast %209 : vector<8x16x8xf32> to vector<8x128xf32>
    %211 = arith.truncf %210 : vector<8x128xf32> to vector<8x128xbf16>
    %c1_74 = arith.constant 1 : index
    %c0_75 = arith.constant 0 : index
    %c0_76 = arith.constant 0 : index
    %212 = vector.load %arg8[%c1_74, %c0_75, %c0_76] : memref<2x128x128xbf16, #tpu.memory_space<vmem>>, vector<1x128x128xbf16>
    %213 = vector.shape_cast %212 : vector<1x128x128xbf16> to vector<128x128xbf16>
    %cst_77 = arith.constant dense<0.000000e+00> : vector<8x128xf32>
    %214 = tpu.matmul %211, %213, %cst_77 {dimension_numbers = #tpu.dot_dimension_numbers<[1], [0], [0], [1], [0, 0, 1, 1], [], []>} : vector<8x128xbf16>, vector<128x128xbf16>, vector<8x128xf32> -> vector<8x128xf32>
    %215 = vector.extract_strided_slice %177 {offsets = [0, 0], sizes = [1, 128], strides = [1, 1]} : vector<6x128xf32> to vector<1x128xf32>
    %216 = vector.broadcast %215 : vector<1x128xf32> to vector<8x128xf32>
    %217 = arith.addf %214, %216 : vector<8x128xf32>
    %218 = arith.addf %175, %217 : vector<8x128xf32>
    %219 = vector.extract_strided_slice %177 {offsets = [2, 0], sizes = [1, 128], strides = [1, 1]} : vector<6x128xf32> to vector<1x128xf32>
    %220 = vector.extract_strided_slice %177 {offsets = [3, 0], sizes = [1, 128], strides = [1, 1]} : vector<6x128xf32> to vector<1x128xf32>
    %221 = vector.broadcast %4 : vector<1x128xf32> to vector<8x128xf32>
    %222 = arith.mulf %218, %221 : vector<8x128xf32>
    %cst_78 = arith.constant dense<0.000000e+00> : vector<8xf32>
    %223 = vector.multi_reduction <add>, %222, %cst_78 [1] : vector<8x128xf32> to vector<8xf32>
    %224 = vector.shape_cast %223 : vector<8xf32> to vector<8x1xf32>
    %cst_79 = arith.constant 3.125000e-02 : f32
    %225 = vector.broadcast %cst_79 : f32 to vector<8x1xf32>
    %226 = arith.mulf %224, %225 : vector<8x1xf32>
    %227 = vector.broadcast %226 : vector<8x1xf32> to vector<8x128xf32>
    %228 = arith.subf %222, %227 : vector<8x128xf32>
    %229 = vector.broadcast %4 : vector<1x128xf32> to vector<8x128xf32>
    %230 = arith.mulf %228, %229 : vector<8x128xf32>
    %231 = arith.mulf %230, %230 : vector<8x128xf32>
    %cst_80 = arith.constant dense<0.000000e+00> : vector<8xf32>
    %232 = vector.multi_reduction <add>, %231, %cst_80 [1] : vector<8x128xf32> to vector<8xf32>
    %233 = vector.shape_cast %232 : vector<8xf32> to vector<8x1xf32>
    %cst_81 = arith.constant 3.125000e-02 : f32
    %234 = vector.broadcast %cst_81 : f32 to vector<8x1xf32>
    %235 = arith.mulf %233, %234 : vector<8x1xf32>
    %cst_82 = arith.constant 9.99999996E-13 : f32
    %236 = vector.broadcast %cst_82 : f32 to vector<8x1xf32>
    %237 = arith.addf %235, %236 : vector<8x1xf32>
    %238 = math.rsqrt %237 : vector<8x1xf32>
    %239 = vector.broadcast %238 : vector<8x1xf32> to vector<8x128xf32>
    %240 = arith.mulf %230, %239 : vector<8x128xf32>
    %241 = vector.broadcast %219 : vector<1x128xf32> to vector<8x128xf32>
    %242 = arith.mulf %240, %241 : vector<8x128xf32>
    %243 = vector.broadcast %220 : vector<1x128xf32> to vector<8x128xf32>
    %244 = arith.addf %242, %243 : vector<8x128xf32>
    %245 = arith.truncf %244 : vector<8x128xf32> to vector<8x128xbf16>
    %c1_83 = arith.constant 1 : index
    %c0_84 = arith.constant 0 : index
    %c0_85 = arith.constant 0 : index
    %246 = vector.load %arg9[%c1_83, %c0_84, %c0_85] : memref<2x128x128xbf16, #tpu.memory_space<vmem>>, vector<1x128x128xbf16>
    %247 = vector.shape_cast %246 : vector<1x128x128xbf16> to vector<128x128xbf16>
    %cst_86 = arith.constant dense<0.000000e+00> : vector<8x128xf32>
    %248 = tpu.matmul %245, %247, %cst_86 {dimension_numbers = #tpu.dot_dimension_numbers<[1], [0], [0], [1], [0, 0, 1, 1], [], []>} : vector<8x128xbf16>, vector<128x128xbf16>, vector<8x128xf32> -> vector<8x128xf32>
    %c1_87 = arith.constant 1 : index
    %c0_88 = arith.constant 0 : index
    %c0_89 = arith.constant 0 : index
    %249 = vector.load %arg10[%c1_87, %c0_88, %c0_89] : memref<2x1x128xf32, #tpu.memory_space<vmem>>, vector<1x1x128xf32>
    %250 = vector.shape_cast %249 : vector<1x1x128xf32> to vector<1x128xf32>
    %251 = vector.broadcast %250 : vector<1x128xf32> to vector<8x128xf32>
    %252 = arith.addf %248, %251 : vector<8x128xf32>
    %cst_90 = arith.constant 5.000000e-01 : f32
    %253 = vector.broadcast %cst_90 : f32 to vector<8x128xf32>
    %254 = arith.mulf %253, %252 : vector<8x128xf32>
    %cst_91 = arith.constant 4.471500e-02 : f32
    %255 = vector.broadcast %cst_91 : f32 to vector<8x128xf32>
    %256 = arith.mulf %255, %252 : vector<8x128xf32>
    %257 = arith.mulf %256, %252 : vector<8x128xf32>
    %258 = arith.mulf %257, %252 : vector<8x128xf32>
    %259 = arith.addf %252, %258 : vector<8x128xf32>
    %cst_92 = arith.constant 0.797884583 : f32
    %260 = vector.broadcast %cst_92 : f32 to vector<8x128xf32>
    %261 = arith.mulf %260, %259 : vector<8x128xf32>
    %262 = math.tanh %261 : vector<8x128xf32>
    %cst_93 = arith.constant 1.000000e+00 : f32
    %263 = vector.broadcast %cst_93 : f32 to vector<8x128xf32>
    %264 = arith.addf %263, %262 : vector<8x128xf32>
    %265 = arith.mulf %254, %264 : vector<8x128xf32>
    %266 = arith.truncf %265 : vector<8x128xf32> to vector<8x128xbf16>
    %c1_94 = arith.constant 1 : index
    %c0_95 = arith.constant 0 : index
    %c0_96 = arith.constant 0 : index
    %267 = vector.load %arg11[%c1_94, %c0_95, %c0_96] : memref<2x128x128xbf16, #tpu.memory_space<vmem>>, vector<1x128x128xbf16>
    %268 = vector.shape_cast %267 : vector<1x128x128xbf16> to vector<128x128xbf16>
    %cst_97 = arith.constant dense<0.000000e+00> : vector<8x128xf32>
    %269 = tpu.matmul %266, %268, %cst_97 {dimension_numbers = #tpu.dot_dimension_numbers<[1], [0], [0], [1], [0, 0, 1, 1], [], []>} : vector<8x128xbf16>, vector<128x128xbf16>, vector<8x128xf32> -> vector<8x128xf32>
    %270 = vector.extract_strided_slice %177 {offsets = [1, 0], sizes = [1, 128], strides = [1, 1]} : vector<6x128xf32> to vector<1x128xf32>
    %271 = vector.broadcast %270 : vector<1x128xf32> to vector<8x128xf32>
    %272 = arith.addf %269, %271 : vector<8x128xf32>
    %273 = arith.addf %244, %272 : vector<8x128xf32>
    %274 = vector.extract_strided_slice %177 {offsets = [4, 0], sizes = [1, 128], strides = [1, 1]} : vector<6x128xf32> to vector<1x128xf32>
    %275 = vector.extract_strided_slice %177 {offsets = [5, 0], sizes = [1, 128], strides = [1, 1]} : vector<6x128xf32> to vector<1x128xf32>
    %276 = vector.broadcast %4 : vector<1x128xf32> to vector<8x128xf32>
    %277 = arith.mulf %273, %276 : vector<8x128xf32>
    %cst_98 = arith.constant dense<0.000000e+00> : vector<8xf32>
    %278 = vector.multi_reduction <add>, %277, %cst_98 [1] : vector<8x128xf32> to vector<8xf32>
    %279 = vector.shape_cast %278 : vector<8xf32> to vector<8x1xf32>
    %cst_99 = arith.constant 3.125000e-02 : f32
    %280 = vector.broadcast %cst_99 : f32 to vector<8x1xf32>
    %281 = arith.mulf %279, %280 : vector<8x1xf32>
    %282 = vector.broadcast %281 : vector<8x1xf32> to vector<8x128xf32>
    %283 = arith.subf %277, %282 : vector<8x128xf32>
    %284 = vector.broadcast %4 : vector<1x128xf32> to vector<8x128xf32>
    %285 = arith.mulf %283, %284 : vector<8x128xf32>
    %286 = arith.mulf %285, %285 : vector<8x128xf32>
    %cst_100 = arith.constant dense<0.000000e+00> : vector<8xf32>
    %287 = vector.multi_reduction <add>, %286, %cst_100 [1] : vector<8x128xf32> to vector<8xf32>
    %288 = vector.shape_cast %287 : vector<8xf32> to vector<8x1xf32>
    %cst_101 = arith.constant 3.125000e-02 : f32
    %289 = vector.broadcast %cst_101 : f32 to vector<8x1xf32>
    %290 = arith.mulf %288, %289 : vector<8x1xf32>
    %cst_102 = arith.constant 9.99999996E-13 : f32
    %291 = vector.broadcast %cst_102 : f32 to vector<8x1xf32>
    %292 = arith.addf %290, %291 : vector<8x1xf32>
    %293 = math.rsqrt %292 : vector<8x1xf32>
    %294 = vector.broadcast %293 : vector<8x1xf32> to vector<8x128xf32>
    %295 = arith.mulf %285, %294 : vector<8x128xf32>
    %296 = vector.broadcast %274 : vector<1x128xf32> to vector<8x128xf32>
    %297 = arith.mulf %295, %296 : vector<8x128xf32>
    %298 = vector.broadcast %275 : vector<1x128xf32> to vector<8x128xf32>
    %299 = arith.addf %297, %298 : vector<8x128xf32>
    %300 = vector.shape_cast %299 : vector<8x128xf32> to vector<1x8x128xf32>
    %c0_103 = arith.constant 0 : index
    %c0_104 = arith.constant 0 : index
    %c0_105 = arith.constant 0 : index
    %301 = vector.load %arg13[%c0_103, %c0_104, %c0_105] : memref<1x8x128xf32, #tpu.memory_space<vmem>>, vector<1x8x128xf32>
    tpu.vector_store %arg13[%c0_103, %c0_104, %c0_105], %300 {strides = array<i32>} : memref<1x8x128xf32, #tpu.memory_space<vmem>>, vector<1x8x128xf32>,
    return
  }
  func.func @transform_0(%arg0: i32) -> (i32, i32, i32) {
    %c0_i32 = arith.constant 0 : i32
    %c0_i32_0 = arith.constant 0 : i32
    %c0_i32_1 = arith.constant 0 : i32
    return %arg0, %c0_i32, %c0_i32_0 : i32, i32, i32
  }
  func.func @transform_1(%arg0: i32) -> (i32, i32, i32) {
    %c0_i32 = arith.constant 0 : i32
    %c0_i32_0 = arith.constant 0 : i32
    %c0_i32_1 = arith.constant 0 : i32
    return %arg0, %c0_i32, %c0_i32_0 : i32, i32, i32
  }
  func.func @transform_2(%arg0: i32) -> (i32, i32) {
    %c0_i32 = arith.constant 0 : i32
    %c0_i32_0 = arith.constant 0 : i32
    %c0_i32_1 = arith.constant 0 : i32
    return %c0_i32, %c0_i32_0 : i32, i32
  }
  func.func @transform_3(%arg0: i32) -> (i32, i32) {
    %c0_i32 = arith.constant 0 : i32
    %c0_i32_0 = arith.constant 0 : i32
    %c0_i32_1 = arith.constant 0 : i32
    return %c0_i32, %c0_i32_0 : i32, i32
  }
  func.func @transform_4(%arg0: i32) -> (i32, i32) {
    %c0_i32 = arith.constant 0 : i32
    %c0_i32_0 = arith.constant 0 : i32
    %c0_i32_1 = arith.constant 0 : i32
    return %c0_i32, %c0_i32_0 : i32, i32
  }
  func.func @transform_5(%arg0: i32) -> (i32, i32, i32) {
    %c0_i32 = arith.constant 0 : i32
    %c0_i32_0 = arith.constant 0 : i32
    %c0_i32_1 = arith.constant 0 : i32
    %c0_i32_2 = arith.constant 0 : i32
    return %c0_i32, %c0_i32_0, %c0_i32_1 : i32, i32, i32
  }
  func.func @transform_6(%arg0: i32) -> (i32, i32, i32) {
    %c0_i32 = arith.constant 0 : i32
    %c0_i32_0 = arith.constant 0 : i32
    %c0_i32_1 = arith.constant 0 : i32
    %c0_i32_2 = arith.constant 0 : i32
    return %c0_i32, %c0_i32_0, %c0_i32_1 : i32, i32, i32
  }
  func.func @transform_7(%arg0: i32) -> (i32, i32, i32) {
    %c0_i32 = arith.constant 0 : i32
    %c0_i32_0 = arith.constant 0 : i32
    %c0_i32_1 = arith.constant 0 : i32
    %c0_i32_2 = arith.constant 0 : i32
    return %c0_i32, %c0_i32_0, %c0_i32_1 : i32, i32, i32
  }
  func.func @transform_8(%arg0: i32) -> (i32, i32, i32) {
    %c0_i32 = arith.constant 0 : i32
    %c0_i32_0 = arith.constant 0 : i32
    %c0_i32_1 = arith.constant 0 : i32
    %c0_i32_2 = arith.constant 0 : i32
    return %c0_i32, %c0_i32_0, %c0_i32_1 : i32, i32, i32
  }
  func.func @transform_9(%arg0: i32) -> (i32, i32, i32) {
    %c0_i32 = arith.constant 0 : i32
    %c0_i32_0 = arith.constant 0 : i32
    %c0_i32_1 = arith.constant 0 : i32
    %c0_i32_2 = arith.constant 0 : i32
    return %c0_i32, %c0_i32_0, %c0_i32_1 : i32, i32, i32
  }
  func.func @transform_10(%arg0: i32) -> (i32, i32, i32) {
    %c0_i32 = arith.constant 0 : i32
    %c0_i32_0 = arith.constant 0 : i32
    %c0_i32_1 = arith.constant 0 : i32
    %c0_i32_2 = arith.constant 0 : i32
    return %c0_i32, %c0_i32_0, %c0_i32_1 : i32, i32, i32
  }
  func.func @transform_11(%arg0: i32) -> (i32, i32, i32) {
    %c0_i32 = arith.constant 0 : i32
    %c0_i32_0 = arith.constant 0 : i32
    %c0_i32_1 = arith.constant 0 : i32
    %c0_i32_2 = arith.constant 0 : i32
    return %c0_i32, %c0_i32_0, %c0_i32_1 : i32, i32, i32
  }
  func.func @transform_12(%arg0: i32) -> (i32, i32, i32) {
    %c0_i32 = arith.constant 0 : i32
    %c0_i32_0 = arith.constant 0 : i32
    %c0_i32_1 = arith.constant 0 : i32
    return %arg0, %c0_i32, %c0_i32_0 : i32, i32, i32
  }
}

</mosaic_0001>

<llo_original>
// kernel: _forward.1
$region0: #{_forward.1}
  #allocation0 [shape = 'u32[]', space=smem, size = 0x4, offset = 0x4, fixed_abs, tag = 'smem constant byte address 0x4 - core index']
  #allocation1 [shape = 'u32[144,128]{1,0:T(1,128)}', space=vmem, size = 0x12000, scoped, tag = 'internal scratch']
  %s0 = inlined_call_operand.vmem [shape: s32[2,8,1], index: 0, kind: input, shape index: {}]
  %s1 = inlined_call_operand.vmem [shape: f32[2,1,8], index: 1, kind: input, shape index: {}]
  %s2 = inlined_call_operand.hbm [shape: f32[128,128], index: 2, kind: input, shape index: {}]
  %s3 = inlined_call_operand.vmem [shape: f32[16,128], index: 3, kind: input, shape index: {}]
  %s4 = inlined_call_operand.vmem [shape: f32[2,128], index: 4, kind: input, shape index: {}]
  %s5 = inlined_call_operand.hbm [shape: bf16[2,128,384], index: 5, kind: input, shape index: {}]
  %s6 = inlined_call_operand.vmem [shape: f32[2,1,384], index: 6, kind: input, shape index: {}]
  %s7 = inlined_call_operand.hbm [shape: bf16[2,128,128], index: 7, kind: input, shape index: {}]
  %s8 = inlined_call_operand.hbm [shape: bf16[2,128,128], index: 8, kind: input, shape index: {}]
  %s9 = inlined_call_operand.vmem [shape: f32[2,1,128], index: 9, kind: input, shape index: {}]
  %s10 = inlined_call_operand.hbm [shape: bf16[2,128,128], index: 10, kind: input, shape index: {}]
  %s11 = inlined_call_operand.vmem [shape: f32[2,6,128], index: 11, kind: input, shape index: {}]
  %s12 = inlined_call_operand.hbm [shape: f32[2,8,128], index: 12, kind: output, shape index: {}]
  %s13 = sld [smem:[#allocation0]]
  $region101: #{_forward.1} parent=0
    _
  %s15 = ssub.s32 1, %s13
  %s16 = scalar_select 0, %s15, %s13
  $region1: #{_forward.1} parent=0
    #allocation2 [shape = 'u8[65536]{0}', space=vmem, size = 0x10000, scoped, tag = 'input window, operand 2, single buffered']
    #allocation3 [shape = 's32[2]{0}', space=sflag, size = 0x8, scoped, tag = 'scoped memory for _forward.1']
    #allocation4 [shape = 's32[2]{0}', space=sflag, size = 0x8, scoped, tag = 'scoped memory for _forward.1']
    #allocation5 [shape = 'u8[196608]{0}', space=vmem, size = 0x30000, scoped, tag = 'input window, operand 5, single buffered']
    #allocation6 [shape = 's32[1]{0}', space=sflag, size = 0x4, scoped, tag = 'scoped memory for _forward.1']
    #allocation7 [shape = 'u8[65536]{0}', space=vmem, size = 0x10000, scoped, tag = 'input window, operand 7, single buffered']
    #allocation8 [shape = 'u8[65536]{0}', space=vmem, size = 0x10000, scoped, tag = 'input window, operand 8, single buffered']
    #allocation9 [shape = 's32[1]{0}', space=sflag, size = 0x4, scoped, tag = 'scoped memory for _forward.1']
    #allocation10 [shape = 'u8[65536]{0}', space=vmem, size = 0x10000, scoped, tag = 'input window, operand 10, single buffered']
    #allocation11 [shape = 'u8[8192]{0}', space=vmem, size = 0x2000, scoped, tag = 'output window, operand 0']
    %17 = vsyncpa [#allocation3], 0
    %18 = vsyncpa [#allocation6], 0
    %19 = vsyncpa [#allocation9], 0
    %20 = vsyncpa [#allocation4], 0
    %s21 = scalar_lea.sflag [#allocation4], 1
    %22 = vsyncpa %s21, 0
    loop: start=0, step=1, limit=4
    $region2: #{_forward.1} parent=1 // loop_pre_header
      _
    $region3: #{_forward.1} parent=1 // loop_header
      %s24 = sphi 0, %s28
      %p25 = scmp.ge.s32.totalorder %s24, 4
      %s34 = sphi 0, %s36
      %s37 = sphi 0, %s34
      %s38 = sphi 0, %s37
      %s54 = sphi 0, %s38
      %s60 = sphi 0, %s62
      %s63 = sphi 0, %s60
      %s64 = sphi 0, %s63
      %s80 = sphi 0, %s64
      %s84 = sphi 0, %s84
      %s86 = sphi 0, %s84
      %s87 = sphi 0, %s86
      %s101 = sphi 0, %s87
      %s105 = sphi 0, %s105
      %s107 = sphi 0, %s105
      %s108 = sphi 0, %s107
      %s122 = sphi 0, %s108
      %s126 = sphi 0, %s126
      %s128 = sphi 0, %s126
      %s129 = sphi 0, %s128
      %s143 = sphi 0, %s129
      %s147 = sphi 0, %s147
      %s149 = sphi 0, %s147
      %s150 = sphi 0, %s149
      %s164 = sphi 0, %s150
      %s168 = sphi 0, %s168
      %s170 = sphi 0, %s168
      %s171 = sphi 0, %s170
      %s185 = sphi 0, %s171
      %s189 = sphi 0, %s189
      %s191 = sphi 0, %s189
      %s192 = sphi 0, %s191
      %s206 = sphi 0, %s192
      %s210 = sphi 0, %s210
      %s212 = sphi 0, %s210
      %s213 = sphi 0, %s212
      %s227 = sphi 0, %s213
      %s231 = sphi 0, %s231
      %s233 = sphi 0, %s231
      %s234 = sphi 0, %s233
      %s248 = sphi 0, %s234
      %s252 = sphi 0, %s252
      %s254 = sphi 0, %s252
      %s255 = sphi 0, %s254
      %s269 = sphi 0, %s255
      %s273 = sphi 0, %s273
      %s275 = sphi 0, %s273
      %s276 = sphi 0, %s275
      %s290 = sphi 0, %s276
      %s296 = sphi 0, %s298
      %s299 = sphi 0, %s296
      %s300 = sphi 0, %s299
      %s316 = sphi 0, %s300
    $region4: #{_forward.1} parent=1 // loop_header_branch
      %27 = sbr.rel (%p25) target = $region8
    $region5: #{_forward.1} parent=1 // loop_body
      %s29 = ssub.s32 %s24, 1
      %s30 = ssub.s32 %s24, 2
      %s31 = sadd.s32 %s24, 1
      %s32 = ssub.s32 %s24, %s31
      %p33 = scmp.eq.s32.totalorder %s32, 0
      %s35 = sadd.s32 %s34, 1
      %s36 = scalar_select %p33, %s34, %s35
      %p39 = pneg %p33
      %p40 = scmp.eq.s32.totalorder %s24, 1
      %p41 = por %p39, %p40
      %p42 = scmp.ne.s32.totalorder %s34, %s37
      %p43 = scmp.eq.s32.totalorder %s24, 0
      %p44 = por %p42, %p43
      %p45 = scmp.ne.s32.totalorder %s34, %s37
      %p46 = scmp.eq.s32.totalorder %s29, 1
      %p47 = por %p45, %p46
      %p48 = scmp.ne.s32.totalorder %s37, %s38
      %p49 = scmp.eq.s32.totalorder %s29, 0
      %p50 = por %p48, %p49
      %p51 = scmp.ne.s32.totalorder %s37, %s38
      %p52 = scmp.eq.s32.totalorder %s30, 1
      %p53 = por %p51, %p52
      %p55 = scmp.ne.s32.totalorder %s38, %s54
      %p56 = scmp.eq.s32.totalorder %s30, 0
      %p57 = por %p55, %p56
      %s58 = ssub.s32 %s24, %s31
      %p59 = scmp.eq.s32.totalorder %s58, 0
      %s61 = sadd.s32 %s60, 1
      %s62 = scalar_select %p59, %s60, %s61
      %p65 = pneg %p59
      %p66 = scmp.eq.s32.totalorder %s24, 1
      %p67 = por %p65, %p66
      %p68 = scmp.ne.s32.totalorder %s60, %s63
      %p69 = scmp.eq.s32.totalorder %s24, 0
      %p70 = por %p68, %p69
      %p71 = scmp.ne.s32.totalorder %s60, %s63
      %p72 = scmp.eq.s32.totalorder %s29, 1
      %p73 = por %p71, %p72
      %p74 = scmp.ne.s32.totalorder %s63, %s64
      %p75 = scmp.eq.s32.totalorder %s29, 0
      %p76 = por %p74, %p75
      %p77 = scmp.ne.s32.totalorder %s63, %s64
      %p78 = scmp.eq.s32.totalorder %s30, 1
      %p79 = por %p77, %p78
      %p81 = scmp.ne.s32.totalorder %s64, %s80
      %p82 = scmp.eq.s32.totalorder %s30, 0
      %p83 = por %p81, %p82
      %s85 = sadd.s32 %s84, 1
      %p88 = scmp.eq.s32.totalorder %s24, 1
      %p89 = scmp.ne.s32.totalorder %s84, %s86
      %p90 = scmp.eq.s32.totalorder %s24, 0
      %p91 = por %p89, %p90
      %p92 = scmp.ne.s32.totalorder %s84, %s86
      %p93 = scmp.eq.s32.totalorder %s29, 1
      %p94 = por %p92, %p93
      %p95 = scmp.ne.s32.totalorder %s86, %s87
      %p96 = scmp.eq.s32.totalorder %s29, 0
      %p97 = por %p95, %p96
      %p98 = scmp.ne.s32.totalorder %s86, %s87
      %p99 = scmp.eq.s32.totalorder %s30, 1
      %p100 = por %p98, %p99
      %p102 = scmp.ne.s32.totalorder %s87, %s101
      %p103 = scmp.eq.s32.totalorder %s30, 0
      %p104 = por %p102, %p103
      %s106 = sadd.s32 %s105, 1
      %p109 = scmp.eq.s32.totalorder %s24, 1
      %p110 = scmp.ne.s32.totalorder %s105, %s107
      %p111 = scmp.eq.s32.totalorder %s24, 0
      %p112 = por %p110, %p111
      %p113 = scmp.ne.s32.totalorder %s105, %s107
      %p114 = scmp.eq.s32.totalorder %s29, 1
      %p115 = por %p113, %p114
      %p116 = scmp.ne.s32.totalorder %s107, %s108
      %p117 = scmp.eq.s32.totalorder %s29, 0
      %p118 = por %p116, %p117
      %p119 = scmp.ne.s32.totalorder %s107, %s108
      %p120 = scmp.eq.s32.totalorder %s30, 1
      %p121 = por %p119, %p120
      %p123 = scmp.ne.s32.totalorder %s108, %s122
      %p124 = scmp.eq.s32.totalorder %s30, 0
      %p125 = por %p123, %p124
      %s127 = sadd.s32 %s126, 1
      %p130 = scmp.eq.s32.totalorder %s24, 1
      %p131 = scmp.ne.s32.totalorder %s126, %s128
      %p132 = scmp.eq.s32.totalorder %s24, 0
      %p133 = por %p131, %p132
      %p134 = scmp.ne.s32.totalorder %s126, %s128
      %p135 = scmp.eq.s32.totalorder %s29, 1
      %p136 = por %p134, %p135
      %p137 = scmp.ne.s32.totalorder %s128, %s129
      %p138 = scmp.eq.s32.totalorder %s29, 0
      %p139 = por %p137, %p138
      %p140 = scmp.ne.s32.totalorder %s128, %s129
      %p141 = scmp.eq.s32.totalorder %s30, 1
      %p142 = por %p140, %p141
      %p144 = scmp.ne.s32.totalorder %s129, %s143
      %p145 = scmp.eq.s32.totalorder %s30, 0
      %p146 = por %p144, %p145
      %s148 = sadd.s32 %s147, 1
      %p151 = scmp.eq.s32.totalorder %s24, 1
      %p152 = scmp.ne.s32.totalorder %s147, %s149
      %p153 = scmp.eq.s32.totalorder %s24, 0
      %p154 = por %p152, %p153
      %p155 = scmp.ne.s32.totalorder %s147, %s149
      %p156 = scmp.eq.s32.totalorder %s29, 1
      %p157 = por %p155, %p156
      %p158 = scmp.ne.s32.totalorder %s149, %s150
      %p159 = scmp.eq.s32.totalorder %s29, 0
      %p160 = por %p158, %p159
      %p161 = scmp.ne.s32.totalorder %s149, %s150
      %p162 = scmp.eq.s32.totalorder %s30, 1
      %p163 = por %p161, %p162
      %p165 = scmp.ne.s32.totalorder %s150, %s164
      %p166 = scmp.eq.s32.totalorder %s30, 0
      %p167 = por %p165, %p166
      %s169 = sadd.s32 %s168, 1
      %p172 = scmp.eq.s32.totalorder %s24, 1
      %p173 = scmp.ne.s32.totalorder %s168, %s170
      %p174 = scmp.eq.s32.totalorder %s24, 0
      %p175 = por %p173, %p174
      %p176 = scmp.ne.s32.totalorder %s168, %s170
      %p177 = scmp.eq.s32.totalorder %s29, 1
      %p178 = por %p176, %p177
      %p179 = scmp.ne.s32.totalorder %s170, %s171
      %p180 = scmp.eq.s32.totalorder %s29, 0
      %p181 = por %p179, %p180
      %p182 = scmp.ne.s32.totalorder %s170, %s171
      %p183 = scmp.eq.s32.totalorder %s30, 1
      %p184 = por %p182, %p183
      %p186 = scmp.ne.s32.totalorder %s171, %s185
      %p187 = scmp.eq.s32.totalorder %s30, 0
      %p188 = por %p186, %p187
      %s190 = sadd.s32 %s189, 1
      %p193 = scmp.eq.s32.totalorder %s24, 1
      %p194 = scmp.ne.s32.totalorder %s189, %s191
      %p195 = scmp.eq.s32.totalorder %s24, 0
      %p196 = por %p194, %p195
      %p197 = scmp.ne.s32.totalorder %s189, %s191
      %p198 = scmp.eq.s32.totalorder %s29, 1
      %p199 = por %p197, %p198
      %p200 = scmp.ne.s32.totalorder %s191, %s192
      %p201 = scmp.eq.s32.totalorder %s29, 0
      %p202 = por %p200, %p201
      %p203 = scmp.ne.s32.totalorder %s191, %s192
      %p204 = scmp.eq.s32.totalorder %s30, 1
      %p205 = por %p203, %p204
      %p207 = scmp.ne.s32.totalorder %s192, %s206
      %p208 = scmp.eq.s32.totalorder %s30, 0
      %p209 = por %p207, %p208
      %s211 = sadd.s32 %s210, 1
      %p214 = scmp.eq.s32.totalorder %s24, 1
      %p215 = scmp.ne.s32.totalorder %s210, %s212
      %p216 = scmp.eq.s32.totalorder %s24, 0
      %p217 = por %p215, %p216
      %p218 = scmp.ne.s32.totalorder %s210, %s212
      %p219 = scmp.eq.s32.totalorder %s29, 1
      %p220 = por %p218, %p219
      %p221 = scmp.ne.s32.totalorder %s212, %s213
      %p222 = scmp.eq.s32.totalorder %s29, 0
      %p223 = por %p221, %p222
      %p224 = scmp.ne.s32.totalorder %s212, %s213
      %p225 = scmp.eq.s32.totalorder %s30, 1
      %p226 = por %p224, %p225
      %p228 = scmp.ne.s32.totalorder %s213, %s227
      %p229 = scmp.eq.s32.totalorder %s30, 0
      %p230 = por %p228, %p229
      %s232 = sadd.s32 %s231, 1
      %p235 = scmp.eq.s32.totalorder %s24, 1
      %p236 = scmp.ne.s32.totalorder %s231, %s233
      %p237 = scmp.eq.s32.totalorder %s24, 0
      %p238 = por %p236, %p237
      %p239 = scmp.ne.s32.totalorder %s231, %s233
      %p240 = scmp.eq.s32.totalorder %s29, 1
      %p241 = por %p239, %p240
      %p242 = scmp.ne.s32.totalorder %s233, %s234
      %p243 = scmp.eq.s32.totalorder %s29, 0
      %p244 = por %p242, %p243
      %p245 = scmp.ne.s32.totalorder %s233, %s234
      %p246 = scmp.eq.s32.totalorder %s30, 1
      %p247 = por %p245, %p246
      %p249 = scmp.ne.s32.totalorder %s234, %s248
      %p250 = scmp.eq.s32.totalorder %s30, 0
      %p251 = por %p249, %p250
      %s253 = sadd.s32 %s252, 1
      %p256 = scmp.eq.s32.totalorder %s24, 1
      %p257 = scmp.ne.s32.totalorder %s252, %s254
      %p258 = scmp.eq.s32.totalorder %s24, 0
      %p259 = por %p257, %p258
      %p260 = scmp.ne.s32.totalorder %s252, %s254
      %p261 = scmp.eq.s32.totalorder %s29, 1
      %p262 = por %p260, %p261
      %p263 = scmp.ne.s32.totalorder %s254, %s255
      %p264 = scmp.eq.s32.totalorder %s29, 0
      %p265 = por %p263, %p264
      %p266 = scmp.ne.s32.totalorder %s254, %s255
      %p267 = scmp.eq.s32.totalorder %s30, 1
      %p268 = por %p266, %p267
      %p270 = scmp.ne.s32.totalorder %s255, %s269
      %p271 = scmp.eq.s32.totalorder %s30, 0
      %p272 = por %p270, %p271
      %s274 = sadd.s32 %s273, 1
      %p277 = scmp.eq.s32.totalorder %s24, 1
      %p278 = scmp.ne.s32.totalorder %s273, %s275
      %p279 = scmp.eq.s32.totalorder %s24, 0
      %p280 = por %p278, %p279
      %p281 = scmp.ne.s32.totalorder %s273, %s275
      %p282 = scmp.eq.s32.totalorder %s29, 1
      %p283 = por %p281, %p282
      %p284 = scmp.ne.s32.totalorder %s275, %s276
      %p285 = scmp.eq.s32.totalorder %s29, 0
      %p286 = por %p284, %p285
      %p287 = scmp.ne.s32.totalorder %s275, %s276
      %p288 = scmp.eq.s32.totalorder %s30, 1
      %p289 = por %p287, %p288
      %p291 = scmp.ne.s32.totalorder %s276, %s290
      %p292 = scmp.eq.s32.totalorder %s30, 0
      %p293 = por %p291, %p292
      %s294 = ssub.s32 %s24, %s31
      %p295 = scmp.eq.s32.totalorder %s294, 0
      %s297 = sadd.s32 %s296, 1
      %s298 = scalar_select %p295, %s296, %s297
      %p301 = pneg %p295
      %p302 = scmp.eq.s32.totalorder %s24, 1
      %p303 = por %p301, %p302
      %p304 = scmp.ne.s32.totalorder %s296, %s299
      %p305 = scmp.eq.s32.totalorder %s24, 0
      %p306 = por %p304, %p305
      %p307 = scmp.ne.s32.totalorder %s296, %s299
      %p308 = scmp.eq.s32.totalorder %s29, 1
      %p309 = por %p307, %p308
      %p310 = scmp.ne.s32.totalorder %s299, %s300
      %p311 = scmp.eq.s32.totalorder %s29, 0
      %p312 = por %p310, %p311
      %p313 = scmp.ne.s32.totalorder %s299, %s300
      %p314 = scmp.eq.s32.totalorder %s30, 1
      %p315 = por %p313, %p314
      %p317 = scmp.ne.s32.totalorder %s300, %s316
      %p318 = scmp.eq.s32.totalorder %s30, 0
      %p319 = por %p317, %p318
      %p320 = scmp.le.s32.totalorder 1, %s24
      %p321 = scmp.lt.s32.totalorder %s24, 3
      %p322 = pnand %p320, %p321
      %p323 = pneg %p322
      // Predicated region
      $region9: #{_forward.1} parent=5 // pred_check
        _
      $region10: #{_forward.1} parent=5 // pred_check_branch
        %325 = sbr.rel (%p322) target = $region12
      $region11: #{_forward.1} parent=5 // pred_region
        %s326 = ssub.s32 %s24, 1
        // Predicated region
        $region13: #{_forward.1} parent=11 // pred_check
          %p327 = pneg %p97
        $region14: #{_forward.1} parent=11 // pred_check_branch
          %329 = sbr.rel (%p327) target = $region16
        $region15: #{_forward.1} parent=11 // pred_region
          %s331 = ssub.s32 2048, 2048
          %332 = vsyncadd [#allocation3], %s331
          %s333 = sshll.u32 [#allocation2], 4
          %s334 = int_to_ptr.vmem [resolvable:$true] %s333
          %339 = dma.hbm_to_vmem [thread:$0]  %s2, 2048, %s334, [#allocation3], 128, 128, 8
        $region16: #{_forward.1} parent=11 // pred_fallthru
          _
        // Predicated region
        $region17: #{_forward.1} parent=11 // pred_check
          %p340 = pneg %p118
        $region18: #{_forward.1} parent=11 // pred_check_branch
          %342 = sbr.rel (%p340) target = $region20
        $region19: #{_forward.1} parent=11 // pred_region
          _
        $region20: #{_forward.1} parent=11 // pred_fallthru
          _
        // Predicated region
        $region21: #{_forward.1} parent=11 // pred_check
          %p343 = pneg %p139
        $region22: #{_forward.1} parent=11 // pred_check_branch
          %345 = sbr.rel (%p343) target = $region24
        $region23: #{_forward.1} parent=11 // pred_region
          _
        $region24: #{_forward.1} parent=11 // pred_fallthru
          _
        // Predicated region
        $region25: #{_forward.1} parent=11 // pred_check
          %p346 = pneg %p160
        $region26: #{_forward.1} parent=11 // pred_check_branch
          %348 = sbr.rel (%p346) target = $region28
        $region27: #{_forward.1} parent=11 // pred_region
          %s350 = ssub.s32 6144, 6144
          %351 = vsyncadd [#allocation6], %s350
          %s352 = sshll.u32 [#allocation5], 4
          %s353 = int_to_ptr.vmem [resolvable:$true] %s352
          %358 = dma.hbm_to_vmem [thread:$0]  %s5, 6144, %s353, [#allocation6], 192, 192, 12
        $region28: #{_forward.1} parent=11 // pred_fallthru
          _
        // Predicated region
        $region29: #{_forward.1} parent=11 // pred_check
          %p359 = pneg %p181
        $region30: #{_forward.1} parent=11 // pred_check_branch
          %361 = sbr.rel (%p359) target = $region32
        $region31: #{_forward.1} parent=11 // pred_region
          _
        $region32: #{_forward.1} parent=11 // pred_fallthru
          _
        // Predicated region
        $region33: #{_forward.1} parent=11 // pred_check
          %p362 = pneg %p202
        $region34: #{_forward.1} parent=11 // pred_check_branch
          %364 = sbr.rel (%p362) target = $region36
        $region35: #{_forward.1} parent=11 // pred_region
          %s366 = ssub.s32 2048, 2048
          %367 = vsyncadd [#allocation6], %s366
          %s368 = sshll.u32 [#allocation7], 4
          %s369 = int_to_ptr.vmem [resolvable:$true] %s368
          %374 = dma.hbm_to_vmem [thread:$0]  %s7, 2048, %s369, [#allocation6], 64, 64, 4
        $region36: #{_forward.1} parent=11 // pred_fallthru
          _
        // Predicated region
        $region37: #{_forward.1} parent=11 // pred_check
          %p375 = pneg %p223
        $region38: #{_forward.1} parent=11 // pred_check_branch
          %377 = sbr.rel (%p375) target = $region40
        $region39: #{_forward.1} parent=11 // pred_region
          %s379 = ssub.s32 2048, 2048
          %380 = vsyncadd [#allocation9], %s379
          %s381 = sshll.u32 [#allocation8], 4
          %s382 = int_to_ptr.vmem [resolvable:$true] %s381
          %387 = dma.hbm_to_vmem [thread:$0]  %s8, 2048, %s382, [#allocation9], 64, 64, 4
        $region40: #{_forward.1} parent=11 // pred_fallthru
          _
        // Predicated region
        $region41: #{_forward.1} parent=11 // pred_check
          %p388 = pneg %p244
        $region42: #{_forward.1} parent=11 // pred_check_branch
          %390 = sbr.rel (%p388) target = $region44
        $region43: #{_forward.1} parent=11 // pred_region
          _
        $region44: #{_forward.1} parent=11 // pred_fallthru
          _
        // Predicated region
        $region45: #{_forward.1} parent=11 // pred_check
          %p391 = pneg %p265
        $region46: #{_forward.1} parent=11 // pred_check_branch
          %393 = sbr.rel (%p391) target = $region48
        $region47: #{_forward.1} parent=11 // pred_region
          %s395 = ssub.s32 2048, 2048
          %396 = vsyncadd [#allocation9], %s395
          %s397 = sshll.u32 [#allocation10], 4
          %s398 = int_to_ptr.vmem [resolvable:$true] %s397
          %403 = dma.hbm_to_vmem [thread:$0]  %s10, 2048, %s398, [#allocation9], 64, 64, 4
        $region48: #{_forward.1} parent=11 // pred_fallthru
          _
        // Predicated region
        $region49: #{_forward.1} parent=11 // pred_check
          %p404 = pneg %p286
        $region50: #{_forward.1} parent=11 // pred_check_branch
          %406 = sbr.rel (%p404) target = $region52
        $region51: #{_forward.1} parent=11 // pred_region
          _
        $region52: #{_forward.1} parent=11 // pred_fallthru
          _
      $region12: #{_forward.1} parent=5 // pred_fallthru
        _
      %p407 = scmp.lt.s32.totalorder %s24, 2
      // Predicated region
      $region53: #{_forward.1} parent=5 // pred_check
        %p408 = pneg %p407
      $region54: #{_forward.1} parent=5 // pred_check_branch
        %410 = sbr.rel (%p408) target = $region56
      $region55: #{_forward.1} parent=5 // pred_region
        // Predicated region
        $region57: #{_forward.1} parent=55 // pred_check
          %p411 = pneg %p44
        $region58: #{_forward.1} parent=55 // pred_check_branch
          %413 = sbr.rel (%p411) target = $region60
        $region59: #{_forward.1} parent=55 // pred_region
          %p414 = scmp.lt.s32.totalorder %s24, 1
          %s415 = scalar_select %p414, %s24, 1
          %s416 = smul.addr %s415, 8
          %s417 = scalar_lea.vmem %s0, %s416
        $region60: #{_forward.1} parent=55 // pred_fallthru
          _
        // Predicated region
        $region61: #{_forward.1} parent=55 // pred_check
          %p418 = pneg %p70
        $region62: #{_forward.1} parent=55 // pred_check_branch
          %420 = sbr.rel (%p418) target = $region64
        $region63: #{_forward.1} parent=55 // pred_region
          %p421 = scmp.lt.s32.totalorder %s24, 1
          %s422 = scalar_select %p421, %s24, 1
          %s423 = scalar_lea.vmem %s1, %s422
        $region64: #{_forward.1} parent=55 // pred_fallthru
          _
      $region56: #{_forward.1} parent=5 // pred_fallthru
        _
      %p424 = scmp.le.s32.totalorder 1, %s24
      %p425 = scmp.lt.s32.totalorder %s24, 3
      %p426 = pnand %p424, %p425
      %p427 = pneg %p426
      // Predicated region
      $region65: #{_forward.1} parent=5 // pred_check
        _
      $region66: #{_forward.1} parent=5 // pred_check_branch
        %429 = sbr.rel (%p426) target = $region68
      $region67: #{_forward.1} parent=5 // pred_region
        %s430 = ssub.s32 %s24, 1
        // Predicated region
        $region69: #{_forward.1} parent=67 // pred_check
          %p431 = pneg %p97
        $region70: #{_forward.1} parent=67 // pred_check_branch
          %433 = sbr.rel (%p431) target = $region72
        $region71: #{_forward.1} parent=67 // pred_region
          %434 = dma.done [#allocation3], 2048
        $region72: #{_forward.1} parent=67 // pred_fallthru
          _
        // Predicated region
        $region73: #{_forward.1} parent=67 // pred_check
          %p435 = pneg %p160
        $region74: #{_forward.1} parent=67 // pred_check_branch
          %437 = sbr.rel (%p435) target = $region76
        $region75: #{_forward.1} parent=67 // pred_region
          %438 = dma.done [#allocation6], 6144
        $region76: #{_forward.1} parent=67 // pred_fallthru
          _
        // Predicated region
        $region77: #{_forward.1} parent=67 // pred_check
          %p439 = pneg %p202
        $region78: #{_forward.1} parent=67 // pred_check_branch
          %441 = sbr.rel (%p439) target = $region80
        $region79: #{_forward.1} parent=67 // pred_region
          %442 = dma.done [#allocation6], 2048
        $region80: #{_forward.1} parent=67 // pred_fallthru
          _
        // Predicated region
        $region81: #{_forward.1} parent=67 // pred_check
          %p443 = pneg %p223
        $region82: #{_forward.1} parent=67 // pred_check_branch
          %445 = sbr.rel (%p443) target = $region84
        $region83: #{_forward.1} parent=67 // pred_region
          %446 = dma.done [#allocation9], 2048
        $region84: #{_forward.1} parent=67 // pred_fallthru
          _
        // Predicated region
        $region85: #{_forward.1} parent=67 // pred_check
          %p447 = pneg %p265
        $region86: #{_forward.1} parent=67 // pred_check_branch
          %449 = sbr.rel (%p447) target = $region88
        $region87: #{_forward.1} parent=67 // pred_region
          %450 = dma.done [#allocation9], 2048
        $region88: #{_forward.1} parent=67 // pred_fallthru
          _
        %p451 = scmp.lt.s32.totalorder %s29, 1
        %s452 = scalar_select %p451, %s29, 1
        %s453 = smul.addr %s452, 8
        %s454 = scalar_lea.vmem %s0, %s453
        %p455 = pneg %p50
        %p456 = pneg %p47
        %p457 = scmp.lt.s32.totalorder %s29, 1
        %s458 = scalar_select %p457, %s29, 1
        %s459 = scalar_lea.vmem %s1, %s458
        %p460 = pneg %p76
        %p461 = pneg %p73
        %p462 = pneg %p97
        %p463 = pneg %p94
        %p464 = pneg %p118
        %p465 = pneg %p115
        %p466 = pneg %p139
        %p467 = pneg %p136
        %p468 = pneg %p160
        %p469 = pneg %p157
        %p470 = pneg %p181
        %p471 = pneg %p178
        %p472 = pneg %p202
        %p473 = pneg %p199
        %p474 = pneg %p223
        %p475 = pneg %p220
        %p476 = pneg %p244
        %p477 = pneg %p241
        %p478 = pneg %p265
        %p479 = pneg %p262
        %p480 = pneg %p286
        %p481 = pneg %p283
        %p482 = pneg %p312
        %p483 = pneg %p309
        %s484 = sand.u32 %s299, 1
        %s485 = scalar_lea.sflag [#allocation4], %s484
        %s486 = sand.u32 %s299, 1
        %s487 = smul.addr %s486, 8
        %s488 = scalar_lea.vmem [#allocation11], %s487
        %p489 = scmp.lt.s32.totalorder %s29, 1
        %s490 = scalar_select %p489, %s29, 1
        %s491 = smul.addr %s490, 8
        %s492 = scalar_lea.vmem %s0, %s491
        %p493 = scmp.lt.s32.totalorder %s29, 1
        %s494 = scalar_select %p493, %s29, 1
        %s495 = scalar_lea.vmem %s1, %s494
        %v497 = vlaneseq
        %v498 = vand.u32 %v497, 127
        %vm499 = vcmp.lt.s32.totalorder %v498, 32
        %v500 = vsel %vm499, 1, 0
        %v501 = vcvt.s32.f32 %v500
        %v502 = vld [vmem:[%s492] sm:$0xff]
        %503 = vset.pattern.permute.xlu0 0
        %504 = vperm.xlu0 %503, %v502
        %v505 = vpop.permute.xlu0 %504
        %vm506 = vcmp.eq.s32.totalorder %v498, %v505
        %v507 = vsel %vm506, 1, 0
        %v508 = vcvt.s32.f32 %v507
        %v509 = vld [vmem:[#allocation2] sm:$0xff]
        %v510 = vld [vmem:[#allocation2 + $0x8] sm:$0xff]
        %v511 = vld [vmem:[#allocation2 + $0x10] sm:$0xff]
        %v512 = vld [vmem:[#allocation2 + $0x18] sm:$0xff]
        %v513 = vld [vmem:[#allocation2 + $0x20] sm:$0xff]
        %v514 = vld [vmem:[#allocation2 + $0x28] sm:$0xff]
        %v515 = vld [vmem:[#allocation2 + $0x30] sm:$0xff]
        %v516 = vld [vmem:[#allocation2 + $0x38] sm:$0xff]
        %v517 = vld [vmem:[#allocation2 + $0x40] sm:$0xff]
        %v518 = vld [vmem:[#allocation2 + $0x48] sm:$0xff]
        %v519 = vld [vmem:[#allocation2 + $0x50] sm:$0xff]
        %v520 = vld [vmem:[#allocation2 + $0x58] sm:$0xff]
        %v521 = vld [vmem:[#allocation2 + $0x60] sm:$0xff]
        %v522 = vld [vmem:[#allocation2 + $0x68] sm:$0xff]
        %v523 = vld [vmem:[#allocation2 + $0x70] sm:$0xff]
        %v524 = vld [vmem:[#allocation2 + $0x78] sm:$0xff]
        %v525 = vld [vmem:[%s3] sm:$0xff]
        %526 = vmatprep.subr.mxu0 0.0
        %527 = vmatpush1.msra.mxu0 %v509
        %528 = vmatprep.subr.mxu0 0.0
        %529 = vmatpush1.msra.mxu0 %v510
        %530 = vmatprep.subr.mxu0 0.0
        %531 = vmatpush1.msra.mxu0 %v511
        %532 = vmatprep.subr.mxu0 0.0
        %533 = vmatpush1.msra.mxu0 %v512
        %534 = vmatprep.subr.mxu0 0.0
        %535 = vmatpush1.msra.mxu0 %v513
        %536 = vmatprep.subr.mxu0 0.0
        %537 = vmatpush1.msra.mxu0 %v514
        %538 = vmatprep.subr.mxu0 0.0
        %539 = vmatpush1.msra.mxu0 %v515
        %540 = vmatprep.subr.mxu0 0.0
        %541 = vmatpush1.msra.mxu0 %v516
        %542 = vmatprep.subr.mxu0 0.0
        %543 = vmatpush1.msra.mxu0 %v517
        %544 = vmatprep.subr.mxu0 0.0
        %545 = vmatpush1.msra.mxu0 %v518
        %546 = vmatprep.subr.mxu0 0.0
        %547 = vmatpush1.msra.mxu0 %v519
        %548 = vmatprep.subr.mxu0 0.0
        %549 = vmatpush1.msra.mxu0 %v520
        %550 = vmatprep.subr.mxu0 0.0
        %551 = vmatpush1.msra.mxu0 %v521
        %552 = vmatprep.subr.mxu0 0.0
        %553 = vmatpush1.msra.mxu0 %v522
        %554 = vmatprep.subr.mxu0 0.0
        %555 = vmatpush1.msra.mxu0 %v523
        %556 = vmatprep.subr.mxu0 0.0
        %557 = vmatpush1.msra.mxu0 %v524
        %558 = vmatprep.subr.mxu0 0.0
        %559 = vmatpush1.msra.mxu0 0.0
        %560 = vmatprep.subr.mxu0 0.0
        %561 = vmatpush1.msra.mxu0 0.0
        %562 = vmatprep.subr.mxu0 0.0
        %563 = vmatpush1.msra.mxu0 0.0
        %564 = vmatprep.subr.mxu0 0.0
        %565 = vmatpush1.msra.mxu0 0.0
        %566 = vmatprep.subr.mxu0 0.0
        %567 = vmatpush1.msra.mxu0 0.0
        %568 = vmatprep.subr.mxu0 0.0
        %569 = vmatpush1.msra.mxu0 0.0
        %570 = vmatprep.subr.mxu0 0.0
        %571 = vmatpush1.msra.mxu0 0.0
        %572 = vmatprep.subr.mxu0 0.0
        %573 = vmatpush1.msra.mxu0 0.0
        %574 = vmatprep.subr.mxu0 0.0
        %575 = vmatpush1.msra.mxu0 0.0
        %576 = vmatprep.subr.mxu0 0.0
        %577 = vmatpush1.msra.mxu0 0.0
        %578 = vmatprep.subr.mxu0 0.0
        %579 = vmatpush1.msra.mxu0 0.0
        %580 = vmatprep.subr.mxu0 0.0
        %581 = vmatpush1.msra.mxu0 0.0
        %582 = vmatprep.subr.mxu0 0.0
        %583 = vmatpush1.msra.mxu0 0.0
        %584 = vmatprep.subr.mxu0 0.0
        %585 = vmatpush1.msra.mxu0 0.0
        %586 = vmatprep.subr.mxu0 0.0
        %587 = vmatpush1.msra.mxu0 0.0
        %588 = vmatprep.subr.mxu0 0.0
        %589 = vmatpush1.msra.mxu0 0.0
        %590 = vmatprep.mubr.f32.mxu0 0.0
        %591 = vmatmul.mubr.f32.gmra.mrb[0].mxu0 %v508
        %v592 = vpop.f32.mrb[0].mxu0
        %v593 = vadd.f32 %v525, %v592
        %v594 = vpop.f32.mrb[0].mxu0
        %595 = vdwg.mxu0
        %v596 = vld [vmem:[%s4] sm:$0x3]
        %v597 = vmul.f32 %v593, %v501
        %598 = vadd.xlane.f32.xlu0 %v597
        %v599 = vpop.xlane.xlu0 %598
        %v600 = vmul.f32 %v599, 0.03125
        %v601 = vsub.f32 %v597, %v600
        %v602 = vmul.f32 %v601, %v501
        %v603 = vmul.f32 %v602, %v602
        %604 = vadd.xlane.f32.xlu0 %v603
        %v605 = vpop.xlane.xlu0 %604
        %v606 = vmul.f32 %v605, 0.03125
        %v607 = vadd.f32 %v606, 1e-12
        %v608 = vrsqrt.pop %v607
        %v609 = vmul.f32 %v602, %v608
        %v610 = vlaneseq
        %v611 = vshrl.u32 %v610, 7
        %v612 = vsub.s32 0, %v611
        %v613 = vrot.slane %v596, %v612
        %v614 = vmul.f32 %v609, %v613
        %v615 = vlaneseq
        %v616 = vshrl.u32 %v615, 7
        %v617 = vsub.s32 1, %v616
        %v618 = vrot.slane %v596, %v617
        %v619 = vadd.f32 %v614, %v618
        %v620 = vld [vmem:[%s495] sm:$0x1]
        %v621 = vsub.f32 1.0, %v620
        %v622 = vmul.f32 %v621, -1e+09
        %v624 = vlaneseq
        %v625 = vshrl.u32 %v624, 7
        %v626 = vsub.s32 0, %v625
        %v627 = vrot.slane %v622, %v626
        %v629 = vld [vmem:[%s11] sm:$0x3f]
        %v630 = vpack.c.bf16 %v619, %v619
        %v631 = vld [vmem:[#allocation5] sm:$0xff]
        %v632 = vld [vmem:[#allocation5 + $0x8] sm:$0xf]
        %v633 = vld [vmem:[#allocation5 + $0xc] sm:$0xff]
        %v634 = vld [vmem:[#allocation5 + $0x14] sm:$0xf]
        %v635 = vld [vmem:[#allocation5 + $0x18] sm:$0xff]
        %v636 = vld [vmem:[#allocation5 + $0x20] sm:$0xf]
        %v637 = vld [vmem:[#allocation5 + $0x24] sm:$0xff]
        %v638 = vld [vmem:[#allocation5 + $0x2c] sm:$0xf]
        %v639 = vld [vmem:[#allocation5 + $0x30] sm:$0xff]
        %v640 = vld [vmem:[#allocation5 + $0x38] sm:$0xf]
        %v641 = vld [vmem:[#allocation5 + $0x3c] sm:$0xff]
        %v642 = vld [vmem:[#allocation5 + $0x44] sm:$0xf]
        %v643 = vld [vmem:[#allocation5 + $0x48] sm:$0xff]
        %v644 = vld [vmem:[#allocation5 + $0x50] sm:$0xf]
        %v645 = vld [vmem:[#allocation5 + $0x54] sm:$0xff]
        %v646 = vld [vmem:[#allocation5 + $0x5c] sm:$0xf]
        %v647 = vld [vmem:[#allocation5 + $0x60] sm:$0xff]
        %v648 = vld [vmem:[#allocation5 + $0x68] sm:$0xf]
        %v649 = vld [vmem:[#allocation5 + $0x6c] sm:$0xff]
        %v650 = vld [vmem:[#allocation5 + $0x74] sm:$0xf]
        %v651 = vld [vmem:[#allocation5 + $0x78] sm:$0xff]
        %v652 = vld [vmem:[#allocation5 + $0x80] sm:$0xf]
        %v653 = vld [vmem:[#allocation5 + $0x84] sm:$0xff]
        %v654 = vld [vmem:[#allocation5 + $0x8c] sm:$0xf]
        %v655 = vld [vmem:[#allocation5 + $0x90] sm:$0xff]
        %v656 = vld [vmem:[#allocation5 + $0x98] sm:$0xf]
        %v657 = vld [vmem:[#allocation5 + $0x9c] sm:$0xff]
        %v658 = vld [vmem:[#allocation5 + $0xa4] sm:$0xf]
        %v659 = vld [vmem:[#allocation5 + $0xa8] sm:$0xff]
        %v660 = vld [vmem:[#allocation5 + $0xb0] sm:$0xf]
        %v661 = vld [vmem:[#allocation5 + $0xb4] sm:$0xff]
        %v662 = vld [vmem:[#allocation5 + $0xbc] sm:$0xf]
        %v663 = vld [vmem:[%s6] sm:$0x7]
        %v665 = vlaneseq
        %v666 = vshrl.u32 %v665, 7
        %v667 = vsub.s32 0, %v666
        %v668 = vrot.slane %v663, %v667
        %v669 = vlaneseq
        %v670 = vshrl.u32 %v669, 7
        %v671 = vsub.s32 1, %v670
        %v672 = vrot.slane %v663, %v671
        %v673 = vlaneseq
        %v674 = vshrl.u32 %v673, 7
        %v675 = vsub.s32 2, %v674
        %v676 = vrot.slane %v663, %v675
        %v712 = vunpack.c.l.b16 %v631
        %v713 = vunpack.c.h.b16 %v631
        %v714 = vunpack.c.l.b16 %v632
        %v715 = vunpack.c.l.b16 %v633
        %v716 = vunpack.c.h.b16 %v633
        %v717 = vunpack.c.l.b16 %v634
        %v718 = vunpack.c.l.b16 %v635
        %v719 = vunpack.c.h.b16 %v635
        %v720 = vunpack.c.l.b16 %v636
        %v721 = vunpack.c.l.b16 %v637
        %v722 = vunpack.c.h.b16 %v637
        %v723 = vunpack.c.l.b16 %v638
        %v724 = vunpack.c.l.b16 %v639
        %v725 = vunpack.c.h.b16 %v639
        %v726 = vunpack.c.l.b16 %v640
        %v727 = vunpack.c.l.b16 %v641
        %v728 = vunpack.c.h.b16 %v641
        %v729 = vunpack.c.l.b16 %v642
        %v730 = vunpack.c.l.b16 %v643
        %v731 = vunpack.c.h.b16 %v643
        %v732 = vunpack.c.l.b16 %v644
        %v733 = vunpack.c.l.b16 %v645
        %v734 = vunpack.c.h.b16 %v645
        %v735 = vunpack.c.l.b16 %v646
        %v736 = vunpack.c.l.b16 %v647
        %v737 = vunpack.c.h.b16 %v647
        %v738 = vunpack.c.l.b16 %v648
        %v739 = vunpack.c.l.b16 %v649
        %v740 = vunpack.c.h.b16 %v649
        %v741 = vunpack.c.l.b16 %v650
        %v742 = vunpack.c.l.b16 %v651
        %v743 = vunpack.c.h.b16 %v651
        %v744 = vunpack.c.l.b16 %v652
        %v745 = vunpack.c.l.b16 %v653
        %v746 = vunpack.c.h.b16 %v653
        %v747 = vunpack.c.l.b16 %v654
        %v748 = vunpack.c.l.b16 %v655
        %v749 = vunpack.c.h.b16 %v655
        %v750 = vunpack.c.l.b16 %v656
        %v751 = vunpack.c.l.b16 %v657
        %v752 = vunpack.c.h.b16 %v657
        %v753 = vunpack.c.l.b16 %v658
        %v754 = vunpack.c.l.b16 %v659
        %v755 = vunpack.c.h.b16 %v659
        %v756 = vunpack.c.l.b16 %v660
        %v757 = vunpack.c.l.b16 %v661
        %v758 = vunpack.c.h.b16 %v661
        %v759 = vunpack.c.l.b16 %v662
        %v760 = vpack.c.b16 %v715, %v712
        %v761 = vpack.c.b16 %v716, %v713
        %v762 = vpack.c.b16 %v717, %v714
        %v763 = vpack.c.b16 %v721, %v718
        %v764 = vpack.c.b16 %v722, %v719
        %v765 = vpack.c.b16 %v723, %v720
        %v766 = vpack.c.b16 %v727, %v724
        %v767 = vpack.c.b16 %v728, %v725
        %v768 = vpack.c.b16 %v729, %v726
        %v769 = vpack.c.b16 %v733, %v730
        %v770 = vpack.c.b16 %v734, %v731
        %v771 = vpack.c.b16 %v735, %v732
        %v772 = vpack.c.b16 %v739, %v736
        %v773 = vpack.c.b16 %v740, %v737
        %v774 = vpack.c.b16 %v741, %v738
        %v775 = vpack.c.b16 %v745, %v742
        %v776 = vpack.c.b16 %v746, %v743
        %v777 = vpack.c.b16 %v747, %v744
        %v778 = vpack.c.b16 %v751, %v748
        %v779 = vpack.c.b16 %v752, %v749
        %v780 = vpack.c.b16 %v753, %v750
        %v781 = vpack.c.b16 %v757, %v754
        %v782 = vpack.c.b16 %v758, %v755
        %v783 = vpack.c.b16 %v759, %v756
        %808 = vmatprep.subr.bf16.mxu0 %v761
        %809 = vmatpush1.bf16.msra.mxu0 %v760
        %810 = vmatprep.subr.bf16.mxu0 %v764
        %811 = vmatpush1.bf16.msra.mxu0 %v763
        %812 = vmatprep.subr.bf16.mxu0 %v767
        %813 = vmatpush1.bf16.msra.mxu0 %v766
        %814 = vmatprep.subr.bf16.mxu0 %v770
        %815 = vmatpush1.bf16.msra.mxu0 %v769
        %816 = vmatprep.subr.bf16.mxu0 %v773
        %817 = vmatpush1.bf16.msra.mxu0 %v772
        %818 = vmatprep.subr.bf16.mxu0 %v776
        %819 = vmatpush1.bf16.msra.mxu0 %v775
        %820 = vmatprep.subr.bf16.mxu0 %v779
        %821 = vmatpush1.bf16.msra.mxu0 %v778
        %822 = vmatprep.subr.bf16.mxu0 %v782
        %823 = vmatpush1.bf16.msra.mxu0 %v781
        %824 = vmatprep.subr.bf16.mxu0 0
        %825 = vmatpush1.bf16.msra.mxu0 0
        %826 = vmatprep.subr.bf16.mxu0 0
        %827 = vmatpush1.bf16.msra.mxu0 0
        %828 = vmatprep.subr.bf16.mxu0 0
        %829 = vmatpush1.bf16.msra.mxu0 0
        %830 = vmatprep.subr.bf16.mxu0 0
        %831 = vmatpush1.bf16.msra.mxu0 0
        %832 = vmatprep.subr.bf16.mxu0 0
        %833 = vmatpush1.bf16.msra.mxu0 0
        %834 = vmatprep.subr.bf16.mxu0 0
        %835 = vmatpush1.bf16.msra.mxu0 0
        %836 = vmatprep.subr.bf16.mxu0 0
        %837 = vmatpush1.bf16.msra.mxu0 0
        %838 = vmatprep.subr.bf16.mxu0 0
        %839 = vmatpush1.bf16.msra.mxu0 0
        %840 = vmatprep.mubr.bf16.mxu0 0
        %841 = vmatmul.mubr.bf16.gmra.mrb[0].mxu0 %v630
        %v842 = vpop.f32.mrb[0].mxu0
        %v843 = vadd.f32 %v668, %v842
        %v844 = vpop.f32.mrb[0].mxu0
        %v845 = vadd.f32 %v672, %v844
        %v846 = vpop.f32.mrb[0].mxu0
        %v847 = vpop.f32.mrb[0].mxu0
        %848 = vdwg.mxu0
        %849 = vmatprep.subr.bf16.mxu0 0
        %850 = vmatpush1.bf16.msra.mxu0 %v762
        %851 = vmatprep.subr.bf16.mxu0 0
        %852 = vmatpush1.bf16.msra.mxu0 %v765
        %853 = vmatprep.subr.bf16.mxu0 0
        %854 = vmatpush1.bf16.msra.mxu0 %v768
        %855 = vmatprep.subr.bf16.mxu0 0
        %856 = vmatpush1.bf16.msra.mxu0 %v771
        %857 = vmatprep.subr.bf16.mxu0 0
        %858 = vmatpush1.bf16.msra.mxu0 %v774
        %859 = vmatprep.subr.bf16.mxu0 0
        %860 = vmatpush1.bf16.msra.mxu0 %v777
        %861 = vmatprep.subr.bf16.mxu0 0
        %862 = vmatpush1.bf16.msra.mxu0 %v780
        %863 = vmatprep.subr.bf16.mxu0 0
        %864 = vmatpush1.bf16.msra.mxu0 %v783
        %865 = vmatprep.subr.bf16.mxu0 0
        %866 = vmatpush1.bf16.msra.mxu0 0
        %867 = vmatprep.subr.bf16.mxu0 0
        %868 = vmatpush1.bf16.msra.mxu0 0
        %869 = vmatprep.subr.bf16.mxu0 0
        %870 = vmatpush1.bf16.msra.mxu0 0
        %871 = vmatprep.subr.bf16.mxu0 0
        %872 = vmatpush1.bf16.msra.mxu0 0
        %873 = vmatprep.subr.bf16.mxu0 0
        %874 = vmatpush1.bf16.msra.mxu0 0
        %875 = vmatprep.subr.bf16.mxu0 0
        %876 = vmatpush1.bf16.msra.mxu0 0
        %877 = vmatprep.subr.bf16.mxu0 0
        %878 = vmatpush1.bf16.msra.mxu0 0
        %879 = vmatprep.subr.bf16.mxu0 0
        %880 = vmatpush1.bf16.msra.mxu0 0
        %881 = vmatprep.mubr.bf16.mxu0 0
        %882 = vmatmul.mubr.bf16.gmra.mrb[0].mxu0 %v630
        %v883 = vpop.f32.mrb[0].mxu0
        %v884 = vadd.f32 %v676, %v883
        %v885 = vpop.f32.mrb[0].mxu0
        %v886 = vpop.f32.mrb[0].mxu0
        %v887 = vpop.f32.mrb[0].mxu0
        %888 = vdwg.mxu0
        %v889 = vpack.c.bf16 %v843, %v843
        %891 = vrot.lane.b32.xlu0 %v889, 120
        %v892 = vpop.permute.xlu0 %891
        %893 = vrot.lane.b32.xlu0 %v889, 112
        %v894 = vpop.permute.xlu0 %893
        %895 = vrot.lane.b32.xlu0 %v889, 104
        %v896 = vpop.permute.xlu0 %895
        %897 = vrot.lane.b32.xlu0 %v889, 96
        %v898 = vpop.permute.xlu0 %897
        %899 = vrot.lane.b32.xlu0 %v889, 88
        %v900 = vpop.permute.xlu0 %899
        %901 = vrot.lane.b32.xlu0 %v889, 80
        %v902 = vpop.permute.xlu0 %901
        %903 = vrot.lane.b32.xlu0 %v889, 72
        %v904 = vpop.permute.xlu0 %903
        %905 = vrot.lane.b32.xlu0 %v889, 64
        %v906 = vpop.permute.xlu0 %905
        %907 = vrot.lane.b32.xlu0 %v889, 56
        %v908 = vpop.permute.xlu0 %907
        %909 = vrot.lane.b32.xlu0 %v889, 48
        %v910 = vpop.permute.xlu0 %909
        %911 = vrot.lane.b32.xlu0 %v889, 40
        %v912 = vpop.permute.xlu0 %911
        %913 = vrot.lane.b32.xlu0 %v889, 32
        %v914 = vpop.permute.xlu0 %913
        %915 = vrot.lane.b32.xlu0 %v889, 24
        %v916 = vpop.permute.xlu0 %915
        %917 = vrot.lane.b32.xlu0 %v889, 16
        %v918 = vpop.permute.xlu0 %917
        %919 = vrot.lane.b32.xlu0 %v889, 8
        %v920 = vpop.permute.xlu0 %919
        %v921 = vpack.c.bf16 %v845, %v845
        %923 = vrot.lane.b32.xlu0 %v921, 120
        %v924 = vpop.permute.xlu0 %923
        %926 = vrot.lane.b32.xlu0 %v921, 112
        %v927 = vpop.permute.xlu0 %926
        %929 = vrot.lane.b32.xlu0 %v921, 104
        %v930 = vpop.permute.xlu0 %929
        %932 = vrot.lane.b32.xlu0 %v921, 96
        %v933 = vpop.permute.xlu0 %932
        %935 = vrot.lane.b32.xlu0 %v921, 88
        %v936 = vpop.permute.xlu0 %935
        %938 = vrot.lane.b32.xlu0 %v921, 80
        %v939 = vpop.permute.xlu0 %938
        %941 = vrot.lane.b32.xlu0 %v921, 72
        %v942 = vpop.permute.xlu0 %941
        %944 = vrot.lane.b32.xlu0 %v921, 64
        %v945 = vpop.permute.xlu0 %944
        %947 = vrot.lane.b32.xlu0 %v921, 56
        %v948 = vpop.permute.xlu0 %947
        %950 = vrot.lane.b32.xlu0 %v921, 48
        %v951 = vpop.permute.xlu0 %950
        %953 = vrot.lane.b32.xlu0 %v921, 40
        %v954 = vpop.permute.xlu0 %953
        %956 = vrot.lane.b32.xlu0 %v921, 32
        %v957 = vpop.permute.xlu0 %956
        %959 = vrot.lane.b32.xlu0 %v921, 24
        %v960 = vpop.permute.xlu0 %959
        %962 = vrot.lane.b32.xlu0 %v921, 16
        %v963 = vpop.permute.xlu0 %962
        %965 = vrot.lane.b32.xlu0 %v921, 8
        %v966 = vpop.permute.xlu0 %965
        %v968 = vpack.c.bf16 %v884, %v884
        %970 = vrot.lane.b32.xlu0 %v968, 120
        %v971 = vpop.permute.xlu0 %970
        %973 = vrot.lane.b32.xlu0 %v968, 112
        %v974 = vpop.permute.xlu0 %973
        %976 = vrot.lane.b32.xlu0 %v968, 104
        %v977 = vpop.permute.xlu0 %976
        %979 = vrot.lane.b32.xlu0 %v968, 96
        %v980 = vpop.permute.xlu0 %979
        %982 = vrot.lane.b32.xlu0 %v968, 88
        %v983 = vpop.permute.xlu0 %982
        %985 = vrot.lane.b32.xlu0 %v968, 80
        %v986 = vpop.permute.xlu0 %985
        %988 = vrot.lane.b32.xlu0 %v968, 72
        %v989 = vpop.permute.xlu0 %988
        %991 = vrot.lane.b32.xlu0 %v968, 64
        %v992 = vpop.permute.xlu0 %991
        %994 = vrot.lane.b32.xlu0 %v968, 56
        %v995 = vpop.permute.xlu0 %994
        %997 = vrot.lane.b32.xlu0 %v968, 48
        %v998 = vpop.permute.xlu0 %997
        %1000 = vrot.lane.b32.xlu0 %v968, 40
        %v1001 = vpop.permute.xlu0 %1000
        %1003 = vrot.lane.b32.xlu0 %v968, 32
        %v1004 = vpop.permute.xlu0 %1003
        %1006 = vrot.lane.b32.xlu0 %v968, 24
        %v1007 = vpop.permute.xlu0 %1006
        %1009 = vrot.lane.b32.xlu0 %v968, 16
        %v1010 = vpop.permute.xlu0 %1009
        %1012 = vrot.lane.b32.xlu0 %v968, 8
        %v1013 = vpop.permute.xlu0 %1012
        %1015 = vxpose.xlu0.c.b16.start [1/8] %v921, 128
        %1016 = vxpose.xlu0.c.b16.cont [2/8] 0, 128
        %1017 = vxpose.xlu0.c.b16.cont [3/8] 0, 128
        %1018 = vxpose.xlu0.c.b16.cont [4/8] 0, 128
        %1019 = vxpose.xlu0.c.b16.cont [5/8] 0, 128
        %1020 = vxpose.xlu0.c.b16.cont [6/8] 0, 128
        %1021 = vxpose.xlu0.c.b16.cont [7/8] 0, 128
        %1022 = vxpose.xlu0.c.b16.end [8/8] 0, 128
        %v1023 = vpop.trf.xlu0
        %v1024 = vpop.trf.xlu0
        %v1025 = vpop.trf.xlu0
        %v1026 = vpop.trf.xlu0
        %v1027 = vpop.trf.xlu0
        %v1028 = vpop.trf.xlu0
        %v1029 = vpop.trf.xlu0
        %v1030 = vpop.trf.xlu0
        %1031 = vxpose.xlu0.c.b16.start [1/8] %v924, 128
        %1032 = vxpose.xlu0.c.b16.cont [2/8] 0, 128
        %1033 = vxpose.xlu0.c.b16.cont [3/8] 0, 128
        %1034 = vxpose.xlu0.c.b16.cont [4/8] 0, 128
        %1035 = vxpose.xlu0.c.b16.cont [5/8] 0, 128
        %1036 = vxpose.xlu0.c.b16.cont [6/8] 0, 128
        %1037 = vxpose.xlu0.c.b16.cont [7/8] 0, 128
        %1038 = vxpose.xlu0.c.b16.end [8/8] 0, 128
        %v1039 = vpop.trf.xlu0
        %v1040 = vpop.trf.xlu0
        %v1041 = vpop.trf.xlu0
        %v1042 = vpop.trf.xlu0
        %v1043 = vpop.trf.xlu0
        %v1044 = vpop.trf.xlu0
        %v1045 = vpop.trf.xlu0
        %v1046 = vpop.trf.xlu0
        %1047 = vxpose.xlu0.c.b16.start [1/8] %v927, 128
        %1048 = vxpose.xlu0.c.b16.cont [2/8] 0, 128
        %1049 = vxpose.xlu0.c.b16.cont [3/8] 0, 128
        %1050 = vxpose.xlu0.c.b16.cont [4/8] 0, 128
        %1051 = vxpose.xlu0.c.b16.cont [5/8] 0, 128
        %1052 = vxpose.xlu0.c.b16.cont [6/8] 0, 128
        %1053 = vxpose.xlu0.c.b16.cont [7/8] 0, 128
        %1054 = vxpose.xlu0.c.b16.end [8/8] 0, 128
        %v1055 = vpop.trf.xlu0
        %v1056 = vpop.trf.xlu0
        %v1057 = vpop.trf.xlu0
        %v1058 = vpop.trf.xlu0
        %v1059 = vpop.trf.xlu0
        %v1060 = vpop.trf.xlu0
        %v1061 = vpop.trf.xlu0
        %v1062 = vpop.trf.xlu0
        %1063 = vxpose.xlu0.c.b16.start [1/8] %v930, 128
        %1064 = vxpose.xlu0.c.b16.cont [2/8] 0, 128
        %1065 = vxpose.xlu0.c.b16.cont [3/8] 0, 128
        %1066 = vxpose.xlu0.c.b16.cont [4/8] 0, 128
        %1067 = vxpose.xlu0.c.b16.cont [5/8] 0, 128
        %1068 = vxpose.xlu0.c.b16.cont [6/8] 0, 128
        %1069 = vxpose.xlu0.c.b16.cont [7/8] 0, 128
        %1070 = vxpose.xlu0.c.b16.end [8/8] 0, 128
        %v1071 = vpop.trf.xlu0
        %v1072 = vpop.trf.xlu0
        %v1073 = vpop.trf.xlu0
        %v1074 = vpop.trf.xlu0
        %v1075 = vpop.trf.xlu0
        %v1076 = vpop.trf.xlu0
        %v1077 = vpop.trf.xlu0
        %v1078 = vpop.trf.xlu0
        %1079 = vxpose.xlu0.c.b16.start [1/8] %v933, 128
        %1080 = vxpose.xlu0.c.b16.cont [2/8] 0, 128
        %1081 = vxpose.xlu0.c.b16.cont [3/8] 0, 128
        %1082 = vxpose.xlu0.c.b16.cont [4/8] 0, 128
        %1083 = vxpose.xlu0.c.b16.cont [5/8] 0, 128
        %1084 = vxpose.xlu0.c.b16.cont [6/8] 0, 128
        %1085 = vxpose.xlu0.c.b16.cont [7/8] 0, 128
        %1086 = vxpose.xlu0.c.b16.end [8/8] 0, 128
        %v1087 = vpop.trf.xlu0
        %v1088 = vpop.trf.xlu0
        %v1089 = vpop.trf.xlu0
        %v1090 = vpop.trf.xlu0
        %v1091 = vpop.trf.xlu0
        %v1092 = vpop.trf.xlu0
        %v1093 = vpop.trf.xlu0
        %v1094 = vpop.trf.xlu0
        %1095 = vxpose.xlu0.c.b16.start [1/8] %v936, 128
        %1096 = vxpose.xlu0.c.b16.cont [2/8] 0, 128
        %1097 = vxpose.xlu0.c.b16.cont [3/8] 0, 128
        %1098 = vxpose.xlu0.c.b16.cont [4/8] 0, 128
        %1099 = vxpose.xlu0.c.b16.cont [5/8] 0, 128
        %1100 = vxpose.xlu0.c.b16.cont [6/8] 0, 128
        %1101 = vxpose.xlu0.c.b16.cont [7/8] 0, 128
        %1102 = vxpose.xlu0.c.b16.end [8/8] 0, 128
        %v1103 = vpop.trf.xlu0
        %v1104 = vpop.trf.xlu0
        %v1105 = vpop.trf.xlu0
        %v1106 = vpop.trf.xlu0
        %v1107 = vpop.trf.xlu0
        %v1108 = vpop.trf.xlu0
        %v1109 = vpop.trf.xlu0
        %v1110 = vpop.trf.xlu0
        %1111 = vxpose.xlu0.c.b16.start [1/8] %v939, 128
        %1112 = vxpose.xlu0.c.b16.cont [2/8] 0, 128
        %1113 = vxpose.xlu0.c.b16.cont [3/8] 0, 128
        %1114 = vxpose.xlu0.c.b16.cont [4/8] 0, 128
        %1115 = vxpose.xlu0.c.b16.cont [5/8] 0, 128
        %1116 = vxpose.xlu0.c.b16.cont [6/8] 0, 128
        %1117 = vxpose.xlu0.c.b16.cont [7/8] 0, 128
        %1118 = vxpose.xlu0.c.b16.end [8/8] 0, 128
        %v1119 = vpop.trf.xlu0
        %v1120 = vpop.trf.xlu0
        %v1121 = vpop.trf.xlu0
        %v1122 = vpop.trf.xlu0
        %v1123 = vpop.trf.xlu0
        %v1124 = vpop.trf.xlu0
        %v1125 = vpop.trf.xlu0
        %v1126 = vpop.trf.xlu0
        %1127 = vxpose.xlu0.c.b16.start [1/8] %v942, 128
        %1128 = vxpose.xlu0.c.b16.cont [2/8] 0, 128
        %1129 = vxpose.xlu0.c.b16.cont [3/8] 0, 128
        %1130 = vxpose.xlu0.c.b16.cont [4/8] 0, 128
        %1131 = vxpose.xlu0.c.b16.cont [5/8] 0, 128
        %1132 = vxpose.xlu0.c.b16.cont [6/8] 0, 128
        %1133 = vxpose.xlu0.c.b16.cont [7/8] 0, 128
        %1134 = vxpose.xlu0.c.b16.end [8/8] 0, 128
        %v1135 = vpop.trf.xlu0
        %v1136 = vpop.trf.xlu0
        %v1137 = vpop.trf.xlu0
        %v1138 = vpop.trf.xlu0
        %v1139 = vpop.trf.xlu0
        %v1140 = vpop.trf.xlu0
        %v1141 = vpop.trf.xlu0
        %v1142 = vpop.trf.xlu0
        %1143 = vxpose.xlu0.c.b16.start [1/8] %v945, 128
        %1144 = vxpose.xlu0.c.b16.cont [2/8] 0, 128
        %1145 = vxpose.xlu0.c.b16.cont [3/8] 0, 128
        %1146 = vxpose.xlu0.c.b16.cont [4/8] 0, 128
        %1147 = vxpose.xlu0.c.b16.cont [5/8] 0, 128
        %1148 = vxpose.xlu0.c.b16.cont [6/8] 0, 128
        %1149 = vxpose.xlu0.c.b16.cont [7/8] 0, 128
        %1150 = vxpose.xlu0.c.b16.end [8/8] 0, 128
        %v1151 = vpop.trf.xlu0
        %v1152 = vpop.trf.xlu0
        %v1153 = vpop.trf.xlu0
        %v1154 = vpop.trf.xlu0
        %v1155 = vpop.trf.xlu0
        %v1156 = vpop.trf.xlu0
        %v1157 = vpop.trf.xlu0
        %v1158 = vpop.trf.xlu0
        %1159 = vxpose.xlu0.c.b16.start [1/8] %v948, 128
        %1160 = vxpose.xlu0.c.b16.cont [2/8] 0, 128
        %1161 = vxpose.xlu0.c.b16.cont [3/8] 0, 128
        %1162 = vxpose.xlu0.c.b16.cont [4/8] 0, 128
        %1163 = vxpose.xlu0.c.b16.cont [5/8] 0, 128
        %1164 = vxpose.xlu0.c.b16.cont [6/8] 0, 128
        %1165 = vxpose.xlu0.c.b16.cont [7/8] 0, 128
        %1166 = vxpose.xlu0.c.b16.end [8/8] 0, 128
        %v1167 = vpop.trf.xlu0
        %v1168 = vpop.trf.xlu0
        %v1169 = vpop.trf.xlu0
        %v1170 = vpop.trf.xlu0
        %v1171 = vpop.trf.xlu0
        %v1172 = vpop.trf.xlu0
        %v1173 = vpop.trf.xlu0
        %v1174 = vpop.trf.xlu0
        %1175 = vxpose.xlu0.c.b16.start [1/8] %v951, 128
        %1176 = vxpose.xlu0.c.b16.cont [2/8] 0, 128
        %1177 = vxpose.xlu0.c.b16.cont [3/8] 0, 128
        %1178 = vxpose.xlu0.c.b16.cont [4/8] 0, 128
        %1179 = vxpose.xlu0.c.b16.cont [5/8] 0, 128
        %1180 = vxpose.xlu0.c.b16.cont [6/8] 0, 128
        %1181 = vxpose.xlu0.c.b16.cont [7/8] 0, 128
        %1182 = vxpose.xlu0.c.b16.end [8/8] 0, 128
        %v1183 = vpop.trf.xlu0
        %v1184 = vpop.trf.xlu0
        %v1185 = vpop.trf.xlu0
        %v1186 = vpop.trf.xlu0
        %v1187 = vpop.trf.xlu0
        %v1188 = vpop.trf.xlu0
        %v1189 = vpop.trf.xlu0
        %v1190 = vpop.trf.xlu0
        %1191 = vxpose.xlu0.c.b16.start [1/8] %v954, 128
        %1192 = vxpose.xlu0.c.b16.cont [2/8] 0, 128
        %1193 = vxpose.xlu0.c.b16.cont [3/8] 0, 128
        %1194 = vxpose.xlu0.c.b16.cont [4/8] 0, 128
        %1195 = vxpose.xlu0.c.b16.cont [5/8] 0, 128
        %1196 = vxpose.xlu0.c.b16.cont [6/8] 0, 128
        %1197 = vxpose.xlu0.c.b16.cont [7/8] 0, 128
        %1198 = vxpose.xlu0.c.b16.end [8/8] 0, 128
        %v1199 = vpop.trf.xlu0
        %v1200 = vpop.trf.xlu0
        %v1201 = vpop.trf.xlu0
        %v1202 = vpop.trf.xlu0
        %v1203 = vpop.trf.xlu0
        %v1204 = vpop.trf.xlu0
        %v1205 = vpop.trf.xlu0
        %v1206 = vpop.trf.xlu0
        %1207 = vxpose.xlu0.c.b16.start [1/8] %v957, 128
        %1208 = vxpose.xlu0.c.b16.cont [2/8] 0, 128
        %1209 = vxpose.xlu0.c.b16.cont [3/8] 0, 128
        %1210 = vxpose.xlu0.c.b16.cont [4/8] 0, 128
        %1211 = vxpose.xlu0.c.b16.cont [5/8] 0, 128
        %1212 = vxpose.xlu0.c.b16.cont [6/8] 0, 128
        %1213 = vxpose.xlu0.c.b16.cont [7/8] 0, 128
        %1214 = vxpose.xlu0.c.b16.end [8/8] 0, 128
        %v1215 = vpop.trf.xlu0
        %v1216 = vpop.trf.xlu0
        %v1217 = vpop.trf.xlu0
        %v1218 = vpop.trf.xlu0
        %v1219 = vpop.trf.xlu0
        %v1220 = vpop.trf.xlu0
        %v1221 = vpop.trf.xlu0
        %v1222 = vpop.trf.xlu0
        %1223 = vxpose.xlu0.c.b16.start [1/8] %v960, 128
        %1224 = vxpose.xlu0.c.b16.cont [2/8] 0, 128
        %1225 = vxpose.xlu0.c.b16.cont [3/8] 0, 128
        %1226 = vxpose.xlu0.c.b16.cont [4/8] 0, 128
        %1227 = vxpose.xlu0.c.b16.cont [5/8] 0, 128
        %1228 = vxpose.xlu0.c.b16.cont [6/8] 0, 128
        %1229 = vxpose.xlu0.c.b16.cont [7/8] 0, 128
        %1230 = vxpose.xlu0.c.b16.end [8/8] 0, 128
        %v1231 = vpop.trf.xlu0
        %v1232 = vpop.trf.xlu0
        %v1233 = vpop.trf.xlu0
        %v1234 = vpop.trf.xlu0
        %v1235 = vpop.trf.xlu0
        %v1236 = vpop.trf.xlu0
        %v1237 = vpop.trf.xlu0
        %v1238 = vpop.trf.xlu0
        %1239 = vxpose.xlu0.c.b16.start [1/8] %v963, 128
        %1240 = vxpose.xlu0.c.b16.cont [2/8] 0, 128
        %1241 = vxpose.xlu0.c.b16.cont [3/8] 0, 128
        %1242 = vxpose.xlu0.c.b16.cont [4/8] 0, 128
        %1243 = vxpose.xlu0.c.b16.cont [5/8] 0, 128
        %1244 = vxpose.xlu0.c.b16.cont [6/8] 0, 128
        %1245 = vxpose.xlu0.c.b16.cont [7/8] 0, 128
        %1246 = vxpose.xlu0.c.b16.end [8/8] 0, 128
        %v1247 = vpop.trf.xlu0
        %v1248 = vpop.trf.xlu0
        %v1249 = vpop.trf.xlu0
        %v1250 = vpop.trf.xlu0
        %v1251 = vpop.trf.xlu0
        %v1252 = vpop.trf.xlu0
        %v1253 = vpop.trf.xlu0
        %v1254 = vpop.trf.xlu0
        %1255 = vxpose.xlu0.c.b16.start [1/8] %v966, 128
        %1256 = vxpose.xlu0.c.b16.cont [2/8] 0, 128
        %1257 = vxpose.xlu0.c.b16.cont [3/8] 0, 128
        %1258 = vxpose.xlu0.c.b16.cont [4/8] 0, 128
        %1259 = vxpose.xlu0.c.b16.cont [5/8] 0, 128
        %1260 = vxpose.xlu0.c.b16.cont [6/8] 0, 128
        %1261 = vxpose.xlu0.c.b16.cont [7/8] 0, 128
        %1262 = vxpose.xlu0.c.b16.end [8/8] 0, 128
        %v1263 = vpop.trf.xlu0
        %v1264 = vpop.trf.xlu0
        %v1265 = vpop.trf.xlu0
        %v1266 = vpop.trf.xlu0
        %v1267 = vpop.trf.xlu0
        %v1268 = vpop.trf.xlu0
        %v1269 = vpop.trf.xlu0
        %v1270 = vpop.trf.xlu0
        %vm1271 = vcmask 64512
        %v1273 = vsel %vm1271, %v889, 0
        %vm1275 = vcmask 1043456
        %v1277 = vsel %vm1275, %v1023, 0
        %1279 = vmatprep.subr.bf16.mxu0 0
        %1280 = vmatpush1.bf16.msra.mxu0 %v1277
        %1281 = vmatprep.subr.bf16.mxu0 0
        %1282 = vmatpush1.bf16.msra.mxu0 0
        %1283 = vmatprep.subr.bf16.mxu0 0
        %1284 = vmatpush1.bf16.msra.mxu0 0
        %1285 = vmatprep.subr.bf16.mxu0 0
        %1286 = vmatpush1.bf16.msra.mxu0 0
        %1287 = vmatprep.subr.bf16.mxu0 0
        %1288 = vmatpush1.bf16.msra.mxu0 0
        %1289 = vmatprep.subr.bf16.mxu0 0
        %1290 = vmatpush1.bf16.msra.mxu0 0
        %1291 = vmatprep.subr.bf16.mxu0 0
        %1292 = vmatpush1.bf16.msra.mxu0 0
        %1293 = vmatprep.subr.bf16.mxu0 0
        %1294 = vmatpush1.bf16.msra.mxu0 0
        %1295 = vmatprep.subr.bf16.mxu0 0
        %1296 = vmatpush1.bf16.msra.mxu0 0
        %1297 = vmatprep.subr.bf16.mxu0 0
        %1298 = vmatpush1.bf16.msra.mxu0 0
        %1299 = vmatprep.subr.bf16.mxu0 0
        %1300 = vmatpush1.bf16.msra.mxu0 0
        %1301 = vmatprep.subr.bf16.mxu0 0
        %1302 = vmatpush1.bf16.msra.mxu0 0
        %1303 = vmatprep.subr.bf16.mxu0 0
        %1304 = vmatpush1.bf16.msra.mxu0 0
        %1305 = vmatprep.subr.bf16.mxu0 0
        %1306 = vmatpush1.bf16.msra.mxu0 0
        %1307 = vmatprep.subr.bf16.mxu0 0
        %1308 = vmatpush1.bf16.msra.mxu0 0
        %1309 = vmatprep.subr.bf16.mxu0 0
        %1310 = vmatpush1.bf16.msra.mxu0 0
        %1311 = vmatprep.mubr.bf16.mxu0 0
        %1312 = vmatmul.mubr.bf16.gmra.mrb[0].mxu0 %v1273
        %v1313 = vpop.f32.mrb[0].mxu0
        %v1314 = vadd.f32 %v627, %v1313
        %v1315 = vpop.f32.mrb[0].mxu0
        %v1316 = vpop.f32.mrb[0].mxu0
        %v1317 = vpop.f32.mrb[0].mxu0
        %1318 = vdwg.mxu0
        %v1320 = vsel %vm1271, %v892, 0
        %v1323 = vsel %vm1275, %v1039, 0
        %1325 = vmatprep.subr.bf16.mxu0 0
        %1326 = vmatpush1.bf16.msra.mxu0 %v1323
        %1327 = vmatprep.subr.bf16.mxu0 0
        %1328 = vmatpush1.bf16.msra.mxu0 0
        %1329 = vmatprep.subr.bf16.mxu0 0
        %1330 = vmatpush1.bf16.msra.mxu0 0
        %1331 = vmatprep.subr.bf16.mxu0 0
        %1332 = vmatpush1.bf16.msra.mxu0 0
        %1333 = vmatprep.subr.bf16.mxu0 0
        %1334 = vmatpush1.bf16.msra.mxu0 0
        %1335 = vmatprep.subr.bf16.mxu0 0
        %1336 = vmatpush1.bf16.msra.mxu0 0
        %1337 = vmatprep.subr.bf16.mxu0 0
        %1338 = vmatpush1.bf16.msra.mxu0 0
        %1339 = vmatprep.subr.bf16.mxu0 0
        %1340 = vmatpush1.bf16.msra.mxu0 0
        %1341 = vmatprep.subr.bf16.mxu0 0
        %1342 = vmatpush1.bf16.msra.mxu0 0
        %1343 = vmatprep.subr.bf16.mxu0 0
        %1344 = vmatpush1.bf16.msra.mxu0 0
        %1345 = vmatprep.subr.bf16.mxu0 0
        %1346 = vmatpush1.bf16.msra.mxu0 0
        %1347 = vmatprep.subr.bf16.mxu0 0
        %1348 = vmatpush1.bf16.msra.mxu0 0
        %1349 = vmatprep.subr.bf16.mxu0 0
        %1350 = vmatpush1.bf16.msra.mxu0 0
        %1351 = vmatprep.subr.bf16.mxu0 0
        %1352 = vmatpush1.bf16.msra.mxu0 0
        %1353 = vmatprep.subr.bf16.mxu0 0
        %1354 = vmatpush1.bf16.msra.mxu0 0
        %1355 = vmatprep.subr.bf16.mxu0 0
        %1356 = vmatpush1.bf16.msra.mxu0 0
        %1357 = vmatprep.mubr.bf16.mxu0 0
        %1358 = vmatmul.mubr.bf16.gmra.mrb[0].mxu0 %v1320
        %v1359 = vpop.f32.mrb[0].mxu0
        %v1360 = vadd.f32 %v627, %v1359
        %v1361 = vpop.f32.mrb[0].mxu0
        %v1362 = vpop.f32.mrb[0].mxu0
        %v1363 = vpop.f32.mrb[0].mxu0
        %1364 = vdwg.mxu0
        %v1366 = vsel %vm1271, %v894, 0
        %v1369 = vsel %vm1275, %v1055, 0
        %1371 = vmatprep.subr.bf16.mxu0 0
        %1372 = vmatpush1.bf16.msra.mxu0 %v1369
        %1373 = vmatprep.subr.bf16.mxu0 0
        %1374 = vmatpush1.bf16.msra.mxu0 0
        %1375 = vmatprep.subr.bf16.mxu0 0
        %1376 = vmatpush1.bf16.msra.mxu0 0
        %1377 = vmatprep.subr.bf16.mxu0 0
        %1378 = vmatpush1.bf16.msra.mxu0 0
        %1379 = vmatprep.subr.bf16.mxu0 0
        %1380 = vmatpush1.bf16.msra.mxu0 0
        %1381 = vmatprep.subr.bf16.mxu0 0
        %1382 = vmatpush1.bf16.msra.mxu0 0
        %1383 = vmatprep.subr.bf16.mxu0 0
        %1384 = vmatpush1.bf16.msra.mxu0 0
        %1385 = vmatprep.subr.bf16.mxu0 0
        %1386 = vmatpush1.bf16.msra.mxu0 0
        %1387 = vmatprep.subr.bf16.mxu0 0
        %1388 = vmatpush1.bf16.msra.mxu0 0
        %1389 = vmatprep.subr.bf16.mxu0 0
        %1390 = vmatpush1.bf16.msra.mxu0 0
        %1391 = vmatprep.subr.bf16.mxu0 0
        %1392 = vmatpush1.bf16.msra.mxu0 0
        %1393 = vmatprep.subr.bf16.mxu0 0
        %1394 = vmatpush1.bf16.msra.mxu0 0
        %1395 = vmatprep.subr.bf16.mxu0 0
        %1396 = vmatpush1.bf16.msra.mxu0 0
        %1397 = vmatprep.subr.bf16.mxu0 0
        %1398 = vmatpush1.bf16.msra.mxu0 0
        %1399 = vmatprep.subr.bf16.mxu0 0
        %1400 = vmatpush1.bf16.msra.mxu0 0
        %1401 = vmatprep.subr.bf16.mxu0 0
        %1402 = vmatpush1.bf16.msra.mxu0 0
        %1403 = vmatprep.mubr.bf16.mxu0 0
        %1404 = vmatmul.mubr.bf16.gmra.mrb[0].mxu0 %v1366
        %v1405 = vpop.f32.mrb[0].mxu0
        %v1406 = vadd.f32 %v627, %v1405
        %v1407 = vpop.f32.mrb[0].mxu0
        %v1408 = vpop.f32.mrb[0].mxu0
        %v1409 = vpop.f32.mrb[0].mxu0
        %1410 = vdwg.mxu0
        %v1412 = vsel %vm1271, %v896, 0
        %v1415 = vsel %vm1275, %v1071, 0
        %1417 = vmatprep.subr.bf16.mxu0 0
        %1418 = vmatpush1.bf16.msra.mxu0 %v1415
        %1419 = vmatprep.subr.bf16.mxu0 0
        %1420 = vmatpush1.bf16.msra.mxu0 0
        %1421 = vmatprep.subr.bf16.mxu0 0
        %1422 = vmatpush1.bf16.msra.mxu0 0
        %1423 = vmatprep.subr.bf16.mxu0 0
        %1424 = vmatpush1.bf16.msra.mxu0 0
        %1425 = vmatprep.subr.bf16.mxu0 0
        %1426 = vmatpush1.bf16.msra.mxu0 0
        %1427 = vmatprep.subr.bf16.mxu0 0
        %1428 = vmatpush1.bf16.msra.mxu0 0
        %1429 = vmatprep.subr.bf16.mxu0 0
        %1430 = vmatpush1.bf16.msra.mxu0 0
        %1431 = vmatprep.subr.bf16.mxu0 0
        %1432 = vmatpush1.bf16.msra.mxu0 0
        %1433 = vmatprep.subr.bf16.mxu0 0
        %1434 = vmatpush1.bf16.msra.mxu0 0
        %1435 = vmatprep.subr.bf16.mxu0 0
        %1436 = vmatpush1.bf16.msra.mxu0 0
        %1437 = vmatprep.subr.bf16.mxu0 0
        %1438 = vmatpush1.bf16.msra.mxu0 0
        %1439 = vmatprep.subr.bf16.mxu0 0
        %1440 = vmatpush1.bf16.msra.mxu0 0
        %1441 = vmatprep.subr.bf16.mxu0 0
        %1442 = vmatpush1.bf16.msra.mxu0 0
        %1443 = vmatprep.subr.bf16.mxu0 0
        %1444 = vmatpush1.bf16.msra.mxu0 0
        %1445 = vmatprep.subr.bf16.mxu0 0
        %1446 = vmatpush1.bf16.msra.mxu0 0
        %1447 = vmatprep.subr.bf16.mxu0 0
        %1448 = vmatpush1.bf16.msra.mxu0 0
        %1449 = vmatprep.mubr.bf16.mxu0 0
        %1450 = vmatmul.mubr.bf16.gmra.mrb[0].mxu0 %v1412
        %v1451 = vpop.f32.mrb[0].mxu0
        %v1452 = vadd.f32 %v627, %v1451
        %v1453 = vpop.f32.mrb[0].mxu0
        %v1454 = vpop.f32.mrb[0].mxu0
        %v1455 = vpop.f32.mrb[0].mxu0
        %1456 = vdwg.mxu0
        %v1458 = vsel %vm1271, %v898, 0
        %v1461 = vsel %vm1275, %v1087, 0
        %1463 = vmatprep.subr.bf16.mxu0 0
        %1464 = vmatpush1.bf16.msra.mxu0 %v1461
        %1465 = vmatprep.subr.bf16.mxu0 0
        %1466 = vmatpush1.bf16.msra.mxu0 0
        %1467 = vmatprep.subr.bf16.mxu0 0
        %1468 = vmatpush1.bf16.msra.mxu0 0
        %1469 = vmatprep.subr.bf16.mxu0 0
        %1470 = vmatpush1.bf16.msra.mxu0 0
        %1471 = vmatprep.subr.bf16.mxu0 0
        %1472 = vmatpush1.bf16.msra.mxu0 0
        %1473 = vmatprep.subr.bf16.mxu0 0
        %1474 = vmatpush1.bf16.msra.mxu0 0
        %1475 = vmatprep.subr.bf16.mxu0 0
        %1476 = vmatpush1.bf16.msra.mxu0 0
        %1477 = vmatprep.subr.bf16.mxu0 0
        %1478 = vmatpush1.bf16.msra.mxu0 0
        %1479 = vmatprep.subr.bf16.mxu0 0
        %1480 = vmatpush1.bf16.msra.mxu0 0
        %1481 = vmatprep.subr.bf16.mxu0 0
        %1482 = vmatpush1.bf16.msra.mxu0 0
        %1483 = vmatprep.subr.bf16.mxu0 0
        %1484 = vmatpush1.bf16.msra.mxu0 0
        %1485 = vmatprep.subr.bf16.mxu0 0
        %1486 = vmatpush1.bf16.msra.mxu0 0
        %1487 = vmatprep.subr.bf16.mxu0 0
        %1488 = vmatpush1.bf16.msra.mxu0 0
        %1489 = vmatprep.subr.bf16.mxu0 0
        %1490 = vmatpush1.bf16.msra.mxu0 0
        %1491 = vmatprep.subr.bf16.mxu0 0
        %1492 = vmatpush1.bf16.msra.mxu0 0
        %1493 = vmatprep.subr.bf16.mxu0 0
        %1494 = vmatpush1.bf16.msra.mxu0 0
        %1495 = vmatprep.mubr.bf16.mxu0 0
        %1496 = vmatmul.mubr.bf16.gmra.mrb[0].mxu0 %v1458
        %v1497 = vpop.f32.mrb[0].mxu0
        %v1498 = vadd.f32 %v627, %v1497
        %v1499 = vpop.f32.mrb[0].mxu0
        %v1500 = vpop.f32.mrb[0].mxu0
        %v1501 = vpop.f32.mrb[0].mxu0
        %1502 = vdwg.mxu0
        %v1504 = vsel %vm1271, %v900, 0
        %v1507 = vsel %vm1275, %v1103, 0
        %1509 = vmatprep.subr.bf16.mxu0 0
        %1510 = vmatpush1.bf16.msra.mxu0 %v1507
        %1511 = vmatprep.subr.bf16.mxu0 0
        %1512 = vmatpush1.bf16.msra.mxu0 0
        %1513 = vmatprep.subr.bf16.mxu0 0
        %1514 = vmatpush1.bf16.msra.mxu0 0
        %1515 = vmatprep.subr.bf16.mxu0 0
        %1516 = vmatpush1.bf16.msra.mxu0 0
        %1517 = vmatprep.subr.bf16.mxu0 0
        %1518 = vmatpush1.bf16.msra.mxu0 0
        %1519 = vmatprep.subr.bf16.mxu0 0
        %1520 = vmatpush1.bf16.msra.mxu0 0
        %1521 = vmatprep.subr.bf16.mxu0 0
        %1522 = vmatpush1.bf16.msra.mxu0 0
        %1523 = vmatprep.subr.bf16.mxu0 0
        %1524 = vmatpush1.bf16.msra.mxu0 0
        %1525 = vmatprep.subr.bf16.mxu0 0
        %1526 = vmatpush1.bf16.msra.mxu0 0
        %1527 = vmatprep.subr.bf16.mxu0 0
        %1528 = vmatpush1.bf16.msra.mxu0 0
        %1529 = vmatprep.subr.bf16.mxu0 0
        %1530 = vmatpush1.bf16.msra.mxu0 0
        %1531 = vmatprep.subr.bf16.mxu0 0
        %1532 = vmatpush1.bf16.msra.mxu0 0
        %1533 = vmatprep.subr.bf16.mxu0 0
        %1534 = vmatpush1.bf16.msra.mxu0 0
        %1535 = vmatprep.subr.bf16.mxu0 0
        %1536 = vmatpush1.bf16.msra.mxu0 0
        %1537 = vmatprep.subr.bf16.mxu0 0
        %1538 = vmatpush1.bf16.msra.mxu0 0
        %1539 = vmatprep.subr.bf16.mxu0 0
        %1540 = vmatpush1.bf16.msra.mxu0 0
        %1541 = vmatprep.mubr.bf16.mxu0 0
        %1542 = vmatmul.mubr.bf16.gmra.mrb[0].mxu0 %v1504
        %v1543 = vpop.f32.mrb[0].mxu0
        %v1544 = vadd.f32 %v627, %v1543
        %v1545 = vpop.f32.mrb[0].mxu0
        %v1546 = vpop.f32.mrb[0].mxu0
        %v1547 = vpop.f32.mrb[0].mxu0
        %1548 = vdwg.mxu0
        %v1550 = vsel %vm1271, %v902, 0
        %v1553 = vsel %vm1275, %v1119, 0
        %1555 = vmatprep.subr.bf16.mxu0 0
        %1556 = vmatpush1.bf16.msra.mxu0 %v1553
        %1557 = vmatprep.subr.bf16.mxu0 0
        %1558 = vmatpush1.bf16.msra.mxu0 0
        %1559 = vmatprep.subr.bf16.mxu0 0
        %1560 = vmatpush1.bf16.msra.mxu0 0
        %1561 = vmatprep.subr.bf16.mxu0 0
        %1562 = vmatpush1.bf16.msra.mxu0 0
        %1563 = vmatprep.subr.bf16.mxu0 0
        %1564 = vmatpush1.bf16.msra.mxu0 0
        %1565 = vmatprep.subr.bf16.mxu0 0
        %1566 = vmatpush1.bf16.msra.mxu0 0
        %1567 = vmatprep.subr.bf16.mxu0 0
        %1568 = vmatpush1.bf16.msra.mxu0 0
        %1569 = vmatprep.subr.bf16.mxu0 0
        %1570 = vmatpush1.bf16.msra.mxu0 0
        %1571 = vmatprep.subr.bf16.mxu0 0
        %1572 = vmatpush1.bf16.msra.mxu0 0
        %1573 = vmatprep.subr.bf16.mxu0 0
        %1574 = vmatpush1.bf16.msra.mxu0 0
        %1575 = vmatprep.subr.bf16.mxu0 0
        %1576 = vmatpush1.bf16.msra.mxu0 0
        %1577 = vmatprep.subr.bf16.mxu0 0
        %1578 = vmatpush1.bf16.msra.mxu0 0
        %1579 = vmatprep.subr.bf16.mxu0 0
        %1580 = vmatpush1.bf16.msra.mxu0 0
        %1581 = vmatprep.subr.bf16.mxu0 0
        %1582 = vmatpush1.bf16.msra.mxu0 0
        %1583 = vmatprep.subr.bf16.mxu0 0
        %1584 = vmatpush1.bf16.msra.mxu0 0
        %1585 = vmatprep.subr.bf16.mxu0 0
        %1586 = vmatpush1.bf16.msra.mxu0 0
        %1587 = vmatprep.mubr.bf16.mxu0 0
        %1588 = vmatmul.mubr.bf16.gmra.mrb[0].mxu0 %v1550
        %v1589 = vpop.f32.mrb[0].mxu0
        %v1590 = vadd.f32 %v627, %v1589
        %v1591 = vpop.f32.mrb[0].mxu0
        %v1592 = vpop.f32.mrb[0].mxu0
        %v1593 = vpop.f32.mrb[0].mxu0
        %1594 = vdwg.mxu0
        %v1596 = vsel %vm1271, %v904, 0
        %v1599 = vsel %vm1275, %v1135, 0
        %1601 = vmatprep.subr.bf16.mxu0 0
        %1602 = vmatpush1.bf16.msra.mxu0 %v1599
        %1603 = vmatprep.subr.bf16.mxu0 0
        %1604 = vmatpush1.bf16.msra.mxu0 0
        %1605 = vmatprep.subr.bf16.mxu0 0
        %1606 = vmatpush1.bf16.msra.mxu0 0
        %1607 = vmatprep.subr.bf16.mxu0 0
        %1608 = vmatpush1.bf16.msra.mxu0 0
        %1609 = vmatprep.subr.bf16.mxu0 0
        %1610 = vmatpush1.bf16.msra.mxu0 0
        %1611 = vmatprep.subr.bf16.mxu0 0
        %1612 = vmatpush1.bf16.msra.mxu0 0
        %1613 = vmatprep.subr.bf16.mxu0 0
        %1614 = vmatpush1.bf16.msra.mxu0 0
        %1615 = vmatprep.subr.bf16.mxu0 0
        %1616 = vmatpush1.bf16.msra.mxu0 0
        %1617 = vmatprep.subr.bf16.mxu0 0
        %1618 = vmatpush1.bf16.msra.mxu0 0
        %1619 = vmatprep.subr.bf16.mxu0 0
        %1620 = vmatpush1.bf16.msra.mxu0 0
        %1621 = vmatprep.subr.bf16.mxu0 0
        %1622 = vmatpush1.bf16.msra.mxu0 0
        %1623 = vmatprep.subr.bf16.mxu0 0
        %1624 = vmatpush1.bf16.msra.mxu0 0
        %1625 = vmatprep.subr.bf16.mxu0 0
        %1626 = vmatpush1.bf16.msra.mxu0 0
        %1627 = vmatprep.subr.bf16.mxu0 0
        %1628 = vmatpush1.bf16.msra.mxu0 0
        %1629 = vmatprep.subr.bf16.mxu0 0
        %1630 = vmatpush1.bf16.msra.mxu0 0
        %1631 = vmatprep.subr.bf16.mxu0 0
        %1632 = vmatpush1.bf16.msra.mxu0 0
        %1633 = vmatprep.mubr.bf16.mxu0 0
        %1634 = vmatmul.mubr.bf16.gmra.mrb[0].mxu0 %v1596
        %v1635 = vpop.f32.mrb[0].mxu0
        %v1636 = vadd.f32 %v627, %v1635
        %v1637 = vpop.f32.mrb[0].mxu0
        %v1638 = vpop.f32.mrb[0].mxu0
        %v1639 = vpop.f32.mrb[0].mxu0
        %1640 = vdwg.mxu0
        %v1642 = vsel %vm1271, %v906, 0
        %v1645 = vsel %vm1275, %v1151, 0
        %1647 = vmatprep.subr.bf16.mxu0 0
        %1648 = vmatpush1.bf16.msra.mxu0 %v1645
        %1649 = vmatprep.subr.bf16.mxu0 0
        %1650 = vmatpush1.bf16.msra.mxu0 0
        %1651 = vmatprep.subr.bf16.mxu0 0
        %1652 = vmatpush1.bf16.msra.mxu0 0
        %1653 = vmatprep.subr.bf16.mxu0 0
        %1654 = vmatpush1.bf16.msra.mxu0 0
        %1655 = vmatprep.subr.bf16.mxu0 0
        %1656 = vmatpush1.bf16.msra.mxu0 0
        %1657 = vmatprep.subr.bf16.mxu0 0
        %1658 = vmatpush1.bf16.msra.mxu0 0
        %1659 = vmatprep.subr.bf16.mxu0 0
        %1660 = vmatpush1.bf16.msra.mxu0 0
        %1661 = vmatprep.subr.bf16.mxu0 0
        %1662 = vmatpush1.bf16.msra.mxu0 0
        %1663 = vmatprep.subr.bf16.mxu0 0
        %1664 = vmatpush1.bf16.msra.mxu0 0
        %1665 = vmatprep.subr.bf16.mxu0 0
        %1666 = vmatpush1.bf16.msra.mxu0 0
        %1667 = vmatprep.subr.bf16.mxu0 0
        %1668 = vmatpush1.bf16.msra.mxu0 0
        %1669 = vmatprep.subr.bf16.mxu0 0
        %1670 = vmatpush1.bf16.msra.mxu0 0
        %1671 = vmatprep.subr.bf16.mxu0 0
        %1672 = vmatpush1.bf16.msra.mxu0 0
        %1673 = vmatprep.subr.bf16.mxu0 0
        %1674 = vmatpush1.bf16.msra.mxu0 0
        %1675 = vmatprep.subr.bf16.mxu0 0
        %1676 = vmatpush1.bf16.msra.mxu0 0
        %1677 = vmatprep.subr.bf16.mxu0 0
        %1678 = vmatpush1.bf16.msra.mxu0 0
        %1679 = vmatprep.mubr.bf16.mxu0 0
        %1680 = vmatmul.mubr.bf16.gmra.mrb[0].mxu0 %v1642
        %v1681 = vpop.f32.mrb[0].mxu0
        %v1682 = vadd.f32 %v627, %v1681
        %v1683 = vpop.f32.mrb[0].mxu0
        %v1684 = vpop.f32.mrb[0].mxu0
        %v1685 = vpop.f32.mrb[0].mxu0
        %1686 = vdwg.mxu0
        %v1688 = vsel %vm1271, %v908, 0
        %v1691 = vsel %vm1275, %v1167, 0
        %1693 = vmatprep.subr.bf16.mxu0 0
        %1694 = vmatpush1.bf16.msra.mxu0 %v1691
        %1695 = vmatprep.subr.bf16.mxu0 0
        %1696 = vmatpush1.bf16.msra.mxu0 0
        %1697 = vmatprep.subr.bf16.mxu0 0
        %1698 = vmatpush1.bf16.msra.mxu0 0
        %1699 = vmatprep.subr.bf16.mxu0 0
        %1700 = vmatpush1.bf16.msra.mxu0 0
        %1701 = vmatprep.subr.bf16.mxu0 0
        %1702 = vmatpush1.bf16.msra.mxu0 0
        %1703 = vmatprep.subr.bf16.mxu0 0
        %1704 = vmatpush1.bf16.msra.mxu0 0
        %1705 = vmatprep.subr.bf16.mxu0 0
        %1706 = vmatpush1.bf16.msra.mxu0 0
        %1707 = vmatprep.subr.bf16.mxu0 0
        %1708 = vmatpush1.bf16.msra.mxu0 0
        %1709 = vmatprep.subr.bf16.mxu0 0
        %1710 = vmatpush1.bf16.msra.mxu0 0
        %1711 = vmatprep.subr.bf16.mxu0 0
        %1712 = vmatpush1.bf16.msra.mxu0 0
        %1713 = vmatprep.subr.bf16.mxu0 0
        %1714 = vmatpush1.bf16.msra.mxu0 0
        %1715 = vmatprep.subr.bf16.mxu0 0
        %1716 = vmatpush1.bf16.msra.mxu0 0
        %1717 = vmatprep.subr.bf16.mxu0 0
        %1718 = vmatpush1.bf16.msra.mxu0 0
        %1719 = vmatprep.subr.bf16.mxu0 0
        %1720 = vmatpush1.bf16.msra.mxu0 0
        %1721 = vmatprep.subr.bf16.mxu0 0
        %1722 = vmatpush1.bf16.msra.mxu0 0
        %1723 = vmatprep.subr.bf16.mxu0 0
        %1724 = vmatpush1.bf16.msra.mxu0 0
        %1725 = vmatprep.mubr.bf16.mxu0 0
        %1726 = vmatmul.mubr.bf16.gmra.mrb[0].mxu0 %v1688
        %v1727 = vpop.f32.mrb[0].mxu0
        %v1728 = vadd.f32 %v627, %v1727
        %v1729 = vpop.f32.mrb[0].mxu0
        %v1730 = vpop.f32.mrb[0].mxu0
        %v1731 = vpop.f32.mrb[0].mxu0
        %1732 = vdwg.mxu0
        %v1734 = vsel %vm1271, %v910, 0
        %v1737 = vsel %vm1275, %v1183, 0
        %1739 = vmatprep.subr.bf16.mxu0 0
        %1740 = vmatpush1.bf16.msra.mxu0 %v1737
        %1741 = vmatprep.subr.bf16.mxu0 0
        %1742 = vmatpush1.bf16.msra.mxu0 0
        %1743 = vmatprep.subr.bf16.mxu0 0
        %1744 = vmatpush1.bf16.msra.mxu0 0
        %1745 = vmatprep.subr.bf16.mxu0 0
        %1746 = vmatpush1.bf16.msra.mxu0 0
        %1747 = vmatprep.subr.bf16.mxu0 0
        %1748 = vmatpush1.bf16.msra.mxu0 0
        %1749 = vmatprep.subr.bf16.mxu0 0
        %1750 = vmatpush1.bf16.msra.mxu0 0
        %1751 = vmatprep.subr.bf16.mxu0 0
        %1752 = vmatpush1.bf16.msra.mxu0 0
        %1753 = vmatprep.subr.bf16.mxu0 0
        %1754 = vmatpush1.bf16.msra.mxu0 0
        %1755 = vmatprep.subr.bf16.mxu0 0
        %1756 = vmatpush1.bf16.msra.mxu0 0
        %1757 = vmatprep.subr.bf16.mxu0 0
        %1758 = vmatpush1.bf16.msra.mxu0 0
        %1759 = vmatprep.subr.bf16.mxu0 0
        %1760 = vmatpush1.bf16.msra.mxu0 0
        %1761 = vmatprep.subr.bf16.mxu0 0
        %1762 = vmatpush1.bf16.msra.mxu0 0
        %1763 = vmatprep.subr.bf16.mxu0 0
        %1764 = vmatpush1.bf16.msra.mxu0 0
        %1765 = vmatprep.subr.bf16.mxu0 0
        %1766 = vmatpush1.bf16.msra.mxu0 0
        %1767 = vmatprep.subr.bf16.mxu0 0
        %1768 = vmatpush1.bf16.msra.mxu0 0
        %1769 = vmatprep.subr.bf16.mxu0 0
        %1770 = vmatpush1.bf16.msra.mxu0 0
        %1771 = vmatprep.mubr.bf16.mxu0 0
        %1772 = vmatmul.mubr.bf16.gmra.mrb[0].mxu0 %v1734
        %v1773 = vpop.f32.mrb[0].mxu0
        %v1774 = vadd.f32 %v627, %v1773
        %v1775 = vpop.f32.mrb[0].mxu0
        %v1776 = vpop.f32.mrb[0].mxu0
        %v1777 = vpop.f32.mrb[0].mxu0
        %1778 = vdwg.mxu0
        %v1780 = vsel %vm1271, %v912, 0
        %v1783 = vsel %vm1275, %v1199, 0
        %1785 = vmatprep.subr.bf16.mxu0 0
        %1786 = vmatpush1.bf16.msra.mxu0 %v1783
        %1787 = vmatprep.subr.bf16.mxu0 0
        %1788 = vmatpush1.bf16.msra.mxu0 0
        %1789 = vmatprep.subr.bf16.mxu0 0
        %1790 = vmatpush1.bf16.msra.mxu0 0
        %1791 = vmatprep.subr.bf16.mxu0 0
        %1792 = vmatpush1.bf16.msra.mxu0 0
        %1793 = vmatprep.subr.bf16.mxu0 0
        %1794 = vmatpush1.bf16.msra.mxu0 0
        %1795 = vmatprep.subr.bf16.mxu0 0
        %1796 = vmatpush1.bf16.msra.mxu0 0
        %1797 = vmatprep.subr.bf16.mxu0 0
        %1798 = vmatpush1.bf16.msra.mxu0 0
        %1799 = vmatprep.subr.bf16.mxu0 0
        %1800 = vmatpush1.bf16.msra.mxu0 0
        %1801 = vmatprep.subr.bf16.mxu0 0
        %1802 = vmatpush1.bf16.msra.mxu0 0
        %1803 = vmatprep.subr.bf16.mxu0 0
        %1804 = vmatpush1.bf16.msra.mxu0 0
        %1805 = vmatprep.subr.bf16.mxu0 0
        %1806 = vmatpush1.bf16.msra.mxu0 0
        %1807 = vmatprep.subr.bf16.mxu0 0
        %1808 = vmatpush1.bf16.msra.mxu0 0
        %1809 = vmatprep.subr.bf16.mxu0 0
        %1810 = vmatpush1.bf16.msra.mxu0 0
        %1811 = vmatprep.subr.bf16.mxu0 0
        %1812 = vmatpush1.bf16.msra.mxu0 0
        %1813 = vmatprep.subr.bf16.mxu0 0
        %1814 = vmatpush1.bf16.msra.mxu0 0
        %1815 = vmatprep.subr.bf16.mxu0 0
        %1816 = vmatpush1.bf16.msra.mxu0 0
        %1817 = vmatprep.mubr.bf16.mxu0 0
        %1818 = vmatmul.mubr.bf16.gmra.mrb[0].mxu0 %v1780
        %v1819 = vpop.f32.mrb[0].mxu0
        %v1820 = vadd.f32 %v627, %v1819
        %v1821 = vpop.f32.mrb[0].mxu0
        %v1822 = vpop.f32.mrb[0].mxu0
        %v1823 = vpop.f32.mrb[0].mxu0
        %1824 = vdwg.mxu0
        %v1826 = vsel %vm1271, %v914, 0
        %v1829 = vsel %vm1275, %v1215, 0
        %1831 = vmatprep.subr.bf16.mxu0 0
        %1832 = vmatpush1.bf16.msra.mxu0 %v1829
        %1833 = vmatprep.subr.bf16.mxu0 0
        %1834 = vmatpush1.bf16.msra.mxu0 0
        %1835 = vmatprep.subr.bf16.mxu0 0
        %1836 = vmatpush1.bf16.msra.mxu0 0
        %1837 = vmatprep.subr.bf16.mxu0 0
        %1838 = vmatpush1.bf16.msra.mxu0 0
        %1839 = vmatprep.subr.bf16.mxu0 0
        %1840 = vmatpush1.bf16.msra.mxu0 0
        %1841 = vmatprep.subr.bf16.mxu0 0
        %1842 = vmatpush1.bf16.msra.mxu0 0
        %1843 = vmatprep.subr.bf16.mxu0 0
        %1844 = vmatpush1.bf16.msra.mxu0 0
        %1845 = vmatprep.subr.bf16.mxu0 0
        %1846 = vmatpush1.bf16.msra.mxu0 0
        %1847 = vmatprep.subr.bf16.mxu0 0
        %1848 = vmatpush1.bf16.msra.mxu0 0
        %1849 = vmatprep.subr.bf16.mxu0 0
        %1850 = vmatpush1.bf16.msra.mxu0 0
        %1851 = vmatprep.subr.bf16.mxu0 0
        %1852 = vmatpush1.bf16.msra.mxu0 0
        %1853 = vmatprep.subr.bf16.mxu0 0
        %1854 = vmatpush1.bf16.msra.mxu0 0
        %1855 = vmatprep.subr.bf16.mxu0 0
        %1856 = vmatpush1.bf16.msra.mxu0 0
        %1857 = vmatprep.subr.bf16.mxu0 0
        %1858 = vmatpush1.bf16.msra.mxu0 0
        %1859 = vmatprep.subr.bf16.mxu0 0
        %1860 = vmatpush1.bf16.msra.mxu0 0
        %1861 = vmatprep.subr.bf16.mxu0 0
        %1862 = vmatpush1.bf16.msra.mxu0 0
        %1863 = vmatprep.mubr.bf16.mxu0 0
        %1864 = vmatmul.mubr.bf16.gmra.mrb[0].mxu0 %v1826
        %v1865 = vpop.f32.mrb[0].mxu0
        %v1866 = vadd.f32 %v627, %v1865
        %v1867 = vpop.f32.mrb[0].mxu0
        %v1868 = vpop.f32.mrb[0].mxu0
        %v1869 = vpop.f32.mrb[0].mxu0
        %1870 = vdwg.mxu0
        %v1872 = vsel %vm1271, %v916, 0
        %v1875 = vsel %vm1275, %v1231, 0
        %1877 = vmatprep.subr.bf16.mxu0 0
        %1878 = vmatpush1.bf16.msra.mxu0 %v1875
        %1879 = vmatprep.subr.bf16.mxu0 0
        %1880 = vmatpush1.bf16.msra.mxu0 0
        %1881 = vmatprep.subr.bf16.mxu0 0
        %1882 = vmatpush1.bf16.msra.mxu0 0
        %1883 = vmatprep.subr.bf16.mxu0 0
        %1884 = vmatpush1.bf16.msra.mxu0 0
        %1885 = vmatprep.subr.bf16.mxu0 0
        %1886 = vmatpush1.bf16.msra.mxu0 0
        %1887 = vmatprep.subr.bf16.mxu0 0
        %1888 = vmatpush1.bf16.msra.mxu0 0
        %1889 = vmatprep.subr.bf16.mxu0 0
        %1890 = vmatpush1.bf16.msra.mxu0 0
        %1891 = vmatprep.subr.bf16.mxu0 0
        %1892 = vmatpush1.bf16.msra.mxu0 0
        %1893 = vmatprep.subr.bf16.mxu0 0
        %1894 = vmatpush1.bf16.msra.mxu0 0
        %1895 = vmatprep.subr.bf16.mxu0 0
        %1896 = vmatpush1.bf16.msra.mxu0 0
        %1897 = vmatprep.subr.bf16.mxu0 0
        %1898 = vmatpush1.bf16.msra.mxu0 0
        %1899 = vmatprep.subr.bf16.mxu0 0
        %1900 = vmatpush1.bf16.msra.mxu0 0
        %1901 = vmatprep.subr.bf16.mxu0 0
        %1902 = vmatpush1.bf16.msra.mxu0 0
        %1903 = vmatprep.subr.bf16.mxu0 0
        %1904 = vmatpush1.bf16.msra.mxu0 0
        %1905 = vmatprep.subr.bf16.mxu0 0
        %1906 = vmatpush1.bf16.msra.mxu0 0
        %1907 = vmatprep.subr.bf16.mxu0 0
        %1908 = vmatpush1.bf16.msra.mxu0 0
        %1909 = vmatprep.mubr.bf16.mxu0 0
        %1910 = vmatmul.mubr.bf16.gmra.mrb[0].mxu0 %v1872
        %v1911 = vpop.f32.mrb[0].mxu0
        %v1912 = vadd.f32 %v627, %v1911
        %v1913 = vpop.f32.mrb[0].mxu0
        %v1914 = vpop.f32.mrb[0].mxu0
        %v1915 = vpop.f32.mrb[0].mxu0
        %1916 = vdwg.mxu0
        %v1918 = vsel %vm1271, %v918, 0
        %v1921 = vsel %vm1275, %v1247, 0
        %1923 = vmatprep.subr.bf16.mxu0 0
        %1924 = vmatpush1.bf16.msra.mxu0 %v1921
        %1925 = vmatprep.subr.bf16.mxu0 0
        %1926 = vmatpush1.bf16.msra.mxu0 0
        %1927 = vmatprep.subr.bf16.mxu0 0
        %1928 = vmatpush1.bf16.msra.mxu0 0
        %1929 = vmatprep.subr.bf16.mxu0 0
        %1930 = vmatpush1.bf16.msra.mxu0 0
        %1931 = vmatprep.subr.bf16.mxu0 0
        %1932 = vmatpush1.bf16.msra.mxu0 0
        %1933 = vmatprep.subr.bf16.mxu0 0
        %1934 = vmatpush1.bf16.msra.mxu0 0
        %1935 = vmatprep.subr.bf16.mxu0 0
        %1936 = vmatpush1.bf16.msra.mxu0 0
        %1937 = vmatprep.subr.bf16.mxu0 0
        %1938 = vmatpush1.bf16.msra.mxu0 0
        %1939 = vmatprep.subr.bf16.mxu0 0
        %1940 = vmatpush1.bf16.msra.mxu0 0
        %1941 = vmatprep.subr.bf16.mxu0 0
        %1942 = vmatpush1.bf16.msra.mxu0 0
        %1943 = vmatprep.subr.bf16.mxu0 0
        %1944 = vmatpush1.bf16.msra.mxu0 0
        %1945 = vmatprep.subr.bf16.mxu0 0
        %1946 = vmatpush1.bf16.msra.mxu0 0
        %1947 = vmatprep.subr.bf16.mxu0 0
        %1948 = vmatpush1.bf16.msra.mxu0 0
        %1949 = vmatprep.subr.bf16.mxu0 0
        %1950 = vmatpush1.bf16.msra.mxu0 0
        %1951 = vmatprep.subr.bf16.mxu0 0
        %1952 = vmatpush1.bf16.msra.mxu0 0
        %1953 = vmatprep.subr.bf16.mxu0 0
        %1954 = vmatpush1.bf16.msra.mxu0 0
        %1955 = vmatprep.mubr.bf16.mxu0 0
        %1956 = vmatmul.mubr.bf16.gmra.mrb[0].mxu0 %v1918
        %v1957 = vpop.f32.mrb[0].mxu0
        %v1958 = vadd.f32 %v627, %v1957
        %v1959 = vpop.f32.mrb[0].mxu0
        %v1960 = vpop.f32.mrb[0].mxu0
        %v1961 = vpop.f32.mrb[0].mxu0
        %1962 = vdwg.mxu0
        %v1964 = vsel %vm1271, %v920, 0
        %v1967 = vsel %vm1275, %v1263, 0
        %1969 = vmatprep.subr.bf16.mxu0 0
        %1970 = vmatpush1.bf16.msra.mxu0 %v1967
        %1971 = vmatprep.subr.bf16.mxu0 0
        %1972 = vmatpush1.bf16.msra.mxu0 0
        %1973 = vmatprep.subr.bf16.mxu0 0
        %1974 = vmatpush1.bf16.msra.mxu0 0
        %1975 = vmatprep.subr.bf16.mxu0 0
        %1976 = vmatpush1.bf16.msra.mxu0 0
        %1977 = vmatprep.subr.bf16.mxu0 0
        %1978 = vmatpush1.bf16.msra.mxu0 0
        %1979 = vmatprep.subr.bf16.mxu0 0
        %1980 = vmatpush1.bf16.msra.mxu0 0
        %1981 = vmatprep.subr.bf16.mxu0 0
        %1982 = vmatpush1.bf16.msra.mxu0 0
        %1983 = vmatprep.subr.bf16.mxu0 0
        %1984 = vmatpush1.bf16.msra.mxu0 0
        %1985 = vmatprep.subr.bf16.mxu0 0
        %1986 = vmatpush1.bf16.msra.mxu0 0
        %1987 = vmatprep.subr.bf16.mxu0 0
        %1988 = vmatpush1.bf16.msra.mxu0 0
        %1989 = vmatprep.subr.bf16.mxu0 0
        %1990 = vmatpush1.bf16.msra.mxu0 0
        %1991 = vmatprep.subr.bf16.mxu0 0
        %1992 = vmatpush1.bf16.msra.mxu0 0
        %1993 = vmatprep.subr.bf16.mxu0 0
        %1994 = vmatpush1.bf16.msra.mxu0 0
        %1995 = vmatprep.subr.bf16.mxu0 0
        %1996 = vmatpush1.bf16.msra.mxu0 0
        %1997 = vmatprep.subr.bf16.mxu0 0
        %1998 = vmatpush1.bf16.msra.mxu0 0
        %1999 = vmatprep.subr.bf16.mxu0 0
        %2000 = vmatpush1.bf16.msra.mxu0 0
        %2001 = vmatprep.mubr.bf16.mxu0 0
        %2002 = vmatmul.mubr.bf16.gmra.mrb[0].mxu0 %v1964
        %v2003 = vpop.f32.mrb[0].mxu0
        %v2004 = vadd.f32 %v627, %v2003
        %v2005 = vpop.f32.mrb[0].mxu0
        %v2006 = vpop.f32.mrb[0].mxu0
        %v2007 = vpop.f32.mrb[0].mxu0
        %2008 = vdwg.mxu0
        %v2009 = vsel %vm1271, %v1314, -inf
        %2010 = vmax.xlane.f32.xlu0 %v2009
        %v2011 = vpop.xlane.xlu0 %2010
        %v2012 = vsel %vm1271, %v1360, -inf
        %2013 = vmax.xlane.f32.xlu0 %v2012
        %v2014 = vpop.xlane.xlu0 %2013
        %v2015 = vsel %vm1271, %v1406, -inf
        %2016 = vmax.xlane.f32.xlu0 %v2015
        %v2017 = vpop.xlane.xlu0 %2016
        %v2018 = vsel %vm1271, %v1452, -inf
        %2019 = vmax.xlane.f32.xlu0 %v2018
        %v2020 = vpop.xlane.xlu0 %2019
        %v2021 = vsel %vm1271, %v1498, -inf
        %2022 = vmax.xlane.f32.xlu0 %v2021
        %v2023 = vpop.xlane.xlu0 %2022
        %v2024 = vsel %vm1271, %v1544, -inf
        %2025 = vmax.xlane.f32.xlu0 %v2024
        %v2026 = vpop.xlane.xlu0 %2025
        %v2027 = vsel %vm1271, %v1590, -inf
        %2028 = vmax.xlane.f32.xlu0 %v2027
        %v2029 = vpop.xlane.xlu0 %2028
        %v2030 = vsel %vm1271, %v1636, -inf
        %2031 = vmax.xlane.f32.xlu0 %v2030
        %v2032 = vpop.xlane.xlu0 %2031
        %v2033 = vsel %vm1271, %v1682, -inf
        %2034 = vmax.xlane.f32.xlu0 %v2033
        %v2035 = vpop.xlane.xlu0 %2034
        %v2036 = vsel %vm1271, %v1728, -inf
        %2037 = vmax.xlane.f32.xlu0 %v2036
        %v2038 = vpop.xlane.xlu0 %2037
        %v2039 = vsel %vm1271, %v1774, -inf
        %2040 = vmax.xlane.f32.xlu0 %v2039
        %v2041 = vpop.xlane.xlu0 %2040
        %v2042 = vsel %vm1271, %v1820, -inf
        %2043 = vmax.xlane.f32.xlu0 %v2042
        %v2044 = vpop.xlane.xlu0 %2043
        %v2045 = vsel %vm1271, %v1866, -inf
        %2046 = vmax.xlane.f32.xlu0 %v2045
        %v2047 = vpop.xlane.xlu0 %2046
        %v2048 = vsel %vm1271, %v1912, -inf
        %2049 = vmax.xlane.f32.xlu0 %v2048
        %v2050 = vpop.xlane.xlu0 %2049
        %v2051 = vsel %vm1271, %v1958, -inf
        %2052 = vmax.xlane.f32.xlu0 %v2051
        %v2053 = vpop.xlane.xlu0 %2052
        %v2054 = vsel %vm1271, %v2004, -inf
        %2055 = vmax.xlane.f32.xlu0 %v2054
        %v2056 = vpop.xlane.xlu0 %2055
        %v2057 = vsub.f32 %v1314, %v2011
        %v2058 = vsub.f32 %v1360, %v2014
        %v2059 = vsub.f32 %v1406, %v2017
        %v2060 = vsub.f32 %v1452, %v2020
        %v2061 = vsub.f32 %v1498, %v2023
        %v2062 = vsub.f32 %v1544, %v2026
        %v2063 = vsub.f32 %v1590, %v2029
        %v2064 = vsub.f32 %v1636, %v2032
        %v2065 = vsub.f32 %v1682, %v2035
        %v2066 = vsub.f32 %v1728, %v2038
        %v2067 = vsub.f32 %v1774, %v2041
        %v2068 = vsub.f32 %v1820, %v2044
        %v2069 = vsub.f32 %v1866, %v2047
        %v2070 = vsub.f32 %v1912, %v2050
        %v2071 = vsub.f32 %v1958, %v2053
        %v2072 = vsub.f32 %v2004, %v2056
        %v2073 = vmul.f32 %v2057, 1.442695
        %v2074 = vpow.pop %v2073
        %v2075 = vmul.f32 %v2058, 1.442695
        %v2076 = vpow.pop %v2075
        %v2077 = vmul.f32 %v2059, 1.442695
        %v2078 = vpow.pop %v2077
        %v2079 = vmul.f32 %v2060, 1.442695
        %v2080 = vpow.pop %v2079
        %v2081 = vmul.f32 %v2061, 1.442695
        %v2082 = vpow.pop %v2081
        %v2083 = vmul.f32 %v2062, 1.442695
        %v2084 = vpow.pop %v2083
        %v2085 = vmul.f32 %v2063, 1.442695
        %v2086 = vpow.pop %v2085
        %v2087 = vmul.f32 %v2064, 1.442695
        %v2088 = vpow.pop %v2087
        %v2089 = vmul.f32 %v2065, 1.442695
        %v2090 = vpow.pop %v2089
        %v2091 = vmul.f32 %v2066, 1.442695
        %v2092 = vpow.pop %v2091
        %v2093 = vmul.f32 %v2067, 1.442695
        %v2094 = vpow.pop %v2093
        %v2095 = vmul.f32 %v2068, 1.442695
        %v2096 = vpow.pop %v2095
        %v2097 = vmul.f32 %v2069, 1.442695
        %v2098 = vpow.pop %v2097
        %v2099 = vmul.f32 %v2070, 1.442695
        %v2100 = vpow.pop %v2099
        %v2101 = vmul.f32 %v2071, 1.442695
        %v2102 = vpow.pop %v2101
        %v2103 = vmul.f32 %v2072, 1.442695
        %v2104 = vpow.pop %v2103
        %v2105 = vsel %vm1271, %v2074, 0.0
        %2106 = vadd.xlane.f32.xlu0 %v2105
        %v2107 = vpop.xlane.xlu0 %2106
        %v2108 = vsel %vm1271, %v2076, 0.0
        %2109 = vadd.xlane.f32.xlu0 %v2108
        %v2110 = vpop.xlane.xlu0 %2109
        %v2111 = vsel %vm1271, %v2078, 0.0
        %2112 = vadd.xlane.f32.xlu0 %v2111
        %v2113 = vpop.xlane.xlu0 %2112
        %v2114 = vsel %vm1271, %v2080, 0.0
        %2115 = vadd.xlane.f32.xlu0 %v2114
        %v2116 = vpop.xlane.xlu0 %2115
        %v2117 = vsel %vm1271, %v2082, 0.0
        %2118 = vadd.xlane.f32.xlu0 %v2117
        %v2119 = vpop.xlane.xlu0 %2118
        %v2120 = vsel %vm1271, %v2084, 0.0
        %2121 = vadd.xlane.f32.xlu0 %v2120
        %v2122 = vpop.xlane.xlu0 %2121
        %v2123 = vsel %vm1271, %v2086, 0.0
        %2124 = vadd.xlane.f32.xlu0 %v2123
        %v2125 = vpop.xlane.xlu0 %2124
        %v2126 = vsel %vm1271, %v2088, 0.0
        %2127 = vadd.xlane.f32.xlu0 %v2126
        %v2128 = vpop.xlane.xlu0 %2127
        %v2129 = vsel %vm1271, %v2090, 0.0
        %2130 = vadd.xlane.f32.xlu0 %v2129
        %v2131 = vpop.xlane.xlu0 %2130
        %v2132 = vsel %vm1271, %v2092, 0.0
        %2133 = vadd.xlane.f32.xlu0 %v2132
        %v2134 = vpop.xlane.xlu0 %2133
        %v2135 = vsel %vm1271, %v2094, 0.0
        %2136 = vadd.xlane.f32.xlu0 %v2135
        %v2137 = vpop.xlane.xlu0 %2136
        %v2138 = vsel %vm1271, %v2096, 0.0
        %2139 = vadd.xlane.f32.xlu0 %v2138
        %v2140 = vpop.xlane.xlu0 %2139
        %v2141 = vsel %vm1271, %v2098, 0.0
        %2142 = vadd.xlane.f32.xlu0 %v2141
        %v2143 = vpop.xlane.xlu0 %2142
        %v2144 = vsel %vm1271, %v2100, 0.0
        %2145 = vadd.xlane.f32.xlu0 %v2144
        %v2146 = vpop.xlane.xlu0 %2145
        %v2147 = vsel %vm1271, %v2102, 0.0
        %2148 = vadd.xlane.f32.xlu0 %v2147
        %v2149 = vpop.xlane.xlu0 %2148
        %v2150 = vsel %vm1271, %v2104, 0.0
        %2151 = vadd.xlane.f32.xlu0 %v2150
        %v2152 = vpop.xlane.xlu0 %2151
        %v2153 = vrcp.pop %v2107
        %v2154 = vrcp.pop %v2110
        %v2155 = vrcp.pop %v2113
        %v2156 = vrcp.pop %v2116
        %v2157 = vrcp.pop %v2119
        %v2158 = vrcp.pop %v2122
        %v2159 = vrcp.pop %v2125
        %v2160 = vrcp.pop %v2128
        %v2161 = vrcp.pop %v2131
        %v2162 = vrcp.pop %v2134
        %v2163 = vrcp.pop %v2137
        %v2164 = vrcp.pop %v2140
        %v2165 = vrcp.pop %v2143
        %v2166 = vrcp.pop %v2146
        %v2167 = vrcp.pop %v2149
        %v2168 = vrcp.pop %v2152
        %v2169 = vmul.f32 %v2074, %v2153
        %v2170 = vmul.f32 %v2076, %v2154
        %v2171 = vmul.f32 %v2078, %v2155
        %v2172 = vmul.f32 %v2080, %v2156
        %v2173 = vmul.f32 %v2082, %v2157
        %v2174 = vmul.f32 %v2084, %v2158
        %v2175 = vmul.f32 %v2086, %v2159
        %v2176 = vmul.f32 %v2088, %v2160
        %v2177 = vmul.f32 %v2090, %v2161
        %v2178 = vmul.f32 %v2092, %v2162
        %v2179 = vmul.f32 %v2094, %v2163
        %v2180 = vmul.f32 %v2096, %v2164
        %v2181 = vmul.f32 %v2098, %v2165
        %v2182 = vmul.f32 %v2100, %v2166
        %v2183 = vmul.f32 %v2102, %v2167
        %v2184 = vmul.f32 %v2104, %v2168
        %v2185 = vpack.c.bf16 %v2169, %v2169
        %v2186 = vpack.c.bf16 %v2170, %v2170
        %v2187 = vpack.c.bf16 %v2171, %v2171
        %v2188 = vpack.c.bf16 %v2172, %v2172
        %v2189 = vpack.c.bf16 %v2173, %v2173
        %v2190 = vpack.c.bf16 %v2174, %v2174
        %v2191 = vpack.c.bf16 %v2175, %v2175
        %v2192 = vpack.c.bf16 %v2176, %v2176
        %v2193 = vpack.c.bf16 %v2177, %v2177
        %v2194 = vpack.c.bf16 %v2178, %v2178
        %v2195 = vpack.c.bf16 %v2179, %v2179
        %v2196 = vpack.c.bf16 %v2180, %v2180
        %v2197 = vpack.c.bf16 %v2181, %v2181
        %v2198 = vpack.c.bf16 %v2182, %v2182
        %v2199 = vpack.c.bf16 %v2183, %v2183
        %v2200 = vpack.c.bf16 %v2184, %v2184
        %2201 = vxpose.xlu0.c.b16.start [1/8] %v968, 128
        %2202 = vxpose.xlu0.c.b16.cont [2/8] 0, 128
        %2203 = vxpose.xlu0.c.b16.cont [3/8] 0, 128
        %2204 = vxpose.xlu0.c.b16.cont [4/8] 0, 128
        %2205 = vxpose.xlu0.c.b16.cont [5/8] 0, 128
        %2206 = vxpose.xlu0.c.b16.cont [6/8] 0, 128
        %2207 = vxpose.xlu0.c.b16.cont [7/8] 0, 128
        %2208 = vxpose.xlu0.c.b16.end [8/8] 0, 128
        %v2209 = vpop.trf.xlu0
        %v2210 = vpop.trf.xlu0
        %v2211 = vpop.trf.xlu0
        %v2212 = vpop.trf.xlu0
        %v2213 = vpop.trf.xlu0
        %v2214 = vpop.trf.xlu0
        %v2215 = vpop.trf.xlu0
        %v2216 = vpop.trf.xlu0
        %2217 = vxpose.xlu0.c.b16.start [1/8] %v971, 128
        %2218 = vxpose.xlu0.c.b16.cont [2/8] 0, 128
        %2219 = vxpose.xlu0.c.b16.cont [3/8] 0, 128
        %2220 = vxpose.xlu0.c.b16.cont [4/8] 0, 128
        %2221 = vxpose.xlu0.c.b16.cont [5/8] 0, 128
        %2222 = vxpose.xlu0.c.b16.cont [6/8] 0, 128
        %2223 = vxpose.xlu0.c.b16.cont [7/8] 0, 128
        %2224 = vxpose.xlu0.c.b16.end [8/8] 0, 128
        %v2225 = vpop.trf.xlu0
        %v2226 = vpop.trf.xlu0
        %v2227 = vpop.trf.xlu0
        %v2228 = vpop.trf.xlu0
        %v2229 = vpop.trf.xlu0
        %v2230 = vpop.trf.xlu0
        %v2231 = vpop.trf.xlu0
        %v2232 = vpop.trf.xlu0
        %2233 = vxpose.xlu0.c.b16.start [1/8] %v974, 128
        %2234 = vxpose.xlu0.c.b16.cont [2/8] 0, 128
        %2235 = vxpose.xlu0.c.b16.cont [3/8] 0, 128
        %2236 = vxpose.xlu0.c.b16.cont [4/8] 0, 128
        %2237 = vxpose.xlu0.c.b16.cont [5/8] 0, 128
        %2238 = vxpose.xlu0.c.b16.cont [6/8] 0, 128
        %2239 = vxpose.xlu0.c.b16.cont [7/8] 0, 128
        %2240 = vxpose.xlu0.c.b16.end [8/8] 0, 128
        %v2241 = vpop.trf.xlu0
        %v2242 = vpop.trf.xlu0
        %v2243 = vpop.trf.xlu0
        %v2244 = vpop.trf.xlu0
        %v2245 = vpop.trf.xlu0
        %v2246 = vpop.trf.xlu0
        %v2247 = vpop.trf.xlu0
        %v2248 = vpop.trf.xlu0
        %2249 = vxpose.xlu0.c.b16.start [1/8] %v977, 128
        %2250 = vxpose.xlu0.c.b16.cont [2/8] 0, 128
        %2251 = vxpose.xlu0.c.b16.cont [3/8] 0, 128
        %2252 = vxpose.xlu0.c.b16.cont [4/8] 0, 128
        %2253 = vxpose.xlu0.c.b16.cont [5/8] 0, 128
        %2254 = vxpose.xlu0.c.b16.cont [6/8] 0, 128
        %2255 = vxpose.xlu0.c.b16.cont [7/8] 0, 128
        %2256 = vxpose.xlu0.c.b16.end [8/8] 0, 128
        %v2257 = vpop.trf.xlu0
        %v2258 = vpop.trf.xlu0
        %v2259 = vpop.trf.xlu0
        %v2260 = vpop.trf.xlu0
        %v2261 = vpop.trf.xlu0
        %v2262 = vpop.trf.xlu0
        %v2263 = vpop.trf.xlu0
        %v2264 = vpop.trf.xlu0
        %2265 = vxpose.xlu0.c.b16.start [1/8] %v980, 128
        %2266 = vxpose.xlu0.c.b16.cont [2/8] 0, 128
        %2267 = vxpose.xlu0.c.b16.cont [3/8] 0, 128
        %2268 = vxpose.xlu0.c.b16.cont [4/8] 0, 128
        %2269 = vxpose.xlu0.c.b16.cont [5/8] 0, 128
        %2270 = vxpose.xlu0.c.b16.cont [6/8] 0, 128
        %2271 = vxpose.xlu0.c.b16.cont [7/8] 0, 128
        %2272 = vxpose.xlu0.c.b16.end [8/8] 0, 128
        %v2273 = vpop.trf.xlu0
        %v2274 = vpop.trf.xlu0
        %v2275 = vpop.trf.xlu0
        %v2276 = vpop.trf.xlu0
        %v2277 = vpop.trf.xlu0
        %v2278 = vpop.trf.xlu0
        %v2279 = vpop.trf.xlu0
        %v2280 = vpop.trf.xlu0
        %2281 = vxpose.xlu0.c.b16.start [1/8] %v983, 128
        %2282 = vxpose.xlu0.c.b16.cont [2/8] 0, 128
        %2283 = vxpose.xlu0.c.b16.cont [3/8] 0, 128
        %2284 = vxpose.xlu0.c.b16.cont [4/8] 0, 128
        %2285 = vxpose.xlu0.c.b16.cont [5/8] 0, 128
        %2286 = vxpose.xlu0.c.b16.cont [6/8] 0, 128
        %2287 = vxpose.xlu0.c.b16.cont [7/8] 0, 128
        %2288 = vxpose.xlu0.c.b16.end [8/8] 0, 128
        %v2289 = vpop.trf.xlu0
        %v2290 = vpop.trf.xlu0
        %v2291 = vpop.trf.xlu0
        %v2292 = vpop.trf.xlu0
        %v2293 = vpop.trf.xlu0
        %v2294 = vpop.trf.xlu0
        %v2295 = vpop.trf.xlu0
        %v2296 = vpop.trf.xlu0
        %2297 = vxpose.xlu0.c.b16.start [1/8] %v986, 128
        %2298 = vxpose.xlu0.c.b16.cont [2/8] 0, 128
        %2299 = vxpose.xlu0.c.b16.cont [3/8] 0, 128
        %2300 = vxpose.xlu0.c.b16.cont [4/8] 0, 128
        %2301 = vxpose.xlu0.c.b16.cont [5/8] 0, 128
        %2302 = vxpose.xlu0.c.b16.cont [6/8] 0, 128
        %2303 = vxpose.xlu0.c.b16.cont [7/8] 0, 128
        %2304 = vxpose.xlu0.c.b16.end [8/8] 0, 128
        %v2305 = vpop.trf.xlu0
        %v2306 = vpop.trf.xlu0
        %v2307 = vpop.trf.xlu0
        %v2308 = vpop.trf.xlu0
        %v2309 = vpop.trf.xlu0
        %v2310 = vpop.trf.xlu0
        %v2311 = vpop.trf.xlu0
        %v2312 = vpop.trf.xlu0
        %2313 = vxpose.xlu0.c.b16.start [1/8] %v989, 128
        %2314 = vxpose.xlu0.c.b16.cont [2/8] 0, 128
        %2315 = vxpose.xlu0.c.b16.cont [3/8] 0, 128
        %2316 = vxpose.xlu0.c.b16.cont [4/8] 0, 128
        %2317 = vxpose.xlu0.c.b16.cont [5/8] 0, 128
        %2318 = vxpose.xlu0.c.b16.cont [6/8] 0, 128
        %2319 = vxpose.xlu0.c.b16.cont [7/8] 0, 128
        %2320 = vxpose.xlu0.c.b16.end [8/8] 0, 128
        %v2321 = vpop.trf.xlu0
        %v2322 = vpop.trf.xlu0
        %v2323 = vpop.trf.xlu0
        %v2324 = vpop.trf.xlu0
        %v2325 = vpop.trf.xlu0
        %v2326 = vpop.trf.xlu0
        %v2327 = vpop.trf.xlu0
        %v2328 = vpop.trf.xlu0
        %2329 = vxpose.xlu0.c.b16.start [1/8] %v992, 128
        %2330 = vxpose.xlu0.c.b16.cont [2/8] 0, 128
        %2331 = vxpose.xlu0.c.b16.cont [3/8] 0, 128
        %2332 = vxpose.xlu0.c.b16.cont [4/8] 0, 128
        %2333 = vxpose.xlu0.c.b16.cont [5/8] 0, 128
        %2334 = vxpose.xlu0.c.b16.cont [6/8] 0, 128
        %2335 = vxpose.xlu0.c.b16.cont [7/8] 0, 128
        %2336 = vxpose.xlu0.c.b16.end [8/8] 0, 128
        %v2337 = vpop.trf.xlu0
        %v2338 = vpop.trf.xlu0
        %v2339 = vpop.trf.xlu0
        %v2340 = vpop.trf.xlu0
        %v2341 = vpop.trf.xlu0
        %v2342 = vpop.trf.xlu0
        %v2343 = vpop.trf.xlu0
        %v2344 = vpop.trf.xlu0
        %2345 = vxpose.xlu0.c.b16.start [1/8] %v995, 128
        %2346 = vxpose.xlu0.c.b16.cont [2/8] 0, 128
        %2347 = vxpose.xlu0.c.b16.cont [3/8] 0, 128
        %2348 = vxpose.xlu0.c.b16.cont [4/8] 0, 128
        %2349 = vxpose.xlu0.c.b16.cont [5/8] 0, 128
        %2350 = vxpose.xlu0.c.b16.cont [6/8] 0, 128
        %2351 = vxpose.xlu0.c.b16.cont [7/8] 0, 128
        %2352 = vxpose.xlu0.c.b16.end [8/8] 0, 128
        %v2353 = vpop.trf.xlu0
        %v2354 = vpop.trf.xlu0
        %v2355 = vpop.trf.xlu0
        %v2356 = vpop.trf.xlu0
        %v2357 = vpop.trf.xlu0
        %v2358 = vpop.trf.xlu0
        %v2359 = vpop.trf.xlu0
        %v2360 = vpop.trf.xlu0
        %2361 = vxpose.xlu0.c.b16.start [1/8] %v998, 128
        %2362 = vxpose.xlu0.c.b16.cont [2/8] 0, 128
        %2363 = vxpose.xlu0.c.b16.cont [3/8] 0, 128
        %2364 = vxpose.xlu0.c.b16.cont [4/8] 0, 128
        %2365 = vxpose.xlu0.c.b16.cont [5/8] 0, 128
        %2366 = vxpose.xlu0.c.b16.cont [6/8] 0, 128
        %2367 = vxpose.xlu0.c.b16.cont [7/8] 0, 128
        %2368 = vxpose.xlu0.c.b16.end [8/8] 0, 128
        %v2369 = vpop.trf.xlu0
        %v2370 = vpop.trf.xlu0
        %v2371 = vpop.trf.xlu0
        %v2372 = vpop.trf.xlu0
        %v2373 = vpop.trf.xlu0
        %v2374 = vpop.trf.xlu0
        %v2375 = vpop.trf.xlu0
        %v2376 = vpop.trf.xlu0
        %2377 = vxpose.xlu0.c.b16.start [1/8] %v1001, 128
        %2378 = vxpose.xlu0.c.b16.cont [2/8] 0, 128
        %2379 = vxpose.xlu0.c.b16.cont [3/8] 0, 128
        %2380 = vxpose.xlu0.c.b16.cont [4/8] 0, 128
        %2381 = vxpose.xlu0.c.b16.cont [5/8] 0, 128
        %2382 = vxpose.xlu0.c.b16.cont [6/8] 0, 128
        %2383 = vxpose.xlu0.c.b16.cont [7/8] 0, 128
        %2384 = vxpose.xlu0.c.b16.end [8/8] 0, 128
        %v2385 = vpop.trf.xlu0
        %v2386 = vpop.trf.xlu0
        %v2387 = vpop.trf.xlu0
        %v2388 = vpop.trf.xlu0
        %v2389 = vpop.trf.xlu0
        %v2390 = vpop.trf.xlu0
        %v2391 = vpop.trf.xlu0
        %v2392 = vpop.trf.xlu0
        %2393 = vxpose.xlu0.c.b16.start [1/8] %v1004, 128
        %2394 = vxpose.xlu0.c.b16.cont [2/8] 0, 128
        %2395 = vxpose.xlu0.c.b16.cont [3/8] 0, 128
        %2396 = vxpose.xlu0.c.b16.cont [4/8] 0, 128
        %2397 = vxpose.xlu0.c.b16.cont [5/8] 0, 128
        %2398 = vxpose.xlu0.c.b16.cont [6/8] 0, 128
        %2399 = vxpose.xlu0.c.b16.cont [7/8] 0, 128
        %2400 = vxpose.xlu0.c.b16.end [8/8] 0, 128
        %v2401 = vpop.trf.xlu0
        %v2402 = vpop.trf.xlu0
        %v2403 = vpop.trf.xlu0
        %v2404 = vpop.trf.xlu0
        %v2405 = vpop.trf.xlu0
        %v2406 = vpop.trf.xlu0
        %v2407 = vpop.trf.xlu0
        %v2408 = vpop.trf.xlu0
        %2409 = vxpose.xlu0.c.b16.start [1/8] %v1007, 128
        %2410 = vxpose.xlu0.c.b16.cont [2/8] 0, 128
        %2411 = vxpose.xlu0.c.b16.cont [3/8] 0, 128
        %2412 = vxpose.xlu0.c.b16.cont [4/8] 0, 128
        %2413 = vxpose.xlu0.c.b16.cont [5/8] 0, 128
        %2414 = vxpose.xlu0.c.b16.cont [6/8] 0, 128
        %2415 = vxpose.xlu0.c.b16.cont [7/8] 0, 128
        %2416 = vxpose.xlu0.c.b16.end [8/8] 0, 128
        %v2417 = vpop.trf.xlu0
        %v2418 = vpop.trf.xlu0
        %v2419 = vpop.trf.xlu0
        %v2420 = vpop.trf.xlu0
        %v2421 = vpop.trf.xlu0
        %v2422 = vpop.trf.xlu0
        %v2423 = vpop.trf.xlu0
        %v2424 = vpop.trf.xlu0
        %2425 = vxpose.xlu0.c.b16.start [1/8] %v1010, 128
        %2426 = vxpose.xlu0.c.b16.cont [2/8] 0, 128
        %2427 = vxpose.xlu0.c.b16.cont [3/8] 0, 128
        %2428 = vxpose.xlu0.c.b16.cont [4/8] 0, 128
        %2429 = vxpose.xlu0.c.b16.cont [5/8] 0, 128
        %2430 = vxpose.xlu0.c.b16.cont [6/8] 0, 128
        %2431 = vxpose.xlu0.c.b16.cont [7/8] 0, 128
        %2432 = vxpose.xlu0.c.b16.end [8/8] 0, 128
        %v2433 = vpop.trf.xlu0
        %v2434 = vpop.trf.xlu0
        %v2435 = vpop.trf.xlu0
        %v2436 = vpop.trf.xlu0
        %v2437 = vpop.trf.xlu0
        %v2438 = vpop.trf.xlu0
        %v2439 = vpop.trf.xlu0
        %v2440 = vpop.trf.xlu0
        %2441 = vxpose.xlu0.c.b16.start [1/8] %v1013, 128
        %2442 = vxpose.xlu0.c.b16.cont [2/8] 0, 128
        %2443 = vxpose.xlu0.c.b16.cont [3/8] 0, 128
        %2444 = vxpose.xlu0.c.b16.cont [4/8] 0, 128
        %2445 = vxpose.xlu0.c.b16.cont [5/8] 0, 128
        %2446 = vxpose.xlu0.c.b16.cont [6/8] 0, 128
        %2447 = vxpose.xlu0.c.b16.cont [7/8] 0, 128
        %2448 = vxpose.xlu0.c.b16.end [8/8] 0, 128
        %v2449 = vpop.trf.xlu0
        %v2450 = vpop.trf.xlu0
        %v2451 = vpop.trf.xlu0
        %v2452 = vpop.trf.xlu0
        %v2453 = vpop.trf.xlu0
        %v2454 = vpop.trf.xlu0
        %v2455 = vpop.trf.xlu0
        %v2456 = vpop.trf.xlu0
        %v2458 = vsel %vm1271, %v2209, 0
        %v2461 = vsel %vm1271, %v2185, 0
        %2463 = vmatprep.subr.bf16.mxu0 0
        %2464 = vmatpush1.bf16.xpose.msra.mxu0 %v2461
        %2465 = vmatprep.subr.bf16.mxu0 0
        %2466 = vmatpush1.bf16.xpose.msra.mxu0 0
        %2467 = vmatprep.subr.bf16.mxu0 0
        %2468 = vmatpush1.bf16.xpose.msra.mxu0 0
        %2469 = vmatprep.subr.bf16.mxu0 0
        %2470 = vmatpush1.bf16.xpose.msra.mxu0 0
        %2471 = vmatprep.subr.bf16.mxu0 0
        %2472 = vmatpush1.bf16.xpose.msra.mxu0 0
        %2473 = vmatprep.subr.bf16.mxu0 0
        %2474 = vmatpush1.bf16.xpose.msra.mxu0 0
        %2475 = vmatprep.subr.bf16.mxu0 0
        %2476 = vmatpush1.bf16.xpose.msra.mxu0 0
        %2477 = vmatprep.subr.bf16.mxu0 0
        %2478 = vmatpush1.bf16.xpose.msra.mxu0 0
        %2479 = vmatprep.subr.bf16.mxu0 0
        %2480 = vmatpush1.bf16.xpose.msra.mxu0 0
        %2481 = vmatprep.subr.bf16.mxu0 0
        %2482 = vmatpush1.bf16.xpose.msra.mxu0 0
        %2483 = vmatprep.subr.bf16.mxu0 0
        %2484 = vmatpush1.bf16.xpose.msra.mxu0 0
        %2485 = vmatprep.subr.bf16.mxu0 0
        %2486 = vmatpush1.bf16.xpose.msra.mxu0 0
        %2487 = vmatprep.subr.bf16.mxu0 0
        %2488 = vmatpush1.bf16.xpose.msra.mxu0 0
        %2489 = vmatprep.subr.bf16.mxu0 0
        %2490 = vmatpush1.bf16.xpose.msra.mxu0 0
        %2491 = vmatprep.subr.bf16.mxu0 0
        %2492 = vmatpush1.bf16.xpose.msra.mxu0 0
        %2493 = vmatprep.subr.bf16.mxu0 0
        %2494 = vmatpush1.bf16.xpose.msra.mxu0 0
        %2495 = vmatprep.mubr.bf16.mxu0 0
        %2496 = vmatmul.mubr.bf16.gmra.mrb[0].mxu0 %v2458
        %v2497 = vpop.f32.mrb[0].mxu0
        %v2498 = vadd.f32 0.0, %v2497
        %v2499 = vpop.f32.mrb[0].mxu0
        %v2500 = vpop.f32.mrb[0].mxu0
        %v2501 = vpop.f32.mrb[0].mxu0
        %2502 = vdwg.mxu0
        %v2504 = vsel %vm1271, %v2225, 0
        %v2507 = vsel %vm1271, %v2186, 0
        %2509 = vmatprep.subr.bf16.mxu0 0
        %2510 = vmatpush1.bf16.xpose.msra.mxu0 %v2507
        %2511 = vmatprep.subr.bf16.mxu0 0
        %2512 = vmatpush1.bf16.xpose.msra.mxu0 0
        %2513 = vmatprep.subr.bf16.mxu0 0
        %2514 = vmatpush1.bf16.xpose.msra.mxu0 0
        %2515 = vmatprep.subr.bf16.mxu0 0
        %2516 = vmatpush1.bf16.xpose.msra.mxu0 0
        %2517 = vmatprep.subr.bf16.mxu0 0
        %2518 = vmatpush1.bf16.xpose.msra.mxu0 0
        %2519 = vmatprep.subr.bf16.mxu0 0
        %2520 = vmatpush1.bf16.xpose.msra.mxu0 0
        %2521 = vmatprep.subr.bf16.mxu0 0
        %2522 = vmatpush1.bf16.xpose.msra.mxu0 0
        %2523 = vmatprep.subr.bf16.mxu0 0
        %2524 = vmatpush1.bf16.xpose.msra.mxu0 0
        %2525 = vmatprep.subr.bf16.mxu0 0
        %2526 = vmatpush1.bf16.xpose.msra.mxu0 0
        %2527 = vmatprep.subr.bf16.mxu0 0
        %2528 = vmatpush1.bf16.xpose.msra.mxu0 0
        %2529 = vmatprep.subr.bf16.mxu0 0
        %2530 = vmatpush1.bf16.xpose.msra.mxu0 0
        %2531 = vmatprep.subr.bf16.mxu0 0
        %2532 = vmatpush1.bf16.xpose.msra.mxu0 0
        %2533 = vmatprep.subr.bf16.mxu0 0
        %2534 = vmatpush1.bf16.xpose.msra.mxu0 0
        %2535 = vmatprep.subr.bf16.mxu0 0
        %2536 = vmatpush1.bf16.xpose.msra.mxu0 0
        %2537 = vmatprep.subr.bf16.mxu0 0
        %2538 = vmatpush1.bf16.xpose.msra.mxu0 0
        %2539 = vmatprep.subr.bf16.mxu0 0
        %2540 = vmatpush1.bf16.xpose.msra.mxu0 0
        %2541 = vmatprep.mubr.bf16.mxu0 0
        %2542 = vmatmul.mubr.bf16.gmra.mrb[0].mxu0 %v2504
        %v2543 = vpop.f32.mrb[0].mxu0
        %v2544 = vadd.f32 0.0, %v2543
        %v2545 = vpop.f32.mrb[0].mxu0
        %v2546 = vpop.f32.mrb[0].mxu0
        %v2547 = vpop.f32.mrb[0].mxu0
        %2548 = vdwg.mxu0
        %v2550 = vsel %vm1271, %v2241, 0
        %v2553 = vsel %vm1271, %v2187, 0
        %2555 = vmatprep.subr.bf16.mxu0 0
        %2556 = vmatpush1.bf16.xpose.msra.mxu0 %v2553
        %2557 = vmatprep.subr.bf16.mxu0 0
        %2558 = vmatpush1.bf16.xpose.msra.mxu0 0
        %2559 = vmatprep.subr.bf16.mxu0 0
        %2560 = vmatpush1.bf16.xpose.msra.mxu0 0
        %2561 = vmatprep.subr.bf16.mxu0 0
        %2562 = vmatpush1.bf16.xpose.msra.mxu0 0
        %2563 = vmatprep.subr.bf16.mxu0 0
        %2564 = vmatpush1.bf16.xpose.msra.mxu0 0
        %2565 = vmatprep.subr.bf16.mxu0 0
        %2566 = vmatpush1.bf16.xpose.msra.mxu0 0
        %2567 = vmatprep.subr.bf16.mxu0 0
        %2568 = vmatpush1.bf16.xpose.msra.mxu0 0
        %2569 = vmatprep.subr.bf16.mxu0 0
        %2570 = vmatpush1.bf16.xpose.msra.mxu0 0
        %2571 = vmatprep.subr.bf16.mxu0 0
        %2572 = vmatpush1.bf16.xpose.msra.mxu0 0
        %2573 = vmatprep.subr.bf16.mxu0 0
        %2574 = vmatpush1.bf16.xpose.msra.mxu0 0
        %2575 = vmatprep.subr.bf16.mxu0 0
        %2576 = vmatpush1.bf16.xpose.msra.mxu0 0
        %2577 = vmatprep.subr.bf16.mxu0 0
        %2578 = vmatpush1.bf16.xpose.msra.mxu0 0
        %2579 = vmatprep.subr.bf16.mxu0 0
        %2580 = vmatpush1.bf16.xpose.msra.mxu0 0
        %2581 = vmatprep.subr.bf16.mxu0 0
        %2582 = vmatpush1.bf16.xpose.msra.mxu0 0
        %2583 = vmatprep.subr.bf16.mxu0 0
        %2584 = vmatpush1.bf16.xpose.msra.mxu0 0
        %2585 = vmatprep.subr.bf16.mxu0 0
        %2586 = vmatpush1.bf16.xpose.msra.mxu0 0
        %2587 = vmatprep.mubr.bf16.mxu0 0
        %2588 = vmatmul.mubr.bf16.gmra.mrb[0].mxu0 %v2550
        %v2589 = vpop.f32.mrb[0].mxu0
        %v2590 = vadd.f32 0.0, %v2589
        %v2591 = vpop.f32.mrb[0].mxu0
        %v2592 = vpop.f32.mrb[0].mxu0
        %v2593 = vpop.f32.mrb[0].mxu0
        %2594 = vdwg.mxu0
        %v2596 = vsel %vm1271, %v2257, 0
        %v2599 = vsel %vm1271, %v2188, 0
        %2601 = vmatprep.subr.bf16.mxu0 0
        %2602 = vmatpush1.bf16.xpose.msra.mxu0 %v2599
        %2603 = vmatprep.subr.bf16.mxu0 0
        %2604 = vmatpush1.bf16.xpose.msra.mxu0 0
        %2605 = vmatprep.subr.bf16.mxu0 0
        %2606 = vmatpush1.bf16.xpose.msra.mxu0 0
        %2607 = vmatprep.subr.bf16.mxu0 0
        %2608 = vmatpush1.bf16.xpose.msra.mxu0 0
        %2609 = vmatprep.subr.bf16.mxu0 0
        %2610 = vmatpush1.bf16.xpose.msra.mxu0 0
        %2611 = vmatprep.subr.bf16.mxu0 0
        %2612 = vmatpush1.bf16.xpose.msra.mxu0 0
        %2613 = vmatprep.subr.bf16.mxu0 0
        %2614 = vmatpush1.bf16.xpose.msra.mxu0 0
        %2615 = vmatprep.subr.bf16.mxu0 0
        %2616 = vmatpush1.bf16.xpose.msra.mxu0 0
        %2617 = vmatprep.subr.bf16.mxu0 0
        %2618 = vmatpush1.bf16.xpose.msra.mxu0 0
        %2619 = vmatprep.subr.bf16.mxu0 0
        %2620 = vmatpush1.bf16.xpose.msra.mxu0 0
        %2621 = vmatprep.subr.bf16.mxu0 0
        %2622 = vmatpush1.bf16.xpose.msra.mxu0 0
        %2623 = vmatprep.subr.bf16.mxu0 0
        %2624 = vmatpush1.bf16.xpose.msra.mxu0 0
        %2625 = vmatprep.subr.bf16.mxu0 0
        %2626 = vmatpush1.bf16.xpose.msra.mxu0 0
        %2627 = vmatprep.subr.bf16.mxu0 0
        %2628 = vmatpush1.bf16.xpose.msra.mxu0 0
        %2629 = vmatprep.subr.bf16.mxu0 0
        %2630 = vmatpush1.bf16.xpose.msra.mxu0 0
        %2631 = vmatprep.subr.bf16.mxu0 0
        %2632 = vmatpush1.bf16.xpose.msra.mxu0 0
        %2633 = vmatprep.mubr.bf16.mxu0 0
        %2634 = vmatmul.mubr.bf16.gmra.mrb[0].mxu0 %v2596
        %v2635 = vpop.f32.mrb[0].mxu0
        %v2636 = vadd.f32 0.0, %v2635
        %v2637 = vpop.f32.mrb[0].mxu0
        %v2638 = vpop.f32.mrb[0].mxu0
        %v2639 = vpop.f32.mrb[0].mxu0
        %2640 = vdwg.mxu0
        %v2642 = vsel %vm1271, %v2273, 0
        %v2645 = vsel %vm1271, %v2189, 0
        %2647 = vmatprep.subr.bf16.mxu0 0
        %2648 = vmatpush1.bf16.xpose.msra.mxu0 %v2645
        %2649 = vmatprep.subr.bf16.mxu0 0
        %2650 = vmatpush1.bf16.xpose.msra.mxu0 0
        %2651 = vmatprep.subr.bf16.mxu0 0
        %2652 = vmatpush1.bf16.xpose.msra.mxu0 0
        %2653 = vmatprep.subr.bf16.mxu0 0
        %2654 = vmatpush1.bf16.xpose.msra.mxu0 0
        %2655 = vmatprep.subr.bf16.mxu0 0
        %2656 = vmatpush1.bf16.xpose.msra.mxu0 0
        %2657 = vmatprep.subr.bf16.mxu0 0
        %2658 = vmatpush1.bf16.xpose.msra.mxu0 0
        %2659 = vmatprep.subr.bf16.mxu0 0
        %2660 = vmatpush1.bf16.xpose.msra.mxu0 0
        %2661 = vmatprep.subr.bf16.mxu0 0
        %2662 = vmatpush1.bf16.xpose.msra.mxu0 0
        %2663 = vmatprep.subr.bf16.mxu0 0
        %2664 = vmatpush1.bf16.xpose.msra.mxu0 0
        %2665 = vmatprep.subr.bf16.mxu0 0
        %2666 = vmatpush1.bf16.xpose.msra.mxu0 0
        %2667 = vmatprep.subr.bf16.mxu0 0
        %2668 = vmatpush1.bf16.xpose.msra.mxu0 0
        %2669 = vmatprep.subr.bf16.mxu0 0
        %2670 = vmatpush1.bf16.xpose.msra.mxu0 0
        %2671 = vmatprep.subr.bf16.mxu0 0
        %2672 = vmatpush1.bf16.xpose.msra.mxu0 0
        %2673 = vmatprep.subr.bf16.mxu0 0
        %2674 = vmatpush1.bf16.xpose.msra.mxu0 0
        %2675 = vmatprep.subr.bf16.mxu0 0
        %2676 = vmatpush1.bf16.xpose.msra.mxu0 0
        %2677 = vmatprep.subr.bf16.mxu0 0
        %2678 = vmatpush1.bf16.xpose.msra.mxu0 0
        %2679 = vmatprep.mubr.bf16.mxu0 0
        %2680 = vmatmul.mubr.bf16.gmra.mrb[0].mxu0 %v2642
        %v2681 = vpop.f32.mrb[0].mxu0
        %v2682 = vadd.f32 0.0, %v2681
        %v2683 = vpop.f32.mrb[0].mxu0
        %v2684 = vpop.f32.mrb[0].mxu0
        %v2685 = vpop.f32.mrb[0].mxu0
        %2686 = vdwg.mxu0
        %v2688 = vsel %vm1271, %v2289, 0
        %v2691 = vsel %vm1271, %v2190, 0
        %2693 = vmatprep.subr.bf16.mxu0 0
        %2694 = vmatpush1.bf16.xpose.msra.mxu0 %v2691
        %2695 = vmatprep.subr.bf16.mxu0 0
        %2696 = vmatpush1.bf16.xpose.msra.mxu0 0
        %2697 = vmatprep.subr.bf16.mxu0 0
        %2698 = vmatpush1.bf16.xpose.msra.mxu0 0
        %2699 = vmatprep.subr.bf16.mxu0 0
        %2700 = vmatpush1.bf16.xpose.msra.mxu0 0
        %2701 = vmatprep.subr.bf16.mxu0 0
        %2702 = vmatpush1.bf16.xpose.msra.mxu0 0
        %2703 = vmatprep.subr.bf16.mxu0 0
        %2704 = vmatpush1.bf16.xpose.msra.mxu0 0
        %2705 = vmatprep.subr.bf16.mxu0 0
        %2706 = vmatpush1.bf16.xpose.msra.mxu0 0
        %2707 = vmatprep.subr.bf16.mxu0 0
        %2708 = vmatpush1.bf16.xpose.msra.mxu0 0
        %2709 = vmatprep.subr.bf16.mxu0 0
        %2710 = vmatpush1.bf16.xpose.msra.mxu0 0
        %2711 = vmatprep.subr.bf16.mxu0 0
        %2712 = vmatpush1.bf16.xpose.msra.mxu0 0
        %2713 = vmatprep.subr.bf16.mxu0 0
        %2714 = vmatpush1.bf16.xpose.msra.mxu0 0
        %2715 = vmatprep.subr.bf16.mxu0 0
        %2716 = vmatpush1.bf16.xpose.msra.mxu0 0
        %2717 = vmatprep.subr.bf16.mxu0 0
        %2718 = vmatpush1.bf16.xpose.msra.mxu0 0
        %2719 = vmatprep.subr.bf16.mxu0 0
        %2720 = vmatpush1.bf16.xpose.msra.mxu0 0
        %2721 = vmatprep.subr.bf16.mxu0 0
        %2722 = vmatpush1.bf16.xpose.msra.mxu0 0
        %2723 = vmatprep.subr.bf16.mxu0 0
        %2724 = vmatpush1.bf16.xpose.msra.mxu0 0
        %2725 = vmatprep.mubr.bf16.mxu0 0
        %2726 = vmatmul.mubr.bf16.gmra.mrb[0].mxu0 %v2688
        %v2727 = vpop.f32.mrb[0].mxu0
        %v2728 = vadd.f32 0.0, %v2727
        %v2729 = vpop.f32.mrb[0].mxu0
        %v2730 = vpop.f32.mrb[0].mxu0
        %v2731 = vpop.f32.mrb[0].mxu0
        %2732 = vdwg.mxu0
        %v2734 = vsel %vm1271, %v2305, 0
        %v2737 = vsel %vm1271, %v2191, 0
        %2739 = vmatprep.subr.bf16.mxu0 0
        %2740 = vmatpush1.bf16.xpose.msra.mxu0 %v2737
        %2741 = vmatprep.subr.bf16.mxu0 0
        %2742 = vmatpush1.bf16.xpose.msra.mxu0 0
        %2743 = vmatprep.subr.bf16.mxu0 0
        %2744 = vmatpush1.bf16.xpose.msra.mxu0 0
        %2745 = vmatprep.subr.bf16.mxu0 0
        %2746 = vmatpush1.bf16.xpose.msra.mxu0 0
        %2747 = vmatprep.subr.bf16.mxu0 0
        %2748 = vmatpush1.bf16.xpose.msra.mxu0 0
        %2749 = vmatprep.subr.bf16.mxu0 0
        %2750 = vmatpush1.bf16.xpose.msra.mxu0 0
        %2751 = vmatprep.subr.bf16.mxu0 0
        %2752 = vmatpush1.bf16.xpose.msra.mxu0 0
        %2753 = vmatprep.subr.bf16.mxu0 0
        %2754 = vmatpush1.bf16.xpose.msra.mxu0 0
        %2755 = vmatprep.subr.bf16.mxu0 0
        %2756 = vmatpush1.bf16.xpose.msra.mxu0 0
        %2757 = vmatprep.subr.bf16.mxu0 0
        %2758 = vmatpush1.bf16.xpose.msra.mxu0 0
        %2759 = vmatprep.subr.bf16.mxu0 0
        %2760 = vmatpush1.bf16.xpose.msra.mxu0 0
        %2761 = vmatprep.subr.bf16.mxu0 0
        %2762 = vmatpush1.bf16.xpose.msra.mxu0 0
        %2763 = vmatprep.subr.bf16.mxu0 0
        %2764 = vmatpush1.bf16.xpose.msra.mxu0 0
        %2765 = vmatprep.subr.bf16.mxu0 0
        %2766 = vmatpush1.bf16.xpose.msra.mxu0 0
        %2767 = vmatprep.subr.bf16.mxu0 0
        %2768 = vmatpush1.bf16.xpose.msra.mxu0 0
        %2769 = vmatprep.subr.bf16.mxu0 0
        %2770 = vmatpush1.bf16.xpose.msra.mxu0 0
        %2771 = vmatprep.mubr.bf16.mxu0 0
        %2772 = vmatmul.mubr.bf16.gmra.mrb[0].mxu0 %v2734
        %v2773 = vpop.f32.mrb[0].mxu0
        %v2774 = vadd.f32 0.0, %v2773
        %v2775 = vpop.f32.mrb[0].mxu0
        %v2776 = vpop.f32.mrb[0].mxu0
        %v2777 = vpop.f32.mrb[0].mxu0
        %2778 = vdwg.mxu0
        %v2780 = vsel %vm1271, %v2321, 0
        %v2783 = vsel %vm1271, %v2192, 0
        %2785 = vmatprep.subr.bf16.mxu0 0
        %2786 = vmatpush1.bf16.xpose.msra.mxu0 %v2783
        %2787 = vmatprep.subr.bf16.mxu0 0
        %2788 = vmatpush1.bf16.xpose.msra.mxu0 0
        %2789 = vmatprep.subr.bf16.mxu0 0
        %2790 = vmatpush1.bf16.xpose.msra.mxu0 0
        %2791 = vmatprep.subr.bf16.mxu0 0
        %2792 = vmatpush1.bf16.xpose.msra.mxu0 0
        %2793 = vmatprep.subr.bf16.mxu0 0
        %2794 = vmatpush1.bf16.xpose.msra.mxu0 0
        %2795 = vmatprep.subr.bf16.mxu0 0
        %2796 = vmatpush1.bf16.xpose.msra.mxu0 0
        %2797 = vmatprep.subr.bf16.mxu0 0
        %2798 = vmatpush1.bf16.xpose.msra.mxu0 0
        %2799 = vmatprep.subr.bf16.mxu0 0
        %2800 = vmatpush1.bf16.xpose.msra.mxu0 0
        %2801 = vmatprep.subr.bf16.mxu0 0
        %2802 = vmatpush1.bf16.xpose.msra.mxu0 0
        %2803 = vmatprep.subr.bf16.mxu0 0
        %2804 = vmatpush1.bf16.xpose.msra.mxu0 0
        %2805 = vmatprep.subr.bf16.mxu0 0
        %2806 = vmatpush1.bf16.xpose.msra.mxu0 0
        %2807 = vmatprep.subr.bf16.mxu0 0
        %2808 = vmatpush1.bf16.xpose.msra.mxu0 0
        %2809 = vmatprep.subr.bf16.mxu0 0
        %2810 = vmatpush1.bf16.xpose.msra.mxu0 0
        %2811 = vmatprep.subr.bf16.mxu0 0
        %2812 = vmatpush1.bf16.xpose.msra.mxu0 0
        %2813 = vmatprep.subr.bf16.mxu0 0
        %2814 = vmatpush1.bf16.xpose.msra.mxu0 0
        %2815 = vmatprep.subr.bf16.mxu0 0
        %2816 = vmatpush1.bf16.xpose.msra.mxu0 0
        %2817 = vmatprep.mubr.bf16.mxu0 0
        %2818 = vmatmul.mubr.bf16.gmra.mrb[0].mxu0 %v2780
        %v2819 = vpop.f32.mrb[0].mxu0
        %v2820 = vadd.f32 0.0, %v2819
        %v2821 = vpop.f32.mrb[0].mxu0
        %v2822 = vpop.f32.mrb[0].mxu0
        %v2823 = vpop.f32.mrb[0].mxu0
        %2824 = vdwg.mxu0
        %v2826 = vsel %vm1271, %v2337, 0
        %v2829 = vsel %vm1271, %v2193, 0
        %2831 = vmatprep.subr.bf16.mxu0 0
        %2832 = vmatpush1.bf16.xpose.msra.mxu0 %v2829
        %2833 = vmatprep.subr.bf16.mxu0 0
        %2834 = vmatpush1.bf16.xpose.msra.mxu0 0
        %2835 = vmatprep.subr.bf16.mxu0 0
        %2836 = vmatpush1.bf16.xpose.msra.mxu0 0
        %2837 = vmatprep.subr.bf16.mxu0 0
        %2838 = vmatpush1.bf16.xpose.msra.mxu0 0
        %2839 = vmatprep.subr.bf16.mxu0 0
        %2840 = vmatpush1.bf16.xpose.msra.mxu0 0
        %2841 = vmatprep.subr.bf16.mxu0 0
        %2842 = vmatpush1.bf16.xpose.msra.mxu0 0
        %2843 = vmatprep.subr.bf16.mxu0 0
        %2844 = vmatpush1.bf16.xpose.msra.mxu0 0
        %2845 = vmatprep.subr.bf16.mxu0 0
        %2846 = vmatpush1.bf16.xpose.msra.mxu0 0
        %2847 = vmatprep.subr.bf16.mxu0 0
        %2848 = vmatpush1.bf16.xpose.msra.mxu0 0
        %2849 = vmatprep.subr.bf16.mxu0 0
        %2850 = vmatpush1.bf16.xpose.msra.mxu0 0
        %2851 = vmatprep.subr.bf16.mxu0 0
        %2852 = vmatpush1.bf16.xpose.msra.mxu0 0
        %2853 = vmatprep.subr.bf16.mxu0 0
        %2854 = vmatpush1.bf16.xpose.msra.mxu0 0
        %2855 = vmatprep.subr.bf16.mxu0 0
        %2856 = vmatpush1.bf16.xpose.msra.mxu0 0
        %2857 = vmatprep.subr.bf16.mxu0 0
        %2858 = vmatpush1.bf16.xpose.msra.mxu0 0
        %2859 = vmatprep.subr.bf16.mxu0 0
        %2860 = vmatpush1.bf16.xpose.msra.mxu0 0
        %2861 = vmatprep.subr.bf16.mxu0 0
        %2862 = vmatpush1.bf16.xpose.msra.mxu0 0
        %2863 = vmatprep.mubr.bf16.mxu0 0
        %2864 = vmatmul.mubr.bf16.gmra.mrb[0].mxu0 %v2826
        %v2865 = vpop.f32.mrb[0].mxu0
        %v2866 = vadd.f32 0.0, %v2865
        %v2867 = vpop.f32.mrb[0].mxu0
        %v2868 = vpop.f32.mrb[0].mxu0
        %v2869 = vpop.f32.mrb[0].mxu0
        %2870 = vdwg.mxu0
        %v2872 = vsel %vm1271, %v2353, 0
        %v2875 = vsel %vm1271, %v2194, 0
        %2877 = vmatprep.subr.bf16.mxu0 0
        %2878 = vmatpush1.bf16.xpose.msra.mxu0 %v2875
        %2879 = vmatprep.subr.bf16.mxu0 0
        %2880 = vmatpush1.bf16.xpose.msra.mxu0 0
        %2881 = vmatprep.subr.bf16.mxu0 0
        %2882 = vmatpush1.bf16.xpose.msra.mxu0 0
        %2883 = vmatprep.subr.bf16.mxu0 0
        %2884 = vmatpush1.bf16.xpose.msra.mxu0 0
        %2885 = vmatprep.subr.bf16.mxu0 0
        %2886 = vmatpush1.bf16.xpose.msra.mxu0 0
        %2887 = vmatprep.subr.bf16.mxu0 0
        %2888 = vmatpush1.bf16.xpose.msra.mxu0 0
        %2889 = vmatprep.subr.bf16.mxu0 0
        %2890 = vmatpush1.bf16.xpose.msra.mxu0 0
        %2891 = vmatprep.subr.bf16.mxu0 0
        %2892 = vmatpush1.bf16.xpose.msra.mxu0 0
        %2893 = vmatprep.subr.bf16.mxu0 0
        %2894 = vmatpush1.bf16.xpose.msra.mxu0 0
        %2895 = vmatprep.subr.bf16.mxu0 0
        %2896 = vmatpush1.bf16.xpose.msra.mxu0 0
        %2897 = vmatprep.subr.bf16.mxu0 0
        %2898 = vmatpush1.bf16.xpose.msra.mxu0 0
        %2899 = vmatprep.subr.bf16.mxu0 0
        %2900 = vmatpush1.bf16.xpose.msra.mxu0 0
        %2901 = vmatprep.subr.bf16.mxu0 0
        %2902 = vmatpush1.bf16.xpose.msra.mxu0 0
        %2903 = vmatprep.subr.bf16.mxu0 0
        %2904 = vmatpush1.bf16.xpose.msra.mxu0 0
        %2905 = vmatprep.subr.bf16.mxu0 0
        %2906 = vmatpush1.bf16.xpose.msra.mxu0 0
        %2907 = vmatprep.subr.bf16.mxu0 0
        %2908 = vmatpush1.bf16.xpose.msra.mxu0 0
        %2909 = vmatprep.mubr.bf16.mxu0 0
        %2910 = vmatmul.mubr.bf16.gmra.mrb[0].mxu0 %v2872
        %v2911 = vpop.f32.mrb[0].mxu0
        %v2912 = vadd.f32 0.0, %v2911
        %v2913 = vpop.f32.mrb[0].mxu0
        %v2914 = vpop.f32.mrb[0].mxu0
        %v2915 = vpop.f32.mrb[0].mxu0
        %2916 = vdwg.mxu0
        %v2918 = vsel %vm1271, %v2369, 0
        %v2921 = vsel %vm1271, %v2195, 0
        %2923 = vmatprep.subr.bf16.mxu0 0
        %2924 = vmatpush1.bf16.xpose.msra.mxu0 %v2921
        %2925 = vmatprep.subr.bf16.mxu0 0
        %2926 = vmatpush1.bf16.xpose.msra.mxu0 0
        %2927 = vmatprep.subr.bf16.mxu0 0
        %2928 = vmatpush1.bf16.xpose.msra.mxu0 0
        %2929 = vmatprep.subr.bf16.mxu0 0
        %2930 = vmatpush1.bf16.xpose.msra.mxu0 0
        %2931 = vmatprep.subr.bf16.mxu0 0
        %2932 = vmatpush1.bf16.xpose.msra.mxu0 0
        %2933 = vmatprep.subr.bf16.mxu0 0
        %2934 = vmatpush1.bf16.xpose.msra.mxu0 0
        %2935 = vmatprep.subr.bf16.mxu0 0
        %2936 = vmatpush1.bf16.xpose.msra.mxu0 0
        %2937 = vmatprep.subr.bf16.mxu0 0
        %2938 = vmatpush1.bf16.xpose.msra.mxu0 0
        %2939 = vmatprep.subr.bf16.mxu0 0
        %2940 = vmatpush1.bf16.xpose.msra.mxu0 0
        %2941 = vmatprep.subr.bf16.mxu0 0
        %2942 = vmatpush1.bf16.xpose.msra.mxu0 0
        %2943 = vmatprep.subr.bf16.mxu0 0
        %2944 = vmatpush1.bf16.xpose.msra.mxu0 0
        %2945 = vmatprep.subr.bf16.mxu0 0
        %2946 = vmatpush1.bf16.xpose.msra.mxu0 0
        %2947 = vmatprep.subr.bf16.mxu0 0
        %2948 = vmatpush1.bf16.xpose.msra.mxu0 0
        %2949 = vmatprep.subr.bf16.mxu0 0
        %2950 = vmatpush1.bf16.xpose.msra.mxu0 0
        %2951 = vmatprep.subr.bf16.mxu0 0
        %2952 = vmatpush1.bf16.xpose.msra.mxu0 0
        %2953 = vmatprep.subr.bf16.mxu0 0
        %2954 = vmatpush1.bf16.xpose.msra.mxu0 0
        %2955 = vmatprep.mubr.bf16.mxu0 0
        %2956 = vmatmul.mubr.bf16.gmra.mrb[0].mxu0 %v2918
        %v2957 = vpop.f32.mrb[0].mxu0
        %v2958 = vadd.f32 0.0, %v2957
        %v2959 = vpop.f32.mrb[0].mxu0
        %v2960 = vpop.f32.mrb[0].mxu0
        %v2961 = vpop.f32.mrb[0].mxu0
        %2962 = vdwg.mxu0
        %v2964 = vsel %vm1271, %v2385, 0
        %v2967 = vsel %vm1271, %v2196, 0
        %2969 = vmatprep.subr.bf16.mxu0 0
        %2970 = vmatpush1.bf16.xpose.msra.mxu0 %v2967
        %2971 = vmatprep.subr.bf16.mxu0 0
        %2972 = vmatpush1.bf16.xpose.msra.mxu0 0
        %2973 = vmatprep.subr.bf16.mxu0 0
        %2974 = vmatpush1.bf16.xpose.msra.mxu0 0
        %2975 = vmatprep.subr.bf16.mxu0 0
        %2976 = vmatpush1.bf16.xpose.msra.mxu0 0
        %2977 = vmatprep.subr.bf16.mxu0 0
        %2978 = vmatpush1.bf16.xpose.msra.mxu0 0
        %2979 = vmatprep.subr.bf16.mxu0 0
        %2980 = vmatpush1.bf16.xpose.msra.mxu0 0
        %2981 = vmatprep.subr.bf16.mxu0 0
        %2982 = vmatpush1.bf16.xpose.msra.mxu0 0
        %2983 = vmatprep.subr.bf16.mxu0 0
        %2984 = vmatpush1.bf16.xpose.msra.mxu0 0
        %2985 = vmatprep.subr.bf16.mxu0 0
        %2986 = vmatpush1.bf16.xpose.msra.mxu0 0
        %2987 = vmatprep.subr.bf16.mxu0 0
        %2988 = vmatpush1.bf16.xpose.msra.mxu0 0
        %2989 = vmatprep.subr.bf16.mxu0 0
        %2990 = vmatpush1.bf16.xpose.msra.mxu0 0
        %2991 = vmatprep.subr.bf16.mxu0 0
        %2992 = vmatpush1.bf16.xpose.msra.mxu0 0
        %2993 = vmatprep.subr.bf16.mxu0 0
        %2994 = vmatpush1.bf16.xpose.msra.mxu0 0
        %2995 = vmatprep.subr.bf16.mxu0 0
        %2996 = vmatpush1.bf16.xpose.msra.mxu0 0
        %2997 = vmatprep.subr.bf16.mxu0 0
        %2998 = vmatpush1.bf16.xpose.msra.mxu0 0
        %2999 = vmatprep.subr.bf16.mxu0 0
        %3000 = vmatpush1.bf16.xpose.msra.mxu0 0
        %3001 = vmatprep.mubr.bf16.mxu0 0
        %3002 = vmatmul.mubr.bf16.gmra.mrb[0].mxu0 %v2964
        %v3003 = vpop.f32.mrb[0].mxu0
        %v3004 = vadd.f32 0.0, %v3003
        %v3005 = vpop.f32.mrb[0].mxu0
        %v3006 = vpop.f32.mrb[0].mxu0
        %v3007 = vpop.f32.mrb[0].mxu0
        %3008 = vdwg.mxu0
        %v3010 = vsel %vm1271, %v2401, 0
        %v3013 = vsel %vm1271, %v2197, 0
        %3015 = vmatprep.subr.bf16.mxu0 0
        %3016 = vmatpush1.bf16.xpose.msra.mxu0 %v3013
        %3017 = vmatprep.subr.bf16.mxu0 0
        %3018 = vmatpush1.bf16.xpose.msra.mxu0 0
        %3019 = vmatprep.subr.bf16.mxu0 0
        %3020 = vmatpush1.bf16.xpose.msra.mxu0 0
        %3021 = vmatprep.subr.bf16.mxu0 0
        %3022 = vmatpush1.bf16.xpose.msra.mxu0 0
        %3023 = vmatprep.subr.bf16.mxu0 0
        %3024 = vmatpush1.bf16.xpose.msra.mxu0 0
        %3025 = vmatprep.subr.bf16.mxu0 0
        %3026 = vmatpush1.bf16.xpose.msra.mxu0 0
        %3027 = vmatprep.subr.bf16.mxu0 0
        %3028 = vmatpush1.bf16.xpose.msra.mxu0 0
        %3029 = vmatprep.subr.bf16.mxu0 0
        %3030 = vmatpush1.bf16.xpose.msra.mxu0 0
        %3031 = vmatprep.subr.bf16.mxu0 0
        %3032 = vmatpush1.bf16.xpose.msra.mxu0 0
        %3033 = vmatprep.subr.bf16.mxu0 0
        %3034 = vmatpush1.bf16.xpose.msra.mxu0 0
        %3035 = vmatprep.subr.bf16.mxu0 0
        %3036 = vmatpush1.bf16.xpose.msra.mxu0 0
        %3037 = vmatprep.subr.bf16.mxu0 0
        %3038 = vmatpush1.bf16.xpose.msra.mxu0 0
        %3039 = vmatprep.subr.bf16.mxu0 0
        %3040 = vmatpush1.bf16.xpose.msra.mxu0 0
        %3041 = vmatprep.subr.bf16.mxu0 0
        %3042 = vmatpush1.bf16.xpose.msra.mxu0 0
        %3043 = vmatprep.subr.bf16.mxu0 0
        %3044 = vmatpush1.bf16.xpose.msra.mxu0 0
        %3045 = vmatprep.subr.bf16.mxu0 0
        %3046 = vmatpush1.bf16.xpose.msra.mxu0 0
        %3047 = vmatprep.mubr.bf16.mxu0 0
        %3048 = vmatmul.mubr.bf16.gmra.mrb[0].mxu0 %v3010
        %v3049 = vpop.f32.mrb[0].mxu0
        %v3050 = vadd.f32 0.0, %v3049
        %v3051 = vpop.f32.mrb[0].mxu0
        %v3052 = vpop.f32.mrb[0].mxu0
        %v3053 = vpop.f32.mrb[0].mxu0
        %3054 = vdwg.mxu0
        %v3056 = vsel %vm1271, %v2417, 0
        %v3059 = vsel %vm1271, %v2198, 0
        %3061 = vmatprep.subr.bf16.mxu0 0
        %3062 = vmatpush1.bf16.xpose.msra.mxu0 %v3059
        %3063 = vmatprep.subr.bf16.mxu0 0
        %3064 = vmatpush1.bf16.xpose.msra.mxu0 0
        %3065 = vmatprep.subr.bf16.mxu0 0
        %3066 = vmatpush1.bf16.xpose.msra.mxu0 0
        %3067 = vmatprep.subr.bf16.mxu0 0
        %3068 = vmatpush1.bf16.xpose.msra.mxu0 0
        %3069 = vmatprep.subr.bf16.mxu0 0
        %3070 = vmatpush1.bf16.xpose.msra.mxu0 0
        %3071 = vmatprep.subr.bf16.mxu0 0
        %3072 = vmatpush1.bf16.xpose.msra.mxu0 0
        %3073 = vmatprep.subr.bf16.mxu0 0
        %3074 = vmatpush1.bf16.xpose.msra.mxu0 0
        %3075 = vmatprep.subr.bf16.mxu0 0
        %3076 = vmatpush1.bf16.xpose.msra.mxu0 0
        %3077 = vmatprep.subr.bf16.mxu0 0
        %3078 = vmatpush1.bf16.xpose.msra.mxu0 0
        %3079 = vmatprep.subr.bf16.mxu0 0
        %3080 = vmatpush1.bf16.xpose.msra.mxu0 0
        %3081 = vmatprep.subr.bf16.mxu0 0
        %3082 = vmatpush1.bf16.xpose.msra.mxu0 0
        %3083 = vmatprep.subr.bf16.mxu0 0
        %3084 = vmatpush1.bf16.xpose.msra.mxu0 0
        %3085 = vmatprep.subr.bf16.mxu0 0
        %3086 = vmatpush1.bf16.xpose.msra.mxu0 0
        %3087 = vmatprep.subr.bf16.mxu0 0
        %3088 = vmatpush1.bf16.xpose.msra.mxu0 0
        %3089 = vmatprep.subr.bf16.mxu0 0
        %3090 = vmatpush1.bf16.xpose.msra.mxu0 0
        %3091 = vmatprep.subr.bf16.mxu0 0
        %3092 = vmatpush1.bf16.xpose.msra.mxu0 0
        %3093 = vmatprep.mubr.bf16.mxu0 0
        %3094 = vmatmul.mubr.bf16.gmra.mrb[0].mxu0 %v3056
        %v3095 = vpop.f32.mrb[0].mxu0
        %v3096 = vadd.f32 0.0, %v3095
        %v3097 = vpop.f32.mrb[0].mxu0
        %v3098 = vpop.f32.mrb[0].mxu0
        %v3099 = vpop.f32.mrb[0].mxu0
        %3100 = vdwg.mxu0
        %v3102 = vsel %vm1271, %v2433, 0
        %v3105 = vsel %vm1271, %v2199, 0
        %3107 = vmatprep.subr.bf16.mxu0 0
        %3108 = vmatpush1.bf16.xpose.msra.mxu0 %v3105
        %3109 = vmatprep.subr.bf16.mxu0 0
        %3110 = vmatpush1.bf16.xpose.msra.mxu0 0
        %3111 = vmatprep.subr.bf16.mxu0 0
        %3112 = vmatpush1.bf16.xpose.msra.mxu0 0
        %3113 = vmatprep.subr.bf16.mxu0 0
        %3114 = vmatpush1.bf16.xpose.msra.mxu0 0
        %3115 = vmatprep.subr.bf16.mxu0 0
        %3116 = vmatpush1.bf16.xpose.msra.mxu0 0
        %3117 = vmatprep.subr.bf16.mxu0 0
        %3118 = vmatpush1.bf16.xpose.msra.mxu0 0
        %3119 = vmatprep.subr.bf16.mxu0 0
        %3120 = vmatpush1.bf16.xpose.msra.mxu0 0
        %3121 = vmatprep.subr.bf16.mxu0 0
        %3122 = vmatpush1.bf16.xpose.msra.mxu0 0
        %3123 = vmatprep.subr.bf16.mxu0 0
        %3124 = vmatpush1.bf16.xpose.msra.mxu0 0
        %3125 = vmatprep.subr.bf16.mxu0 0
        %3126 = vmatpush1.bf16.xpose.msra.mxu0 0
        %3127 = vmatprep.subr.bf16.mxu0 0
        %3128 = vmatpush1.bf16.xpose.msra.mxu0 0
        %3129 = vmatprep.subr.bf16.mxu0 0
        %3130 = vmatpush1.bf16.xpose.msra.mxu0 0
        %3131 = vmatprep.subr.bf16.mxu0 0
        %3132 = vmatpush1.bf16.xpose.msra.mxu0 0
        %3133 = vmatprep.subr.bf16.mxu0 0
        %3134 = vmatpush1.bf16.xpose.msra.mxu0 0
        %3135 = vmatprep.subr.bf16.mxu0 0
        %3136 = vmatpush1.bf16.xpose.msra.mxu0 0
        %3137 = vmatprep.subr.bf16.mxu0 0
        %3138 = vmatpush1.bf16.xpose.msra.mxu0 0
        %3139 = vmatprep.mubr.bf16.mxu0 0
        %3140 = vmatmul.mubr.bf16.gmra.mrb[0].mxu0 %v3102
        %v3141 = vpop.f32.mrb[0].mxu0
        %v3142 = vadd.f32 0.0, %v3141
        %v3143 = vpop.f32.mrb[0].mxu0
        %v3144 = vpop.f32.mrb[0].mxu0
        %v3145 = vpop.f32.mrb[0].mxu0
        %3146 = vdwg.mxu0
        %v3148 = vsel %vm1271, %v2449, 0
        %v3151 = vsel %vm1271, %v2200, 0
        %3153 = vmatprep.subr.bf16.mxu0 0
        %3154 = vmatpush1.bf16.xpose.msra.mxu0 %v3151
        %3155 = vmatprep.subr.bf16.mxu0 0
        %3156 = vmatpush1.bf16.xpose.msra.mxu0 0
        %3157 = vmatprep.subr.bf16.mxu0 0
        %3158 = vmatpush1.bf16.xpose.msra.mxu0 0
        %3159 = vmatprep.subr.bf16.mxu0 0
        %3160 = vmatpush1.bf16.xpose.msra.mxu0 0
        %3161 = vmatprep.subr.bf16.mxu0 0
        %3162 = vmatpush1.bf16.xpose.msra.mxu0 0
        %3163 = vmatprep.subr.bf16.mxu0 0
        %3164 = vmatpush1.bf16.xpose.msra.mxu0 0
        %3165 = vmatprep.subr.bf16.mxu0 0
        %3166 = vmatpush1.bf16.xpose.msra.mxu0 0
        %3167 = vmatprep.subr.bf16.mxu0 0
        %3168 = vmatpush1.bf16.xpose.msra.mxu0 0
        %3169 = vmatprep.subr.bf16.mxu0 0
        %3170 = vmatpush1.bf16.xpose.msra.mxu0 0
        %3171 = vmatprep.subr.bf16.mxu0 0
        %3172 = vmatpush1.bf16.xpose.msra.mxu0 0
        %3173 = vmatprep.subr.bf16.mxu0 0
        %3174 = vmatpush1.bf16.xpose.msra.mxu0 0
        %3175 = vmatprep.subr.bf16.mxu0 0
        %3176 = vmatpush1.bf16.xpose.msra.mxu0 0
        %3177 = vmatprep.subr.bf16.mxu0 0
        %3178 = vmatpush1.bf16.xpose.msra.mxu0 0
        %3179 = vmatprep.subr.bf16.mxu0 0
        %3180 = vmatpush1.bf16.xpose.msra.mxu0 0
        %3181 = vmatprep.subr.bf16.mxu0 0
        %3182 = vmatpush1.bf16.xpose.msra.mxu0 0
        %3183 = vmatprep.subr.bf16.mxu0 0
        %3184 = vmatpush1.bf16.xpose.msra.mxu0 0
        %3185 = vmatprep.mubr.bf16.mxu0 0
        %3186 = vmatmul.mubr.bf16.gmra.mrb[0].mxu0 %v3148
        %v3187 = vpop.f32.mrb[0].mxu0
        %v3188 = vadd.f32 0.0, %v3187
        %v3189 = vpop.f32.mrb[0].mxu0
        %v3190 = vpop.f32.mrb[0].mxu0
        %v3191 = vpop.f32.mrb[0].mxu0
        %3192 = vdwg.mxu0
        %3193 = vxpose.xlu0.b32.start [1/16] %v2498, 128
        %3194 = vxpose.xlu0.b32.cont [2/16] 0.0, 128
        %3195 = vxpose.xlu0.b32.cont [3/16] 0.0, 128
        %3196 = vxpose.xlu0.b32.cont [4/16] 0.0, 128
        %3197 = vxpose.xlu0.b32.cont [5/16] 0.0, 128
        %3198 = vxpose.xlu0.b32.cont [6/16] 0.0, 128
        %3199 = vxpose.xlu0.b32.cont [7/16] 0.0, 128
        %3200 = vxpose.xlu0.b32.cont [8/16] 0.0, 128
        %3201 = vxpose.xlu0.b32.cont [9/16] 0.0, 128
        %3202 = vxpose.xlu0.b32.cont [10/16] 0.0, 128
        %3203 = vxpose.xlu0.b32.cont [11/16] 0.0, 128
        %3204 = vxpose.xlu0.b32.cont [12/16] 0.0, 128
        %3205 = vxpose.xlu0.b32.cont [13/16] 0.0, 128
        %3206 = vxpose.xlu0.b32.cont [14/16] 0.0, 128
        %3207 = vxpose.xlu0.b32.cont [15/16] 0.0, 128
        %3208 = vxpose.xlu0.b32.end [16/16] 0.0, 128
        %v3209 = vpop.trf.xlu0
        %v3210 = vpop.trf.xlu0
        %v3211 = vpop.trf.xlu0
        %v3212 = vpop.trf.xlu0
        %v3213 = vpop.trf.xlu0
        %v3214 = vpop.trf.xlu0
        %v3215 = vpop.trf.xlu0
        %v3216 = vpop.trf.xlu0
        %v3217 = vpop.trf.xlu0
        %v3218 = vpop.trf.xlu0
        %v3219 = vpop.trf.xlu0
        %v3220 = vpop.trf.xlu0
        %v3221 = vpop.trf.xlu0
        %v3222 = vpop.trf.xlu0
        %v3223 = vpop.trf.xlu0
        %v3224 = vpop.trf.xlu0
        %3225 = vxpose.xlu0.b32.start [1/16] %v2544, 128
        %3226 = vxpose.xlu0.b32.cont [2/16] 0.0, 128
        %3227 = vxpose.xlu0.b32.cont [3/16] 0.0, 128
        %3228 = vxpose.xlu0.b32.cont [4/16] 0.0, 128
        %3229 = vxpose.xlu0.b32.cont [5/16] 0.0, 128
        %3230 = vxpose.xlu0.b32.cont [6/16] 0.0, 128
        %3231 = vxpose.xlu0.b32.cont [7/16] 0.0, 128
        %3232 = vxpose.xlu0.b32.cont [8/16] 0.0, 128
        %3233 = vxpose.xlu0.b32.cont [9/16] 0.0, 128
        %3234 = vxpose.xlu0.b32.cont [10/16] 0.0, 128
        %3235 = vxpose.xlu0.b32.cont [11/16] 0.0, 128
        %3236 = vxpose.xlu0.b32.cont [12/16] 0.0, 128
        %3237 = vxpose.xlu0.b32.cont [13/16] 0.0, 128
        %3238 = vxpose.xlu0.b32.cont [14/16] 0.0, 128
        %3239 = vxpose.xlu0.b32.cont [15/16] 0.0, 128
        %3240 = vxpose.xlu0.b32.end [16/16] 0.0, 128
        %v3241 = vpop.trf.xlu0
        %v3242 = vpop.trf.xlu0
        %v3243 = vpop.trf.xlu0
        %v3244 = vpop.trf.xlu0
        %v3245 = vpop.trf.xlu0
        %v3246 = vpop.trf.xlu0
        %v3247 = vpop.trf.xlu0
        %v3248 = vpop.trf.xlu0
        %v3249 = vpop.trf.xlu0
        %v3250 = vpop.trf.xlu0
        %v3251 = vpop.trf.xlu0
        %v3252 = vpop.trf.xlu0
        %v3253 = vpop.trf.xlu0
        %v3254 = vpop.trf.xlu0
        %v3255 = vpop.trf.xlu0
        %v3256 = vpop.trf.xlu0
        %3257 = vxpose.xlu0.b32.start [1/16] %v2590, 128
        %3258 = vxpose.xlu0.b32.cont [2/16] 0.0, 128
        %3259 = vxpose.xlu0.b32.cont [3/16] 0.0, 128
        %3260 = vxpose.xlu0.b32.cont [4/16] 0.0, 128
        %3261 = vxpose.xlu0.b32.cont [5/16] 0.0, 128
        %3262 = vxpose.xlu0.b32.cont [6/16] 0.0, 128
        %3263 = vxpose.xlu0.b32.cont [7/16] 0.0, 128
        %3264 = vxpose.xlu0.b32.cont [8/16] 0.0, 128
        %3265 = vxpose.xlu0.b32.cont [9/16] 0.0, 128
        %3266 = vxpose.xlu0.b32.cont [10/16] 0.0, 128
        %3267 = vxpose.xlu0.b32.cont [11/16] 0.0, 128
        %3268 = vxpose.xlu0.b32.cont [12/16] 0.0, 128
        %3269 = vxpose.xlu0.b32.cont [13/16] 0.0, 128
        %3270 = vxpose.xlu0.b32.cont [14/16] 0.0, 128
        %3271 = vxpose.xlu0.b32.cont [15/16] 0.0, 128
        %3272 = vxpose.xlu0.b32.end [16/16] 0.0, 128
        %v3273 = vpop.trf.xlu0
        %v3274 = vpop.trf.xlu0
        %v3275 = vpop.trf.xlu0
        %v3276 = vpop.trf.xlu0
        %v3277 = vpop.trf.xlu0
        %v3278 = vpop.trf.xlu0
        %v3279 = vpop.trf.xlu0
        %v3280 = vpop.trf.xlu0
        %v3281 = vpop.trf.xlu0
        %v3282 = vpop.trf.xlu0
        %v3283 = vpop.trf.xlu0
        %v3284 = vpop.trf.xlu0
        %v3285 = vpop.trf.xlu0
        %v3286 = vpop.trf.xlu0
        %v3287 = vpop.trf.xlu0
        %v3288 = vpop.trf.xlu0
        %3289 = vxpose.xlu0.b32.start [1/16] %v2636, 128
        %3290 = vxpose.xlu0.b32.cont [2/16] 0.0, 128
        %3291 = vxpose.xlu0.b32.cont [3/16] 0.0, 128
        %3292 = vxpose.xlu0.b32.cont [4/16] 0.0, 128
        %3293 = vxpose.xlu0.b32.cont [5/16] 0.0, 128
        %3294 = vxpose.xlu0.b32.cont [6/16] 0.0, 128
        %3295 = vxpose.xlu0.b32.cont [7/16] 0.0, 128
        %3296 = vxpose.xlu0.b32.cont [8/16] 0.0, 128
        %3297 = vxpose.xlu0.b32.cont [9/16] 0.0, 128
        %3298 = vxpose.xlu0.b32.cont [10/16] 0.0, 128
        %3299 = vxpose.xlu0.b32.cont [11/16] 0.0, 128
        %3300 = vxpose.xlu0.b32.cont [12/16] 0.0, 128
        %3301 = vxpose.xlu0.b32.cont [13/16] 0.0, 128
        %3302 = vxpose.xlu0.b32.cont [14/16] 0.0, 128
        %3303 = vxpose.xlu0.b32.cont [15/16] 0.0, 128
        %3304 = vxpose.xlu0.b32.end [16/16] 0.0, 128
        %v3305 = vpop.trf.xlu0
        %v3306 = vpop.trf.xlu0
        %v3307 = vpop.trf.xlu0
        %v3308 = vpop.trf.xlu0
        %v3309 = vpop.trf.xlu0
        %v3310 = vpop.trf.xlu0
        %v3311 = vpop.trf.xlu0
        %v3312 = vpop.trf.xlu0
        %v3313 = vpop.trf.xlu0
        %v3314 = vpop.trf.xlu0
        %v3315 = vpop.trf.xlu0
        %v3316 = vpop.trf.xlu0
        %v3317 = vpop.trf.xlu0
        %v3318 = vpop.trf.xlu0
        %v3319 = vpop.trf.xlu0
        %v3320 = vpop.trf.xlu0
        %3321 = vxpose.xlu0.b32.start [1/16] %v2682, 128
        %3322 = vxpose.xlu0.b32.cont [2/16] 0.0, 128
        %3323 = vxpose.xlu0.b32.cont [3/16] 0.0, 128
        %3324 = vxpose.xlu0.b32.cont [4/16] 0.0, 128
        %3325 = vxpose.xlu0.b32.cont [5/16] 0.0, 128
        %3326 = vxpose.xlu0.b32.cont [6/16] 0.0, 128
        %3327 = vxpose.xlu0.b32.cont [7/16] 0.0, 128
        %3328 = vxpose.xlu0.b32.cont [8/16] 0.0, 128
        %3329 = vxpose.xlu0.b32.cont [9/16] 0.0, 128
        %3330 = vxpose.xlu0.b32.cont [10/16] 0.0, 128
        %3331 = vxpose.xlu0.b32.cont [11/16] 0.0, 128
        %3332 = vxpose.xlu0.b32.cont [12/16] 0.0, 128
        %3333 = vxpose.xlu0.b32.cont [13/16] 0.0, 128
        %3334 = vxpose.xlu0.b32.cont [14/16] 0.0, 128
        %3335 = vxpose.xlu0.b32.cont [15/16] 0.0, 128
        %3336 = vxpose.xlu0.b32.end [16/16] 0.0, 128
        %v3337 = vpop.trf.xlu0
        %v3338 = vpop.trf.xlu0
        %v3339 = vpop.trf.xlu0
        %v3340 = vpop.trf.xlu0
        %v3341 = vpop.trf.xlu0
        %v3342 = vpop.trf.xlu0
        %v3343 = vpop.trf.xlu0
        %v3344 = vpop.trf.xlu0
        %v3345 = vpop.trf.xlu0
        %v3346 = vpop.trf.xlu0
        %v3347 = vpop.trf.xlu0
        %v3348 = vpop.trf.xlu0
        %v3349 = vpop.trf.xlu0
        %v3350 = vpop.trf.xlu0
        %v3351 = vpop.trf.xlu0
        %v3352 = vpop.trf.xlu0
        %3353 = vxpose.xlu0.b32.start [1/16] %v2728, 128
        %3354 = vxpose.xlu0.b32.cont [2/16] 0.0, 128
        %3355 = vxpose.xlu0.b32.cont [3/16] 0.0, 128
        %3356 = vxpose.xlu0.b32.cont [4/16] 0.0, 128
        %3357 = vxpose.xlu0.b32.cont [5/16] 0.0, 128
        %3358 = vxpose.xlu0.b32.cont [6/16] 0.0, 128
        %3359 = vxpose.xlu0.b32.cont [7/16] 0.0, 128
        %3360 = vxpose.xlu0.b32.cont [8/16] 0.0, 128
        %3361 = vxpose.xlu0.b32.cont [9/16] 0.0, 128
        %3362 = vxpose.xlu0.b32.cont [10/16] 0.0, 128
        %3363 = vxpose.xlu0.b32.cont [11/16] 0.0, 128
        %3364 = vxpose.xlu0.b32.cont [12/16] 0.0, 128
        %3365 = vxpose.xlu0.b32.cont [13/16] 0.0, 128
        %3366 = vxpose.xlu0.b32.cont [14/16] 0.0, 128
        %3367 = vxpose.xlu0.b32.cont [15/16] 0.0, 128
        %3368 = vxpose.xlu0.b32.end [16/16] 0.0, 128
        %v3369 = vpop.trf.xlu0
        %v3370 = vpop.trf.xlu0
        %v3371 = vpop.trf.xlu0
        %v3372 = vpop.trf.xlu0
        %v3373 = vpop.trf.xlu0
        %v3374 = vpop.trf.xlu0
        %v3375 = vpop.trf.xlu0
        %v3376 = vpop.trf.xlu0
        %v3377 = vpop.trf.xlu0
        %v3378 = vpop.trf.xlu0
        %v3379 = vpop.trf.xlu0
        %v3380 = vpop.trf.xlu0
        %v3381 = vpop.trf.xlu0
        %v3382 = vpop.trf.xlu0
        %v3383 = vpop.trf.xlu0
        %v3384 = vpop.trf.xlu0
        %3385 = vxpose.xlu0.b32.start [1/16] %v2774, 128
        %3386 = vxpose.xlu0.b32.cont [2/16] 0.0, 128
        %3387 = vxpose.xlu0.b32.cont [3/16] 0.0, 128
        %3388 = vxpose.xlu0.b32.cont [4/16] 0.0, 128
        %3389 = vxpose.xlu0.b32.cont [5/16] 0.0, 128
        %3390 = vxpose.xlu0.b32.cont [6/16] 0.0, 128
        %3391 = vxpose.xlu0.b32.cont [7/16] 0.0, 128
        %3392 = vxpose.xlu0.b32.cont [8/16] 0.0, 128
        %3393 = vxpose.xlu0.b32.cont [9/16] 0.0, 128
        %3394 = vxpose.xlu0.b32.cont [10/16] 0.0, 128
        %3395 = vxpose.xlu0.b32.cont [11/16] 0.0, 128
        %3396 = vxpose.xlu0.b32.cont [12/16] 0.0, 128
        %3397 = vxpose.xlu0.b32.cont [13/16] 0.0, 128
        %3398 = vxpose.xlu0.b32.cont [14/16] 0.0, 128
        %3399 = vxpose.xlu0.b32.cont [15/16] 0.0, 128
        %3400 = vxpose.xlu0.b32.end [16/16] 0.0, 128
        %v3401 = vpop.trf.xlu0
        %v3402 = vpop.trf.xlu0
        %v3403 = vpop.trf.xlu0
        %v3404 = vpop.trf.xlu0
        %v3405 = vpop.trf.xlu0
        %v3406 = vpop.trf.xlu0
        %v3407 = vpop.trf.xlu0
        %v3408 = vpop.trf.xlu0
        %v3409 = vpop.trf.xlu0
        %v3410 = vpop.trf.xlu0
        %v3411 = vpop.trf.xlu0
        %v3412 = vpop.trf.xlu0
        %v3413 = vpop.trf.xlu0
        %v3414 = vpop.trf.xlu0
        %v3415 = vpop.trf.xlu0
        %v3416 = vpop.trf.xlu0
        %3417 = vxpose.xlu0.b32.start [1/16] %v2820, 128
        %3418 = vxpose.xlu0.b32.cont [2/16] 0.0, 128
        %3419 = vxpose.xlu0.b32.cont [3/16] 0.0, 128
        %3420 = vxpose.xlu0.b32.cont [4/16] 0.0, 128
        %3421 = vxpose.xlu0.b32.cont [5/16] 0.0, 128
        %3422 = vxpose.xlu0.b32.cont [6/16] 0.0, 128
        %3423 = vxpose.xlu0.b32.cont [7/16] 0.0, 128
        %3424 = vxpose.xlu0.b32.cont [8/16] 0.0, 128
        %3425 = vxpose.xlu0.b32.cont [9/16] 0.0, 128
        %3426 = vxpose.xlu0.b32.cont [10/16] 0.0, 128
        %3427 = vxpose.xlu0.b32.cont [11/16] 0.0, 128
        %3428 = vxpose.xlu0.b32.cont [12/16] 0.0, 128
        %3429 = vxpose.xlu0.b32.cont [13/16] 0.0, 128
        %3430 = vxpose.xlu0.b32.cont [14/16] 0.0, 128
        %3431 = vxpose.xlu0.b32.cont [15/16] 0.0, 128
        %3432 = vxpose.xlu0.b32.end [16/16] 0.0, 128
        %v3433 = vpop.trf.xlu0
        %v3434 = vpop.trf.xlu0
        %v3435 = vpop.trf.xlu0
        %v3436 = vpop.trf.xlu0
        %v3437 = vpop.trf.xlu0
        %v3438 = vpop.trf.xlu0
        %v3439 = vpop.trf.xlu0
        %v3440 = vpop.trf.xlu0
        %v3441 = vpop.trf.xlu0
        %v3442 = vpop.trf.xlu0
        %v3443 = vpop.trf.xlu0
        %v3444 = vpop.trf.xlu0
        %v3445 = vpop.trf.xlu0
        %v3446 = vpop.trf.xlu0
        %v3447 = vpop.trf.xlu0
        %v3448 = vpop.trf.xlu0
        %3449 = vxpose.xlu0.b32.start [1/16] %v2866, 128
        %3450 = vxpose.xlu0.b32.cont [2/16] 0.0, 128
        %3451 = vxpose.xlu0.b32.cont [3/16] 0.0, 128
        %3452 = vxpose.xlu0.b32.cont [4/16] 0.0, 128
        %3453 = vxpose.xlu0.b32.cont [5/16] 0.0, 128
        %3454 = vxpose.xlu0.b32.cont [6/16] 0.0, 128
        %3455 = vxpose.xlu0.b32.cont [7/16] 0.0, 128
        %3456 = vxpose.xlu0.b32.cont [8/16] 0.0, 128
        %3457 = vxpose.xlu0.b32.cont [9/16] 0.0, 128
        %3458 = vxpose.xlu0.b32.cont [10/16] 0.0, 128
        %3459 = vxpose.xlu0.b32.cont [11/16] 0.0, 128
        %3460 = vxpose.xlu0.b32.cont [12/16] 0.0, 128
        %3461 = vxpose.xlu0.b32.cont [13/16] 0.0, 128
        %3462 = vxpose.xlu0.b32.cont [14/16] 0.0, 128
        %3463 = vxpose.xlu0.b32.cont [15/16] 0.0, 128
        %3464 = vxpose.xlu0.b32.end [16/16] 0.0, 128
        %v3465 = vpop.trf.xlu0
        %v3466 = vpop.trf.xlu0
        %v3467 = vpop.trf.xlu0
        %v3468 = vpop.trf.xlu0
        %v3469 = vpop.trf.xlu0
        %v3470 = vpop.trf.xlu0
        %v3471 = vpop.trf.xlu0
        %v3472 = vpop.trf.xlu0
        %v3473 = vpop.trf.xlu0
        %v3474 = vpop.trf.xlu0
        %v3475 = vpop.trf.xlu0
        %v3476 = vpop.trf.xlu0
        %v3477 = vpop.trf.xlu0
        %v3478 = vpop.trf.xlu0
        %v3479 = vpop.trf.xlu0
        %v3480 = vpop.trf.xlu0
        %3481 = vxpose.xlu0.b32.start [1/16] %v2912, 128
        %3482 = vxpose.xlu0.b32.cont [2/16] 0.0, 128
        %3483 = vxpose.xlu0.b32.cont [3/16] 0.0, 128
        %3484 = vxpose.xlu0.b32.cont [4/16] 0.0, 128
        %3485 = vxpose.xlu0.b32.cont [5/16] 0.0, 128
        %3486 = vxpose.xlu0.b32.cont [6/16] 0.0, 128
        %3487 = vxpose.xlu0.b32.cont [7/16] 0.0, 128
        %3488 = vxpose.xlu0.b32.cont [8/16] 0.0, 128
        %3489 = vxpose.xlu0.b32.cont [9/16] 0.0, 128
        %3490 = vxpose.xlu0.b32.cont [10/16] 0.0, 128
        %3491 = vxpose.xlu0.b32.cont [11/16] 0.0, 128
        %3492 = vxpose.xlu0.b32.cont [12/16] 0.0, 128
        %3493 = vxpose.xlu0.b32.cont [13/16] 0.0, 128
        %3494 = vxpose.xlu0.b32.cont [14/16] 0.0, 128
        %3495 = vxpose.xlu0.b32.cont [15/16] 0.0, 128
        %3496 = vxpose.xlu0.b32.end [16/16] 0.0, 128
        %v3497 = vpop.trf.xlu0
        %v3498 = vpop.trf.xlu0
        %v3499 = vpop.trf.xlu0
        %v3500 = vpop.trf.xlu0
        %v3501 = vpop.trf.xlu0
        %v3502 = vpop.trf.xlu0
        %v3503 = vpop.trf.xlu0
        %v3504 = vpop.trf.xlu0
        %v3505 = vpop.trf.xlu0
        %v3506 = vpop.trf.xlu0
        %v3507 = vpop.trf.xlu0
        %v3508 = vpop.trf.xlu0
        %v3509 = vpop.trf.xlu0
        %v3510 = vpop.trf.xlu0
        %v3511 = vpop.trf.xlu0
        %v3512 = vpop.trf.xlu0
        %3513 = vxpose.xlu0.b32.start [1/16] %v2958, 128
        %3514 = vxpose.xlu0.b32.cont [2/16] 0.0, 128
        %3515 = vxpose.xlu0.b32.cont [3/16] 0.0, 128
        %3516 = vxpose.xlu0.b32.cont [4/16] 0.0, 128
        %3517 = vxpose.xlu0.b32.cont [5/16] 0.0, 128
        %3518 = vxpose.xlu0.b32.cont [6/16] 0.0, 128
        %3519 = vxpose.xlu0.b32.cont [7/16] 0.0, 128
        %3520 = vxpose.xlu0.b32.cont [8/16] 0.0, 128
        %3521 = vxpose.xlu0.b32.cont [9/16] 0.0, 128
        %3522 = vxpose.xlu0.b32.cont [10/16] 0.0, 128
        %3523 = vxpose.xlu0.b32.cont [11/16] 0.0, 128
        %3524 = vxpose.xlu0.b32.cont [12/16] 0.0, 128
        %3525 = vxpose.xlu0.b32.cont [13/16] 0.0, 128
        %3526 = vxpose.xlu0.b32.cont [14/16] 0.0, 128
        %3527 = vxpose.xlu0.b32.cont [15/16] 0.0, 128
        %3528 = vxpose.xlu0.b32.end [16/16] 0.0, 128
        %v3529 = vpop.trf.xlu0
        %v3530 = vpop.trf.xlu0
        %v3531 = vpop.trf.xlu0
        %v3532 = vpop.trf.xlu0
        %v3533 = vpop.trf.xlu0
        %v3534 = vpop.trf.xlu0
        %v3535 = vpop.trf.xlu0
        %v3536 = vpop.trf.xlu0
        %v3537 = vpop.trf.xlu0
        %v3538 = vpop.trf.xlu0
        %v3539 = vpop.trf.xlu0
        %v3540 = vpop.trf.xlu0
        %v3541 = vpop.trf.xlu0
        %v3542 = vpop.trf.xlu0
        %v3543 = vpop.trf.xlu0
        %v3544 = vpop.trf.xlu0
        %3545 = vxpose.xlu0.b32.start [1/16] %v3004, 128
        %3546 = vxpose.xlu0.b32.cont [2/16] 0.0, 128
        %3547 = vxpose.xlu0.b32.cont [3/16] 0.0, 128
        %3548 = vxpose.xlu0.b32.cont [4/16] 0.0, 128
        %3549 = vxpose.xlu0.b32.cont [5/16] 0.0, 128
        %3550 = vxpose.xlu0.b32.cont [6/16] 0.0, 128
        %3551 = vxpose.xlu0.b32.cont [7/16] 0.0, 128
        %3552 = vxpose.xlu0.b32.cont [8/16] 0.0, 128
        %3553 = vxpose.xlu0.b32.cont [9/16] 0.0, 128
        %3554 = vxpose.xlu0.b32.cont [10/16] 0.0, 128
        %3555 = vxpose.xlu0.b32.cont [11/16] 0.0, 128
        %3556 = vxpose.xlu0.b32.cont [12/16] 0.0, 128
        %3557 = vxpose.xlu0.b32.cont [13/16] 0.0, 128
        %3558 = vxpose.xlu0.b32.cont [14/16] 0.0, 128
        %3559 = vxpose.xlu0.b32.cont [15/16] 0.0, 128
        %3560 = vxpose.xlu0.b32.end [16/16] 0.0, 128
        %v3561 = vpop.trf.xlu0
        %v3562 = vpop.trf.xlu0
        %v3563 = vpop.trf.xlu0
        %v3564 = vpop.trf.xlu0
        %v3565 = vpop.trf.xlu0
        %v3566 = vpop.trf.xlu0
        %v3567 = vpop.trf.xlu0
        %v3568 = vpop.trf.xlu0
        %v3569 = vpop.trf.xlu0
        %v3570 = vpop.trf.xlu0
        %v3571 = vpop.trf.xlu0
        %v3572 = vpop.trf.xlu0
        %v3573 = vpop.trf.xlu0
        %v3574 = vpop.trf.xlu0
        %v3575 = vpop.trf.xlu0
        %v3576 = vpop.trf.xlu0
        %3577 = vxpose.xlu0.b32.start [1/16] %v3050, 128
        %3578 = vxpose.xlu0.b32.cont [2/16] 0.0, 128
        %3579 = vxpose.xlu0.b32.cont [3/16] 0.0, 128
        %3580 = vxpose.xlu0.b32.cont [4/16] 0.0, 128
        %3581 = vxpose.xlu0.b32.cont [5/16] 0.0, 128
        %3582 = vxpose.xlu0.b32.cont [6/16] 0.0, 128
        %3583 = vxpose.xlu0.b32.cont [7/16] 0.0, 128
        %3584 = vxpose.xlu0.b32.cont [8/16] 0.0, 128
        %3585 = vxpose.xlu0.b32.cont [9/16] 0.0, 128
        %3586 = vxpose.xlu0.b32.cont [10/16] 0.0, 128
        %3587 = vxpose.xlu0.b32.cont [11/16] 0.0, 128
        %3588 = vxpose.xlu0.b32.cont [12/16] 0.0, 128
        %3589 = vxpose.xlu0.b32.cont [13/16] 0.0, 128
        %3590 = vxpose.xlu0.b32.cont [14/16] 0.0, 128
        %3591 = vxpose.xlu0.b32.cont [15/16] 0.0, 128
        %3592 = vxpose.xlu0.b32.end [16/16] 0.0, 128
        %v3593 = vpop.trf.xlu0
        %v3594 = vpop.trf.xlu0
        %v3595 = vpop.trf.xlu0
        %v3596 = vpop.trf.xlu0
        %v3597 = vpop.trf.xlu0
        %v3598 = vpop.trf.xlu0
        %v3599 = vpop.trf.xlu0
        %v3600 = vpop.trf.xlu0
        %v3601 = vpop.trf.xlu0
        %v3602 = vpop.trf.xlu0
        %v3603 = vpop.trf.xlu0
        %v3604 = vpop.trf.xlu0
        %v3605 = vpop.trf.xlu0
        %v3606 = vpop.trf.xlu0
        %v3607 = vpop.trf.xlu0
        %v3608 = vpop.trf.xlu0
        %3609 = vxpose.xlu0.b32.start [1/16] %v3096, 128
        %3610 = vxpose.xlu0.b32.cont [2/16] 0.0, 128
        %3611 = vxpose.xlu0.b32.cont [3/16] 0.0, 128
        %3612 = vxpose.xlu0.b32.cont [4/16] 0.0, 128
        %3613 = vxpose.xlu0.b32.cont [5/16] 0.0, 128
        %3614 = vxpose.xlu0.b32.cont [6/16] 0.0, 128
        %3615 = vxpose.xlu0.b32.cont [7/16] 0.0, 128
        %3616 = vxpose.xlu0.b32.cont [8/16] 0.0, 128
        %3617 = vxpose.xlu0.b32.cont [9/16] 0.0, 128
        %3618 = vxpose.xlu0.b32.cont [10/16] 0.0, 128
        %3619 = vxpose.xlu0.b32.cont [11/16] 0.0, 128
        %3620 = vxpose.xlu0.b32.cont [12/16] 0.0, 128
        %3621 = vxpose.xlu0.b32.cont [13/16] 0.0, 128
        %3622 = vxpose.xlu0.b32.cont [14/16] 0.0, 128
        %3623 = vxpose.xlu0.b32.cont [15/16] 0.0, 128
        %3624 = vxpose.xlu0.b32.end [16/16] 0.0, 128
        %v3625 = vpop.trf.xlu0
        %v3626 = vpop.trf.xlu0
        %v3627 = vpop.trf.xlu0
        %v3628 = vpop.trf.xlu0
        %v3629 = vpop.trf.xlu0
        %v3630 = vpop.trf.xlu0
        %v3631 = vpop.trf.xlu0
        %v3632 = vpop.trf.xlu0
        %v3633 = vpop.trf.xlu0
        %v3634 = vpop.trf.xlu0
        %v3635 = vpop.trf.xlu0
        %v3636 = vpop.trf.xlu0
        %v3637 = vpop.trf.xlu0
        %v3638 = vpop.trf.xlu0
        %v3639 = vpop.trf.xlu0
        %v3640 = vpop.trf.xlu0
        %3641 = vxpose.xlu0.b32.start [1/16] %v3142, 128
        %3642 = vxpose.xlu0.b32.cont [2/16] 0.0, 128
        %3643 = vxpose.xlu0.b32.cont [3/16] 0.0, 128
        %3644 = vxpose.xlu0.b32.cont [4/16] 0.0, 128
        %3645 = vxpose.xlu0.b32.cont [5/16] 0.0, 128
        %3646 = vxpose.xlu0.b32.cont [6/16] 0.0, 128
        %3647 = vxpose.xlu0.b32.cont [7/16] 0.0, 128
        %3648 = vxpose.xlu0.b32.cont [8/16] 0.0, 128
        %3649 = vxpose.xlu0.b32.cont [9/16] 0.0, 128
        %3650 = vxpose.xlu0.b32.cont [10/16] 0.0, 128
        %3651 = vxpose.xlu0.b32.cont [11/16] 0.0, 128
        %3652 = vxpose.xlu0.b32.cont [12/16] 0.0, 128
        %3653 = vxpose.xlu0.b32.cont [13/16] 0.0, 128
        %3654 = vxpose.xlu0.b32.cont [14/16] 0.0, 128
        %3655 = vxpose.xlu0.b32.cont [15/16] 0.0, 128
        %3656 = vxpose.xlu0.b32.end [16/16] 0.0, 128
        %v3657 = vpop.trf.xlu0
        %v3658 = vpop.trf.xlu0
        %v3659 = vpop.trf.xlu0
        %v3660 = vpop.trf.xlu0
        %v3661 = vpop.trf.xlu0
        %v3662 = vpop.trf.xlu0
        %v3663 = vpop.trf.xlu0
        %v3664 = vpop.trf.xlu0
        %v3665 = vpop.trf.xlu0
        %v3666 = vpop.trf.xlu0
        %v3667 = vpop.trf.xlu0
        %v3668 = vpop.trf.xlu0
        %v3669 = vpop.trf.xlu0
        %v3670 = vpop.trf.xlu0
        %v3671 = vpop.trf.xlu0
        %v3672 = vpop.trf.xlu0
        %3673 = vxpose.xlu0.b32.start [1/16] %v3188, 128
        %3674 = vxpose.xlu0.b32.cont [2/16] 0.0, 128
        %3675 = vxpose.xlu0.b32.cont [3/16] 0.0, 128
        %3676 = vxpose.xlu0.b32.cont [4/16] 0.0, 128
        %3677 = vxpose.xlu0.b32.cont [5/16] 0.0, 128
        %3678 = vxpose.xlu0.b32.cont [6/16] 0.0, 128
        %3679 = vxpose.xlu0.b32.cont [7/16] 0.0, 128
        %3680 = vxpose.xlu0.b32.cont [8/16] 0.0, 128
        %3681 = vxpose.xlu0.b32.cont [9/16] 0.0, 128
        %3682 = vxpose.xlu0.b32.cont [10/16] 0.0, 128
        %3683 = vxpose.xlu0.b32.cont [11/16] 0.0, 128
        %3684 = vxpose.xlu0.b32.cont [12/16] 0.0, 128
        %3685 = vxpose.xlu0.b32.cont [13/16] 0.0, 128
        %3686 = vxpose.xlu0.b32.cont [14/16] 0.0, 128
        %3687 = vxpose.xlu0.b32.cont [15/16] 0.0, 128
        %3688 = vxpose.xlu0.b32.end [16/16] 0.0, 128
        %v3689 = vpop.trf.xlu0
        %v3690 = vpop.trf.xlu0
        %v3691 = vpop.trf.xlu0
        %v3692 = vpop.trf.xlu0
        %v3693 = vpop.trf.xlu0
        %v3694 = vpop.trf.xlu0
        %v3695 = vpop.trf.xlu0
        %v3696 = vpop.trf.xlu0
        %v3697 = vpop.trf.xlu0
        %v3698 = vpop.trf.xlu0
        %v3699 = vpop.trf.xlu0
        %v3700 = vpop.trf.xlu0
        %v3701 = vpop.trf.xlu0
        %v3702 = vpop.trf.xlu0
        %v3703 = vpop.trf.xlu0
        %v3704 = vpop.trf.xlu0
        %v3705 = vcombine.low %v3209, %v3273
        %v3706 = vcombine.high %v3209, %v3273
        %v3708 = vunpack.c.l.s4 1983009808
        %v3709 = vunpack.c.0.s8 %v3708
        %v3710 = vlaneseq
        %v3711 = vshrl.u32 %v3710, 7
        %v3712 = vsub.s32 %v3709, %v3711
        %v3713 = vrot.slane %v3705, %v3712
        %v3715 = vunpack.c.l.s4 1983009808
        %v3716 = vunpack.c.0.s8 %v3715
        %v3717 = vlaneseq
        %v3718 = vshrl.u32 %v3717, 7
        %v3719 = vsub.s32 %v3716, %v3718
        %v3720 = vrot.slane %v3706, %v3719
        %v3721 = vcombine.low %v3241, %v3305
        %v3722 = vcombine.high %v3241, %v3305
        %v3724 = vunpack.c.l.s4 1983009808
        %v3725 = vunpack.c.0.s8 %v3724
        %v3726 = vlaneseq
        %v3727 = vshrl.u32 %v3726, 7
        %v3728 = vsub.s32 %v3725, %v3727
        %v3729 = vrot.slane %v3721, %v3728
        %v3731 = vunpack.c.l.s4 1983009808
        %v3732 = vunpack.c.0.s8 %v3731
        %v3733 = vlaneseq
        %v3734 = vshrl.u32 %v3733, 7
        %v3735 = vsub.s32 %v3732, %v3734
        %v3736 = vrot.slane %v3722, %v3735
        %v3737 = vcombine.low %v3337, %v3401
        %v3738 = vcombine.high %v3337, %v3401
        %v3740 = vunpack.c.l.s4 1983009808
        %v3741 = vunpack.c.0.s8 %v3740
        %v3742 = vlaneseq
        %v3743 = vshrl.u32 %v3742, 7
        %v3744 = vsub.s32 %v3741, %v3743
        %v3745 = vrot.slane %v3737, %v3744
        %v3747 = vunpack.c.l.s4 1983009808
        %v3748 = vunpack.c.0.s8 %v3747
        %v3749 = vlaneseq
        %v3750 = vshrl.u32 %v3749, 7
        %v3751 = vsub.s32 %v3748, %v3750
        %v3752 = vrot.slane %v3738, %v3751
        %v3753 = vcombine.low %v3369, %v3433
        %v3754 = vcombine.high %v3369, %v3433
        %v3756 = vunpack.c.l.s4 1983009808
        %v3757 = vunpack.c.0.s8 %v3756
        %v3758 = vlaneseq
        %v3759 = vshrl.u32 %v3758, 7
        %v3760 = vsub.s32 %v3757, %v3759
        %v3761 = vrot.slane %v3753, %v3760
        %v3763 = vunpack.c.l.s4 1983009808
        %v3764 = vunpack.c.0.s8 %v3763
        %v3765 = vlaneseq
        %v3766 = vshrl.u32 %v3765, 7
        %v3767 = vsub.s32 %v3764, %v3766
        %v3768 = vrot.slane %v3754, %v3767
        %v3769 = vcombine.low %v3713, %v3729
        %v3770 = vcombine.high %v3713, %v3729
        %v3772 = vunpack.c.l.s4 1934713408
        %v3773 = vunpack.c.0.s8 %v3772
        %v3774 = vlaneseq
        %v3775 = vshrl.u32 %v3774, 7
        %v3776 = vsub.s32 %v3773, %v3775
        %v3777 = vrot.slane %v3769, %v3776
        %v3779 = vunpack.c.l.s4 1934713408
        %v3780 = vunpack.c.0.s8 %v3779
        %v3781 = vlaneseq
        %v3782 = vshrl.u32 %v3781, 7
        %v3783 = vsub.s32 %v3780, %v3782
        %v3784 = vrot.slane %v3770, %v3783
        %v3785 = vcombine.low %v3720, %v3736
        %v3786 = vcombine.high %v3720, %v3736
        %v3788 = vunpack.c.l.s4 1934713408
        %v3789 = vunpack.c.0.s8 %v3788
        %v3790 = vlaneseq
        %v3791 = vshrl.u32 %v3790, 7
        %v3792 = vsub.s32 %v3789, %v3791
        %v3793 = vrot.slane %v3785, %v3792
        %v3795 = vunpack.c.l.s4 1934713408
        %v3796 = vunpack.c.0.s8 %v3795
        %v3797 = vlaneseq
        %v3798 = vshrl.u32 %v3797, 7
        %v3799 = vsub.s32 %v3796, %v3798
        %v3800 = vrot.slane %v3786, %v3799
        %v3801 = vcombine.low %v3745, %v3761
        %v3802 = vcombine.high %v3745, %v3761
        %v3804 = vunpack.c.l.s4 1934713408
        %v3805 = vunpack.c.0.s8 %v3804
        %v3806 = vlaneseq
        %v3807 = vshrl.u32 %v3806, 7
        %v3808 = vsub.s32 %v3805, %v3807
        %v3809 = vrot.slane %v3801, %v3808
        %v3811 = vunpack.c.l.s4 1934713408
        %v3812 = vunpack.c.0.s8 %v3811
        %v3813 = vlaneseq
        %v3814 = vshrl.u32 %v3813, 7
        %v3815 = vsub.s32 %v3812, %v3814
        %v3816 = vrot.slane %v3802, %v3815
        %v3817 = vcombine.low %v3752, %v3768
        %v3818 = vcombine.high %v3752, %v3768
        %v3820 = vunpack.c.l.s4 1934713408
        %v3821 = vunpack.c.0.s8 %v3820
        %v3822 = vlaneseq
        %v3823 = vshrl.u32 %v3822, 7
        %v3824 = vsub.s32 %v3821, %v3823
        %v3825 = vrot.slane %v3817, %v3824
        %v3827 = vunpack.c.l.s4 1934713408
        %v3828 = vunpack.c.0.s8 %v3827
        %v3829 = vlaneseq
        %v3830 = vshrl.u32 %v3829, 7
        %v3831 = vsub.s32 %v3828, %v3830
        %v3832 = vrot.slane %v3818, %v3831
        %v3833 = vcombine.low %v3777, %v3809
        %v3834 = vcombine.high %v3777, %v3809
        %v3835 = vcombine.low %v3784, %v3816
        %v3836 = vcombine.high %v3784, %v3816
        %v3837 = vcombine.low %v3793, %v3825
        %v3838 = vcombine.high %v3793, %v3825
        %v3839 = vcombine.low %v3800, %v3832
        %v3840 = vcombine.high %v3800, %v3832
        %v3841 = vcombine.low %v3465, %v3529
        %v3842 = vcombine.high %v3465, %v3529
        %v3844 = vunpack.c.l.s4 1983009808
        %v3845 = vunpack.c.0.s8 %v3844
        %v3846 = vlaneseq
        %v3847 = vshrl.u32 %v3846, 7
        %v3848 = vsub.s32 %v3845, %v3847
        %v3849 = vrot.slane %v3841, %v3848
        %v3851 = vunpack.c.l.s4 1983009808
        %v3852 = vunpack.c.0.s8 %v3851
        %v3853 = vlaneseq
        %v3854 = vshrl.u32 %v3853, 7
        %v3855 = vsub.s32 %v3852, %v3854
        %v3856 = vrot.slane %v3842, %v3855
        %v3857 = vcombine.low %v3497, %v3561
        %v3858 = vcombine.high %v3497, %v3561
        %v3860 = vunpack.c.l.s4 1983009808
        %v3861 = vunpack.c.0.s8 %v3860
        %v3862 = vlaneseq
        %v3863 = vshrl.u32 %v3862, 7
        %v3864 = vsub.s32 %v3861, %v3863
        %v3865 = vrot.slane %v3857, %v3864
        %v3867 = vunpack.c.l.s4 1983009808
        %v3868 = vunpack.c.0.s8 %v3867
        %v3869 = vlaneseq
        %v3870 = vshrl.u32 %v3869, 7
        %v3871 = vsub.s32 %v3868, %v3870
        %v3872 = vrot.slane %v3858, %v3871
        %v3873 = vcombine.low %v3593, %v3657
        %v3874 = vcombine.high %v3593, %v3657
        %v3876 = vunpack.c.l.s4 1983009808
        %v3877 = vunpack.c.0.s8 %v3876
        %v3878 = vlaneseq
        %v3879 = vshrl.u32 %v3878, 7
        %v3880 = vsub.s32 %v3877, %v3879
        %v3881 = vrot.slane %v3873, %v3880
        %v3883 = vunpack.c.l.s4 1983009808
        %v3884 = vunpack.c.0.s8 %v3883
        %v3885 = vlaneseq
        %v3886 = vshrl.u32 %v3885, 7
        %v3887 = vsub.s32 %v3884, %v3886
        %v3888 = vrot.slane %v3874, %v3887
        %v3889 = vcombine.low %v3625, %v3689
        %v3890 = vcombine.high %v3625, %v3689
        %v3892 = vunpack.c.l.s4 1983009808
        %v3893 = vunpack.c.0.s8 %v3892
        %v3894 = vlaneseq
        %v3895 = vshrl.u32 %v3894, 7
        %v3896 = vsub.s32 %v3893, %v3895
        %v3897 = vrot.slane %v3889, %v3896
        %v3899 = vunpack.c.l.s4 1983009808
        %v3900 = vunpack.c.0.s8 %v3899
        %v3901 = vlaneseq
        %v3902 = vshrl.u32 %v3901, 7
        %v3903 = vsub.s32 %v3900, %v3902
        %v3904 = vrot.slane %v3890, %v3903
        %v3905 = vcombine.low %v3849, %v3865
        %v3906 = vcombine.high %v3849, %v3865
        %v3908 = vunpack.c.l.s4 1934713408
        %v3909 = vunpack.c.0.s8 %v3908
        %v3910 = vlaneseq
        %v3911 = vshrl.u32 %v3910, 7
        %v3912 = vsub.s32 %v3909, %v3911
        %v3913 = vrot.slane %v3905, %v3912
        %v3915 = vunpack.c.l.s4 1934713408
        %v3916 = vunpack.c.0.s8 %v3915
        %v3917 = vlaneseq
        %v3918 = vshrl.u32 %v3917, 7
        %v3919 = vsub.s32 %v3916, %v3918
        %v3920 = vrot.slane %v3906, %v3919
        %v3921 = vcombine.low %v3856, %v3872
        %v3922 = vcombine.high %v3856, %v3872
        %v3924 = vunpack.c.l.s4 1934713408
        %v3925 = vunpack.c.0.s8 %v3924
        %v3926 = vlaneseq
        %v3927 = vshrl.u32 %v3926, 7
        %v3928 = vsub.s32 %v3925, %v3927
        %v3929 = vrot.slane %v3921, %v3928
        %v3931 = vunpack.c.l.s4 1934713408
        %v3932 = vunpack.c.0.s8 %v3931
        %v3933 = vlaneseq
        %v3934 = vshrl.u32 %v3933, 7
        %v3935 = vsub.s32 %v3932, %v3934
        %v3936 = vrot.slane %v3922, %v3935
        %v3937 = vcombine.low %v3881, %v3897
        %v3938 = vcombine.high %v3881, %v3897
        %v3940 = vunpack.c.l.s4 1934713408
        %v3941 = vunpack.c.0.s8 %v3940
        %v3942 = vlaneseq
        %v3943 = vshrl.u32 %v3942, 7
        %v3944 = vsub.s32 %v3941, %v3943
        %v3945 = vrot.slane %v3937, %v3944
        %v3947 = vunpack.c.l.s4 1934713408
        %v3948 = vunpack.c.0.s8 %v3947
        %v3949 = vlaneseq
        %v3950 = vshrl.u32 %v3949, 7
        %v3951 = vsub.s32 %v3948, %v3950
        %v3952 = vrot.slane %v3938, %v3951
        %v3953 = vcombine.low %v3888, %v3904
        %v3954 = vcombine.high %v3888, %v3904
        %v3956 = vunpack.c.l.s4 1934713408
        %v3957 = vunpack.c.0.s8 %v3956
        %v3958 = vlaneseq
        %v3959 = vshrl.u32 %v3958, 7
        %v3960 = vsub.s32 %v3957, %v3959
        %v3961 = vrot.slane %v3953, %v3960
        %v3963 = vunpack.c.l.s4 1934713408
        %v3964 = vunpack.c.0.s8 %v3963
        %v3965 = vlaneseq
        %v3966 = vshrl.u32 %v3965, 7
        %v3967 = vsub.s32 %v3964, %v3966
        %v3968 = vrot.slane %v3954, %v3967
        %v3969 = vcombine.low %v3913, %v3945
        %v3970 = vcombine.high %v3913, %v3945
        %v3971 = vcombine.low %v3920, %v3952
        %v3972 = vcombine.high %v3920, %v3952
        %v3973 = vcombine.low %v3929, %v3961
        %v3974 = vcombine.high %v3929, %v3961
        %v3975 = vcombine.low %v3936, %v3968
        %v3976 = vcombine.high %v3936, %v3968
        %v3977 = vcombine.low %v3833, %v3835
        %v3978 = vcombine.high %v3833, %v3835
        %v3980 = vunpack.c.l.s4 1983009808
        %v3981 = vunpack.c.0.s8 %v3980
        %v3982 = vlaneseq
        %v3983 = vshrl.u32 %v3982, 7
        %v3984 = vsub.s32 %v3981, %v3983
        %v3985 = vrot.slane %v3977, %v3984
        %v3987 = vunpack.c.l.s4 1983009808
        %v3988 = vunpack.c.0.s8 %v3987
        %v3989 = vlaneseq
        %v3990 = vshrl.u32 %v3989, 7
        %v3991 = vsub.s32 %v3988, %v3990
        %v3992 = vrot.slane %v3978, %v3991
        %v3993 = vcombine.low %v3834, %v3836
        %v3994 = vcombine.high %v3834, %v3836
        %v3996 = vunpack.c.l.s4 1983009808
        %v3997 = vunpack.c.0.s8 %v3996
        %v3998 = vlaneseq
        %v3999 = vshrl.u32 %v3998, 7
        %v4000 = vsub.s32 %v3997, %v3999
        %v4001 = vrot.slane %v3993, %v4000
        %v4003 = vunpack.c.l.s4 1983009808
        %v4004 = vunpack.c.0.s8 %v4003
        %v4005 = vlaneseq
        %v4006 = vshrl.u32 %v4005, 7
        %v4007 = vsub.s32 %v4004, %v4006
        %v4008 = vrot.slane %v3994, %v4007
        %v4009 = vcombine.low %v3837, %v3839
        %v4010 = vcombine.high %v3837, %v3839
        %v4012 = vunpack.c.l.s4 1983009808
        %v4013 = vunpack.c.0.s8 %v4012
        %v4014 = vlaneseq
        %v4015 = vshrl.u32 %v4014, 7
        %v4016 = vsub.s32 %v4013, %v4015
        %v4017 = vrot.slane %v4009, %v4016
        %v4019 = vunpack.c.l.s4 1983009808
        %v4020 = vunpack.c.0.s8 %v4019
        %v4021 = vlaneseq
        %v4022 = vshrl.u32 %v4021, 7
        %v4023 = vsub.s32 %v4020, %v4022
        %v4024 = vrot.slane %v4010, %v4023
        %v4025 = vcombine.low %v3838, %v3840
        %v4026 = vcombine.high %v3838, %v3840
        %v4028 = vunpack.c.l.s4 1983009808
        %v4029 = vunpack.c.0.s8 %v4028
        %v4030 = vlaneseq
        %v4031 = vshrl.u32 %v4030, 7
        %v4032 = vsub.s32 %v4029, %v4031
        %v4033 = vrot.slane %v4025, %v4032
        %v4035 = vunpack.c.l.s4 1983009808
        %v4036 = vunpack.c.0.s8 %v4035
        %v4037 = vlaneseq
        %v4038 = vshrl.u32 %v4037, 7
        %v4039 = vsub.s32 %v4036, %v4038
        %v4040 = vrot.slane %v4026, %v4039
        %v4041 = vcombine.low %v3985, %v4001
        %v4042 = vcombine.high %v3985, %v4001
        %v4044 = vunpack.c.l.s4 1934713408
        %v4045 = vunpack.c.0.s8 %v4044
        %v4046 = vlaneseq
        %v4047 = vshrl.u32 %v4046, 7
        %v4048 = vsub.s32 %v4045, %v4047
        %v4049 = vrot.slane %v4041, %v4048
        %v4051 = vunpack.c.l.s4 1934713408
        %v4052 = vunpack.c.0.s8 %v4051
        %v4053 = vlaneseq
        %v4054 = vshrl.u32 %v4053, 7
        %v4055 = vsub.s32 %v4052, %v4054
        %v4056 = vrot.slane %v4042, %v4055
        %v4057 = vcombine.low %v3992, %v4008
        %v4058 = vcombine.high %v3992, %v4008
        %v4060 = vunpack.c.l.s4 1934713408
        %v4061 = vunpack.c.0.s8 %v4060
        %v4062 = vlaneseq
        %v4063 = vshrl.u32 %v4062, 7
        %v4064 = vsub.s32 %v4061, %v4063
        %v4065 = vrot.slane %v4057, %v4064
        %v4067 = vunpack.c.l.s4 1934713408
        %v4068 = vunpack.c.0.s8 %v4067
        %v4069 = vlaneseq
        %v4070 = vshrl.u32 %v4069, 7
        %v4071 = vsub.s32 %v4068, %v4070
        %v4072 = vrot.slane %v4058, %v4071
        %v4073 = vcombine.low %v4017, %v4033
        %v4074 = vcombine.high %v4017, %v4033
        %v4076 = vunpack.c.l.s4 1934713408
        %v4077 = vunpack.c.0.s8 %v4076
        %v4078 = vlaneseq
        %v4079 = vshrl.u32 %v4078, 7
        %v4080 = vsub.s32 %v4077, %v4079
        %v4081 = vrot.slane %v4073, %v4080
        %v4083 = vunpack.c.l.s4 1934713408
        %v4084 = vunpack.c.0.s8 %v4083
        %v4085 = vlaneseq
        %v4086 = vshrl.u32 %v4085, 7
        %v4087 = vsub.s32 %v4084, %v4086
        %v4088 = vrot.slane %v4074, %v4087
        %v4089 = vcombine.low %v4024, %v4040
        %v4090 = vcombine.high %v4024, %v4040
        %v4092 = vunpack.c.l.s4 1934713408
        %v4093 = vunpack.c.0.s8 %v4092
        %v4094 = vlaneseq
        %v4095 = vshrl.u32 %v4094, 7
        %v4096 = vsub.s32 %v4093, %v4095
        %v4097 = vrot.slane %v4089, %v4096
        %v4099 = vunpack.c.l.s4 1934713408
        %v4100 = vunpack.c.0.s8 %v4099
        %v4101 = vlaneseq
        %v4102 = vshrl.u32 %v4101, 7
        %v4103 = vsub.s32 %v4100, %v4102
        %v4104 = vrot.slane %v4090, %v4103
        %v4105 = vcombine.low %v4049, %v4081
        %v4106 = vcombine.high %v4049, %v4081
        %v4107 = vcombine.low %v4056, %v4088
        %v4108 = vcombine.high %v4056, %v4088
        %v4109 = vcombine.low %v4065, %v4097
        %v4110 = vcombine.high %v4065, %v4097
        %v4111 = vcombine.low %v4072, %v4104
        %v4112 = vcombine.high %v4072, %v4104
        %v4113 = vcombine.low %v3969, %v3971
        %v4114 = vcombine.high %v3969, %v3971
        %v4116 = vunpack.c.l.s4 1983009808
        %v4117 = vunpack.c.0.s8 %v4116
        %v4118 = vlaneseq
        %v4119 = vshrl.u32 %v4118, 7
        %v4120 = vsub.s32 %v4117, %v4119
        %v4121 = vrot.slane %v4113, %v4120
        %v4123 = vunpack.c.l.s4 1983009808
        %v4124 = vunpack.c.0.s8 %v4123
        %v4125 = vlaneseq
        %v4126 = vshrl.u32 %v4125, 7
        %v4127 = vsub.s32 %v4124, %v4126
        %v4128 = vrot.slane %v4114, %v4127
        %v4129 = vcombine.low %v3970, %v3972
        %v4130 = vcombine.high %v3970, %v3972
        %v4132 = vunpack.c.l.s4 1983009808
        %v4133 = vunpack.c.0.s8 %v4132
        %v4134 = vlaneseq
        %v4135 = vshrl.u32 %v4134, 7
        %v4136 = vsub.s32 %v4133, %v4135
        %v4137 = vrot.slane %v4129, %v4136
        %v4139 = vunpack.c.l.s4 1983009808
        %v4140 = vunpack.c.0.s8 %v4139
        %v4141 = vlaneseq
        %v4142 = vshrl.u32 %v4141, 7
        %v4143 = vsub.s32 %v4140, %v4142
        %v4144 = vrot.slane %v4130, %v4143
        %v4145 = vcombine.low %v3973, %v3975
        %v4146 = vcombine.high %v3973, %v3975
        %v4148 = vunpack.c.l.s4 1983009808
        %v4149 = vunpack.c.0.s8 %v4148
        %v4150 = vlaneseq
        %v4151 = vshrl.u32 %v4150, 7
        %v4152 = vsub.s32 %v4149, %v4151
        %v4153 = vrot.slane %v4145, %v4152
        %v4155 = vunpack.c.l.s4 1983009808
        %v4156 = vunpack.c.0.s8 %v4155
        %v4157 = vlaneseq
        %v4158 = vshrl.u32 %v4157, 7
        %v4159 = vsub.s32 %v4156, %v4158
        %v4160 = vrot.slane %v4146, %v4159
        %v4161 = vcombine.low %v3974, %v3976
        %v4162 = vcombine.high %v3974, %v3976
        %v4164 = vunpack.c.l.s4 1983009808
        %v4165 = vunpack.c.0.s8 %v4164
        %v4166 = vlaneseq
        %v4167 = vshrl.u32 %v4166, 7
        %v4168 = vsub.s32 %v4165, %v4167
        %v4169 = vrot.slane %v4161, %v4168
        %v4171 = vunpack.c.l.s4 1983009808
        %v4172 = vunpack.c.0.s8 %v4171
        %v4173 = vlaneseq
        %v4174 = vshrl.u32 %v4173, 7
        %v4175 = vsub.s32 %v4172, %v4174
        %v4176 = vrot.slane %v4162, %v4175
        %v4177 = vcombine.low %v4121, %v4137
        %v4178 = vcombine.high %v4121, %v4137
        %v4180 = vunpack.c.l.s4 1934713408
        %v4181 = vunpack.c.0.s8 %v4180
        %v4182 = vlaneseq
        %v4183 = vshrl.u32 %v4182, 7
        %v4184 = vsub.s32 %v4181, %v4183
        %v4185 = vrot.slane %v4177, %v4184
        %v4187 = vunpack.c.l.s4 1934713408
        %v4188 = vunpack.c.0.s8 %v4187
        %v4189 = vlaneseq
        %v4190 = vshrl.u32 %v4189, 7
        %v4191 = vsub.s32 %v4188, %v4190
        %v4192 = vrot.slane %v4178, %v4191
        %v4193 = vcombine.low %v4128, %v4144
        %v4194 = vcombine.high %v4128, %v4144
        %v4196 = vunpack.c.l.s4 1934713408
        %v4197 = vunpack.c.0.s8 %v4196
        %v4198 = vlaneseq
        %v4199 = vshrl.u32 %v4198, 7
        %v4200 = vsub.s32 %v4197, %v4199
        %v4201 = vrot.slane %v4193, %v4200
        %v4203 = vunpack.c.l.s4 1934713408
        %v4204 = vunpack.c.0.s8 %v4203
        %v4205 = vlaneseq
        %v4206 = vshrl.u32 %v4205, 7
        %v4207 = vsub.s32 %v4204, %v4206
        %v4208 = vrot.slane %v4194, %v4207
        %v4209 = vcombine.low %v4153, %v4169
        %v4210 = vcombine.high %v4153, %v4169
        %v4212 = vunpack.c.l.s4 1934713408
        %v4213 = vunpack.c.0.s8 %v4212
        %v4214 = vlaneseq
        %v4215 = vshrl.u32 %v4214, 7
        %v4216 = vsub.s32 %v4213, %v4215
        %v4217 = vrot.slane %v4209, %v4216
        %v4219 = vunpack.c.l.s4 1934713408
        %v4220 = vunpack.c.0.s8 %v4219
        %v4221 = vlaneseq
        %v4222 = vshrl.u32 %v4221, 7
        %v4223 = vsub.s32 %v4220, %v4222
        %v4224 = vrot.slane %v4210, %v4223
        %v4225 = vcombine.low %v4160, %v4176
        %v4226 = vcombine.high %v4160, %v4176
        %v4228 = vunpack.c.l.s4 1934713408
        %v4229 = vunpack.c.0.s8 %v4228
        %v4230 = vlaneseq
        %v4231 = vshrl.u32 %v4230, 7
        %v4232 = vsub.s32 %v4229, %v4231
        %v4233 = vrot.slane %v4225, %v4232
        %v4235 = vunpack.c.l.s4 1934713408
        %v4236 = vunpack.c.0.s8 %v4235
        %v4237 = vlaneseq
        %v4238 = vshrl.u32 %v4237, 7
        %v4239 = vsub.s32 %v4236, %v4238
        %v4240 = vrot.slane %v4226, %v4239
        %v4241 = vcombine.low %v4185, %v4217
        %v4242 = vcombine.high %v4185, %v4217
        %v4243 = vcombine.low %v4192, %v4224
        %v4244 = vcombine.high %v4192, %v4224
        %v4245 = vcombine.low %v4201, %v4233
        %v4246 = vcombine.high %v4201, %v4233
        %v4247 = vcombine.low %v4208, %v4240
        %v4248 = vcombine.high %v4208, %v4240
        %4250 = vrot.lane.b32.xlu0 %v4106, 8
        %v4251 = vpop.permute.xlu0 %4250
        %4254 = vrot.lane.b32.xlu0 %v4107, 16
        %v4255 = vpop.permute.xlu0 %4254
        %4258 = vrot.lane.b32.xlu0 %v4108, 24
        %v4259 = vpop.permute.xlu0 %4258
        %4262 = vrot.lane.b32.xlu0 %v4109, 32
        %v4263 = vpop.permute.xlu0 %4262
        %4266 = vrot.lane.b32.xlu0 %v4110, 40
        %v4267 = vpop.permute.xlu0 %4266
        %4270 = vrot.lane.b32.xlu0 %v4111, 48
        %v4271 = vpop.permute.xlu0 %4270
        %4274 = vrot.lane.b32.xlu0 %v4112, 56
        %v4275 = vpop.permute.xlu0 %4274
        %4278 = vrot.lane.b32.xlu0 %v4241, 64
        %v4279 = vpop.permute.xlu0 %4278
        %4282 = vrot.lane.b32.xlu0 %v4242, 72
        %v4283 = vpop.permute.xlu0 %4282
        %4286 = vrot.lane.b32.xlu0 %v4243, 80
        %v4287 = vpop.permute.xlu0 %4286
        %4290 = vrot.lane.b32.xlu0 %v4244, 88
        %v4291 = vpop.permute.xlu0 %4290
        %4294 = vrot.lane.b32.xlu0 %v4245, 96
        %v4295 = vpop.permute.xlu0 %4294
        %4298 = vrot.lane.b32.xlu0 %v4246, 104
        %v4299 = vpop.permute.xlu0 %4298
        %4302 = vrot.lane.b32.xlu0 %v4247, 112
        %v4303 = vpop.permute.xlu0 %4302
        %4306 = vrot.lane.b32.xlu0 %v4248, 120
        %v4307 = vpop.permute.xlu0 %4306
        %v4309 = vsel %vm1271, %v4105, %v4251
        %vm4310 = vcmask 130048
        %v4311 = vsel %vm4310, %v4309, %v4255
        %vm4312 = vcmask 195584
        %v4313 = vsel %vm4312, %v4311, %v4259
        %vm4314 = vcmask 261120
        %v4315 = vsel %vm4314, %v4313, %v4263
        %vm4316 = vcmask 326656
        %v4317 = vsel %vm4316, %v4315, %v4267
        %vm4318 = vcmask 392192
        %v4319 = vsel %vm4318, %v4317, %v4271
        %vm4320 = vcmask 457728
        %v4321 = vsel %vm4320, %v4319, %v4275
        %vm4322 = vcmask 523264
        %v4323 = vsel %vm4322, %v4321, %v4279
        %vm4324 = vcmask 588800
        %v4325 = vsel %vm4324, %v4323, %v4283
        %vm4326 = vcmask 654336
        %v4327 = vsel %vm4326, %v4325, %v4287
        %vm4328 = vcmask 719872
        %v4329 = vsel %vm4328, %v4327, %v4291
        %vm4330 = vcmask 785408
        %v4331 = vsel %vm4330, %v4329, %v4295
        %vm4332 = vcmask 850944
        %v4333 = vsel %vm4332, %v4331, %v4299
        %vm4334 = vcmask 916480
        %v4335 = vsel %vm4334, %v4333, %v4303
        %vm4336 = vcmask 982016
        %v4337 = vsel %vm4336, %v4335, %v4307
        %v4338 = vpack.c.bf16 %v4337, %v4337
        %v4339 = vld [vmem:[#allocation7] sm:$0xf]
        %v4340 = vld [vmem:[#allocation7 + $0x4] sm:$0xf]
        %v4341 = vld [vmem:[#allocation7 + $0x8] sm:$0xf]
        %v4342 = vld [vmem:[#allocation7 + $0xc] sm:$0xf]
        %v4343 = vld [vmem:[#allocation7 + $0x10] sm:$0xf]
        %v4344 = vld [vmem:[#allocation7 + $0x14] sm:$0xf]
        %v4345 = vld [vmem:[#allocation7 + $0x18] sm:$0xf]
        %v4346 = vld [vmem:[#allocation7 + $0x1c] sm:$0xf]
        %v4347 = vld [vmem:[#allocation7 + $0x20] sm:$0xf]
        %v4348 = vld [vmem:[#allocation7 + $0x24] sm:$0xf]
        %v4349 = vld [vmem:[#allocation7 + $0x28] sm:$0xf]
        %v4350 = vld [vmem:[#allocation7 + $0x2c] sm:$0xf]
        %v4351 = vld [vmem:[#allocation7 + $0x30] sm:$0xf]
        %v4352 = vld [vmem:[#allocation7 + $0x34] sm:$0xf]
        %v4353 = vld [vmem:[#allocation7 + $0x38] sm:$0xf]
        %v4354 = vld [vmem:[#allocation7 + $0x3c] sm:$0xf]
        %v4355 = vlaneseq
        %v4356 = vshrl.u32 %v4355, 7
        %v4357 = vsub.s32 0, %v4356
        %v4358 = vrot.slane %v629, %v4357
        %v4375 = vunpack.c.l.b16 %v4339
        %v4376 = vunpack.c.l.b16 %v4340
        %v4377 = vunpack.c.l.b16 %v4341
        %v4378 = vunpack.c.l.b16 %v4342
        %v4379 = vunpack.c.l.b16 %v4343
        %v4380 = vunpack.c.l.b16 %v4344
        %v4381 = vunpack.c.l.b16 %v4345
        %v4382 = vunpack.c.l.b16 %v4346
        %v4383 = vunpack.c.l.b16 %v4347
        %v4384 = vunpack.c.l.b16 %v4348
        %v4385 = vunpack.c.l.b16 %v4349
        %v4386 = vunpack.c.l.b16 %v4350
        %v4387 = vunpack.c.l.b16 %v4351
        %v4388 = vunpack.c.l.b16 %v4352
        %v4389 = vunpack.c.l.b16 %v4353
        %v4390 = vunpack.c.l.b16 %v4354
        %v4391 = vpack.c.b16 %v4376, %v4375
        %v4392 = vpack.c.b16 %v4378, %v4377
        %v4393 = vpack.c.b16 %v4380, %v4379
        %v4394 = vpack.c.b16 %v4382, %v4381
        %v4395 = vpack.c.b16 %v4384, %v4383
        %v4396 = vpack.c.b16 %v4386, %v4385
        %v4397 = vpack.c.b16 %v4388, %v4387
        %v4398 = vpack.c.b16 %v4390, %v4389
        %4407 = vmatprep.subr.bf16.mxu0 0
        %4408 = vmatpush1.bf16.msra.mxu0 %v4391
        %4409 = vmatprep.subr.bf16.mxu0 0
        %4410 = vmatpush1.bf16.msra.mxu0 %v4392
        %4411 = vmatprep.subr.bf16.mxu0 0
        %4412 = vmatpush1.bf16.msra.mxu0 %v4393
        %4413 = vmatprep.subr.bf16.mxu0 0
        %4414 = vmatpush1.bf16.msra.mxu0 %v4394
        %4415 = vmatprep.subr.bf16.mxu0 0
        %4416 = vmatpush1.bf16.msra.mxu0 %v4395
        %4417 = vmatprep.subr.bf16.mxu0 0
        %4418 = vmatpush1.bf16.msra.mxu0 %v4396
        %4419 = vmatprep.subr.bf16.mxu0 0
        %4420 = vmatpush1.bf16.msra.mxu0 %v4397
        %4421 = vmatprep.subr.bf16.mxu0 0
        %4422 = vmatpush1.bf16.msra.mxu0 %v4398
        %4423 = vmatprep.subr.bf16.mxu0 0
        %4424 = vmatpush1.bf16.msra.mxu0 0
        %4425 = vmatprep.subr.bf16.mxu0 0
        %4426 = vmatpush1.bf16.msra.mxu0 0
        %4427 = vmatprep.subr.bf16.mxu0 0
        %4428 = vmatpush1.bf16.msra.mxu0 0
        %4429 = vmatprep.subr.bf16.mxu0 0
        %4430 = vmatpush1.bf16.msra.mxu0 0
        %4431 = vmatprep.subr.bf16.mxu0 0
        %4432 = vmatpush1.bf16.msra.mxu0 0
        %4433 = vmatprep.subr.bf16.mxu0 0
        %4434 = vmatpush1.bf16.msra.mxu0 0
        %4435 = vmatprep.subr.bf16.mxu0 0
        %4436 = vmatpush1.bf16.msra.mxu0 0
        %4437 = vmatprep.subr.bf16.mxu0 0
        %4438 = vmatpush1.bf16.msra.mxu0 0
        %4439 = vmatprep.mubr.bf16.mxu0 0
        %4440 = vmatmul.mubr.bf16.gmra.mrb[0].mxu0 %v4338
        %v4441 = vpop.f32.mrb[0].mxu0
        %v4442 = vadd.f32 %v4358, %v4441
        %v4443 = vpop.f32.mrb[0].mxu0
        %v4444 = vpop.f32.mrb[0].mxu0
        %v4445 = vpop.f32.mrb[0].mxu0
        %4446 = vdwg.mxu0
        %v4447 = vadd.f32 %v619, %v4442
        %v4448 = vmul.f32 %v4447, %v501
        %4449 = vadd.xlane.f32.xlu0 %v4448
        %v4450 = vpop.xlane.xlu0 %4449
        %v4451 = vmul.f32 %v4450, 0.03125
        %v4452 = vsub.f32 %v4448, %v4451
        %v4453 = vmul.f32 %v4452, %v501
        %v4454 = vmul.f32 %v4453, %v4453
        %4455 = vadd.xlane.f32.xlu0 %v4454
        %v4456 = vpop.xlane.xlu0 %4455
        %v4457 = vmul.f32 %v4456, 0.03125
        %v4458 = vadd.f32 %v4457, 1e-12
        %v4459 = vrsqrt.pop %v4458
        %v4460 = vmul.f32 %v4453, %v4459
        %v4461 = vlaneseq
        %v4462 = vshrl.u32 %v4461, 7
        %v4463 = vsub.s32 2, %v4462
        %v4464 = vrot.slane %v629, %v4463
        %v4465 = vmul.f32 %v4460, %v4464
        %v4466 = vlaneseq
        %v4467 = vshrl.u32 %v4466, 7
        %v4468 = vsub.s32 3, %v4467
        %v4469 = vrot.slane %v629, %v4468
        %v4470 = vadd.f32 %v4465, %v4469
        %v4471 = vpack.c.bf16 %v4470, %v4470
        %v4472 = vld [vmem:[#allocation8] sm:$0xf]
        %v4473 = vld [vmem:[#allocation8 + $0x4] sm:$0xf]
        %v4474 = vld [vmem:[#allocation8 + $0x8] sm:$0xf]
        %v4475 = vld [vmem:[#allocation8 + $0xc] sm:$0xf]
        %v4476 = vld [vmem:[#allocation8 + $0x10] sm:$0xf]
        %v4477 = vld [vmem:[#allocation8 + $0x14] sm:$0xf]
        %v4478 = vld [vmem:[#allocation8 + $0x18] sm:$0xf]
        %v4479 = vld [vmem:[#allocation8 + $0x1c] sm:$0xf]
        %v4480 = vld [vmem:[#allocation8 + $0x20] sm:$0xf]
        %v4481 = vld [vmem:[#allocation8 + $0x24] sm:$0xf]
        %v4482 = vld [vmem:[#allocation8 + $0x28] sm:$0xf]
        %v4483 = vld [vmem:[#allocation8 + $0x2c] sm:$0xf]
        %v4484 = vld [vmem:[#allocation8 + $0x30] sm:$0xf]
        %v4485 = vld [vmem:[#allocation8 + $0x34] sm:$0xf]
        %v4486 = vld [vmem:[#allocation8 + $0x38] sm:$0xf]
        %v4487 = vld [vmem:[#allocation8 + $0x3c] sm:$0xf]
        %v4488 = vld [vmem:[%s9] sm:$0x1]
        %v4490 = vlaneseq
        %v4491 = vshrl.u32 %v4490, 7
        %v4492 = vsub.s32 0, %v4491
        %v4493 = vrot.slane %v4488, %v4492
        %v4511 = vunpack.c.l.b16 %v4472
        %v4512 = vunpack.c.l.b16 %v4473
        %v4513 = vunpack.c.l.b16 %v4474
        %v4514 = vunpack.c.l.b16 %v4475
        %v4515 = vunpack.c.l.b16 %v4476
        %v4516 = vunpack.c.l.b16 %v4477
        %v4517 = vunpack.c.l.b16 %v4478
        %v4518 = vunpack.c.l.b16 %v4479
        %v4519 = vunpack.c.l.b16 %v4480
        %v4520 = vunpack.c.l.b16 %v4481
        %v4521 = vunpack.c.l.b16 %v4482
        %v4522 = vunpack.c.l.b16 %v4483
        %v4523 = vunpack.c.l.b16 %v4484
        %v4524 = vunpack.c.l.b16 %v4485
        %v4525 = vunpack.c.l.b16 %v4486
        %v4526 = vunpack.c.l.b16 %v4487
        %v4527 = vpack.c.b16 %v4512, %v4511
        %v4528 = vpack.c.b16 %v4514, %v4513
        %v4529 = vpack.c.b16 %v4516, %v4515
        %v4530 = vpack.c.b16 %v4518, %v4517
        %v4531 = vpack.c.b16 %v4520, %v4519
        %v4532 = vpack.c.b16 %v4522, %v4521
        %v4533 = vpack.c.b16 %v4524, %v4523
        %v4534 = vpack.c.b16 %v4526, %v4525
        %4543 = vmatprep.subr.bf16.mxu0 0
        %4544 = vmatpush1.bf16.msra.mxu0 %v4527
        %4545 = vmatprep.subr.bf16.mxu0 0
        %4546 = vmatpush1.bf16.msra.mxu0 %v4528
        %4547 = vmatprep.subr.bf16.mxu0 0
        %4548 = vmatpush1.bf16.msra.mxu0 %v4529
        %4549 = vmatprep.subr.bf16.mxu0 0
        %4550 = vmatpush1.bf16.msra.mxu0 %v4530
        %4551 = vmatprep.subr.bf16.mxu0 0
        %4552 = vmatpush1.bf16.msra.mxu0 %v4531
        %4553 = vmatprep.subr.bf16.mxu0 0
        %4554 = vmatpush1.bf16.msra.mxu0 %v4532
        %4555 = vmatprep.subr.bf16.mxu0 0
        %4556 = vmatpush1.bf16.msra.mxu0 %v4533
        %4557 = vmatprep.subr.bf16.mxu0 0
        %4558 = vmatpush1.bf16.msra.mxu0 %v4534
        %4559 = vmatprep.subr.bf16.mxu0 0
        %4560 = vmatpush1.bf16.msra.mxu0 0
        %4561 = vmatprep.subr.bf16.mxu0 0
        %4562 = vmatpush1.bf16.msra.mxu0 0
        %4563 = vmatprep.subr.bf16.mxu0 0
        %4564 = vmatpush1.bf16.msra.mxu0 0
        %4565 = vmatprep.subr.bf16.mxu0 0
        %4566 = vmatpush1.bf16.msra.mxu0 0
        %4567 = vmatprep.subr.bf16.mxu0 0
        %4568 = vmatpush1.bf16.msra.mxu0 0
        %4569 = vmatprep.subr.bf16.mxu0 0
        %4570 = vmatpush1.bf16.msra.mxu0 0
        %4571 = vmatprep.subr.bf16.mxu0 0
        %4572 = vmatpush1.bf16.msra.mxu0 0
        %4573 = vmatprep.subr.bf16.mxu0 0
        %4574 = vmatpush1.bf16.msra.mxu0 0
        %4575 = vmatprep.mubr.bf16.mxu0 0
        %4576 = vmatmul.mubr.bf16.gmra.mrb[0].mxu0 %v4471
        %v4577 = vpop.f32.mrb[0].mxu0
        %v4578 = vadd.f32 %v4493, %v4577
        %v4579 = vpop.f32.mrb[0].mxu0
        %v4580 = vpop.f32.mrb[0].mxu0
        %v4581 = vpop.f32.mrb[0].mxu0
        %4582 = vdwg.mxu0
        %v4583 = vmul.f32 %v4578, 0.5
        %v4584 = vmul.f32 %v4578, 0.044715
        %v4585 = vmul.f32 %v4584, %v4578
        %v4586 = vmul.f32 %v4585, %v4578
        %v4587 = vadd.f32 %v4578, %v4586
        %v4588 = vmul.f32 %v4587, 0.7978846
        %v4589 = vtanh.pop %v4588
        %v4590 = vadd.f32 %v4589, 1.0
        %v4591 = vmul.f32 %v4583, %v4590
        %v4592 = vpack.c.bf16 %v4591, %v4591
        %v4593 = vld [vmem:[#allocation10] sm:$0xf]
        %v4594 = vld [vmem:[#allocation10 + $0x4] sm:$0xf]
        %v4595 = vld [vmem:[#allocation10 + $0x8] sm:$0xf]
        %v4596 = vld [vmem:[#allocation10 + $0xc] sm:$0xf]
        %v4597 = vld [vmem:[#allocation10 + $0x10] sm:$0xf]
        %v4598 = vld [vmem:[#allocation10 + $0x14] sm:$0xf]
        %v4599 = vld [vmem:[#allocation10 + $0x18] sm:$0xf]
        %v4600 = vld [vmem:[#allocation10 + $0x1c] sm:$0xf]
        %v4601 = vld [vmem:[#allocation10 + $0x20] sm:$0xf]
        %v4602 = vld [vmem:[#allocation10 + $0x24] sm:$0xf]
        %v4603 = vld [vmem:[#allocation10 + $0x28] sm:$0xf]
        %v4604 = vld [vmem:[#allocation10 + $0x2c] sm:$0xf]
        %v4605 = vld [vmem:[#allocation10 + $0x30] sm:$0xf]
        %v4606 = vld [vmem:[#allocation10 + $0x34] sm:$0xf]
        %v4607 = vld [vmem:[#allocation10 + $0x38] sm:$0xf]
        %v4608 = vld [vmem:[#allocation10 + $0x3c] sm:$0xf]
        %v4609 = vlaneseq
        %v4610 = vshrl.u32 %v4609, 7
        %v4611 = vsub.s32 1, %v4610
        %v4612 = vrot.slane %v629, %v4611
        %v4629 = vunpack.c.l.b16 %v4593
        %v4630 = vunpack.c.l.b16 %v4594
        %v4631 = vunpack.c.l.b16 %v4595
        %v4632 = vunpack.c.l.b16 %v4596
        %v4633 = vunpack.c.l.b16 %v4597
        %v4634 = vunpack.c.l.b16 %v4598
        %v4635 = vunpack.c.l.b16 %v4599
        %v4636 = vunpack.c.l.b16 %v4600
        %v4637 = vunpack.c.l.b16 %v4601
        %v4638 = vunpack.c.l.b16 %v4602
        %v4639 = vunpack.c.l.b16 %v4603
        %v4640 = vunpack.c.l.b16 %v4604
        %v4641 = vunpack.c.l.b16 %v4605
        %v4642 = vunpack.c.l.b16 %v4606
        %v4643 = vunpack.c.l.b16 %v4607
        %v4644 = vunpack.c.l.b16 %v4608
        %v4645 = vpack.c.b16 %v4630, %v4629
        %v4646 = vpack.c.b16 %v4632, %v4631
        %v4647 = vpack.c.b16 %v4634, %v4633
        %v4648 = vpack.c.b16 %v4636, %v4635
        %v4649 = vpack.c.b16 %v4638, %v4637
        %v4650 = vpack.c.b16 %v4640, %v4639
        %v4651 = vpack.c.b16 %v4642, %v4641
        %v4652 = vpack.c.b16 %v4644, %v4643
        %4661 = vmatprep.subr.bf16.mxu0 0
        %4662 = vmatpush1.bf16.msra.mxu0 %v4645
        %4663 = vmatprep.subr.bf16.mxu0 0
        %4664 = vmatpush1.bf16.msra.mxu0 %v4646
        %4665 = vmatprep.subr.bf16.mxu0 0
        %4666 = vmatpush1.bf16.msra.mxu0 %v4647
        %4667 = vmatprep.subr.bf16.mxu0 0
        %4668 = vmatpush1.bf16.msra.mxu0 %v4648
        %4669 = vmatprep.subr.bf16.mxu0 0
        %4670 = vmatpush1.bf16.msra.mxu0 %v4649
        %4671 = vmatprep.subr.bf16.mxu0 0
        %4672 = vmatpush1.bf16.msra.mxu0 %v4650
        %4673 = vmatprep.subr.bf16.mxu0 0
        %4674 = vmatpush1.bf16.msra.mxu0 %v4651
        %4675 = vmatprep.subr.bf16.mxu0 0
        %4676 = vmatpush1.bf16.msra.mxu0 %v4652
        %4677 = vmatprep.subr.bf16.mxu0 0
        %4678 = vmatpush1.bf16.msra.mxu0 0
        %4679 = vmatprep.subr.bf16.mxu0 0
        %4680 = vmatpush1.bf16.msra.mxu0 0
        %4681 = vmatprep.subr.bf16.mxu0 0
        %4682 = vmatpush1.bf16.msra.mxu0 0
        %4683 = vmatprep.subr.bf16.mxu0 0
        %4684 = vmatpush1.bf16.msra.mxu0 0
        %4685 = vmatprep.subr.bf16.mxu0 0
        %4686 = vmatpush1.bf16.msra.mxu0 0
        %4687 = vmatprep.subr.bf16.mxu0 0
        %4688 = vmatpush1.bf16.msra.mxu0 0
        %4689 = vmatprep.subr.bf16.mxu0 0
        %4690 = vmatpush1.bf16.msra.mxu0 0
        %4691 = vmatprep.subr.bf16.mxu0 0
        %4692 = vmatpush1.bf16.msra.mxu0 0
        %4693 = vmatprep.mubr.bf16.mxu0 0
        %4694 = vmatmul.mubr.bf16.gmra.mrb[0].mxu0 %v4592
        %v4695 = vpop.f32.mrb[0].mxu0
        %v4696 = vadd.f32 %v4612, %v4695
        %v4697 = vpop.f32.mrb[0].mxu0
        %v4698 = vpop.f32.mrb[0].mxu0
        %v4699 = vpop.f32.mrb[0].mxu0
        %4700 = vdwg.mxu0
        %v4701 = vadd.f32 %v4470, %v4696
        %v4702 = vmul.f32 %v4701, %v501
        %4703 = vadd.xlane.f32.xlu0 %v4702
        %v4704 = vpop.xlane.xlu0 %4703
        %v4705 = vmul.f32 %v4704, 0.03125
        %v4706 = vsub.f32 %v4702, %v4705
        %v4707 = vmul.f32 %v4706, %v501
        %v4708 = vmul.f32 %v4707, %v4707
        %4709 = vadd.xlane.f32.xlu0 %v4708
        %v4710 = vpop.xlane.xlu0 %4709
        %v4711 = vmul.f32 %v4710, 0.03125
        %v4712 = vadd.f32 %v4711, 1e-12
        %v4713 = vrsqrt.pop %v4712
        %v4714 = vmul.f32 %v4707, %v4713
        %v4715 = vlaneseq
        %v4716 = vshrl.u32 %v4715, 7
        %v4717 = vsub.s32 4, %v4716
        %v4718 = vrot.slane %v629, %v4717
        %v4719 = vmul.f32 %v4714, %v4718
        %v4720 = vlaneseq
        %v4721 = vshrl.u32 %v4720, 7
        %v4722 = vsub.s32 5, %v4721
        %v4723 = vrot.slane %v629, %v4722
        %v4724 = vadd.f32 %v4719, %v4723
        %s4725 = scalar_lea.vmem %s11, 8
        %v4726 = vld [vmem:[%s4725] sm:$0x3f]
        %v4727 = vpack.c.bf16 %v4724, %v4724
        %s4728 = scalar_lea.vmem [#allocation5], 192
        %v4729 = vld [vmem:[%s4728] sm:$0xff]
        %v4730 = vld [vmem:[%s4728 + $0x8] sm:$0xf]
        %v4731 = vld [vmem:[%s4728 + $0xc] sm:$0xff]
        %v4732 = vld [vmem:[%s4728 + $0x14] sm:$0xf]
        %v4733 = vld [vmem:[%s4728 + $0x18] sm:$0xff]
        %v4734 = vld [vmem:[%s4728 + $0x20] sm:$0xf]
        %v4735 = vld [vmem:[%s4728 + $0x24] sm:$0xff]
        %v4736 = vld [vmem:[%s4728 + $0x2c] sm:$0xf]
        %v4737 = vld [vmem:[%s4728 + $0x30] sm:$0xff]
        %v4738 = vld [vmem:[%s4728 + $0x38] sm:$0xf]
        %v4739 = vld [vmem:[%s4728 + $0x3c] sm:$0xff]
        %v4740 = vld [vmem:[%s4728 + $0x44] sm:$0xf]
        %v4741 = vld [vmem:[%s4728 + $0x48] sm:$0xff]
        %v4742 = vld [vmem:[%s4728 + $0x50] sm:$0xf]
        %v4743 = vld [vmem:[%s4728 + $0x54] sm:$0xff]
        %v4744 = vld [vmem:[%s4728 + $0x5c] sm:$0xf]
        %v4745 = vld [vmem:[%s4728 + $0x60] sm:$0xff]
        %v4746 = vld [vmem:[%s4728 + $0x68] sm:$0xf]
        %v4747 = vld [vmem:[%s4728 + $0x6c] sm:$0xff]
        %v4748 = vld [vmem:[%s4728 + $0x74] sm:$0xf]
        %v4749 = vld [vmem:[%s4728 + $0x78] sm:$0xff]
        %v4750 = vld [vmem:[%s4728 + $0x80] sm:$0xf]
        %v4751 = vld [vmem:[%s4728 + $0x84] sm:$0xff]
        %v4752 = vld [vmem:[%s4728 + $0x8c] sm:$0xf]
        %v4753 = vld [vmem:[%s4728 + $0x90] sm:$0xff]
        %v4754 = vld [vmem:[%s4728 + $0x98] sm:$0xf]
        %v4755 = vld [vmem:[%s4728 + $0x9c] sm:$0xff]
        %v4756 = vld [vmem:[%s4728 + $0xa4] sm:$0xf]
        %v4757 = vld [vmem:[%s4728 + $0xa8] sm:$0xff]
        %v4758 = vld [vmem:[%s4728 + $0xb0] sm:$0xf]
        %v4759 = vld [vmem:[%s4728 + $0xb4] sm:$0xff]
        %v4760 = vld [vmem:[%s4728 + $0xbc] sm:$0xf]
        %s4761 = scalar_lea.vmem %s6, 3
        %v4762 = vld [vmem:[%s4761] sm:$0x7]
        %v4764 = vlaneseq
        %v4765 = vshrl.u32 %v4764, 7
        %v4766 = vsub.s32 0, %v4765
        %v4767 = vrot.slane %v4762, %v4766
        %v4768 = vlaneseq
        %v4769 = vshrl.u32 %v4768, 7
        %v4770 = vsub.s32 1, %v4769
        %v4771 = vrot.slane %v4762, %v4770
        %v4772 = vlaneseq
        %v4773 = vshrl.u32 %v4772, 7
        %v4774 = vsub.s32 2, %v4773
        %v4775 = vrot.slane %v4762, %v4774
        %v4811 = vunpack.c.l.b16 %v4729
        %v4812 = vunpack.c.h.b16 %v4729
        %v4813 = vunpack.c.l.b16 %v4730
        %v4814 = vunpack.c.l.b16 %v4731
        %v4815 = vunpack.c.h.b16 %v4731
        %v4816 = vunpack.c.l.b16 %v4732
        %v4817 = vunpack.c.l.b16 %v4733
        %v4818 = vunpack.c.h.b16 %v4733
        %v4819 = vunpack.c.l.b16 %v4734
        %v4820 = vunpack.c.l.b16 %v4735
        %v4821 = vunpack.c.h.b16 %v4735
        %v4822 = vunpack.c.l.b16 %v4736
        %v4823 = vunpack.c.l.b16 %v4737
        %v4824 = vunpack.c.h.b16 %v4737
        %v4825 = vunpack.c.l.b16 %v4738
        %v4826 = vunpack.c.l.b16 %v4739
        %v4827 = vunpack.c.h.b16 %v4739
        %v4828 = vunpack.c.l.b16 %v4740
        %v4829 = vunpack.c.l.b16 %v4741
        %v4830 = vunpack.c.h.b16 %v4741
        %v4831 = vunpack.c.l.b16 %v4742
        %v4832 = vunpack.c.l.b16 %v4743
        %v4833 = vunpack.c.h.b16 %v4743
        %v4834 = vunpack.c.l.b16 %v4744
        %v4835 = vunpack.c.l.b16 %v4745
        %v4836 = vunpack.c.h.b16 %v4745
        %v4837 = vunpack.c.l.b16 %v4746
        %v4838 = vunpack.c.l.b16 %v4747
        %v4839 = vunpack.c.h.b16 %v4747
        %v4840 = vunpack.c.l.b16 %v4748
        %v4841 = vunpack.c.l.b16 %v4749
        %v4842 = vunpack.c.h.b16 %v4749
        %v4843 = vunpack.c.l.b16 %v4750
        %v4844 = vunpack.c.l.b16 %v4751
        %v4845 = vunpack.c.h.b16 %v4751
        %v4846 = vunpack.c.l.b16 %v4752
        %v4847 = vunpack.c.l.b16 %v4753
        %v4848 = vunpack.c.h.b16 %v4753
        %v4849 = vunpack.c.l.b16 %v4754
        %v4850 = vunpack.c.l.b16 %v4755
        %v4851 = vunpack.c.h.b16 %v4755
        %v4852 = vunpack.c.l.b16 %v4756
        %v4853 = vunpack.c.l.b16 %v4757
        %v4854 = vunpack.c.h.b16 %v4757
        %v4855 = vunpack.c.l.b16 %v4758
        %v4856 = vunpack.c.l.b16 %v4759
        %v4857 = vunpack.c.h.b16 %v4759
        %v4858 = vunpack.c.l.b16 %v4760
        %v4859 = vpack.c.b16 %v4814, %v4811
        %v4860 = vpack.c.b16 %v4815, %v4812
        %v4861 = vpack.c.b16 %v4816, %v4813
        %v4862 = vpack.c.b16 %v4820, %v4817
        %v4863 = vpack.c.b16 %v4821, %v4818
        %v4864 = vpack.c.b16 %v4822, %v4819
        %v4865 = vpack.c.b16 %v4826, %v4823
        %v4866 = vpack.c.b16 %v4827, %v4824
        %v4867 = vpack.c.b16 %v4828, %v4825
        %v4868 = vpack.c.b16 %v4832, %v4829
        %v4869 = vpack.c.b16 %v4833, %v4830
        %v4870 = vpack.c.b16 %v4834, %v4831
        %v4871 = vpack.c.b16 %v4838, %v4835
        %v4872 = vpack.c.b16 %v4839, %v4836
        %v4873 = vpack.c.b16 %v4840, %v4837
        %v4874 = vpack.c.b16 %v4844, %v4841
        %v4875 = vpack.c.b16 %v4845, %v4842
        %v4876 = vpack.c.b16 %v4846, %v4843
        %v4877 = vpack.c.b16 %v4850, %v4847
        %v4878 = vpack.c.b16 %v4851, %v4848
        %v4879 = vpack.c.b16 %v4852, %v4849
        %v4880 = vpack.c.b16 %v4856, %v4853
        %v4881 = vpack.c.b16 %v4857, %v4854
        %v4882 = vpack.c.b16 %v4858, %v4855
        %4907 = vmatprep.subr.bf16.mxu0 %v4860
        %4908 = vmatpush1.bf16.msra.mxu0 %v4859
        %4909 = vmatprep.subr.bf16.mxu0 %v4863
        %4910 = vmatpush1.bf16.msra.mxu0 %v4862
        %4911 = vmatprep.subr.bf16.mxu0 %v4866
        %4912 = vmatpush1.bf16.msra.mxu0 %v4865
        %4913 = vmatprep.subr.bf16.mxu0 %v4869
        %4914 = vmatpush1.bf16.msra.mxu0 %v4868
        %4915 = vmatprep.subr.bf16.mxu0 %v4872
        %4916 = vmatpush1.bf16.msra.mxu0 %v4871
        %4917 = vmatprep.subr.bf16.mxu0 %v4875
        %4918 = vmatpush1.bf16.msra.mxu0 %v4874
        %4919 = vmatprep.subr.bf16.mxu0 %v4878
        %4920 = vmatpush1.bf16.msra.mxu0 %v4877
        %4921 = vmatprep.subr.bf16.mxu0 %v4881
        %4922 = vmatpush1.bf16.msra.mxu0 %v4880
        %4923 = vmatprep.subr.bf16.mxu0 0
        %4924 = vmatpush1.bf16.msra.mxu0 0
        %4925 = vmatprep.subr.bf16.mxu0 0
        %4926 = vmatpush1.bf16.msra.mxu0 0
        %4927 = vmatprep.subr.bf16.mxu0 0
        %4928 = vmatpush1.bf16.msra.mxu0 0
        %4929 = vmatprep.subr.bf16.mxu0 0
        %4930 = vmatpush1.bf16.msra.mxu0 0
        %4931 = vmatprep.subr.bf16.mxu0 0
        %4932 = vmatpush1.bf16.msra.mxu0 0
        %4933 = vmatprep.subr.bf16.mxu0 0
        %4934 = vmatpush1.bf16.msra.mxu0 0
        %4935 = vmatprep.subr.bf16.mxu0 0
        %4936 = vmatpush1.bf16.msra.mxu0 0
        %4937 = vmatprep.subr.bf16.mxu0 0
        %4938 = vmatpush1.bf16.msra.mxu0 0
        %4939 = vmatprep.mubr.bf16.mxu0 0
        %4940 = vmatmul.mubr.bf16.gmra.mrb[0].mxu0 %v4727
        %v4941 = vpop.f32.mrb[0].mxu0
        %v4942 = vadd.f32 %v4767, %v4941
        %v4943 = vpop.f32.mrb[0].mxu0
        %v4944 = vadd.f32 %v4771, %v4943
        %v4945 = vpop.f32.mrb[0].mxu0
        %v4946 = vpop.f32.mrb[0].mxu0
        %4947 = vdwg.mxu0
        %4948 = vmatprep.subr.bf16.mxu0 0
        %4949 = vmatpush1.bf16.msra.mxu0 %v4861
        %4950 = vmatprep.subr.bf16.mxu0 0
        %4951 = vmatpush1.bf16.msra.mxu0 %v4864
        %4952 = vmatprep.subr.bf16.mxu0 0
        %4953 = vmatpush1.bf16.msra.mxu0 %v4867
        %4954 = vmatprep.subr.bf16.mxu0 0
        %4955 = vmatpush1.bf16.msra.mxu0 %v4870
        %4956 = vmatprep.subr.bf16.mxu0 0
        %4957 = vmatpush1.bf16.msra.mxu0 %v4873
        %4958 = vmatprep.subr.bf16.mxu0 0
        %4959 = vmatpush1.bf16.msra.mxu0 %v4876
        %4960 = vmatprep.subr.bf16.mxu0 0
        %4961 = vmatpush1.bf16.msra.mxu0 %v4879
        %4962 = vmatprep.subr.bf16.mxu0 0
        %4963 = vmatpush1.bf16.msra.mxu0 %v4882
        %4964 = vmatprep.subr.bf16.mxu0 0
        %4965 = vmatpush1.bf16.msra.mxu0 0
        %4966 = vmatprep.subr.bf16.mxu0 0
        %4967 = vmatpush1.bf16.msra.mxu0 0
        %4968 = vmatprep.subr.bf16.mxu0 0
        %4969 = vmatpush1.bf16.msra.mxu0 0
        %4970 = vmatprep.subr.bf16.mxu0 0
        %4971 = vmatpush1.bf16.msra.mxu0 0
        %4972 = vmatprep.subr.bf16.mxu0 0
        %4973 = vmatpush1.bf16.msra.mxu0 0
        %4974 = vmatprep.subr.bf16.mxu0 0
        %4975 = vmatpush1.bf16.msra.mxu0 0
        %4976 = vmatprep.subr.bf16.mxu0 0
        %4977 = vmatpush1.bf16.msra.mxu0 0
        %4978 = vmatprep.subr.bf16.mxu0 0
        %4979 = vmatpush1.bf16.msra.mxu0 0
        %4980 = vmatprep.mubr.bf16.mxu0 0
        %4981 = vmatmul.mubr.bf16.gmra.mrb[0].mxu0 %v4727
        %v4982 = vpop.f32.mrb[0].mxu0
        %v4983 = vadd.f32 %v4775, %v4982
        %v4984 = vpop.f32.mrb[0].mxu0
        %v4985 = vpop.f32.mrb[0].mxu0
        %v4986 = vpop.f32.mrb[0].mxu0
        %4987 = vdwg.mxu0
        %v4988 = vpack.c.bf16 %v4942, %v4942
        %4990 = vrot.lane.b32.xlu0 %v4988, 120
        %v4991 = vpop.permute.xlu0 %4990
        %4992 = vrot.lane.b32.xlu0 %v4988, 112
        %v4993 = vpop.permute.xlu0 %4992
        %4994 = vrot.lane.b32.xlu0 %v4988, 104
        %v4995 = vpop.permute.xlu0 %4994
        %4996 = vrot.lane.b32.xlu0 %v4988, 96
        %v4997 = vpop.permute.xlu0 %4996
        %4998 = vrot.lane.b32.xlu0 %v4988, 88
        %v4999 = vpop.permute.xlu0 %4998
        %5000 = vrot.lane.b32.xlu0 %v4988, 80
        %v5001 = vpop.permute.xlu0 %5000
        %5002 = vrot.lane.b32.xlu0 %v4988, 72
        %v5003 = vpop.permute.xlu0 %5002
        %5004 = vrot.lane.b32.xlu0 %v4988, 64
        %v5005 = vpop.permute.xlu0 %5004
        %5006 = vrot.lane.b32.xlu0 %v4988, 56
        %v5007 = vpop.permute.xlu0 %5006
        %5008 = vrot.lane.b32.xlu0 %v4988, 48
        %v5009 = vpop.permute.xlu0 %5008
        %5010 = vrot.lane.b32.xlu0 %v4988, 40
        %v5011 = vpop.permute.xlu0 %5010
        %5012 = vrot.lane.b32.xlu0 %v4988, 32
        %v5013 = vpop.permute.xlu0 %5012
        %5014 = vrot.lane.b32.xlu0 %v4988, 24
        %v5015 = vpop.permute.xlu0 %5014
        %5016 = vrot.lane.b32.xlu0 %v4988, 16
        %v5017 = vpop.permute.xlu0 %5016
        %5018 = vrot.lane.b32.xlu0 %v4988, 8
        %v5019 = vpop.permute.xlu0 %5018
        %v5020 = vpack.c.bf16 %v4944, %v4944
        %5022 = vrot.lane.b32.xlu0 %v5020, 120
        %v5023 = vpop.permute.xlu0 %5022
        %5025 = vrot.lane.b32.xlu0 %v5020, 112
        %v5026 = vpop.permute.xlu0 %5025
        %5028 = vrot.lane.b32.xlu0 %v5020, 104
        %v5029 = vpop.permute.xlu0 %5028
        %5031 = vrot.lane.b32.xlu0 %v5020, 96
        %v5032 = vpop.permute.xlu0 %5031
        %5034 = vrot.lane.b32.xlu0 %v5020, 88
        %v5035 = vpop.permute.xlu0 %5034
        %5037 = vrot.lane.b32.xlu0 %v5020, 80
        %v5038 = vpop.permute.xlu0 %5037
        %5040 = vrot.lane.b32.xlu0 %v5020, 72
        %v5041 = vpop.permute.xlu0 %5040
        %5043 = vrot.lane.b32.xlu0 %v5020, 64
        %v5044 = vpop.permute.xlu0 %5043
        %5046 = vrot.lane.b32.xlu0 %v5020, 56
        %v5047 = vpop.permute.xlu0 %5046
        %5049 = vrot.lane.b32.xlu0 %v5020, 48
        %v5050 = vpop.permute.xlu0 %5049
        %5052 = vrot.lane.b32.xlu0 %v5020, 40
        %v5053 = vpop.permute.xlu0 %5052
        %5055 = vrot.lane.b32.xlu0 %v5020, 32
        %v5056 = vpop.permute.xlu0 %5055
        %5058 = vrot.lane.b32.xlu0 %v5020, 24
        %v5059 = vpop.permute.xlu0 %5058
        %5061 = vrot.lane.b32.xlu0 %v5020, 16
        %v5062 = vpop.permute.xlu0 %5061
        %5064 = vrot.lane.b32.xlu0 %v5020, 8
        %v5065 = vpop.permute.xlu0 %5064
        %v5067 = vpack.c.bf16 %v4983, %v4983
        %5069 = vrot.lane.b32.xlu0 %v5067, 120
        %v5070 = vpop.permute.xlu0 %5069
        %5072 = vrot.lane.b32.xlu0 %v5067, 112
        %v5073 = vpop.permute.xlu0 %5072
        %5075 = vrot.lane.b32.xlu0 %v5067, 104
        %v5076 = vpop.permute.xlu0 %5075
        %5078 = vrot.lane.b32.xlu0 %v5067, 96
        %v5079 = vpop.permute.xlu0 %5078
        %5081 = vrot.lane.b32.xlu0 %v5067, 88
        %v5082 = vpop.permute.xlu0 %5081
        %5084 = vrot.lane.b32.xlu0 %v5067, 80
        %v5085 = vpop.permute.xlu0 %5084
        %5087 = vrot.lane.b32.xlu0 %v5067, 72
        %v5088 = vpop.permute.xlu0 %5087
        %5090 = vrot.lane.b32.xlu0 %v5067, 64
        %v5091 = vpop.permute.xlu0 %5090
        %5093 = vrot.lane.b32.xlu0 %v5067, 56
        %v5094 = vpop.permute.xlu0 %5093
        %5096 = vrot.lane.b32.xlu0 %v5067, 48
        %v5097 = vpop.permute.xlu0 %5096
        %5099 = vrot.lane.b32.xlu0 %v5067, 40
        %v5100 = vpop.permute.xlu0 %5099
        %5102 = vrot.lane.b32.xlu0 %v5067, 32
        %v5103 = vpop.permute.xlu0 %5102
        %5105 = vrot.lane.b32.xlu0 %v5067, 24
        %v5106 = vpop.permute.xlu0 %5105
        %5108 = vrot.lane.b32.xlu0 %v5067, 16
        %v5109 = vpop.permute.xlu0 %5108
        %5111 = vrot.lane.b32.xlu0 %v5067, 8
        %v5112 = vpop.permute.xlu0 %5111
        %5114 = vxpose.xlu0.c.b16.start [1/8] %v5020, 128
        %5115 = vxpose.xlu0.c.b16.cont [2/8] 0, 128
        %5116 = vxpose.xlu0.c.b16.cont [3/8] 0, 128
        %5117 = vxpose.xlu0.c.b16.cont [4/8] 0, 128
        %5118 = vxpose.xlu0.c.b16.cont [5/8] 0, 128
        %5119 = vxpose.xlu0.c.b16.cont [6/8] 0, 128
        %5120 = vxpose.xlu0.c.b16.cont [7/8] 0, 128
        %5121 = vxpose.xlu0.c.b16.end [8/8] 0, 128
        %v5122 = vpop.trf.xlu0
        %v5123 = vpop.trf.xlu0
        %v5124 = vpop.trf.xlu0
        %v5125 = vpop.trf.xlu0
        %v5126 = vpop.trf.xlu0
        %v5127 = vpop.trf.xlu0
        %v5128 = vpop.trf.xlu0
        %v5129 = vpop.trf.xlu0
        %5130 = vxpose.xlu0.c.b16.start [1/8] %v5023, 128
        %5131 = vxpose.xlu0.c.b16.cont [2/8] 0, 128
        %5132 = vxpose.xlu0.c.b16.cont [3/8] 0, 128
        %5133 = vxpose.xlu0.c.b16.cont [4/8] 0, 128
        %5134 = vxpose.xlu0.c.b16.cont [5/8] 0, 128
        %5135 = vxpose.xlu0.c.b16.cont [6/8] 0, 128
        %5136 = vxpose.xlu0.c.b16.cont [7/8] 0, 128
        %5137 = vxpose.xlu0.c.b16.end [8/8] 0, 128
        %v5138 = vpop.trf.xlu0
        %v5139 = vpop.trf.xlu0
        %v5140 = vpop.trf.xlu0
        %v5141 = vpop.trf.xlu0
        %v5142 = vpop.trf.xlu0
        %v5143 = vpop.trf.xlu0
        %v5144 = vpop.trf.xlu0
        %v5145 = vpop.trf.xlu0
        %5146 = vxpose.xlu0.c.b16.start [1/8] %v5026, 128
        %5147 = vxpose.xlu0.c.b16.cont [2/8] 0, 128
        %5148 = vxpose.xlu0.c.b16.cont [3/8] 0, 128
        %5149 = vxpose.xlu0.c.b16.cont [4/8] 0, 128
        %5150 = vxpose.xlu0.c.b16.cont [5/8] 0, 128
        %5151 = vxpose.xlu0.c.b16.cont [6/8] 0, 128
        %5152 = vxpose.xlu0.c.b16.cont [7/8] 0, 128
        %5153 = vxpose.xlu0.c.b16.end [8/8] 0, 128
        %v5154 = vpop.trf.xlu0
        %v5155 = vpop.trf.xlu0
        %v5156 = vpop.trf.xlu0
        %v5157 = vpop.trf.xlu0
        %v5158 = vpop.trf.xlu0
        %v5159 = vpop.trf.xlu0
        %v5160 = vpop.trf.xlu0
        %v5161 = vpop.trf.xlu0
        %5162 = vxpose.xlu0.c.b16.start [1/8] %v5029, 128
        %5163 = vxpose.xlu0.c.b16.cont [2/8] 0, 128
        %5164 = vxpose.xlu0.c.b16.cont [3/8] 0, 128
        %5165 = vxpose.xlu0.c.b16.cont [4/8] 0, 128
        %5166 = vxpose.xlu0.c.b16.cont [5/8] 0, 128
        %5167 = vxpose.xlu0.c.b16.cont [6/8] 0, 128
        %5168 = vxpose.xlu0.c.b16.cont [7/8] 0, 128
        %5169 = vxpose.xlu0.c.b16.end [8/8] 0, 128
        %v5170 = vpop.trf.xlu0
        %v5171 = vpop.trf.xlu0
        %v5172 = vpop.trf.xlu0
        %v5173 = vpop.trf.xlu0
        %v5174 = vpop.trf.xlu0
        %v5175 = vpop.trf.xlu0
        %v5176 = vpop.trf.xlu0
        %v5177 = vpop.trf.xlu0
        %5178 = vxpose.xlu0.c.b16.start [1/8] %v5032, 128
        %5179 = vxpose.xlu0.c.b16.cont [2/8] 0, 128
        %5180 = vxpose.xlu0.c.b16.cont [3/8] 0, 128
        %5181 = vxpose.xlu0.c.b16.cont [4/8] 0, 128
        %5182 = vxpose.xlu0.c.b16.cont [5/8] 0, 128
        %5183 = vxpose.xlu0.c.b16.cont [6/8] 0, 128
        %5184 = vxpose.xlu0.c.b16.cont [7/8] 0, 128
        %5185 = vxpose.xlu0.c.b16.end [8/8] 0, 128
        %v5186 = vpop.trf.xlu0
        %v5187 = vpop.trf.xlu0
        %v5188 = vpop.trf.xlu0
        %v5189 = vpop.trf.xlu0
        %v5190 = vpop.trf.xlu0
        %v5191 = vpop.trf.xlu0
        %v5192 = vpop.trf.xlu0
        %v5193 = vpop.trf.xlu0
        %5194 = vxpose.xlu0.c.b16.start [1/8] %v5035, 128
        %5195 = vxpose.xlu0.c.b16.cont [2/8] 0, 128
        %5196 = vxpose.xlu0.c.b16.cont [3/8] 0, 128
        %5197 = vxpose.xlu0.c.b16.cont [4/8] 0, 128
        %5198 = vxpose.xlu0.c.b16.cont [5/8] 0, 128
        %5199 = vxpose.xlu0.c.b16.cont [6/8] 0, 128
        %5200 = vxpose.xlu0.c.b16.cont [7/8] 0, 128
        %5201 = vxpose.xlu0.c.b16.end [8/8] 0, 128
        %v5202 = vpop.trf.xlu0
        %v5203 = vpop.trf.xlu0
        %v5204 = vpop.trf.xlu0
        %v5205 = vpop.trf.xlu0
        %v5206 = vpop.trf.xlu0
        %v5207 = vpop.trf.xlu0
        %v5208 = vpop.trf.xlu0
        %v5209 = vpop.trf.xlu0
        %5210 = vxpose.xlu0.c.b16.start [1/8] %v5038, 128
        %5211 = vxpose.xlu0.c.b16.cont [2/8] 0, 128
        %5212 = vxpose.xlu0.c.b16.cont [3/8] 0, 128
        %5213 = vxpose.xlu0.c.b16.cont [4/8] 0, 128
        %5214 = vxpose.xlu0.c.b16.cont [5/8] 0, 128
        %5215 = vxpose.xlu0.c.b16.cont [6/8] 0, 128
        %5216 = vxpose.xlu0.c.b16.cont [7/8] 0, 128
        %5217 = vxpose.xlu0.c.b16.end [8/8] 0, 128
        %v5218 = vpop.trf.xlu0
        %v5219 = vpop.trf.xlu0
        %v5220 = vpop.trf.xlu0
        %v5221 = vpop.trf.xlu0
        %v5222 = vpop.trf.xlu0
        %v5223 = vpop.trf.xlu0
        %v5224 = vpop.trf.xlu0
        %v5225 = vpop.trf.xlu0
        %5226 = vxpose.xlu0.c.b16.start [1/8] %v5041, 128
        %5227 = vxpose.xlu0.c.b16.cont [2/8] 0, 128
        %5228 = vxpose.xlu0.c.b16.cont [3/8] 0, 128
        %5229 = vxpose.xlu0.c.b16.cont [4/8] 0, 128
        %5230 = vxpose.xlu0.c.b16.cont [5/8] 0, 128
        %5231 = vxpose.xlu0.c.b16.cont [6/8] 0, 128
        %5232 = vxpose.xlu0.c.b16.cont [7/8] 0, 128
        %5233 = vxpose.xlu0.c.b16.end [8/8] 0, 128
        %v5234 = vpop.trf.xlu0
        %v5235 = vpop.trf.xlu0
        %v5236 = vpop.trf.xlu0
        %v5237 = vpop.trf.xlu0
        %v5238 = vpop.trf.xlu0
        %v5239 = vpop.trf.xlu0
        %v5240 = vpop.trf.xlu0
        %v5241 = vpop.trf.xlu0
        %5242 = vxpose.xlu0.c.b16.start [1/8] %v5044, 128
        %5243 = vxpose.xlu0.c.b16.cont [2/8] 0, 128
        %5244 = vxpose.xlu0.c.b16.cont [3/8] 0, 128
        %5245 = vxpose.xlu0.c.b16.cont [4/8] 0, 128
        %5246 = vxpose.xlu0.c.b16.cont [5/8] 0, 128
        %5247 = vxpose.xlu0.c.b16.cont [6/8] 0, 128
        %5248 = vxpose.xlu0.c.b16.cont [7/8] 0, 128
        %5249 = vxpose.xlu0.c.b16.end [8/8] 0, 128
        %v5250 = vpop.trf.xlu0
        %v5251 = vpop.trf.xlu0
        %v5252 = vpop.trf.xlu0
        %v5253 = vpop.trf.xlu0
        %v5254 = vpop.trf.xlu0
        %v5255 = vpop.trf.xlu0
        %v5256 = vpop.trf.xlu0
        %v5257 = vpop.trf.xlu0
        %5258 = vxpose.xlu0.c.b16.start [1/8] %v5047, 128
        %5259 = vxpose.xlu0.c.b16.cont [2/8] 0, 128
        %5260 = vxpose.xlu0.c.b16.cont [3/8] 0, 128
        %5261 = vxpose.xlu0.c.b16.cont [4/8] 0, 128
        %5262 = vxpose.xlu0.c.b16.cont [5/8] 0, 128
        %5263 = vxpose.xlu0.c.b16.cont [6/8] 0, 128
        %5264 = vxpose.xlu0.c.b16.cont [7/8] 0, 128
        %5265 = vxpose.xlu0.c.b16.end [8/8] 0, 128
        %v5266 = vpop.trf.xlu0
        %v5267 = vpop.trf.xlu0
        %v5268 = vpop.trf.xlu0
        %v5269 = vpop.trf.xlu0
        %v5270 = vpop.trf.xlu0
        %v5271 = vpop.trf.xlu0
        %v5272 = vpop.trf.xlu0
        %v5273 = vpop.trf.xlu0
        %5274 = vxpose.xlu0.c.b16.start [1/8] %v5050, 128
        %5275 = vxpose.xlu0.c.b16.cont [2/8] 0, 128
        %5276 = vxpose.xlu0.c.b16.cont [3/8] 0, 128
        %5277 = vxpose.xlu0.c.b16.cont [4/8] 0, 128
        %5278 = vxpose.xlu0.c.b16.cont [5/8] 0, 128
        %5279 = vxpose.xlu0.c.b16.cont [6/8] 0, 128
        %5280 = vxpose.xlu0.c.b16.cont [7/8] 0, 128
        %5281 = vxpose.xlu0.c.b16.end [8/8] 0, 128
        %v5282 = vpop.trf.xlu0
        %v5283 = vpop.trf.xlu0
        %v5284 = vpop.trf.xlu0
        %v5285 = vpop.trf.xlu0
        %v5286 = vpop.trf.xlu0
        %v5287 = vpop.trf.xlu0
        %v5288 = vpop.trf.xlu0
        %v5289 = vpop.trf.xlu0
        %5290 = vxpose.xlu0.c.b16.start [1/8] %v5053, 128
        %5291 = vxpose.xlu0.c.b16.cont [2/8] 0, 128
        %5292 = vxpose.xlu0.c.b16.cont [3/8] 0, 128
        %5293 = vxpose.xlu0.c.b16.cont [4/8] 0, 128
        %5294 = vxpose.xlu0.c.b16.cont [5/8] 0, 128
        %5295 = vxpose.xlu0.c.b16.cont [6/8] 0, 128
        %5296 = vxpose.xlu0.c.b16.cont [7/8] 0, 128
        %5297 = vxpose.xlu0.c.b16.end [8/8] 0, 128
        %v5298 = vpop.trf.xlu0
        %v5299 = vpop.trf.xlu0
        %v5300 = vpop.trf.xlu0
        %v5301 = vpop.trf.xlu0
        %v5302 = vpop.trf.xlu0
        %v5303 = vpop.trf.xlu0
        %v5304 = vpop.trf.xlu0
        %v5305 = vpop.trf.xlu0
        %5306 = vxpose.xlu0.c.b16.start [1/8] %v5056, 128
        %5307 = vxpose.xlu0.c.b16.cont [2/8] 0, 128
        %5308 = vxpose.xlu0.c.b16.cont [3/8] 0, 128
        %5309 = vxpose.xlu0.c.b16.cont [4/8] 0, 128
        %5310 = vxpose.xlu0.c.b16.cont [5/8] 0, 128
        %5311 = vxpose.xlu0.c.b16.cont [6/8] 0, 128
        %5312 = vxpose.xlu0.c.b16.cont [7/8] 0, 128
        %5313 = vxpose.xlu0.c.b16.end [8/8] 0, 128
        %v5314 = vpop.trf.xlu0
        %v5315 = vpop.trf.xlu0
        %v5316 = vpop.trf.xlu0
        %v5317 = vpop.trf.xlu0
        %v5318 = vpop.trf.xlu0
        %v5319 = vpop.trf.xlu0
        %v5320 = vpop.trf.xlu0
        %v5321 = vpop.trf.xlu0
        %5322 = vxpose.xlu0.c.b16.start [1/8] %v5059, 128
        %5323 = vxpose.xlu0.c.b16.cont [2/8] 0, 128
        %5324 = vxpose.xlu0.c.b16.cont [3/8] 0, 128
        %5325 = vxpose.xlu0.c.b16.cont [4/8] 0, 128
        %5326 = vxpose.xlu0.c.b16.cont [5/8] 0, 128
        %5327 = vxpose.xlu0.c.b16.cont [6/8] 0, 128
        %5328 = vxpose.xlu0.c.b16.cont [7/8] 0, 128
        %5329 = vxpose.xlu0.c.b16.end [8/8] 0, 128
        %v5330 = vpop.trf.xlu0
        %v5331 = vpop.trf.xlu0
        %v5332 = vpop.trf.xlu0
        %v5333 = vpop.trf.xlu0
        %v5334 = vpop.trf.xlu0
        %v5335 = vpop.trf.xlu0
        %v5336 = vpop.trf.xlu0
        %v5337 = vpop.trf.xlu0
        %5338 = vxpose.xlu0.c.b16.start [1/8] %v5062, 128
        %5339 = vxpose.xlu0.c.b16.cont [2/8] 0, 128
        %5340 = vxpose.xlu0.c.b16.cont [3/8] 0, 128
        %5341 = vxpose.xlu0.c.b16.cont [4/8] 0, 128
        %5342 = vxpose.xlu0.c.b16.cont [5/8] 0, 128
        %5343 = vxpose.xlu0.c.b16.cont [6/8] 0, 128
        %5344 = vxpose.xlu0.c.b16.cont [7/8] 0, 128
        %5345 = vxpose.xlu0.c.b16.end [8/8] 0, 128
        %v5346 = vpop.trf.xlu0
        %v5347 = vpop.trf.xlu0
        %v5348 = vpop.trf.xlu0
        %v5349 = vpop.trf.xlu0
        %v5350 = vpop.trf.xlu0
        %v5351 = vpop.trf.xlu0
        %v5352 = vpop.trf.xlu0
        %v5353 = vpop.trf.xlu0
        %5354 = vxpose.xlu0.c.b16.start [1/8] %v5065, 128
        %5355 = vxpose.xlu0.c.b16.cont [2/8] 0, 128
        %5356 = vxpose.xlu0.c.b16.cont [3/8] 0, 128
        %5357 = vxpose.xlu0.c.b16.cont [4/8] 0, 128
        %5358 = vxpose.xlu0.c.b16.cont [5/8] 0, 128
        %5359 = vxpose.xlu0.c.b16.cont [6/8] 0, 128
        %5360 = vxpose.xlu0.c.b16.cont [7/8] 0, 128
        %5361 = vxpose.xlu0.c.b16.end [8/8] 0, 128
        %v5362 = vpop.trf.xlu0
        %v5363 = vpop.trf.xlu0
        %v5364 = vpop.trf.xlu0
        %v5365 = vpop.trf.xlu0
        %v5366 = vpop.trf.xlu0
        %v5367 = vpop.trf.xlu0
        %v5368 = vpop.trf.xlu0
        %v5369 = vpop.trf.xlu0
        %v5371 = vsel %vm1271, %v4988, 0
        %v5374 = vsel %vm1275, %v5122, 0
        %5376 = vmatprep.subr.bf16.mxu0 0
        %5377 = vmatpush1.bf16.msra.mxu0 %v5374
        %5378 = vmatprep.subr.bf16.mxu0 0
        %5379 = vmatpush1.bf16.msra.mxu0 0
        %5380 = vmatprep.subr.bf16.mxu0 0
        %5381 = vmatpush1.bf16.msra.mxu0 0
        %5382 = vmatprep.subr.bf16.mxu0 0
        %5383 = vmatpush1.bf16.msra.mxu0 0
        %5384 = vmatprep.subr.bf16.mxu0 0
        %5385 = vmatpush1.bf16.msra.mxu0 0
        %5386 = vmatprep.subr.bf16.mxu0 0
        %5387 = vmatpush1.bf16.msra.mxu0 0
        %5388 = vmatprep.subr.bf16.mxu0 0
        %5389 = vmatpush1.bf16.msra.mxu0 0
        %5390 = vmatprep.subr.bf16.mxu0 0
        %5391 = vmatpush1.bf16.msra.mxu0 0
        %5392 = vmatprep.subr.bf16.mxu0 0
        %5393 = vmatpush1.bf16.msra.mxu0 0
        %5394 = vmatprep.subr.bf16.mxu0 0
        %5395 = vmatpush1.bf16.msra.mxu0 0
        %5396 = vmatprep.subr.bf16.mxu0 0
        %5397 = vmatpush1.bf16.msra.mxu0 0
        %5398 = vmatprep.subr.bf16.mxu0 0
        %5399 = vmatpush1.bf16.msra.mxu0 0
        %5400 = vmatprep.subr.bf16.mxu0 0
        %5401 = vmatpush1.bf16.msra.mxu0 0
        %5402 = vmatprep.subr.bf16.mxu0 0
        %5403 = vmatpush1.bf16.msra.mxu0 0
        %5404 = vmatprep.subr.bf16.mxu0 0
        %5405 = vmatpush1.bf16.msra.mxu0 0
        %5406 = vmatprep.subr.bf16.mxu0 0
        %5407 = vmatpush1.bf16.msra.mxu0 0
        %5408 = vmatprep.mubr.bf16.mxu0 0
        %5409 = vmatmul.mubr.bf16.gmra.mrb[0].mxu0 %v5371
        %v5410 = vpop.f32.mrb[0].mxu0
        %v5411 = vadd.f32 %v627, %v5410
        %v5412 = vpop.f32.mrb[0].mxu0
        %v5413 = vpop.f32.mrb[0].mxu0
        %v5414 = vpop.f32.mrb[0].mxu0
        %5415 = vdwg.mxu0
        %v5417 = vsel %vm1271, %v4991, 0
        %v5420 = vsel %vm1275, %v5138, 0
        %5422 = vmatprep.subr.bf16.mxu0 0
        %5423 = vmatpush1.bf16.msra.mxu0 %v5420
        %5424 = vmatprep.subr.bf16.mxu0 0
        %5425 = vmatpush1.bf16.msra.mxu0 0
        %5426 = vmatprep.subr.bf16.mxu0 0
        %5427 = vmatpush1.bf16.msra.mxu0 0
        %5428 = vmatprep.subr.bf16.mxu0 0
        %5429 = vmatpush1.bf16.msra.mxu0 0
        %5430 = vmatprep.subr.bf16.mxu0 0
        %5431 = vmatpush1.bf16.msra.mxu0 0
        %5432 = vmatprep.subr.bf16.mxu0 0
        %5433 = vmatpush1.bf16.msra.mxu0 0
        %5434 = vmatprep.subr.bf16.mxu0 0
        %5435 = vmatpush1.bf16.msra.mxu0 0
        %5436 = vmatprep.subr.bf16.mxu0 0
        %5437 = vmatpush1.bf16.msra.mxu0 0
        %5438 = vmatprep.subr.bf16.mxu0 0
        %5439 = vmatpush1.bf16.msra.mxu0 0
        %5440 = vmatprep.subr.bf16.mxu0 0
        %5441 = vmatpush1.bf16.msra.mxu0 0
        %5442 = vmatprep.subr.bf16.mxu0 0
        %5443 = vmatpush1.bf16.msra.mxu0 0
        %5444 = vmatprep.subr.bf16.mxu0 0
        %5445 = vmatpush1.bf16.msra.mxu0 0
        %5446 = vmatprep.subr.bf16.mxu0 0
        %5447 = vmatpush1.bf16.msra.mxu0 0
        %5448 = vmatprep.subr.bf16.mxu0 0
        %5449 = vmatpush1.bf16.msra.mxu0 0
        %5450 = vmatprep.subr.bf16.mxu0 0
        %5451 = vmatpush1.bf16.msra.mxu0 0
        %5452 = vmatprep.subr.bf16.mxu0 0
        %5453 = vmatpush1.bf16.msra.mxu0 0
        %5454 = vmatprep.mubr.bf16.mxu0 0
        %5455 = vmatmul.mubr.bf16.gmra.mrb[0].mxu0 %v5417
        %v5456 = vpop.f32.mrb[0].mxu0
        %v5457 = vadd.f32 %v627, %v5456
        %v5458 = vpop.f32.mrb[0].mxu0
        %v5459 = vpop.f32.mrb[0].mxu0
        %v5460 = vpop.f32.mrb[0].mxu0
        %5461 = vdwg.mxu0
        %v5463 = vsel %vm1271, %v4993, 0
        %v5466 = vsel %vm1275, %v5154, 0
        %5468 = vmatprep.subr.bf16.mxu0 0
        %5469 = vmatpush1.bf16.msra.mxu0 %v5466
        %5470 = vmatprep.subr.bf16.mxu0 0
        %5471 = vmatpush1.bf16.msra.mxu0 0
        %5472 = vmatprep.subr.bf16.mxu0 0
        %5473 = vmatpush1.bf16.msra.mxu0 0
        %5474 = vmatprep.subr.bf16.mxu0 0
        %5475 = vmatpush1.bf16.msra.mxu0 0
        %5476 = vmatprep.subr.bf16.mxu0 0
        %5477 = vmatpush1.bf16.msra.mxu0 0
        %5478 = vmatprep.subr.bf16.mxu0 0
        %5479 = vmatpush1.bf16.msra.mxu0 0
        %5480 = vmatprep.subr.bf16.mxu0 0
        %5481 = vmatpush1.bf16.msra.mxu0 0
        %5482 = vmatprep.subr.bf16.mxu0 0
        %5483 = vmatpush1.bf16.msra.mxu0 0
        %5484 = vmatprep.subr.bf16.mxu0 0
        %5485 = vmatpush1.bf16.msra.mxu0 0
        %5486 = vmatprep.subr.bf16.mxu0 0
        %5487 = vmatpush1.bf16.msra.mxu0 0
        %5488 = vmatprep.subr.bf16.mxu0 0
        %5489 = vmatpush1.bf16.msra.mxu0 0
        %5490 = vmatprep.subr.bf16.mxu0 0
        %5491 = vmatpush1.bf16.msra.mxu0 0
        %5492 = vmatprep.subr.bf16.mxu0 0
        %5493 = vmatpush1.bf16.msra.mxu0 0
        %5494 = vmatprep.subr.bf16.mxu0 0
        %5495 = vmatpush1.bf16.msra.mxu0 0
        %5496 = vmatprep.subr.bf16.mxu0 0
        %5497 = vmatpush1.bf16.msra.mxu0 0
        %5498 = vmatprep.subr.bf16.mxu0 0
        %5499 = vmatpush1.bf16.msra.mxu0 0
        %5500 = vmatprep.mubr.bf16.mxu0 0
        %5501 = vmatmul.mubr.bf16.gmra.mrb[0].mxu0 %v5463
        %v5502 = vpop.f32.mrb[0].mxu0
        %v5503 = vadd.f32 %v627, %v5502
        %v5504 = vpop.f32.mrb[0].mxu0
        %v5505 = vpop.f32.mrb[0].mxu0
        %v5506 = vpop.f32.mrb[0].mxu0
        %5507 = vdwg.mxu0
        %v5509 = vsel %vm1271, %v4995, 0
        %v5512 = vsel %vm1275, %v5170, 0
        %5514 = vmatprep.subr.bf16.mxu0 0
        %5515 = vmatpush1.bf16.msra.mxu0 %v5512
        %5516 = vmatprep.subr.bf16.mxu0 0
        %5517 = vmatpush1.bf16.msra.mxu0 0
        %5518 = vmatprep.subr.bf16.mxu0 0
        %5519 = vmatpush1.bf16.msra.mxu0 0
        %5520 = vmatprep.subr.bf16.mxu0 0
        %5521 = vmatpush1.bf16.msra.mxu0 0
        %5522 = vmatprep.subr.bf16.mxu0 0
        %5523 = vmatpush1.bf16.msra.mxu0 0
        %5524 = vmatprep.subr.bf16.mxu0 0
        %5525 = vmatpush1.bf16.msra.mxu0 0
        %5526 = vmatprep.subr.bf16.mxu0 0
        %5527 = vmatpush1.bf16.msra.mxu0 0
        %5528 = vmatprep.subr.bf16.mxu0 0
        %5529 = vmatpush1.bf16.msra.mxu0 0
        %5530 = vmatprep.subr.bf16.mxu0 0
        %5531 = vmatpush1.bf16.msra.mxu0 0
        %5532 = vmatprep.subr.bf16.mxu0 0
        %5533 = vmatpush1.bf16.msra.mxu0 0
        %5534 = vmatprep.subr.bf16.mxu0 0
        %5535 = vmatpush1.bf16.msra.mxu0 0
        %5536 = vmatprep.subr.bf16.mxu0 0
        %5537 = vmatpush1.bf16.msra.mxu0 0
        %5538 = vmatprep.subr.bf16.mxu0 0
        %5539 = vmatpush1.bf16.msra.mxu0 0
        %5540 = vmatprep.subr.bf16.mxu0 0
        %5541 = vmatpush1.bf16.msra.mxu0 0
        %5542 = vmatprep.subr.bf16.mxu0 0
        %5543 = vmatpush1.bf16.msra.mxu0 0
        %5544 = vmatprep.subr.bf16.mxu0 0
        %5545 = vmatpush1.bf16.msra.mxu0 0
        %5546 = vmatprep.mubr.bf16.mxu0 0
        %5547 = vmatmul.mubr.bf16.gmra.mrb[0].mxu0 %v5509
        %v5548 = vpop.f32.mrb[0].mxu0
        %v5549 = vadd.f32 %v627, %v5548
        %v5550 = vpop.f32.mrb[0].mxu0
        %v5551 = vpop.f32.mrb[0].mxu0
        %v5552 = vpop.f32.mrb[0].mxu0
        %5553 = vdwg.mxu0
        %v5555 = vsel %vm1271, %v4997, 0
        %v5558 = vsel %vm1275, %v5186, 0
        %5560 = vmatprep.subr.bf16.mxu0 0
        %5561 = vmatpush1.bf16.msra.mxu0 %v5558
        %5562 = vmatprep.subr.bf16.mxu0 0
        %5563 = vmatpush1.bf16.msra.mxu0 0
        %5564 = vmatprep.subr.bf16.mxu0 0
        %5565 = vmatpush1.bf16.msra.mxu0 0
        %5566 = vmatprep.subr.bf16.mxu0 0
        %5567 = vmatpush1.bf16.msra.mxu0 0
        %5568 = vmatprep.subr.bf16.mxu0 0
        %5569 = vmatpush1.bf16.msra.mxu0 0
        %5570 = vmatprep.subr.bf16.mxu0 0
        %5571 = vmatpush1.bf16.msra.mxu0 0
        %5572 = vmatprep.subr.bf16.mxu0 0
        %5573 = vmatpush1.bf16.msra.mxu0 0
        %5574 = vmatprep.subr.bf16.mxu0 0
        %5575 = vmatpush1.bf16.msra.mxu0 0
        %5576 = vmatprep.subr.bf16.mxu0 0
        %5577 = vmatpush1.bf16.msra.mxu0 0
        %5578 = vmatprep.subr.bf16.mxu0 0
        %5579 = vmatpush1.bf16.msra.mxu0 0
        %5580 = vmatprep.subr.bf16.mxu0 0
        %5581 = vmatpush1.bf16.msra.mxu0 0
        %5582 = vmatprep.subr.bf16.mxu0 0
        %5583 = vmatpush1.bf16.msra.mxu0 0
        %5584 = vmatprep.subr.bf16.mxu0 0
        %5585 = vmatpush1.bf16.msra.mxu0 0
        %5586 = vmatprep.subr.bf16.mxu0 0
        %5587 = vmatpush1.bf16.msra.mxu0 0
        %5588 = vmatprep.subr.bf16.mxu0 0
        %5589 = vmatpush1.bf16.msra.mxu0 0
        %5590 = vmatprep.subr.bf16.mxu0 0
        %5591 = vmatpush1.bf16.msra.mxu0 0
        %5592 = vmatprep.mubr.bf16.mxu0 0
        %5593 = vmatmul.mubr.bf16.gmra.mrb[0].mxu0 %v5555
        %v5594 = vpop.f32.mrb[0].mxu0
        %v5595 = vadd.f32 %v627, %v5594
        %v5596 = vpop.f32.mrb[0].mxu0
        %v5597 = vpop.f32.mrb[0].mxu0
        %v5598 = vpop.f32.mrb[0].mxu0
        %5599 = vdwg.mxu0
        %v5601 = vsel %vm1271, %v4999, 0
        %v5604 = vsel %vm1275, %v5202, 0
        %5606 = vmatprep.subr.bf16.mxu0 0
        %5607 = vmatpush1.bf16.msra.mxu0 %v5604
        %5608 = vmatprep.subr.bf16.mxu0 0
        %5609 = vmatpush1.bf16.msra.mxu0 0
        %5610 = vmatprep.subr.bf16.mxu0 0
        %5611 = vmatpush1.bf16.msra.mxu0 0
        %5612 = vmatprep.subr.bf16.mxu0 0
        %5613 = vmatpush1.bf16.msra.mxu0 0
        %5614 = vmatprep.subr.bf16.mxu0 0
        %5615 = vmatpush1.bf16.msra.mxu0 0
        %5616 = vmatprep.subr.bf16.mxu0 0
        %5617 = vmatpush1.bf16.msra.mxu0 0
        %5618 = vmatprep.subr.bf16.mxu0 0
        %5619 = vmatpush1.bf16.msra.mxu0 0
        %5620 = vmatprep.subr.bf16.mxu0 0
        %5621 = vmatpush1.bf16.msra.mxu0 0
        %5622 = vmatprep.subr.bf16.mxu0 0
        %5623 = vmatpush1.bf16.msra.mxu0 0
        %5624 = vmatprep.subr.bf16.mxu0 0
        %5625 = vmatpush1.bf16.msra.mxu0 0
        %5626 = vmatprep.subr.bf16.mxu0 0
        %5627 = vmatpush1.bf16.msra.mxu0 0
        %5628 = vmatprep.subr.bf16.mxu0 0
        %5629 = vmatpush1.bf16.msra.mxu0 0
        %5630 = vmatprep.subr.bf16.mxu0 0
        %5631 = vmatpush1.bf16.msra.mxu0 0
        %5632 = vmatprep.subr.bf16.mxu0 0
        %5633 = vmatpush1.bf16.msra.mxu0 0
        %5634 = vmatprep.subr.bf16.mxu0 0
        %5635 = vmatpush1.bf16.msra.mxu0 0
        %5636 = vmatprep.subr.bf16.mxu0 0
        %5637 = vmatpush1.bf16.msra.mxu0 0
        %5638 = vmatprep.mubr.bf16.mxu0 0
        %5639 = vmatmul.mubr.bf16.gmra.mrb[0].mxu0 %v5601
        %v5640 = vpop.f32.mrb[0].mxu0
        %v5641 = vadd.f32 %v627, %v5640
        %v5642 = vpop.f32.mrb[0].mxu0
        %v5643 = vpop.f32.mrb[0].mxu0
        %v5644 = vpop.f32.mrb[0].mxu0
        %5645 = vdwg.mxu0
        %v5647 = vsel %vm1271, %v5001, 0
        %v5650 = vsel %vm1275, %v5218, 0
        %5652 = vmatprep.subr.bf16.mxu0 0
        %5653 = vmatpush1.bf16.msra.mxu0 %v5650
        %5654 = vmatprep.subr.bf16.mxu0 0
        %5655 = vmatpush1.bf16.msra.mxu0 0
        %5656 = vmatprep.subr.bf16.mxu0 0
        %5657 = vmatpush1.bf16.msra.mxu0 0
        %5658 = vmatprep.subr.bf16.mxu0 0
        %5659 = vmatpush1.bf16.msra.mxu0 0
        %5660 = vmatprep.subr.bf16.mxu0 0
        %5661 = vmatpush1.bf16.msra.mxu0 0
        %5662 = vmatprep.subr.bf16.mxu0 0
        %5663 = vmatpush1.bf16.msra.mxu0 0
        %5664 = vmatprep.subr.bf16.mxu0 0
        %5665 = vmatpush1.bf16.msra.mxu0 0
        %5666 = vmatprep.subr.bf16.mxu0 0
        %5667 = vmatpush1.bf16.msra.mxu0 0
        %5668 = vmatprep.subr.bf16.mxu0 0
        %5669 = vmatpush1.bf16.msra.mxu0 0
        %5670 = vmatprep.subr.bf16.mxu0 0
        %5671 = vmatpush1.bf16.msra.mxu0 0
        %5672 = vmatprep.subr.bf16.mxu0 0
        %5673 = vmatpush1.bf16.msra.mxu0 0
        %5674 = vmatprep.subr.bf16.mxu0 0
        %5675 = vmatpush1.bf16.msra.mxu0 0
        %5676 = vmatprep.subr.bf16.mxu0 0
        %5677 = vmatpush1.bf16.msra.mxu0 0
        %5678 = vmatprep.subr.bf16.mxu0 0
        %5679 = vmatpush1.bf16.msra.mxu0 0
        %5680 = vmatprep.subr.bf16.mxu0 0
        %5681 = vmatpush1.bf16.msra.mxu0 0
        %5682 = vmatprep.subr.bf16.mxu0 0
        %5683 = vmatpush1.bf16.msra.mxu0 0
        %5684 = vmatprep.mubr.bf16.mxu0 0
        %5685 = vmatmul.mubr.bf16.gmra.mrb[0].mxu0 %v5647
        %v5686 = vpop.f32.mrb[0].mxu0
        %v5687 = vadd.f32 %v627, %v5686
        %v5688 = vpop.f32.mrb[0].mxu0
        %v5689 = vpop.f32.mrb[0].mxu0
        %v5690 = vpop.f32.mrb[0].mxu0
        %5691 = vdwg.mxu0
        %v5693 = vsel %vm1271, %v5003, 0
        %v5696 = vsel %vm1275, %v5234, 0
        %5698 = vmatprep.subr.bf16.mxu0 0
        %5699 = vmatpush1.bf16.msra.mxu0 %v5696
        %5700 = vmatprep.subr.bf16.mxu0 0
        %5701 = vmatpush1.bf16.msra.mxu0 0
        %5702 = vmatprep.subr.bf16.mxu0 0
        %5703 = vmatpush1.bf16.msra.mxu0 0
        %5704 = vmatprep.subr.bf16.mxu0 0
        %5705 = vmatpush1.bf16.msra.mxu0 0
        %5706 = vmatprep.subr.bf16.mxu0 0
        %5707 = vmatpush1.bf16.msra.mxu0 0
        %5708 = vmatprep.subr.bf16.mxu0 0
        %5709 = vmatpush1.bf16.msra.mxu0 0
        %5710 = vmatprep.subr.bf16.mxu0 0
        %5711 = vmatpush1.bf16.msra.mxu0 0
        %5712 = vmatprep.subr.bf16.mxu0 0
        %5713 = vmatpush1.bf16.msra.mxu0 0
        %5714 = vmatprep.subr.bf16.mxu0 0
        %5715 = vmatpush1.bf16.msra.mxu0 0
        %5716 = vmatprep.subr.bf16.mxu0 0
        %5717 = vmatpush1.bf16.msra.mxu0 0
        %5718 = vmatprep.subr.bf16.mxu0 0
        %5719 = vmatpush1.bf16.msra.mxu0 0
        %5720 = vmatprep.subr.bf16.mxu0 0
        %5721 = vmatpush1.bf16.msra.mxu0 0
        %5722 = vmatprep.subr.bf16.mxu0 0
        %5723 = vmatpush1.bf16.msra.mxu0 0
        %5724 = vmatprep.subr.bf16.mxu0 0
        %5725 = vmatpush1.bf16.msra.mxu0 0
        %5726 = vmatprep.subr.bf16.mxu0 0
        %5727 = vmatpush1.bf16.msra.mxu0 0
        %5728 = vmatprep.subr.bf16.mxu0 0
        %5729 = vmatpush1.bf16.msra.mxu0 0
        %5730 = vmatprep.mubr.bf16.mxu0 0
        %5731 = vmatmul.mubr.bf16.gmra.mrb[0].mxu0 %v5693
        %v5732 = vpop.f32.mrb[0].mxu0
        %v5733 = vadd.f32 %v627, %v5732
        %v5734 = vpop.f32.mrb[0].mxu0
        %v5735 = vpop.f32.mrb[0].mxu0
        %v5736 = vpop.f32.mrb[0].mxu0
        %5737 = vdwg.mxu0
        %v5739 = vsel %vm1271, %v5005, 0
        %v5742 = vsel %vm1275, %v5250, 0
        %5744 = vmatprep.subr.bf16.mxu0 0
        %5745 = vmatpush1.bf16.msra.mxu0 %v5742
        %5746 = vmatprep.subr.bf16.mxu0 0
        %5747 = vmatpush1.bf16.msra.mxu0 0
        %5748 = vmatprep.subr.bf16.mxu0 0
        %5749 = vmatpush1.bf16.msra.mxu0 0
        %5750 = vmatprep.subr.bf16.mxu0 0
        %5751 = vmatpush1.bf16.msra.mxu0 0
        %5752 = vmatprep.subr.bf16.mxu0 0
        %5753 = vmatpush1.bf16.msra.mxu0 0
        %5754 = vmatprep.subr.bf16.mxu0 0
        %5755 = vmatpush1.bf16.msra.mxu0 0
        %5756 = vmatprep.subr.bf16.mxu0 0
        %5757 = vmatpush1.bf16.msra.mxu0 0
        %5758 = vmatprep.subr.bf16.mxu0 0
        %5759 = vmatpush1.bf16.msra.mxu0 0
        %5760 = vmatprep.subr.bf16.mxu0 0
        %5761 = vmatpush1.bf16.msra.mxu0 0
        %5762 = vmatprep.subr.bf16.mxu0 0
        %5763 = vmatpush1.bf16.msra.mxu0 0
        %5764 = vmatprep.subr.bf16.mxu0 0
        %5765 = vmatpush1.bf16.msra.mxu0 0
        %5766 = vmatprep.subr.bf16.mxu0 0
        %5767 = vmatpush1.bf16.msra.mxu0 0
        %5768 = vmatprep.subr.bf16.mxu0 0
        %5769 = vmatpush1.bf16.msra.mxu0 0
        %5770 = vmatprep.subr.bf16.mxu0 0
        %5771 = vmatpush1.bf16.msra.mxu0 0
        %5772 = vmatprep.subr.bf16.mxu0 0
        %5773 = vmatpush1.bf16.msra.mxu0 0
        %5774 = vmatprep.subr.bf16.mxu0 0
        %5775 = vmatpush1.bf16.msra.mxu0 0
        %5776 = vmatprep.mubr.bf16.mxu0 0
        %5777 = vmatmul.mubr.bf16.gmra.mrb[0].mxu0 %v5739
        %v5778 = vpop.f32.mrb[0].mxu0
        %v5779 = vadd.f32 %v627, %v5778
        %v5780 = vpop.f32.mrb[0].mxu0
        %v5781 = vpop.f32.mrb[0].mxu0
        %v5782 = vpop.f32.mrb[0].mxu0
        %5783 = vdwg.mxu0
        %v5785 = vsel %vm1271, %v5007, 0
        %v5788 = vsel %vm1275, %v5266, 0
        %5790 = vmatprep.subr.bf16.mxu0 0
        %5791 = vmatpush1.bf16.msra.mxu0 %v5788
        %5792 = vmatprep.subr.bf16.mxu0 0
        %5793 = vmatpush1.bf16.msra.mxu0 0
        %5794 = vmatprep.subr.bf16.mxu0 0
        %5795 = vmatpush1.bf16.msra.mxu0 0
        %5796 = vmatprep.subr.bf16.mxu0 0
        %5797 = vmatpush1.bf16.msra.mxu0 0
        %5798 = vmatprep.subr.bf16.mxu0 0
        %5799 = vmatpush1.bf16.msra.mxu0 0
        %5800 = vmatprep.subr.bf16.mxu0 0
        %5801 = vmatpush1.bf16.msra.mxu0 0
        %5802 = vmatprep.subr.bf16.mxu0 0
        %5803 = vmatpush1.bf16.msra.mxu0 0
        %5804 = vmatprep.subr.bf16.mxu0 0
        %5805 = vmatpush1.bf16.msra.mxu0 0
        %5806 = vmatprep.subr.bf16.mxu0 0
        %5807 = vmatpush1.bf16.msra.mxu0 0
        %5808 = vmatprep.subr.bf16.mxu0 0
        %5809 = vmatpush1.bf16.msra.mxu0 0
        %5810 = vmatprep.subr.bf16.mxu0 0
        %5811 = vmatpush1.bf16.msra.mxu0 0
        %5812 = vmatprep.subr.bf16.mxu0 0
        %5813 = vmatpush1.bf16.msra.mxu0 0
        %5814 = vmatprep.subr.bf16.mxu0 0
        %5815 = vmatpush1.bf16.msra.mxu0 0
        %5816 = vmatprep.subr.bf16.mxu0 0
        %5817 = vmatpush1.bf16.msra.mxu0 0
        %5818 = vmatprep.subr.bf16.mxu0 0
        %5819 = vmatpush1.bf16.msra.mxu0 0
        %5820 = vmatprep.subr.bf16.mxu0 0
        %5821 = vmatpush1.bf16.msra.mxu0 0
        %5822 = vmatprep.mubr.bf16.mxu0 0
        %5823 = vmatmul.mubr.bf16.gmra.mrb[0].mxu0 %v5785
        %v5824 = vpop.f32.mrb[0].mxu0
        %v5825 = vadd.f32 %v627, %v5824
        %v5826 = vpop.f32.mrb[0].mxu0
        %v5827 = vpop.f32.mrb[0].mxu0
        %v5828 = vpop.f32.mrb[0].mxu0
        %5829 = vdwg.mxu0
        %v5831 = vsel %vm1271, %v5009, 0
        %v5834 = vsel %vm1275, %v5282, 0
        %5836 = vmatprep.subr.bf16.mxu0 0
        %5837 = vmatpush1.bf16.msra.mxu0 %v5834
        %5838 = vmatprep.subr.bf16.mxu0 0
        %5839 = vmatpush1.bf16.msra.mxu0 0
        %5840 = vmatprep.subr.bf16.mxu0 0
        %5841 = vmatpush1.bf16.msra.mxu0 0
        %5842 = vmatprep.subr.bf16.mxu0 0
        %5843 = vmatpush1.bf16.msra.mxu0 0
        %5844 = vmatprep.subr.bf16.mxu0 0
        %5845 = vmatpush1.bf16.msra.mxu0 0
        %5846 = vmatprep.subr.bf16.mxu0 0
        %5847 = vmatpush1.bf16.msra.mxu0 0
        %5848 = vmatprep.subr.bf16.mxu0 0
        %5849 = vmatpush1.bf16.msra.mxu0 0
        %5850 = vmatprep.subr.bf16.mxu0 0
        %5851 = vmatpush1.bf16.msra.mxu0 0
        %5852 = vmatprep.subr.bf16.mxu0 0
        %5853 = vmatpush1.bf16.msra.mxu0 0
        %5854 = vmatprep.subr.bf16.mxu0 0
        %5855 = vmatpush1.bf16.msra.mxu0 0
        %5856 = vmatprep.subr.bf16.mxu0 0
        %5857 = vmatpush1.bf16.msra.mxu0 0
        %5858 = vmatprep.subr.bf16.mxu0 0
        %5859 = vmatpush1.bf16.msra.mxu0 0
        %5860 = vmatprep.subr.bf16.mxu0 0
        %5861 = vmatpush1.bf16.msra.mxu0 0
        %5862 = vmatprep.subr.bf16.mxu0 0
        %5863 = vmatpush1.bf16.msra.mxu0 0
        %5864 = vmatprep.subr.bf16.mxu0 0
        %5865 = vmatpush1.bf16.msra.mxu0 0
        %5866 = vmatprep.subr.bf16.mxu0 0
        %5867 = vmatpush1.bf16.msra.mxu0 0
        %5868 = vmatprep.mubr.bf16.mxu0 0
        %5869 = vmatmul.mubr.bf16.gmra.mrb[0].mxu0 %v5831
        %v5870 = vpop.f32.mrb[0].mxu0
        %v5871 = vadd.f32 %v627, %v5870
        %v5872 = vpop.f32.mrb[0].mxu0
        %v5873 = vpop.f32.mrb[0].mxu0
        %v5874 = vpop.f32.mrb[0].mxu0
        %5875 = vdwg.mxu0
        %v5877 = vsel %vm1271, %v5011, 0
        %v5880 = vsel %vm1275, %v5298, 0
        %5882 = vmatprep.subr.bf16.mxu0 0
        %5883 = vmatpush1.bf16.msra.mxu0 %v5880
        %5884 = vmatprep.subr.bf16.mxu0 0
        %5885 = vmatpush1.bf16.msra.mxu0 0
        %5886 = vmatprep.subr.bf16.mxu0 0
        %5887 = vmatpush1.bf16.msra.mxu0 0
        %5888 = vmatprep.subr.bf16.mxu0 0
        %5889 = vmatpush1.bf16.msra.mxu0 0
        %5890 = vmatprep.subr.bf16.mxu0 0
        %5891 = vmatpush1.bf16.msra.mxu0 0
        %5892 = vmatprep.subr.bf16.mxu0 0
        %5893 = vmatpush1.bf16.msra.mxu0 0
        %5894 = vmatprep.subr.bf16.mxu0 0
        %5895 = vmatpush1.bf16.msra.mxu0 0
        %5896 = vmatprep.subr.bf16.mxu0 0
        %5897 = vmatpush1.bf16.msra.mxu0 0
        %5898 = vmatprep.subr.bf16.mxu0 0
        %5899 = vmatpush1.bf16.msra.mxu0 0
        %5900 = vmatprep.subr.bf16.mxu0 0
        %5901 = vmatpush1.bf16.msra.mxu0 0
        %5902 = vmatprep.subr.bf16.mxu0 0
        %5903 = vmatpush1.bf16.msra.mxu0 0
        %5904 = vmatprep.subr.bf16.mxu0 0
        %5905 = vmatpush1.bf16.msra.mxu0 0
        %5906 = vmatprep.subr.bf16.mxu0 0
        %5907 = vmatpush1.bf16.msra.mxu0 0
        %5908 = vmatprep.subr.bf16.mxu0 0
        %5909 = vmatpush1.bf16.msra.mxu0 0
        %5910 = vmatprep.subr.bf16.mxu0 0
        %5911 = vmatpush1.bf16.msra.mxu0 0
        %5912 = vmatprep.subr.bf16.mxu0 0
        %5913 = vmatpush1.bf16.msra.mxu0 0
        %5914 = vmatprep.mubr.bf16.mxu0 0
        %5915 = vmatmul.mubr.bf16.gmra.mrb[0].mxu0 %v5877
        %v5916 = vpop.f32.mrb[0].mxu0
        %v5917 = vadd.f32 %v627, %v5916
        %v5918 = vpop.f32.mrb[0].mxu0
        %v5919 = vpop.f32.mrb[0].mxu0
        %v5920 = vpop.f32.mrb[0].mxu0
        %5921 = vdwg.mxu0
        %v5923 = vsel %vm1271, %v5013, 0
        %v5926 = vsel %vm1275, %v5314, 0
        %5928 = vmatprep.subr.bf16.mxu0 0
        %5929 = vmatpush1.bf16.msra.mxu0 %v5926
        %5930 = vmatprep.subr.bf16.mxu0 0
        %5931 = vmatpush1.bf16.msra.mxu0 0
        %5932 = vmatprep.subr.bf16.mxu0 0
        %5933 = vmatpush1.bf16.msra.mxu0 0
        %5934 = vmatprep.subr.bf16.mxu0 0
        %5935 = vmatpush1.bf16.msra.mxu0 0
        %5936 = vmatprep.subr.bf16.mxu0 0
        %5937 = vmatpush1.bf16.msra.mxu0 0
        %5938 = vmatprep.subr.bf16.mxu0 0
        %5939 = vmatpush1.bf16.msra.mxu0 0
        %5940 = vmatprep.subr.bf16.mxu0 0
        %5941 = vmatpush1.bf16.msra.mxu0 0
        %5942 = vmatprep.subr.bf16.mxu0 0
        %5943 = vmatpush1.bf16.msra.mxu0 0
        %5944 = vmatprep.subr.bf16.mxu0 0
        %5945 = vmatpush1.bf16.msra.mxu0 0
        %5946 = vmatprep.subr.bf16.mxu0 0
        %5947 = vmatpush1.bf16.msra.mxu0 0
        %5948 = vmatprep.subr.bf16.mxu0 0
        %5949 = vmatpush1.bf16.msra.mxu0 0
        %5950 = vmatprep.subr.bf16.mxu0 0
        %5951 = vmatpush1.bf16.msra.mxu0 0
        %5952 = vmatprep.subr.bf16.mxu0 0
        %5953 = vmatpush1.bf16.msra.mxu0 0
        %5954 = vmatprep.subr.bf16.mxu0 0
        %5955 = vmatpush1.bf16.msra.mxu0 0
        %5956 = vmatprep.subr.bf16.mxu0 0
        %5957 = vmatpush1.bf16.msra.mxu0 0
        %5958 = vmatprep.subr.bf16.mxu0 0
        %5959 = vmatpush1.bf16.msra.mxu0 0
        %5960 = vmatprep.mubr.bf16.mxu0 0
        %5961 = vmatmul.mubr.bf16.gmra.mrb[0].mxu0 %v5923
        %v5962 = vpop.f32.mrb[0].mxu0
        %v5963 = vadd.f32 %v627, %v5962
        %v5964 = vpop.f32.mrb[0].mxu0
        %v5965 = vpop.f32.mrb[0].mxu0
        %v5966 = vpop.f32.mrb[0].mxu0
        %5967 = vdwg.mxu0
        %v5969 = vsel %vm1271, %v5015, 0
        %v5972 = vsel %vm1275, %v5330, 0
        %5974 = vmatprep.subr.bf16.mxu0 0
        %5975 = vmatpush1.bf16.msra.mxu0 %v5972
        %5976 = vmatprep.subr.bf16.mxu0 0
        %5977 = vmatpush1.bf16.msra.mxu0 0
        %5978 = vmatprep.subr.bf16.mxu0 0
        %5979 = vmatpush1.bf16.msra.mxu0 0
        %5980 = vmatprep.subr.bf16.mxu0 0
        %5981 = vmatpush1.bf16.msra.mxu0 0
        %5982 = vmatprep.subr.bf16.mxu0 0
        %5983 = vmatpush1.bf16.msra.mxu0 0
        %5984 = vmatprep.subr.bf16.mxu0 0
        %5985 = vmatpush1.bf16.msra.mxu0 0
        %5986 = vmatprep.subr.bf16.mxu0 0
        %5987 = vmatpush1.bf16.msra.mxu0 0
        %5988 = vmatprep.subr.bf16.mxu0 0
        %5989 = vmatpush1.bf16.msra.mxu0 0
        %5990 = vmatprep.subr.bf16.mxu0 0
        %5991 = vmatpush1.bf16.msra.mxu0 0
        %5992 = vmatprep.subr.bf16.mxu0 0
        %5993 = vmatpush1.bf16.msra.mxu0 0
        %5994 = vmatprep.subr.bf16.mxu0 0
        %5995 = vmatpush1.bf16.msra.mxu0 0
        %5996 = vmatprep.subr.bf16.mxu0 0
        %5997 = vmatpush1.bf16.msra.mxu0 0
        %5998 = vmatprep.subr.bf16.mxu0 0
        %5999 = vmatpush1.bf16.msra.mxu0 0
        %6000 = vmatprep.subr.bf16.mxu0 0
        %6001 = vmatpush1.bf16.msra.mxu0 0
        %6002 = vmatprep.subr.bf16.mxu0 0
        %6003 = vmatpush1.bf16.msra.mxu0 0
        %6004 = vmatprep.subr.bf16.mxu0 0
        %6005 = vmatpush1.bf16.msra.mxu0 0
        %6006 = vmatprep.mubr.bf16.mxu0 0
        %6007 = vmatmul.mubr.bf16.gmra.mrb[0].mxu0 %v5969
        %v6008 = vpop.f32.mrb[0].mxu0
        %v6009 = vadd.f32 %v627, %v6008
        %v6010 = vpop.f32.mrb[0].mxu0
        %v6011 = vpop.f32.mrb[0].mxu0
        %v6012 = vpop.f32.mrb[0].mxu0
        %6013 = vdwg.mxu0
        %v6015 = vsel %vm1271, %v5017, 0
        %v6018 = vsel %vm1275, %v5346, 0
        %6020 = vmatprep.subr.bf16.mxu0 0
        %6021 = vmatpush1.bf16.msra.mxu0 %v6018
        %6022 = vmatprep.subr.bf16.mxu0 0
        %6023 = vmatpush1.bf16.msra.mxu0 0
        %6024 = vmatprep.subr.bf16.mxu0 0
        %6025 = vmatpush1.bf16.msra.mxu0 0
        %6026 = vmatprep.subr.bf16.mxu0 0
        %6027 = vmatpush1.bf16.msra.mxu0 0
        %6028 = vmatprep.subr.bf16.mxu0 0
        %6029 = vmatpush1.bf16.msra.mxu0 0
        %6030 = vmatprep.subr.bf16.mxu0 0
        %6031 = vmatpush1.bf16.msra.mxu0 0
        %6032 = vmatprep.subr.bf16.mxu0 0
        %6033 = vmatpush1.bf16.msra.mxu0 0
        %6034 = vmatprep.subr.bf16.mxu0 0
        %6035 = vmatpush1.bf16.msra.mxu0 0
        %6036 = vmatprep.subr.bf16.mxu0 0
        %6037 = vmatpush1.bf16.msra.mxu0 0
        %6038 = vmatprep.subr.bf16.mxu0 0
        %6039 = vmatpush1.bf16.msra.mxu0 0
        %6040 = vmatprep.subr.bf16.mxu0 0
        %6041 = vmatpush1.bf16.msra.mxu0 0
        %6042 = vmatprep.subr.bf16.mxu0 0
        %6043 = vmatpush1.bf16.msra.mxu0 0
        %6044 = vmatprep.subr.bf16.mxu0 0
        %6045 = vmatpush1.bf16.msra.mxu0 0
        %6046 = vmatprep.subr.bf16.mxu0 0
        %6047 = vmatpush1.bf16.msra.mxu0 0
        %6048 = vmatprep.subr.bf16.mxu0 0
        %6049 = vmatpush1.bf16.msra.mxu0 0
        %6050 = vmatprep.subr.bf16.mxu0 0
        %6051 = vmatpush1.bf16.msra.mxu0 0
        %6052 = vmatprep.mubr.bf16.mxu0 0
        %6053 = vmatmul.mubr.bf16.gmra.mrb[0].mxu0 %v6015
        %v6054 = vpop.f32.mrb[0].mxu0
        %v6055 = vadd.f32 %v627, %v6054
        %v6056 = vpop.f32.mrb[0].mxu0
        %v6057 = vpop.f32.mrb[0].mxu0
        %v6058 = vpop.f32.mrb[0].mxu0
        %6059 = vdwg.mxu0
        %v6061 = vsel %vm1271, %v5019, 0
        %v6064 = vsel %vm1275, %v5362, 0
        %6066 = vmatprep.subr.bf16.mxu0 0
        %6067 = vmatpush1.bf16.msra.mxu0 %v6064
        %6068 = vmatprep.subr.bf16.mxu0 0
        %6069 = vmatpush1.bf16.msra.mxu0 0
        %6070 = vmatprep.subr.bf16.mxu0 0
        %6071 = vmatpush1.bf16.msra.mxu0 0
        %6072 = vmatprep.subr.bf16.mxu0 0
        %6073 = vmatpush1.bf16.msra.mxu0 0
        %6074 = vmatprep.subr.bf16.mxu0 0
        %6075 = vmatpush1.bf16.msra.mxu0 0
        %6076 = vmatprep.subr.bf16.mxu0 0
        %6077 = vmatpush1.bf16.msra.mxu0 0
        %6078 = vmatprep.subr.bf16.mxu0 0
        %6079 = vmatpush1.bf16.msra.mxu0 0
        %6080 = vmatprep.subr.bf16.mxu0 0
        %6081 = vmatpush1.bf16.msra.mxu0 0
        %6082 = vmatprep.subr.bf16.mxu0 0
        %6083 = vmatpush1.bf16.msra.mxu0 0
        %6084 = vmatprep.subr.bf16.mxu0 0
        %6085 = vmatpush1.bf16.msra.mxu0 0
        %6086 = vmatprep.subr.bf16.mxu0 0
        %6087 = vmatpush1.bf16.msra.mxu0 0
        %6088 = vmatprep.subr.bf16.mxu0 0
        %6089 = vmatpush1.bf16.msra.mxu0 0
        %6090 = vmatprep.subr.bf16.mxu0 0
        %6091 = vmatpush1.bf16.msra.mxu0 0
        %6092 = vmatprep.subr.bf16.mxu0 0
        %6093 = vmatpush1.bf16.msra.mxu0 0
        %6094 = vmatprep.subr.bf16.mxu0 0
        %6095 = vmatpush1.bf16.msra.mxu0 0
        %6096 = vmatprep.subr.bf16.mxu0 0
        %6097 = vmatpush1.bf16.msra.mxu0 0
        %6098 = vmatprep.mubr.bf16.mxu0 0
        %6099 = vmatmul.mubr.bf16.gmra.mrb[0].mxu0 %v6061
        %v6100 = vpop.f32.mrb[0].mxu0
        %v6101 = vadd.f32 %v627, %v6100
        %v6102 = vpop.f32.mrb[0].mxu0
        %v6103 = vpop.f32.mrb[0].mxu0
        %v6104 = vpop.f32.mrb[0].mxu0
        %6105 = vdwg.mxu0
        %v6106 = vsel %vm1271, %v5411, -inf
        %6107 = vmax.xlane.f32.xlu0 %v6106
        %v6108 = vpop.xlane.xlu0 %6107
        %v6109 = vsel %vm1271, %v5457, -inf
        %6110 = vmax.xlane.f32.xlu0 %v6109
        %v6111 = vpop.xlane.xlu0 %6110
        %v6112 = vsel %vm1271, %v5503, -inf
        %6113 = vmax.xlane.f32.xlu0 %v6112
        %v6114 = vpop.xlane.xlu0 %6113
        %v6115 = vsel %vm1271, %v5549, -inf
        %6116 = vmax.xlane.f32.xlu0 %v6115
        %v6117 = vpop.xlane.xlu0 %6116
        %v6118 = vsel %vm1271, %v5595, -inf
        %6119 = vmax.xlane.f32.xlu0 %v6118
        %v6120 = vpop.xlane.xlu0 %6119
        %v6121 = vsel %vm1271, %v5641, -inf
        %6122 = vmax.xlane.f32.xlu0 %v6121
        %v6123 = vpop.xlane.xlu0 %6122
        %v6124 = vsel %vm1271, %v5687, -inf
        %6125 = vmax.xlane.f32.xlu0 %v6124
        %v6126 = vpop.xlane.xlu0 %6125
        %v6127 = vsel %vm1271, %v5733, -inf
        %6128 = vmax.xlane.f32.xlu0 %v6127
        %v6129 = vpop.xlane.xlu0 %6128
        %v6130 = vsel %vm1271, %v5779, -inf
        %6131 = vmax.xlane.f32.xlu0 %v6130
        %v6132 = vpop.xlane.xlu0 %6131
        %v6133 = vsel %vm1271, %v5825, -inf
        %6134 = vmax.xlane.f32.xlu0 %v6133
        %v6135 = vpop.xlane.xlu0 %6134
        %v6136 = vsel %vm1271, %v5871, -inf
        %6137 = vmax.xlane.f32.xlu0 %v6136
        %v6138 = vpop.xlane.xlu0 %6137
        %v6139 = vsel %vm1271, %v5917, -inf
        %6140 = vmax.xlane.f32.xlu0 %v6139
        %v6141 = vpop.xlane.xlu0 %6140
        %v6142 = vsel %vm1271, %v5963, -inf
        %6143 = vmax.xlane.f32.xlu0 %v6142
        %v6144 = vpop.xlane.xlu0 %6143
        %v6145 = vsel %vm1271, %v6009, -inf
        %6146 = vmax.xlane.f32.xlu0 %v6145
        %v6147 = vpop.xlane.xlu0 %6146
        %v6148 = vsel %vm1271, %v6055, -inf
        %6149 = vmax.xlane.f32.xlu0 %v6148
        %v6150 = vpop.xlane.xlu0 %6149
        %v6151 = vsel %vm1271, %v6101, -inf
        %6152 = vmax.xlane.f32.xlu0 %v6151
        %v6153 = vpop.xlane.xlu0 %6152
        %v6154 = vsub.f32 %v5411, %v6108
        %v6155 = vsub.f32 %v5457, %v6111
        %v6156 = vsub.f32 %v5503, %v6114
        %v6157 = vsub.f32 %v5549, %v6117
        %v6158 = vsub.f32 %v5595, %v6120
        %v6159 = vsub.f32 %v5641, %v6123
        %v6160 = vsub.f32 %v5687, %v6126
        %v6161 = vsub.f32 %v5733, %v6129
        %v6162 = vsub.f32 %v5779, %v6132
        %v6163 = vsub.f32 %v5825, %v6135
        %v6164 = vsub.f32 %v5871, %v6138
        %v6165 = vsub.f32 %v5917, %v6141
        %v6166 = vsub.f32 %v5963, %v6144
        %v6167 = vsub.f32 %v6009, %v6147
        %v6168 = vsub.f32 %v6055, %v6150
        %v6169 = vsub.f32 %v6101, %v6153
        %v6170 = vmul.f32 %v6154, 1.442695
        %v6171 = vpow.pop %v6170
        %v6172 = vmul.f32 %v6155, 1.442695
        %v6173 = vpow.pop %v6172
        %v6174 = vmul.f32 %v6156, 1.442695
        %v6175 = vpow.pop %v6174
        %v6176 = vmul.f32 %v6157, 1.442695
        %v6177 = vpow.pop %v6176
        %v6178 = vmul.f32 %v6158, 1.442695
        %v6179 = vpow.pop %v6178
        %v6180 = vmul.f32 %v6159, 1.442695
        %v6181 = vpow.pop %v6180
        %v6182 = vmul.f32 %v6160, 1.442695
        %v6183 = vpow.pop %v6182
        %v6184 = vmul.f32 %v6161, 1.442695
        %v6185 = vpow.pop %v6184
        %v6186 = vmul.f32 %v6162, 1.442695
        %v6187 = vpow.pop %v6186
        %v6188 = vmul.f32 %v6163, 1.442695
        %v6189 = vpow.pop %v6188
        %v6190 = vmul.f32 %v6164, 1.442695
        %v6191 = vpow.pop %v6190
        %v6192 = vmul.f32 %v6165, 1.442695
        %v6193 = vpow.pop %v6192
        %v6194 = vmul.f32 %v6166, 1.442695
        %v6195 = vpow.pop %v6194
        %v6196 = vmul.f32 %v6167, 1.442695
        %v6197 = vpow.pop %v6196
        %v6198 = vmul.f32 %v6168, 1.442695
        %v6199 = vpow.pop %v6198
        %v6200 = vmul.f32 %v6169, 1.442695
        %v6201 = vpow.pop %v6200
        %v6202 = vsel %vm1271, %v6171, 0.0
        %6203 = vadd.xlane.f32.xlu0 %v6202
        %v6204 = vpop.xlane.xlu0 %6203
        %v6205 = vsel %vm1271, %v6173, 0.0
        %6206 = vadd.xlane.f32.xlu0 %v6205
        %v6207 = vpop.xlane.xlu0 %6206
        %v6208 = vsel %vm1271, %v6175, 0.0
        %6209 = vadd.xlane.f32.xlu0 %v6208
        %v6210 = vpop.xlane.xlu0 %6209
        %v6211 = vsel %vm1271, %v6177, 0.0
        %6212 = vadd.xlane.f32.xlu0 %v6211
        %v6213 = vpop.xlane.xlu0 %6212
        %v6214 = vsel %vm1271, %v6179, 0.0
        %6215 = vadd.xlane.f32.xlu0 %v6214
        %v6216 = vpop.xlane.xlu0 %6215
        %v6217 = vsel %vm1271, %v6181, 0.0
        %6218 = vadd.xlane.f32.xlu0 %v6217
        %v6219 = vpop.xlane.xlu0 %6218
        %v6220 = vsel %vm1271, %v6183, 0.0
        %6221 = vadd.xlane.f32.xlu0 %v6220
        %v6222 = vpop.xlane.xlu0 %6221
        %v6223 = vsel %vm1271, %v6185, 0.0
        %6224 = vadd.xlane.f32.xlu0 %v6223
        %v6225 = vpop.xlane.xlu0 %6224
        %v6226 = vsel %vm1271, %v6187, 0.0
        %6227 = vadd.xlane.f32.xlu0 %v6226
        %v6228 = vpop.xlane.xlu0 %6227
        %v6229 = vsel %vm1271, %v6189, 0.0
        %6230 = vadd.xlane.f32.xlu0 %v6229
        %v6231 = vpop.xlane.xlu0 %6230
        %v6232 = vsel %vm1271, %v6191, 0.0
        %6233 = vadd.xlane.f32.xlu0 %v6232
        %v6234 = vpop.xlane.xlu0 %6233
        %v6235 = vsel %vm1271, %v6193, 0.0
        %6236 = vadd.xlane.f32.xlu0 %v6235
        %v6237 = vpop.xlane.xlu0 %6236
        %v6238 = vsel %vm1271, %v6195, 0.0
        %6239 = vadd.xlane.f32.xlu0 %v6238
        %v6240 = vpop.xlane.xlu0 %6239
        %v6241 = vsel %vm1271, %v6197, 0.0
        %6242 = vadd.xlane.f32.xlu0 %v6241
        %v6243 = vpop.xlane.xlu0 %6242
        %v6244 = vsel %vm1271, %v6199, 0.0
        %6245 = vadd.xlane.f32.xlu0 %v6244
        %v6246 = vpop.xlane.xlu0 %6245
        %v6247 = vsel %vm1271, %v6201, 0.0
        %6248 = vadd.xlane.f32.xlu0 %v6247
        %v6249 = vpop.xlane.xlu0 %6248
        %v6250 = vrcp.pop %v6204
        %v6251 = vrcp.pop %v6207
        %v6252 = vrcp.pop %v6210
        %v6253 = vrcp.pop %v6213
        %v6254 = vrcp.pop %v6216
        %v6255 = vrcp.pop %v6219
        %v6256 = vrcp.pop %v6222
        %v6257 = vrcp.pop %v6225
        %v6258 = vrcp.pop %v6228
        %v6259 = vrcp.pop %v6231
        %v6260 = vrcp.pop %v6234
        %v6261 = vrcp.pop %v6237
        %v6262 = vrcp.pop %v6240
        %v6263 = vrcp.pop %v6243
        %v6264 = vrcp.pop %v6246
        %v6265 = vrcp.pop %v6249
        %v6266 = vmul.f32 %v6171, %v6250
        %v6267 = vmul.f32 %v6173, %v6251
        %v6268 = vmul.f32 %v6175, %v6252
        %v6269 = vmul.f32 %v6177, %v6253
        %v6270 = vmul.f32 %v6179, %v6254
        %v6271 = vmul.f32 %v6181, %v6255
        %v6272 = vmul.f32 %v6183, %v6256
        %v6273 = vmul.f32 %v6185, %v6257
        %v6274 = vmul.f32 %v6187, %v6258
        %v6275 = vmul.f32 %v6189, %v6259
        %v6276 = vmul.f32 %v6191, %v6260
        %v6277 = vmul.f32 %v6193, %v6261
        %v6278 = vmul.f32 %v6195, %v6262
        %v6279 = vmul.f32 %v6197, %v6263
        %v6280 = vmul.f32 %v6199, %v6264
        %v6281 = vmul.f32 %v6201, %v6265
        %v6282 = vpack.c.bf16 %v6266, %v6266
        %v6283 = vpack.c.bf16 %v6267, %v6267
        %v6284 = vpack.c.bf16 %v6268, %v6268
        %v6285 = vpack.c.bf16 %v6269, %v6269
        %v6286 = vpack.c.bf16 %v6270, %v6270
        %v6287 = vpack.c.bf16 %v6271, %v6271
        %v6288 = vpack.c.bf16 %v6272, %v6272
        %v6289 = vpack.c.bf16 %v6273, %v6273
        %v6290 = vpack.c.bf16 %v6274, %v6274
        %v6291 = vpack.c.bf16 %v6275, %v6275
        %v6292 = vpack.c.bf16 %v6276, %v6276
        %v6293 = vpack.c.bf16 %v6277, %v6277
        %v6294 = vpack.c.bf16 %v6278, %v6278
        %v6295 = vpack.c.bf16 %v6279, %v6279
        %v6296 = vpack.c.bf16 %v6280, %v6280
        %v6297 = vpack.c.bf16 %v6281, %v6281
        %6298 = vxpose.xlu0.c.b16.start [1/8] %v5067, 128
        %6299 = vxpose.xlu0.c.b16.cont [2/8] 0, 128
        %6300 = vxpose.xlu0.c.b16.cont [3/8] 0, 128
        %6301 = vxpose.xlu0.c.b16.cont [4/8] 0, 128
        %6302 = vxpose.xlu0.c.b16.cont [5/8] 0, 128
        %6303 = vxpose.xlu0.c.b16.cont [6/8] 0, 128
        %6304 = vxpose.xlu0.c.b16.cont [7/8] 0, 128
        %6305 = vxpose.xlu0.c.b16.end [8/8] 0, 128
        %v6306 = vpop.trf.xlu0
        %v6307 = vpop.trf.xlu0
        %v6308 = vpop.trf.xlu0
        %v6309 = vpop.trf.xlu0
        %v6310 = vpop.trf.xlu0
        %v6311 = vpop.trf.xlu0
        %v6312 = vpop.trf.xlu0
        %v6313 = vpop.trf.xlu0
        %6314 = vxpose.xlu0.c.b16.start [1/8] %v5070, 128
        %6315 = vxpose.xlu0.c.b16.cont [2/8] 0, 128
        %6316 = vxpose.xlu0.c.b16.cont [3/8] 0, 128
        %6317 = vxpose.xlu0.c.b16.cont [4/8] 0, 128
        %6318 = vxpose.xlu0.c.b16.cont [5/8] 0, 128
        %6319 = vxpose.xlu0.c.b16.cont [6/8] 0, 128
        %6320 = vxpose.xlu0.c.b16.cont [7/8] 0, 128
        %6321 = vxpose.xlu0.c.b16.end [8/8] 0, 128
        %v6322 = vpop.trf.xlu0
        %v6323 = vpop.trf.xlu0
        %v6324 = vpop.trf.xlu0
        %v6325 = vpop.trf.xlu0
        %v6326 = vpop.trf.xlu0
        %v6327 = vpop.trf.xlu0
        %v6328 = vpop.trf.xlu0
        %v6329 = vpop.trf.xlu0
        %6330 = vxpose.xlu0.c.b16.start [1/8] %v5073, 128
        %6331 = vxpose.xlu0.c.b16.cont [2/8] 0, 128
        %6332 = vxpose.xlu0.c.b16.cont [3/8] 0, 128
        %6333 = vxpose.xlu0.c.b16.cont [4/8] 0, 128
        %6334 = vxpose.xlu0.c.b16.cont [5/8] 0, 128
        %6335 = vxpose.xlu0.c.b16.cont [6/8] 0, 128
        %6336 = vxpose.xlu0.c.b16.cont [7/8] 0, 128
        %6337 = vxpose.xlu0.c.b16.end [8/8] 0, 128
        %v6338 = vpop.trf.xlu0
        %v6339 = vpop.trf.xlu0
        %v6340 = vpop.trf.xlu0
        %v6341 = vpop.trf.xlu0
        %v6342 = vpop.trf.xlu0
        %v6343 = vpop.trf.xlu0
        %v6344 = vpop.trf.xlu0
        %v6345 = vpop.trf.xlu0
        %6346 = vxpose.xlu0.c.b16.start [1/8] %v5076, 128
        %6347 = vxpose.xlu0.c.b16.cont [2/8] 0, 128
        %6348 = vxpose.xlu0.c.b16.cont [3/8] 0, 128
        %6349 = vxpose.xlu0.c.b16.cont [4/8] 0, 128
        %6350 = vxpose.xlu0.c.b16.cont [5/8] 0, 128
        %6351 = vxpose.xlu0.c.b16.cont [6/8] 0, 128
        %6352 = vxpose.xlu0.c.b16.cont [7/8] 0, 128
        %6353 = vxpose.xlu0.c.b16.end [8/8] 0, 128
        %v6354 = vpop.trf.xlu0
        %v6355 = vpop.trf.xlu0
        %v6356 = vpop.trf.xlu0
        %v6357 = vpop.trf.xlu0
        %v6358 = vpop.trf.xlu0
        %v6359 = vpop.trf.xlu0
        %v6360 = vpop.trf.xlu0
        %v6361 = vpop.trf.xlu0
        %6362 = vxpose.xlu0.c.b16.start [1/8] %v5079, 128
        %6363 = vxpose.xlu0.c.b16.cont [2/8] 0, 128
        %6364 = vxpose.xlu0.c.b16.cont [3/8] 0, 128
        %6365 = vxpose.xlu0.c.b16.cont [4/8] 0, 128
        %6366 = vxpose.xlu0.c.b16.cont [5/8] 0, 128
        %6367 = vxpose.xlu0.c.b16.cont [6/8] 0, 128
        %6368 = vxpose.xlu0.c.b16.cont [7/8] 0, 128
        %6369 = vxpose.xlu0.c.b16.end [8/8] 0, 128
        %v6370 = vpop.trf.xlu0
        %v6371 = vpop.trf.xlu0
        %v6372 = vpop.trf.xlu0
        %v6373 = vpop.trf.xlu0
        %v6374 = vpop.trf.xlu0
        %v6375 = vpop.trf.xlu0
        %v6376 = vpop.trf.xlu0
        %v6377 = vpop.trf.xlu0
        %6378 = vxpose.xlu0.c.b16.start [1/8] %v5082, 128
        %6379 = vxpose.xlu0.c.b16.cont [2/8] 0, 128
        %6380 = vxpose.xlu0.c.b16.cont [3/8] 0, 128
        %6381 = vxpose.xlu0.c.b16.cont [4/8] 0, 128
        %6382 = vxpose.xlu0.c.b16.cont [5/8] 0, 128
        %6383 = vxpose.xlu0.c.b16.cont [6/8] 0, 128
        %6384 = vxpose.xlu0.c.b16.cont [7/8] 0, 128
        %6385 = vxpose.xlu0.c.b16.end [8/8] 0, 128
        %v6386 = vpop.trf.xlu0
        %v6387 = vpop.trf.xlu0
        %v6388 = vpop.trf.xlu0
        %v6389 = vpop.trf.xlu0
        %v6390 = vpop.trf.xlu0
        %v6391 = vpop.trf.xlu0
        %v6392 = vpop.trf.xlu0
        %v6393 = vpop.trf.xlu0
        %6394 = vxpose.xlu0.c.b16.start [1/8] %v5085, 128
        %6395 = vxpose.xlu0.c.b16.cont [2/8] 0, 128
        %6396 = vxpose.xlu0.c.b16.cont [3/8] 0, 128
        %6397 = vxpose.xlu0.c.b16.cont [4/8] 0, 128
        %6398 = vxpose.xlu0.c.b16.cont [5/8] 0, 128
        %6399 = vxpose.xlu0.c.b16.cont [6/8] 0, 128
        %6400 = vxpose.xlu0.c.b16.cont [7/8] 0, 128
        %6401 = vxpose.xlu0.c.b16.end [8/8] 0, 128
        %v6402 = vpop.trf.xlu0
        %v6403 = vpop.trf.xlu0
        %v6404 = vpop.trf.xlu0
        %v6405 = vpop.trf.xlu0
        %v6406 = vpop.trf.xlu0
        %v6407 = vpop.trf.xlu0
        %v6408 = vpop.trf.xlu0
        %v6409 = vpop.trf.xlu0
        %6410 = vxpose.xlu0.c.b16.start [1/8] %v5088, 128
        %6411 = vxpose.xlu0.c.b16.cont [2/8] 0, 128
        %6412 = vxpose.xlu0.c.b16.cont [3/8] 0, 128
        %6413 = vxpose.xlu0.c.b16.cont [4/8] 0, 128
        %6414 = vxpose.xlu0.c.b16.cont [5/8] 0, 128
        %6415 = vxpose.xlu0.c.b16.cont [6/8] 0, 128
        %6416 = vxpose.xlu0.c.b16.cont [7/8] 0, 128
        %6417 = vxpose.xlu0.c.b16.end [8/8] 0, 128
        %v6418 = vpop.trf.xlu0
        %v6419 = vpop.trf.xlu0
        %v6420 = vpop.trf.xlu0
        %v6421 = vpop.trf.xlu0
        %v6422 = vpop.trf.xlu0
        %v6423 = vpop.trf.xlu0
        %v6424 = vpop.trf.xlu0
        %v6425 = vpop.trf.xlu0
        %6426 = vxpose.xlu0.c.b16.start [1/8] %v5091, 128
        %6427 = vxpose.xlu0.c.b16.cont [2/8] 0, 128
        %6428 = vxpose.xlu0.c.b16.cont [3/8] 0, 128
        %6429 = vxpose.xlu0.c.b16.cont [4/8] 0, 128
        %6430 = vxpose.xlu0.c.b16.cont [5/8] 0, 128
        %6431 = vxpose.xlu0.c.b16.cont [6/8] 0, 128
        %6432 = vxpose.xlu0.c.b16.cont [7/8] 0, 128
        %6433 = vxpose.xlu0.c.b16.end [8/8] 0, 128
        %v6434 = vpop.trf.xlu0
        %v6435 = vpop.trf.xlu0
        %v6436 = vpop.trf.xlu0
        %v6437 = vpop.trf.xlu0
        %v6438 = vpop.trf.xlu0
        %v6439 = vpop.trf.xlu0
        %v6440 = vpop.trf.xlu0
        %v6441 = vpop.trf.xlu0
        %6442 = vxpose.xlu0.c.b16.start [1/8] %v5094, 128
        %6443 = vxpose.xlu0.c.b16.cont [2/8] 0, 128
        %6444 = vxpose.xlu0.c.b16.cont [3/8] 0, 128
        %6445 = vxpose.xlu0.c.b16.cont [4/8] 0, 128
        %6446 = vxpose.xlu0.c.b16.cont [5/8] 0, 128
        %6447 = vxpose.xlu0.c.b16.cont [6/8] 0, 128
        %6448 = vxpose.xlu0.c.b16.cont [7/8] 0, 128
        %6449 = vxpose.xlu0.c.b16.end [8/8] 0, 128
        %v6450 = vpop.trf.xlu0
        %v6451 = vpop.trf.xlu0
        %v6452 = vpop.trf.xlu0
        %v6453 = vpop.trf.xlu0
        %v6454 = vpop.trf.xlu0
        %v6455 = vpop.trf.xlu0
        %v6456 = vpop.trf.xlu0
        %v6457 = vpop.trf.xlu0
        %6458 = vxpose.xlu0.c.b16.start [1/8] %v5097, 128
        %6459 = vxpose.xlu0.c.b16.cont [2/8] 0, 128
        %6460 = vxpose.xlu0.c.b16.cont [3/8] 0, 128
        %6461 = vxpose.xlu0.c.b16.cont [4/8] 0, 128
        %6462 = vxpose.xlu0.c.b16.cont [5/8] 0, 128
        %6463 = vxpose.xlu0.c.b16.cont [6/8] 0, 128
        %6464 = vxpose.xlu0.c.b16.cont [7/8] 0, 128
        %6465 = vxpose.xlu0.c.b16.end [8/8] 0, 128
        %v6466 = vpop.trf.xlu0
        %v6467 = vpop.trf.xlu0
        %v6468 = vpop.trf.xlu0
        %v6469 = vpop.trf.xlu0
        %v6470 = vpop.trf.xlu0
        %v6471 = vpop.trf.xlu0
        %v6472 = vpop.trf.xlu0
        %v6473 = vpop.trf.xlu0
        %6474 = vxpose.xlu0.c.b16.start [1/8] %v5100, 128
        %6475 = vxpose.xlu0.c.b16.cont [2/8] 0, 128
        %6476 = vxpose.xlu0.c.b16.cont [3/8] 0, 128
        %6477 = vxpose.xlu0.c.b16.cont [4/8] 0, 128
        %6478 = vxpose.xlu0.c.b16.cont [5/8] 0, 128
        %6479 = vxpose.xlu0.c.b16.cont [6/8] 0, 128
        %6480 = vxpose.xlu0.c.b16.cont [7/8] 0, 128
        %6481 = vxpose.xlu0.c.b16.end [8/8] 0, 128
        %v6482 = vpop.trf.xlu0
        %v6483 = vpop.trf.xlu0
        %v6484 = vpop.trf.xlu0
        %v6485 = vpop.trf.xlu0
        %v6486 = vpop.trf.xlu0
        %v6487 = vpop.trf.xlu0
        %v6488 = vpop.trf.xlu0
        %v6489 = vpop.trf.xlu0
        %6490 = vxpose.xlu0.c.b16.start [1/8] %v5103, 128
        %6491 = vxpose.xlu0.c.b16.cont [2/8] 0, 128
        %6492 = vxpose.xlu0.c.b16.cont [3/8] 0, 128
        %6493 = vxpose.xlu0.c.b16.cont [4/8] 0, 128
        %6494 = vxpose.xlu0.c.b16.cont [5/8] 0, 128
        %6495 = vxpose.xlu0.c.b16.cont [6/8] 0, 128
        %6496 = vxpose.xlu0.c.b16.cont [7/8] 0, 128
        %6497 = vxpose.xlu0.c.b16.end [8/8] 0, 128
        %v6498 = vpop.trf.xlu0
        %v6499 = vpop.trf.xlu0
        %v6500 = vpop.trf.xlu0
        %v6501 = vpop.trf.xlu0
        %v6502 = vpop.trf.xlu0
        %v6503 = vpop.trf.xlu0
        %v6504 = vpop.trf.xlu0
        %v6505 = vpop.trf.xlu0
        %6506 = vxpose.xlu0.c.b16.start [1/8] %v5106, 128
        %6507 = vxpose.xlu0.c.b16.cont [2/8] 0, 128
        %6508 = vxpose.xlu0.c.b16.cont [3/8] 0, 128
        %6509 = vxpose.xlu0.c.b16.cont [4/8] 0, 128
        %6510 = vxpose.xlu0.c.b16.cont [5/8] 0, 128
        %6511 = vxpose.xlu0.c.b16.cont [6/8] 0, 128
        %6512 = vxpose.xlu0.c.b16.cont [7/8] 0, 128
        %6513 = vxpose.xlu0.c.b16.end [8/8] 0, 128
        %v6514 = vpop.trf.xlu0
        %v6515 = vpop.trf.xlu0
        %v6516 = vpop.trf.xlu0
        %v6517 = vpop.trf.xlu0
        %v6518 = vpop.trf.xlu0
        %v6519 = vpop.trf.xlu0
        %v6520 = vpop.trf.xlu0
        %v6521 = vpop.trf.xlu0
        %6522 = vxpose.xlu0.c.b16.start [1/8] %v5109, 128
        %6523 = vxpose.xlu0.c.b16.cont [2/8] 0, 128
        %6524 = vxpose.xlu0.c.b16.cont [3/8] 0, 128
        %6525 = vxpose.xlu0.c.b16.cont [4/8] 0, 128
        %6526 = vxpose.xlu0.c.b16.cont [5/8] 0, 128
        %6527 = vxpose.xlu0.c.b16.cont [6/8] 0, 128
        %6528 = vxpose.xlu0.c.b16.cont [7/8] 0, 128
        %6529 = vxpose.xlu0.c.b16.end [8/8] 0, 128
        %v6530 = vpop.trf.xlu0
        %v6531 = vpop.trf.xlu0
        %v6532 = vpop.trf.xlu0
        %v6533 = vpop.trf.xlu0
        %v6534 = vpop.trf.xlu0
        %v6535 = vpop.trf.xlu0
        %v6536 = vpop.trf.xlu0
        %v6537 = vpop.trf.xlu0
        %6538 = vxpose.xlu0.c.b16.start [1/8] %v5112, 128
        %6539 = vxpose.xlu0.c.b16.cont [2/8] 0, 128
        %6540 = vxpose.xlu0.c.b16.cont [3/8] 0, 128
        %6541 = vxpose.xlu0.c.b16.cont [4/8] 0, 128
        %6542 = vxpose.xlu0.c.b16.cont [5/8] 0, 128
        %6543 = vxpose.xlu0.c.b16.cont [6/8] 0, 128
        %6544 = vxpose.xlu0.c.b16.cont [7/8] 0, 128
        %6545 = vxpose.xlu0.c.b16.end [8/8] 0, 128
        %v6546 = vpop.trf.xlu0
        %v6547 = vpop.trf.xlu0
        %v6548 = vpop.trf.xlu0
        %v6549 = vpop.trf.xlu0
        %v6550 = vpop.trf.xlu0
        %v6551 = vpop.trf.xlu0
        %v6552 = vpop.trf.xlu0
        %v6553 = vpop.trf.xlu0
        %v6555 = vsel %vm1271, %v6306, 0
        %v6558 = vsel %vm1271, %v6282, 0
        %6560 = vmatprep.subr.bf16.mxu0 0
        %6561 = vmatpush1.bf16.xpose.msra.mxu0 %v6558
        %6562 = vmatprep.subr.bf16.mxu0 0
        %6563 = vmatpush1.bf16.xpose.msra.mxu0 0
        %6564 = vmatprep.subr.bf16.mxu0 0
        %6565 = vmatpush1.bf16.xpose.msra.mxu0 0
        %6566 = vmatprep.subr.bf16.mxu0 0
        %6567 = vmatpush1.bf16.xpose.msra.mxu0 0
        %6568 = vmatprep.subr.bf16.mxu0 0
        %6569 = vmatpush1.bf16.xpose.msra.mxu0 0
        %6570 = vmatprep.subr.bf16.mxu0 0
        %6571 = vmatpush1.bf16.xpose.msra.mxu0 0
        %6572 = vmatprep.subr.bf16.mxu0 0
        %6573 = vmatpush1.bf16.xpose.msra.mxu0 0
        %6574 = vmatprep.subr.bf16.mxu0 0
        %6575 = vmatpush1.bf16.xpose.msra.mxu0 0
        %6576 = vmatprep.subr.bf16.mxu0 0
        %6577 = vmatpush1.bf16.xpose.msra.mxu0 0
        %6578 = vmatprep.subr.bf16.mxu0 0
        %6579 = vmatpush1.bf16.xpose.msra.mxu0 0
        %6580 = vmatprep.subr.bf16.mxu0 0
        %6581 = vmatpush1.bf16.xpose.msra.mxu0 0
        %6582 = vmatprep.subr.bf16.mxu0 0
        %6583 = vmatpush1.bf16.xpose.msra.mxu0 0
        %6584 = vmatprep.subr.bf16.mxu0 0
        %6585 = vmatpush1.bf16.xpose.msra.mxu0 0
        %6586 = vmatprep.subr.bf16.mxu0 0
        %6587 = vmatpush1.bf16.xpose.msra.mxu0 0
        %6588 = vmatprep.subr.bf16.mxu0 0
        %6589 = vmatpush1.bf16.xpose.msra.mxu0 0
        %6590 = vmatprep.subr.bf16.mxu0 0
        %6591 = vmatpush1.bf16.xpose.msra.mxu0 0
        %6592 = vmatprep.mubr.bf16.mxu0 0
        %6593 = vmatmul.mubr.bf16.gmra.mrb[0].mxu0 %v6555
        %v6594 = vpop.f32.mrb[0].mxu0
        %v6595 = vadd.f32 0.0, %v6594
        %v6596 = vpop.f32.mrb[0].mxu0
        %v6597 = vpop.f32.mrb[0].mxu0
        %v6598 = vpop.f32.mrb[0].mxu0
        %6599 = vdwg.mxu0
        %v6601 = vsel %vm1271, %v6322, 0
        %v6604 = vsel %vm1271, %v6283, 0
        %6606 = vmatprep.subr.bf16.mxu0 0
        %6607 = vmatpush1.bf16.xpose.msra.mxu0 %v6604
        %6608 = vmatprep.subr.bf16.mxu0 0
        %6609 = vmatpush1.bf16.xpose.msra.mxu0 0
        %6610 = vmatprep.subr.bf16.mxu0 0
        %6611 = vmatpush1.bf16.xpose.msra.mxu0 0
        %6612 = vmatprep.subr.bf16.mxu0 0
        %6613 = vmatpush1.bf16.xpose.msra.mxu0 0
        %6614 = vmatprep.subr.bf16.mxu0 0
        %6615 = vmatpush1.bf16.xpose.msra.mxu0 0
        %6616 = vmatprep.subr.bf16.mxu0 0
        %6617 = vmatpush1.bf16.xpose.msra.mxu0 0
        %6618 = vmatprep.subr.bf16.mxu0 0
        %6619 = vmatpush1.bf16.xpose.msra.mxu0 0
        %6620 = vmatprep.subr.bf16.mxu0 0
        %6621 = vmatpush1.bf16.xpose.msra.mxu0 0
        %6622 = vmatprep.subr.bf16.mxu0 0
        %6623 = vmatpush1.bf16.xpose.msra.mxu0 0
        %6624 = vmatprep.subr.bf16.mxu0 0
        %6625 = vmatpush1.bf16.xpose.msra.mxu0 0
        %6626 = vmatprep.subr.bf16.mxu0 0
        %6627 = vmatpush1.bf16.xpose.msra.mxu0 0
        %6628 = vmatprep.subr.bf16.mxu0 0
        %6629 = vmatpush1.bf16.xpose.msra.mxu0 0
        %6630 = vmatprep.subr.bf16.mxu0 0
        %6631 = vmatpush1.bf16.xpose.msra.mxu0 0
        %6632 = vmatprep.subr.bf16.mxu0 0
        %6633 = vmatpush1.bf16.xpose.msra.mxu0 0
        %6634 = vmatprep.subr.bf16.mxu0 0
        %6635 = vmatpush1.bf16.xpose.msra.mxu0 0
        %6636 = vmatprep.subr.bf16.mxu0 0
        %6637 = vmatpush1.bf16.xpose.msra.mxu0 0
        %6638 = vmatprep.mubr.bf16.mxu0 0
        %6639 = vmatmul.mubr.bf16.gmra.mrb[0].mxu0 %v6601
        %v6640 = vpop.f32.mrb[0].mxu0
        %v6641 = vadd.f32 0.0, %v6640
        %v6642 = vpop.f32.mrb[0].mxu0
        %v6643 = vpop.f32.mrb[0].mxu0
        %v6644 = vpop.f32.mrb[0].mxu0
        %6645 = vdwg.mxu0
        %v6647 = vsel %vm1271, %v6338, 0
        %v6650 = vsel %vm1271, %v6284, 0
        %6652 = vmatprep.subr.bf16.mxu0 0
        %6653 = vmatpush1.bf16.xpose.msra.mxu0 %v6650
        %6654 = vmatprep.subr.bf16.mxu0 0
        %6655 = vmatpush1.bf16.xpose.msra.mxu0 0
        %6656 = vmatprep.subr.bf16.mxu0 0
        %6657 = vmatpush1.bf16.xpose.msra.mxu0 0
        %6658 = vmatprep.subr.bf16.mxu0 0
        %6659 = vmatpush1.bf16.xpose.msra.mxu0 0
        %6660 = vmatprep.subr.bf16.mxu0 0
        %6661 = vmatpush1.bf16.xpose.msra.mxu0 0
        %6662 = vmatprep.subr.bf16.mxu0 0
        %6663 = vmatpush1.bf16.xpose.msra.mxu0 0
        %6664 = vmatprep.subr.bf16.mxu0 0
        %6665 = vmatpush1.bf16.xpose.msra.mxu0 0
        %6666 = vmatprep.subr.bf16.mxu0 0
        %6667 = vmatpush1.bf16.xpose.msra.mxu0 0
        %6668 = vmatprep.subr.bf16.mxu0 0
        %6669 = vmatpush1.bf16.xpose.msra.mxu0 0
        %6670 = vmatprep.subr.bf16.mxu0 0
        %6671 = vmatpush1.bf16.xpose.msra.mxu0 0
        %6672 = vmatprep.subr.bf16.mxu0 0
        %6673 = vmatpush1.bf16.xpose.msra.mxu0 0
        %6674 = vmatprep.subr.bf16.mxu0 0
        %6675 = vmatpush1.bf16.xpose.msra.mxu0 0
        %6676 = vmatprep.subr.bf16.mxu0 0
        %6677 = vmatpush1.bf16.xpose.msra.mxu0 0
        %6678 = vmatprep.subr.bf16.mxu0 0
        %6679 = vmatpush1.bf16.xpose.msra.mxu0 0
        %6680 = vmatprep.subr.bf16.mxu0 0
        %6681 = vmatpush1.bf16.xpose.msra.mxu0 0
        %6682 = vmatprep.subr.bf16.mxu0 0
        %6683 = vmatpush1.bf16.xpose.msra.mxu0 0
        %6684 = vmatprep.mubr.bf16.mxu0 0
        %6685 = vmatmul.mubr.bf16.gmra.mrb[0].mxu0 %v6647
        %v6686 = vpop.f32.mrb[0].mxu0
        %v6687 = vadd.f32 0.0, %v6686
        %v6688 = vpop.f32.mrb[0].mxu0
        %v6689 = vpop.f32.mrb[0].mxu0
        %v6690 = vpop.f32.mrb[0].mxu0
        %6691 = vdwg.mxu0
        %v6693 = vsel %vm1271, %v6354, 0
        %v6696 = vsel %vm1271, %v6285, 0
        %6698 = vmatprep.subr.bf16.mxu0 0
        %6699 = vmatpush1.bf16.xpose.msra.mxu0 %v6696
        %6700 = vmatprep.subr.bf16.mxu0 0
        %6701 = vmatpush1.bf16.xpose.msra.mxu0 0
        %6702 = vmatprep.subr.bf16.mxu0 0
        %6703 = vmatpush1.bf16.xpose.msra.mxu0 0
        %6704 = vmatprep.subr.bf16.mxu0 0
        %6705 = vmatpush1.bf16.xpose.msra.mxu0 0
        %6706 = vmatprep.subr.bf16.mxu0 0
        %6707 = vmatpush1.bf16.xpose.msra.mxu0 0
        %6708 = vmatprep.subr.bf16.mxu0 0
        %6709 = vmatpush1.bf16.xpose.msra.mxu0 0
        %6710 = vmatprep.subr.bf16.mxu0 0
        %6711 = vmatpush1.bf16.xpose.msra.mxu0 0
        %6712 = vmatprep.subr.bf16.mxu0 0
        %6713 = vmatpush1.bf16.xpose.msra.mxu0 0
        %6714 = vmatprep.subr.bf16.mxu0 0
        %6715 = vmatpush1.bf16.xpose.msra.mxu0 0
        %6716 = vmatprep.subr.bf16.mxu0 0
        %6717 = vmatpush1.bf16.xpose.msra.mxu0 0
        %6718 = vmatprep.subr.bf16.mxu0 0
        %6719 = vmatpush1.bf16.xpose.msra.mxu0 0
        %6720 = vmatprep.subr.bf16.mxu0 0
        %6721 = vmatpush1.bf16.xpose.msra.mxu0 0
        %6722 = vmatprep.subr.bf16.mxu0 0
        %6723 = vmatpush1.bf16.xpose.msra.mxu0 0
        %6724 = vmatprep.subr.bf16.mxu0 0
        %6725 = vmatpush1.bf16.xpose.msra.mxu0 0
        %6726 = vmatprep.subr.bf16.mxu0 0
        %6727 = vmatpush1.bf16.xpose.msra.mxu0 0
        %6728 = vmatprep.subr.bf16.mxu0 0
        %6729 = vmatpush1.bf16.xpose.msra.mxu0 0
        %6730 = vmatprep.mubr.bf16.mxu0 0
        %6731 = vmatmul.mubr.bf16.gmra.mrb[0].mxu0 %v6693
        %v6732 = vpop.f32.mrb[0].mxu0
        %v6733 = vadd.f32 0.0, %v6732
        %v6734 = vpop.f32.mrb[0].mxu0
        %v6735 = vpop.f32.mrb[0].mxu0
        %v6736 = vpop.f32.mrb[0].mxu0
        %6737 = vdwg.mxu0
        %v6739 = vsel %vm1271, %v6370, 0
        %v6742 = vsel %vm1271, %v6286, 0
        %6744 = vmatprep.subr.bf16.mxu0 0
        %6745 = vmatpush1.bf16.xpose.msra.mxu0 %v6742
        %6746 = vmatprep.subr.bf16.mxu0 0
        %6747 = vmatpush1.bf16.xpose.msra.mxu0 0
        %6748 = vmatprep.subr.bf16.mxu0 0
        %6749 = vmatpush1.bf16.xpose.msra.mxu0 0
        %6750 = vmatprep.subr.bf16.mxu0 0
        %6751 = vmatpush1.bf16.xpose.msra.mxu0 0
        %6752 = vmatprep.subr.bf16.mxu0 0
        %6753 = vmatpush1.bf16.xpose.msra.mxu0 0
        %6754 = vmatprep.subr.bf16.mxu0 0
        %6755 = vmatpush1.bf16.xpose.msra.mxu0 0
        %6756 = vmatprep.subr.bf16.mxu0 0
        %6757 = vmatpush1.bf16.xpose.msra.mxu0 0
        %6758 = vmatprep.subr.bf16.mxu0 0
        %6759 = vmatpush1.bf16.xpose.msra.mxu0 0
        %6760 = vmatprep.subr.bf16.mxu0 0
        %6761 = vmatpush1.bf16.xpose.msra.mxu0 0
        %6762 = vmatprep.subr.bf16.mxu0 0
        %6763 = vmatpush1.bf16.xpose.msra.mxu0 0
        %6764 = vmatprep.subr.bf16.mxu0 0
        %6765 = vmatpush1.bf16.xpose.msra.mxu0 0
        %6766 = vmatprep.subr.bf16.mxu0 0
        %6767 = vmatpush1.bf16.xpose.msra.mxu0 0
        %6768 = vmatprep.subr.bf16.mxu0 0
        %6769 = vmatpush1.bf16.xpose.msra.mxu0 0
        %6770 = vmatprep.subr.bf16.mxu0 0
        %6771 = vmatpush1.bf16.xpose.msra.mxu0 0
        %6772 = vmatprep.subr.bf16.mxu0 0
        %6773 = vmatpush1.bf16.xpose.msra.mxu0 0
        %6774 = vmatprep.subr.bf16.mxu0 0
        %6775 = vmatpush1.bf16.xpose.msra.mxu0 0
        %6776 = vmatprep.mubr.bf16.mxu0 0
        %6777 = vmatmul.mubr.bf16.gmra.mrb[0].mxu0 %v6739
        %v6778 = vpop.f32.mrb[0].mxu0
        %v6779 = vadd.f32 0.0, %v6778
        %v6780 = vpop.f32.mrb[0].mxu0
        %v6781 = vpop.f32.mrb[0].mxu0
        %v6782 = vpop.f32.mrb[0].mxu0
        %6783 = vdwg.mxu0
        %v6785 = vsel %vm1271, %v6386, 0
        %v6788 = vsel %vm1271, %v6287, 0
        %6790 = vmatprep.subr.bf16.mxu0 0
        %6791 = vmatpush1.bf16.xpose.msra.mxu0 %v6788
        %6792 = vmatprep.subr.bf16.mxu0 0
        %6793 = vmatpush1.bf16.xpose.msra.mxu0 0
        %6794 = vmatprep.subr.bf16.mxu0 0
        %6795 = vmatpush1.bf16.xpose.msra.mxu0 0
        %6796 = vmatprep.subr.bf16.mxu0 0
        %6797 = vmatpush1.bf16.xpose.msra.mxu0 0
        %6798 = vmatprep.subr.bf16.mxu0 0
        %6799 = vmatpush1.bf16.xpose.msra.mxu0 0
        %6800 = vmatprep.subr.bf16.mxu0 0
        %6801 = vmatpush1.bf16.xpose.msra.mxu0 0
        %6802 = vmatprep.subr.bf16.mxu0 0
        %6803 = vmatpush1.bf16.xpose.msra.mxu0 0
        %6804 = vmatprep.subr.bf16.mxu0 0
        %6805 = vmatpush1.bf16.xpose.msra.mxu0 0
        %6806 = vmatprep.subr.bf16.mxu0 0
        %6807 = vmatpush1.bf16.xpose.msra.mxu0 0
        %6808 = vmatprep.subr.bf16.mxu0 0
        %6809 = vmatpush1.bf16.xpose.msra.mxu0 0
        %6810 = vmatprep.subr.bf16.mxu0 0
        %6811 = vmatpush1.bf16.xpose.msra.mxu0 0
        %6812 = vmatprep.subr.bf16.mxu0 0
        %6813 = vmatpush1.bf16.xpose.msra.mxu0 0
        %6814 = vmatprep.subr.bf16.mxu0 0
        %6815 = vmatpush1.bf16.xpose.msra.mxu0 0
        %6816 = vmatprep.subr.bf16.mxu0 0
        %6817 = vmatpush1.bf16.xpose.msra.mxu0 0
        %6818 = vmatprep.subr.bf16.mxu0 0
        %6819 = vmatpush1.bf16.xpose.msra.mxu0 0
        %6820 = vmatprep.subr.bf16.mxu0 0
        %6821 = vmatpush1.bf16.xpose.msra.mxu0 0
        %6822 = vmatprep.mubr.bf16.mxu0 0
        %6823 = vmatmul.mubr.bf16.gmra.mrb[0].mxu0 %v6785
        %v6824 = vpop.f32.mrb[0].mxu0
        %v6825 = vadd.f32 0.0, %v6824
        %v6826 = vpop.f32.mrb[0].mxu0
        %v6827 = vpop.f32.mrb[0].mxu0
        %v6828 = vpop.f32.mrb[0].mxu0
        %6829 = vdwg.mxu0
        %v6831 = vsel %vm1271, %v6402, 0
        %v6834 = vsel %vm1271, %v6288, 0
        %6836 = vmatprep.subr.bf16.mxu0 0
        %6837 = vmatpush1.bf16.xpose.msra.mxu0 %v6834
        %6838 = vmatprep.subr.bf16.mxu0 0
        %6839 = vmatpush1.bf16.xpose.msra.mxu0 0
        %6840 = vmatprep.subr.bf16.mxu0 0
        %6841 = vmatpush1.bf16.xpose.msra.mxu0 0
        %6842 = vmatprep.subr.bf16.mxu0 0
        %6843 = vmatpush1.bf16.xpose.msra.mxu0 0
        %6844 = vmatprep.subr.bf16.mxu0 0
        %6845 = vmatpush1.bf16.xpose.msra.mxu0 0
        %6846 = vmatprep.subr.bf16.mxu0 0
        %6847 = vmatpush1.bf16.xpose.msra.mxu0 0
        %6848 = vmatprep.subr.bf16.mxu0 0
        %6849 = vmatpush1.bf16.xpose.msra.mxu0 0
        %6850 = vmatprep.subr.bf16.mxu0 0
        %6851 = vmatpush1.bf16.xpose.msra.mxu0 0
        %6852 = vmatprep.subr.bf16.mxu0 0
        %6853 = vmatpush1.bf16.xpose.msra.mxu0 0
        %6854 = vmatprep.subr.bf16.mxu0 0
        %6855 = vmatpush1.bf16.xpose.msra.mxu0 0
        %6856 = vmatprep.subr.bf16.mxu0 0
        %6857 = vmatpush1.bf16.xpose.msra.mxu0 0
        %6858 = vmatprep.subr.bf16.mxu0 0
        %6859 = vmatpush1.bf16.xpose.msra.mxu0 0
        %6860 = vmatprep.subr.bf16.mxu0 0
        %6861 = vmatpush1.bf16.xpose.msra.mxu0 0
        %6862 = vmatprep.subr.bf16.mxu0 0
        %6863 = vmatpush1.bf16.xpose.msra.mxu0 0
        %6864 = vmatprep.subr.bf16.mxu0 0
        %6865 = vmatpush1.bf16.xpose.msra.mxu0 0
        %6866 = vmatprep.subr.bf16.mxu0 0
        %6867 = vmatpush1.bf16.xpose.msra.mxu0 0
        %6868 = vmatprep.mubr.bf16.mxu0 0
        %6869 = vmatmul.mubr.bf16.gmra.mrb[0].mxu0 %v6831
        %v6870 = vpop.f32.mrb[0].mxu0
        %v6871 = vadd.f32 0.0, %v6870
        %v6872 = vpop.f32.mrb[0].mxu0
        %v6873 = vpop.f32.mrb[0].mxu0
        %v6874 = vpop.f32.mrb[0].mxu0
        %6875 = vdwg.mxu0
        %v6877 = vsel %vm1271, %v6418, 0
        %v6880 = vsel %vm1271, %v6289, 0
        %6882 = vmatprep.subr.bf16.mxu0 0
        %6883 = vmatpush1.bf16.xpose.msra.mxu0 %v6880
        %6884 = vmatprep.subr.bf16.mxu0 0
        %6885 = vmatpush1.bf16.xpose.msra.mxu0 0
        %6886 = vmatprep.subr.bf16.mxu0 0
        %6887 = vmatpush1.bf16.xpose.msra.mxu0 0
        %6888 = vmatprep.subr.bf16.mxu0 0
        %6889 = vmatpush1.bf16.xpose.msra.mxu0 0
        %6890 = vmatprep.subr.bf16.mxu0 0
        %6891 = vmatpush1.bf16.xpose.msra.mxu0 0
        %6892 = vmatprep.subr.bf16.mxu0 0
        %6893 = vmatpush1.bf16.xpose.msra.mxu0 0
        %6894 = vmatprep.subr.bf16.mxu0 0
        %6895 = vmatpush1.bf16.xpose.msra.mxu0 0
        %6896 = vmatprep.subr.bf16.mxu0 0
        %6897 = vmatpush1.bf16.xpose.msra.mxu0 0
        %6898 = vmatprep.subr.bf16.mxu0 0
        %6899 = vmatpush1.bf16.xpose.msra.mxu0 0
        %6900 = vmatprep.subr.bf16.mxu0 0
        %6901 = vmatpush1.bf16.xpose.msra.mxu0 0
        %6902 = vmatprep.subr.bf16.mxu0 0
        %6903 = vmatpush1.bf16.xpose.msra.mxu0 0
        %6904 = vmatprep.subr.bf16.mxu0 0
        %6905 = vmatpush1.bf16.xpose.msra.mxu0 0
        %6906 = vmatprep.subr.bf16.mxu0 0
        %6907 = vmatpush1.bf16.xpose.msra.mxu0 0
        %6908 = vmatprep.subr.bf16.mxu0 0
        %6909 = vmatpush1.bf16.xpose.msra.mxu0 0
        %6910 = vmatprep.subr.bf16.mxu0 0
        %6911 = vmatpush1.bf16.xpose.msra.mxu0 0
        %6912 = vmatprep.subr.bf16.mxu0 0
        %6913 = vmatpush1.bf16.xpose.msra.mxu0 0
        %6914 = vmatprep.mubr.bf16.mxu0 0
        %6915 = vmatmul.mubr.bf16.gmra.mrb[0].mxu0 %v6877
        %v6916 = vpop.f32.mrb[0].mxu0
        %v6917 = vadd.f32 0.0, %v6916
        %v6918 = vpop.f32.mrb[0].mxu0
        %v6919 = vpop.f32.mrb[0].mxu0
        %v6920 = vpop.f32.mrb[0].mxu0
        %6921 = vdwg.mxu0
        %v6923 = vsel %vm1271, %v6434, 0
        %v6926 = vsel %vm1271, %v6290, 0
        %6928 = vmatprep.subr.bf16.mxu0 0
        %6929 = vmatpush1.bf16.xpose.msra.mxu0 %v6926
        %6930 = vmatprep.subr.bf16.mxu0 0
        %6931 = vmatpush1.bf16.xpose.msra.mxu0 0
        %6932 = vmatprep.subr.bf16.mxu0 0
        %6933 = vmatpush1.bf16.xpose.msra.mxu0 0
        %6934 = vmatprep.subr.bf16.mxu0 0
        %6935 = vmatpush1.bf16.xpose.msra.mxu0 0
        %6936 = vmatprep.subr.bf16.mxu0 0
        %6937 = vmatpush1.bf16.xpose.msra.mxu0 0
        %6938 = vmatprep.subr.bf16.mxu0 0
        %6939 = vmatpush1.bf16.xpose.msra.mxu0 0
        %6940 = vmatprep.subr.bf16.mxu0 0
        %6941 = vmatpush1.bf16.xpose.msra.mxu0 0
        %6942 = vmatprep.subr.bf16.mxu0 0
        %6943 = vmatpush1.bf16.xpose.msra.mxu0 0
        %6944 = vmatprep.subr.bf16.mxu0 0
        %6945 = vmatpush1.bf16.xpose.msra.mxu0 0
        %6946 = vmatprep.subr.bf16.mxu0 0
        %6947 = vmatpush1.bf16.xpose.msra.mxu0 0
        %6948 = vmatprep.subr.bf16.mxu0 0
        %6949 = vmatpush1.bf16.xpose.msra.mxu0 0
        %6950 = vmatprep.subr.bf16.mxu0 0
        %6951 = vmatpush1.bf16.xpose.msra.mxu0 0
        %6952 = vmatprep.subr.bf16.mxu0 0
        %6953 = vmatpush1.bf16.xpose.msra.mxu0 0
        %6954 = vmatprep.subr.bf16.mxu0 0
        %6955 = vmatpush1.bf16.xpose.msra.mxu0 0
        %6956 = vmatprep.subr.bf16.mxu0 0
        %6957 = vmatpush1.bf16.xpose.msra.mxu0 0
        %6958 = vmatprep.subr.bf16.mxu0 0
        %6959 = vmatpush1.bf16.xpose.msra.mxu0 0
        %6960 = vmatprep.mubr.bf16.mxu0 0
        %6961 = vmatmul.mubr.bf16.gmra.mrb[0].mxu0 %v6923
        %v6962 = vpop.f32.mrb[0].mxu0
        %v6963 = vadd.f32 0.0, %v6962
        %v6964 = vpop.f32.mrb[0].mxu0
        %v6965 = vpop.f32.mrb[0].mxu0
        %v6966 = vpop.f32.mrb[0].mxu0
        %6967 = vdwg.mxu0
        %v6969 = vsel %vm1271, %v6450, 0
        %v6972 = vsel %vm1271, %v6291, 0
        %6974 = vmatprep.subr.bf16.mxu0 0
        %6975 = vmatpush1.bf16.xpose.msra.mxu0 %v6972
        %6976 = vmatprep.subr.bf16.mxu0 0
        %6977 = vmatpush1.bf16.xpose.msra.mxu0 0
        %6978 = vmatprep.subr.bf16.mxu0 0
        %6979 = vmatpush1.bf16.xpose.msra.mxu0 0
        %6980 = vmatprep.subr.bf16.mxu0 0
        %6981 = vmatpush1.bf16.xpose.msra.mxu0 0
        %6982 = vmatprep.subr.bf16.mxu0 0
        %6983 = vmatpush1.bf16.xpose.msra.mxu0 0
        %6984 = vmatprep.subr.bf16.mxu0 0
        %6985 = vmatpush1.bf16.xpose.msra.mxu0 0
        %6986 = vmatprep.subr.bf16.mxu0 0
        %6987 = vmatpush1.bf16.xpose.msra.mxu0 0
        %6988 = vmatprep.subr.bf16.mxu0 0
        %6989 = vmatpush1.bf16.xpose.msra.mxu0 0
        %6990 = vmatprep.subr.bf16.mxu0 0
        %6991 = vmatpush1.bf16.xpose.msra.mxu0 0
        %6992 = vmatprep.subr.bf16.mxu0 0
        %6993 = vmatpush1.bf16.xpose.msra.mxu0 0
        %6994 = vmatprep.subr.bf16.mxu0 0
        %6995 = vmatpush1.bf16.xpose.msra.mxu0 0
        %6996 = vmatprep.subr.bf16.mxu0 0
        %6997 = vmatpush1.bf16.xpose.msra.mxu0 0
        %6998 = vmatprep.subr.bf16.mxu0 0
        %6999 = vmatpush1.bf16.xpose.msra.mxu0 0
        %7000 = vmatprep.subr.bf16.mxu0 0
        %7001 = vmatpush1.bf16.xpose.msra.mxu0 0
        %7002 = vmatprep.subr.bf16.mxu0 0
        %7003 = vmatpush1.bf16.xpose.msra.mxu0 0
        %7004 = vmatprep.subr.bf16.mxu0 0
        %7005 = vmatpush1.bf16.xpose.msra.mxu0 0
        %7006 = vmatprep.mubr.bf16.mxu0 0
        %7007 = vmatmul.mubr.bf16.gmra.mrb[0].mxu0 %v6969
        %v7008 = vpop.f32.mrb[0].mxu0
        %v7009 = vadd.f32 0.0, %v7008
        %v7010 = vpop.f32.mrb[0].mxu0
        %v7011 = vpop.f32.mrb[0].mxu0
        %v7012 = vpop.f32.mrb[0].mxu0
        %7013 = vdwg.mxu0
        %v7015 = vsel %vm1271, %v6466, 0
        %v7018 = vsel %vm1271, %v6292, 0
        %7020 = vmatprep.subr.bf16.mxu0 0
        %7021 = vmatpush1.bf16.xpose.msra.mxu0 %v7018
        %7022 = vmatprep.subr.bf16.mxu0 0
        %7023 = vmatpush1.bf16.xpose.msra.mxu0 0
        %7024 = vmatprep.subr.bf16.mxu0 0
        %7025 = vmatpush1.bf16.xpose.msra.mxu0 0
        %7026 = vmatprep.subr.bf16.mxu0 0
        %7027 = vmatpush1.bf16.xpose.msra.mxu0 0
        %7028 = vmatprep.subr.bf16.mxu0 0
        %7029 = vmatpush1.bf16.xpose.msra.mxu0 0
        %7030 = vmatprep.subr.bf16.mxu0 0
        %7031 = vmatpush1.bf16.xpose.msra.mxu0 0
        %7032 = vmatprep.subr.bf16.mxu0 0
        %7033 = vmatpush1.bf16.xpose.msra.mxu0 0
        %7034 = vmatprep.subr.bf16.mxu0 0
        %7035 = vmatpush1.bf16.xpose.msra.mxu0 0
        %7036 = vmatprep.subr.bf16.mxu0 0
        %7037 = vmatpush1.bf16.xpose.msra.mxu0 0
        %7038 = vmatprep.subr.bf16.mxu0 0
        %7039 = vmatpush1.bf16.xpose.msra.mxu0 0
        %7040 = vmatprep.subr.bf16.mxu0 0
        %7041 = vmatpush1.bf16.xpose.msra.mxu0 0
        %7042 = vmatprep.subr.bf16.mxu0 0
        %7043 = vmatpush1.bf16.xpose.msra.mxu0 0
        %7044 = vmatprep.subr.bf16.mxu0 0
        %7045 = vmatpush1.bf16.xpose.msra.mxu0 0
        %7046 = vmatprep.subr.bf16.mxu0 0
        %7047 = vmatpush1.bf16.xpose.msra.mxu0 0
        %7048 = vmatprep.subr.bf16.mxu0 0
        %7049 = vmatpush1.bf16.xpose.msra.mxu0 0
        %7050 = vmatprep.subr.bf16.mxu0 0
        %7051 = vmatpush1.bf16.xpose.msra.mxu0 0
        %7052 = vmatprep.mubr.bf16.mxu0 0
        %7053 = vmatmul.mubr.bf16.gmra.mrb[0].mxu0 %v7015
        %v7054 = vpop.f32.mrb[0].mxu0
        %v7055 = vadd.f32 0.0, %v7054
        %v7056 = vpop.f32.mrb[0].mxu0
        %v7057 = vpop.f32.mrb[0].mxu0
        %v7058 = vpop.f32.mrb[0].mxu0
        %7059 = vdwg.mxu0
        %v7061 = vsel %vm1271, %v6482, 0
        %v7064 = vsel %vm1271, %v6293, 0
        %7066 = vmatprep.subr.bf16.mxu0 0
        %7067 = vmatpush1.bf16.xpose.msra.mxu0 %v7064
        %7068 = vmatprep.subr.bf16.mxu0 0
        %7069 = vmatpush1.bf16.xpose.msra.mxu0 0
        %7070 = vmatprep.subr.bf16.mxu0 0
        %7071 = vmatpush1.bf16.xpose.msra.mxu0 0
        %7072 = vmatprep.subr.bf16.mxu0 0
        %7073 = vmatpush1.bf16.xpose.msra.mxu0 0
        %7074 = vmatprep.subr.bf16.mxu0 0
        %7075 = vmatpush1.bf16.xpose.msra.mxu0 0
        %7076 = vmatprep.subr.bf16.mxu0 0
        %7077 = vmatpush1.bf16.xpose.msra.mxu0 0
        %7078 = vmatprep.subr.bf16.mxu0 0
        %7079 = vmatpush1.bf16.xpose.msra.mxu0 0
        %7080 = vmatprep.subr.bf16.mxu0 0
        %7081 = vmatpush1.bf16.xpose.msra.mxu0 0
        %7082 = vmatprep.subr.bf16.mxu0 0
        %7083 = vmatpush1.bf16.xpose.msra.mxu0 0
        %7084 = vmatprep.subr.bf16.mxu0 0
        %7085 = vmatpush1.bf16.xpose.msra.mxu0 0
        %7086 = vmatprep.subr.bf16.mxu0 0
        %7087 = vmatpush1.bf16.xpose.msra.mxu0 0
        %7088 = vmatprep.subr.bf16.mxu0 0
        %7089 = vmatpush1.bf16.xpose.msra.mxu0 0
        %7090 = vmatprep.subr.bf16.mxu0 0
        %7091 = vmatpush1.bf16.xpose.msra.mxu0 0
        %7092 = vmatprep.subr.bf16.mxu0 0
        %7093 = vmatpush1.bf16.xpose.msra.mxu0 0
        %7094 = vmatprep.subr.bf16.mxu0 0
        %7095 = vmatpush1.bf16.xpose.msra.mxu0 0
        %7096 = vmatprep.subr.bf16.mxu0 0
        %7097 = vmatpush1.bf16.xpose.msra.mxu0 0
        %7098 = vmatprep.mubr.bf16.mxu0 0
        %7099 = vmatmul.mubr.bf16.gmra.mrb[0].mxu0 %v7061
        %v7100 = vpop.f32.mrb[0].mxu0
        %v7101 = vadd.f32 0.0, %v7100
        %v7102 = vpop.f32.mrb[0].mxu0
        %v7103 = vpop.f32.mrb[0].mxu0
        %v7104 = vpop.f32.mrb[0].mxu0
        %7105 = vdwg.mxu0
        %v7107 = vsel %vm1271, %v6498, 0
        %v7110 = vsel %vm1271, %v6294, 0
        %7112 = vmatprep.subr.bf16.mxu0 0
        %7113 = vmatpush1.bf16.xpose.msra.mxu0 %v7110
        %7114 = vmatprep.subr.bf16.mxu0 0
        %7115 = vmatpush1.bf16.xpose.msra.mxu0 0
        %7116 = vmatprep.subr.bf16.mxu0 0
        %7117 = vmatpush1.bf16.xpose.msra.mxu0 0
        %7118 = vmatprep.subr.bf16.mxu0 0
        %7119 = vmatpush1.bf16.xpose.msra.mxu0 0
        %7120 = vmatprep.subr.bf16.mxu0 0
        %7121 = vmatpush1.bf16.xpose.msra.mxu0 0
        %7122 = vmatprep.subr.bf16.mxu0 0
        %7123 = vmatpush1.bf16.xpose.msra.mxu0 0
        %7124 = vmatprep.subr.bf16.mxu0 0
        %7125 = vmatpush1.bf16.xpose.msra.mxu0 0
        %7126 = vmatprep.subr.bf16.mxu0 0
        %7127 = vmatpush1.bf16.xpose.msra.mxu0 0
        %7128 = vmatprep.subr.bf16.mxu0 0
        %7129 = vmatpush1.bf16.xpose.msra.mxu0 0
        %7130 = vmatprep.subr.bf16.mxu0 0
        %7131 = vmatpush1.bf16.xpose.msra.mxu0 0
        %7132 = vmatprep.subr.bf16.mxu0 0
        %7133 = vmatpush1.bf16.xpose.msra.mxu0 0
        %7134 = vmatprep.subr.bf16.mxu0 0
        %7135 = vmatpush1.bf16.xpose.msra.mxu0 0
        %7136 = vmatprep.subr.bf16.mxu0 0
        %7137 = vmatpush1.bf16.xpose.msra.mxu0 0
        %7138 = vmatprep.subr.bf16.mxu0 0
        %7139 = vmatpush1.bf16.xpose.msra.mxu0 0
        %7140 = vmatprep.subr.bf16.mxu0 0
        %7141 = vmatpush1.bf16.xpose.msra.mxu0 0
        %7142 = vmatprep.subr.bf16.mxu0 0
        %7143 = vmatpush1.bf16.xpose.msra.mxu0 0
        %7144 = vmatprep.mubr.bf16.mxu0 0
        %7145 = vmatmul.mubr.bf16.gmra.mrb[0].mxu0 %v7107
        %v7146 = vpop.f32.mrb[0].mxu0
        %v7147 = vadd.f32 0.0, %v7146
        %v7148 = vpop.f32.mrb[0].mxu0
        %v7149 = vpop.f32.mrb[0].mxu0
        %v7150 = vpop.f32.mrb[0].mxu0
        %7151 = vdwg.mxu0
        %v7153 = vsel %vm1271, %v6514, 0
        %v7156 = vsel %vm1271, %v6295, 0
        %7158 = vmatprep.subr.bf16.mxu0 0
        %7159 = vmatpush1.bf16.xpose.msra.mxu0 %v7156
        %7160 = vmatprep.subr.bf16.mxu0 0
        %7161 = vmatpush1.bf16.xpose.msra.mxu0 0
        %7162 = vmatprep.subr.bf16.mxu0 0
        %7163 = vmatpush1.bf16.xpose.msra.mxu0 0
        %7164 = vmatprep.subr.bf16.mxu0 0
        %7165 = vmatpush1.bf16.xpose.msra.mxu0 0
        %7166 = vmatprep.subr.bf16.mxu0 0
        %7167 = vmatpush1.bf16.xpose.msra.mxu0 0
        %7168 = vmatprep.subr.bf16.mxu0 0
        %7169 = vmatpush1.bf16.xpose.msra.mxu0 0
        %7170 = vmatprep.subr.bf16.mxu0 0
        %7171 = vmatpush1.bf16.xpose.msra.mxu0 0
        %7172 = vmatprep.subr.bf16.mxu0 0
        %7173 = vmatpush1.bf16.xpose.msra.mxu0 0
        %7174 = vmatprep.subr.bf16.mxu0 0
        %7175 = vmatpush1.bf16.xpose.msra.mxu0 0
        %7176 = vmatprep.subr.bf16.mxu0 0
        %7177 = vmatpush1.bf16.xpose.msra.mxu0 0
        %7178 = vmatprep.subr.bf16.mxu0 0
        %7179 = vmatpush1.bf16.xpose.msra.mxu0 0
        %7180 = vmatprep.subr.bf16.mxu0 0
        %7181 = vmatpush1.bf16.xpose.msra.mxu0 0
        %7182 = vmatprep.subr.bf16.mxu0 0
        %7183 = vmatpush1.bf16.xpose.msra.mxu0 0
        %7184 = vmatprep.subr.bf16.mxu0 0
        %7185 = vmatpush1.bf16.xpose.msra.mxu0 0
        %7186 = vmatprep.subr.bf16.mxu0 0
        %7187 = vmatpush1.bf16.xpose.msra.mxu0 0
        %7188 = vmatprep.subr.bf16.mxu0 0
        %7189 = vmatpush1.bf16.xpose.msra.mxu0 0
        %7190 = vmatprep.mubr.bf16.mxu0 0
        %7191 = vmatmul.mubr.bf16.gmra.mrb[0].mxu0 %v7153
        %v7192 = vpop.f32.mrb[0].mxu0
        %v7193 = vadd.f32 0.0, %v7192
        %v7194 = vpop.f32.mrb[0].mxu0
        %v7195 = vpop.f32.mrb[0].mxu0
        %v7196 = vpop.f32.mrb[0].mxu0
        %7197 = vdwg.mxu0
        %v7199 = vsel %vm1271, %v6530, 0
        %v7202 = vsel %vm1271, %v6296, 0
        %7204 = vmatprep.subr.bf16.mxu0 0
        %7205 = vmatpush1.bf16.xpose.msra.mxu0 %v7202
        %7206 = vmatprep.subr.bf16.mxu0 0
        %7207 = vmatpush1.bf16.xpose.msra.mxu0 0
        %7208 = vmatprep.subr.bf16.mxu0 0
        %7209 = vmatpush1.bf16.xpose.msra.mxu0 0
        %7210 = vmatprep.subr.bf16.mxu0 0
        %7211 = vmatpush1.bf16.xpose.msra.mxu0 0
        %7212 = vmatprep.subr.bf16.mxu0 0
        %7213 = vmatpush1.bf16.xpose.msra.mxu0 0
        %7214 = vmatprep.subr.bf16.mxu0 0
        %7215 = vmatpush1.bf16.xpose.msra.mxu0 0
        %7216 = vmatprep.subr.bf16.mxu0 0
        %7217 = vmatpush1.bf16.xpose.msra.mxu0 0
        %7218 = vmatprep.subr.bf16.mxu0 0
        %7219 = vmatpush1.bf16.xpose.msra.mxu0 0
        %7220 = vmatprep.subr.bf16.mxu0 0
        %7221 = vmatpush1.bf16.xpose.msra.mxu0 0
        %7222 = vmatprep.subr.bf16.mxu0 0
        %7223 = vmatpush1.bf16.xpose.msra.mxu0 0
        %7224 = vmatprep.subr.bf16.mxu0 0
        %7225 = vmatpush1.bf16.xpose.msra.mxu0 0
        %7226 = vmatprep.subr.bf16.mxu0 0
        %7227 = vmatpush1.bf16.xpose.msra.mxu0 0
        %7228 = vmatprep.subr.bf16.mxu0 0
        %7229 = vmatpush1.bf16.xpose.msra.mxu0 0
        %7230 = vmatprep.subr.bf16.mxu0 0
        %7231 = vmatpush1.bf16.xpose.msra.mxu0 0
        %7232 = vmatprep.subr.bf16.mxu0 0
        %7233 = vmatpush1.bf16.xpose.msra.mxu0 0
        %7234 = vmatprep.subr.bf16.mxu0 0
        %7235 = vmatpush1.bf16.xpose.msra.mxu0 0
        %7236 = vmatprep.mubr.bf16.mxu0 0
        %7237 = vmatmul.mubr.bf16.gmra.mrb[0].mxu0 %v7199
        %v7238 = vpop.f32.mrb[0].mxu0
        %v7239 = vadd.f32 0.0, %v7238
        %v7240 = vpop.f32.mrb[0].mxu0
        %v7241 = vpop.f32.mrb[0].mxu0
        %v7242 = vpop.f32.mrb[0].mxu0
        %7243 = vdwg.mxu0
        %v7245 = vsel %vm1271, %v6546, 0
        %v7248 = vsel %vm1271, %v6297, 0
        %7250 = vmatprep.subr.bf16.mxu0 0
        %7251 = vmatpush1.bf16.xpose.msra.mxu0 %v7248
        %7252 = vmatprep.subr.bf16.mxu0 0
        %7253 = vmatpush1.bf16.xpose.msra.mxu0 0
        %7254 = vmatprep.subr.bf16.mxu0 0
        %7255 = vmatpush1.bf16.xpose.msra.mxu0 0
        %7256 = vmatprep.subr.bf16.mxu0 0
        %7257 = vmatpush1.bf16.xpose.msra.mxu0 0
        %7258 = vmatprep.subr.bf16.mxu0 0
        %7259 = vmatpush1.bf16.xpose.msra.mxu0 0
        %7260 = vmatprep.subr.bf16.mxu0 0
        %7261 = vmatpush1.bf16.xpose.msra.mxu0 0
        %7262 = vmatprep.subr.bf16.mxu0 0
        %7263 = vmatpush1.bf16.xpose.msra.mxu0 0
        %7264 = vmatprep.subr.bf16.mxu0 0
        %7265 = vmatpush1.bf16.xpose.msra.mxu0 0
        %7266 = vmatprep.subr.bf16.mxu0 0
        %7267 = vmatpush1.bf16.xpose.msra.mxu0 0
        %7268 = vmatprep.subr.bf16.mxu0 0
        %7269 = vmatpush1.bf16.xpose.msra.mxu0 0
        %7270 = vmatprep.subr.bf16.mxu0 0
        %7271 = vmatpush1.bf16.xpose.msra.mxu0 0
        %7272 = vmatprep.subr.bf16.mxu0 0
        %7273 = vmatpush1.bf16.xpose.msra.mxu0 0
        %7274 = vmatprep.subr.bf16.mxu0 0
        %7275 = vmatpush1.bf16.xpose.msra.mxu0 0
        %7276 = vmatprep.subr.bf16.mxu0 0
        %7277 = vmatpush1.bf16.xpose.msra.mxu0 0
        %7278 = vmatprep.subr.bf16.mxu0 0
        %7279 = vmatpush1.bf16.xpose.msra.mxu0 0
        %7280 = vmatprep.subr.bf16.mxu0 0
        %7281 = vmatpush1.bf16.xpose.msra.mxu0 0
        %7282 = vmatprep.mubr.bf16.mxu0 0
        %7283 = vmatmul.mubr.bf16.gmra.mrb[0].mxu0 %v7245
        %v7284 = vpop.f32.mrb[0].mxu0
        %v7285 = vadd.f32 0.0, %v7284
        %v7286 = vpop.f32.mrb[0].mxu0
        %v7287 = vpop.f32.mrb[0].mxu0
        %v7288 = vpop.f32.mrb[0].mxu0
        %7289 = vdwg.mxu0
        %7290 = vxpose.xlu0.b32.start [1/16] %v6595, 128
        %7291 = vxpose.xlu0.b32.cont [2/16] 0.0, 128
        %7292 = vxpose.xlu0.b32.cont [3/16] 0.0, 128
        %7293 = vxpose.xlu0.b32.cont [4/16] 0.0, 128
        %7294 = vxpose.xlu0.b32.cont [5/16] 0.0, 128
        %7295 = vxpose.xlu0.b32.cont [6/16] 0.0, 128
        %7296 = vxpose.xlu0.b32.cont [7/16] 0.0, 128
        %7297 = vxpose.xlu0.b32.cont [8/16] 0.0, 128
        %7298 = vxpose.xlu0.b32.cont [9/16] 0.0, 128
        %7299 = vxpose.xlu0.b32.cont [10/16] 0.0, 128
        %7300 = vxpose.xlu0.b32.cont [11/16] 0.0, 128
        %7301 = vxpose.xlu0.b32.cont [12/16] 0.0, 128
        %7302 = vxpose.xlu0.b32.cont [13/16] 0.0, 128
        %7303 = vxpose.xlu0.b32.cont [14/16] 0.0, 128
        %7304 = vxpose.xlu0.b32.cont [15/16] 0.0, 128
        %7305 = vxpose.xlu0.b32.end [16/16] 0.0, 128
        %v7306 = vpop.trf.xlu0
        %v7307 = vpop.trf.xlu0
        %v7308 = vpop.trf.xlu0
        %v7309 = vpop.trf.xlu0
        %v7310 = vpop.trf.xlu0
        %v7311 = vpop.trf.xlu0
        %v7312 = vpop.trf.xlu0
        %v7313 = vpop.trf.xlu0
        %v7314 = vpop.trf.xlu0
        %v7315 = vpop.trf.xlu0
        %v7316 = vpop.trf.xlu0
        %v7317 = vpop.trf.xlu0
        %v7318 = vpop.trf.xlu0
        %v7319 = vpop.trf.xlu0
        %v7320 = vpop.trf.xlu0
        %v7321 = vpop.trf.xlu0
        %7322 = vxpose.xlu0.b32.start [1/16] %v6641, 128
        %7323 = vxpose.xlu0.b32.cont [2/16] 0.0, 128
        %7324 = vxpose.xlu0.b32.cont [3/16] 0.0, 128
        %7325 = vxpose.xlu0.b32.cont [4/16] 0.0, 128
        %7326 = vxpose.xlu0.b32.cont [5/16] 0.0, 128
        %7327 = vxpose.xlu0.b32.cont [6/16] 0.0, 128
        %7328 = vxpose.xlu0.b32.cont [7/16] 0.0, 128
        %7329 = vxpose.xlu0.b32.cont [8/16] 0.0, 128
        %7330 = vxpose.xlu0.b32.cont [9/16] 0.0, 128
        %7331 = vxpose.xlu0.b32.cont [10/16] 0.0, 128
        %7332 = vxpose.xlu0.b32.cont [11/16] 0.0, 128
        %7333 = vxpose.xlu0.b32.cont [12/16] 0.0, 128
        %7334 = vxpose.xlu0.b32.cont [13/16] 0.0, 128
        %7335 = vxpose.xlu0.b32.cont [14/16] 0.0, 128
        %7336 = vxpose.xlu0.b32.cont [15/16] 0.0, 128
        %7337 = vxpose.xlu0.b32.end [16/16] 0.0, 128
        %v7338 = vpop.trf.xlu0
        %v7339 = vpop.trf.xlu0
        %v7340 = vpop.trf.xlu0
        %v7341 = vpop.trf.xlu0
        %v7342 = vpop.trf.xlu0
        %v7343 = vpop.trf.xlu0
        %v7344 = vpop.trf.xlu0
        %v7345 = vpop.trf.xlu0
        %v7346 = vpop.trf.xlu0
        %v7347 = vpop.trf.xlu0
        %v7348 = vpop.trf.xlu0
        %v7349 = vpop.trf.xlu0
        %v7350 = vpop.trf.xlu0
        %v7351 = vpop.trf.xlu0
        %v7352 = vpop.trf.xlu0
        %v7353 = vpop.trf.xlu0
        %7354 = vxpose.xlu0.b32.start [1/16] %v6687, 128
        %7355 = vxpose.xlu0.b32.cont [2/16] 0.0, 128
        %7356 = vxpose.xlu0.b32.cont [3/16] 0.0, 128
        %7357 = vxpose.xlu0.b32.cont [4/16] 0.0, 128
        %7358 = vxpose.xlu0.b32.cont [5/16] 0.0, 128
        %7359 = vxpose.xlu0.b32.cont [6/16] 0.0, 128
        %7360 = vxpose.xlu0.b32.cont [7/16] 0.0, 128
        %7361 = vxpose.xlu0.b32.cont [8/16] 0.0, 128
        %7362 = vxpose.xlu0.b32.cont [9/16] 0.0, 128
        %7363 = vxpose.xlu0.b32.cont [10/16] 0.0, 128
        %7364 = vxpose.xlu0.b32.cont [11/16] 0.0, 128
        %7365 = vxpose.xlu0.b32.cont [12/16] 0.0, 128
        %7366 = vxpose.xlu0.b32.cont [13/16] 0.0, 128
        %7367 = vxpose.xlu0.b32.cont [14/16] 0.0, 128
        %7368 = vxpose.xlu0.b32.cont [15/16] 0.0, 128
        %7369 = vxpose.xlu0.b32.end [16/16] 0.0, 128
        %v7370 = vpop.trf.xlu0
        %v7371 = vpop.trf.xlu0
        %v7372 = vpop.trf.xlu0
        %v7373 = vpop.trf.xlu0
        %v7374 = vpop.trf.xlu0
        %v7375 = vpop.trf.xlu0
        %v7376 = vpop.trf.xlu0
        %v7377 = vpop.trf.xlu0
        %v7378 = vpop.trf.xlu0
        %v7379 = vpop.trf.xlu0
        %v7380 = vpop.trf.xlu0
        %v7381 = vpop.trf.xlu0
        %v7382 = vpop.trf.xlu0
        %v7383 = vpop.trf.xlu0
        %v7384 = vpop.trf.xlu0
        %v7385 = vpop.trf.xlu0
        %7386 = vxpose.xlu0.b32.start [1/16] %v6733, 128
        %7387 = vxpose.xlu0.b32.cont [2/16] 0.0, 128
        %7388 = vxpose.xlu0.b32.cont [3/16] 0.0, 128
        %7389 = vxpose.xlu0.b32.cont [4/16] 0.0, 128
        %7390 = vxpose.xlu0.b32.cont [5/16] 0.0, 128
        %7391 = vxpose.xlu0.b32.cont [6/16] 0.0, 128
        %7392 = vxpose.xlu0.b32.cont [7/16] 0.0, 128
        %7393 = vxpose.xlu0.b32.cont [8/16] 0.0, 128
        %7394 = vxpose.xlu0.b32.cont [9/16] 0.0, 128
        %7395 = vxpose.xlu0.b32.cont [10/16] 0.0, 128
        %7396 = vxpose.xlu0.b32.cont [11/16] 0.0, 128
        %7397 = vxpose.xlu0.b32.cont [12/16] 0.0, 128
        %7398 = vxpose.xlu0.b32.cont [13/16] 0.0, 128
        %7399 = vxpose.xlu0.b32.cont [14/16] 0.0, 128
        %7400 = vxpose.xlu0.b32.cont [15/16] 0.0, 128
        %7401 = vxpose.xlu0.b32.end [16/16] 0.0, 128
        %v7402 = vpop.trf.xlu0
        %v7403 = vpop.trf.xlu0
        %v7404 = vpop.trf.xlu0
        %v7405 = vpop.trf.xlu0
        %v7406 = vpop.trf.xlu0
        %v7407 = vpop.trf.xlu0
        %v7408 = vpop.trf.xlu0
        %v7409 = vpop.trf.xlu0
        %v7410 = vpop.trf.xlu0
        %v7411 = vpop.trf.xlu0
        %v7412 = vpop.trf.xlu0
        %v7413 = vpop.trf.xlu0
        %v7414 = vpop.trf.xlu0
        %v7415 = vpop.trf.xlu0
        %v7416 = vpop.trf.xlu0
        %v7417 = vpop.trf.xlu0
        %7418 = vxpose.xlu0.b32.start [1/16] %v6779, 128
        %7419 = vxpose.xlu0.b32.cont [2/16] 0.0, 128
        %7420 = vxpose.xlu0.b32.cont [3/16] 0.0, 128
        %7421 = vxpose.xlu0.b32.cont [4/16] 0.0, 128
        %7422 = vxpose.xlu0.b32.cont [5/16] 0.0, 128
        %7423 = vxpose.xlu0.b32.cont [6/16] 0.0, 128
        %7424 = vxpose.xlu0.b32.cont [7/16] 0.0, 128
        %7425 = vxpose.xlu0.b32.cont [8/16] 0.0, 128
        %7426 = vxpose.xlu0.b32.cont [9/16] 0.0, 128
        %7427 = vxpose.xlu0.b32.cont [10/16] 0.0, 128
        %7428 = vxpose.xlu0.b32.cont [11/16] 0.0, 128
        %7429 = vxpose.xlu0.b32.cont [12/16] 0.0, 128
        %7430 = vxpose.xlu0.b32.cont [13/16] 0.0, 128
        %7431 = vxpose.xlu0.b32.cont [14/16] 0.0, 128
        %7432 = vxpose.xlu0.b32.cont [15/16] 0.0, 128
        %7433 = vxpose.xlu0.b32.end [16/16] 0.0, 128
        %v7434 = vpop.trf.xlu0
        %v7435 = vpop.trf.xlu0
        %v7436 = vpop.trf.xlu0
        %v7437 = vpop.trf.xlu0
        %v7438 = vpop.trf.xlu0
        %v7439 = vpop.trf.xlu0
        %v7440 = vpop.trf.xlu0
        %v7441 = vpop.trf.xlu0
        %v7442 = vpop.trf.xlu0
        %v7443 = vpop.trf.xlu0
        %v7444 = vpop.trf.xlu0
        %v7445 = vpop.trf.xlu0
        %v7446 = vpop.trf.xlu0
        %v7447 = vpop.trf.xlu0
        %v7448 = vpop.trf.xlu0
        %v7449 = vpop.trf.xlu0
        %7450 = vxpose.xlu0.b32.start [1/16] %v6825, 128
        %7451 = vxpose.xlu0.b32.cont [2/16] 0.0, 128
        %7452 = vxpose.xlu0.b32.cont [3/16] 0.0, 128
        %7453 = vxpose.xlu0.b32.cont [4/16] 0.0, 128
        %7454 = vxpose.xlu0.b32.cont [5/16] 0.0, 128
        %7455 = vxpose.xlu0.b32.cont [6/16] 0.0, 128
        %7456 = vxpose.xlu0.b32.cont [7/16] 0.0, 128
        %7457 = vxpose.xlu0.b32.cont [8/16] 0.0, 128
        %7458 = vxpose.xlu0.b32.cont [9/16] 0.0, 128
        %7459 = vxpose.xlu0.b32.cont [10/16] 0.0, 128
        %7460 = vxpose.xlu0.b32.cont [11/16] 0.0, 128
        %7461 = vxpose.xlu0.b32.cont [12/16] 0.0, 128
        %7462 = vxpose.xlu0.b32.cont [13/16] 0.0, 128
        %7463 = vxpose.xlu0.b32.cont [14/16] 0.0, 128
        %7464 = vxpose.xlu0.b32.cont [15/16] 0.0, 128
        %7465 = vxpose.xlu0.b32.end [16/16] 0.0, 128
        %v7466 = vpop.trf.xlu0
        %v7467 = vpop.trf.xlu0
        %v7468 = vpop.trf.xlu0
        %v7469 = vpop.trf.xlu0
        %v7470 = vpop.trf.xlu0
        %v7471 = vpop.trf.xlu0
        %v7472 = vpop.trf.xlu0
        %v7473 = vpop.trf.xlu0
        %v7474 = vpop.trf.xlu0
        %v7475 = vpop.trf.xlu0
        %v7476 = vpop.trf.xlu0
        %v7477 = vpop.trf.xlu0
        %v7478 = vpop.trf.xlu0
        %v7479 = vpop.trf.xlu0
        %v7480 = vpop.trf.xlu0
        %v7481 = vpop.trf.xlu0
        %7482 = vxpose.xlu0.b32.start [1/16] %v6871, 128
        %7483 = vxpose.xlu0.b32.cont [2/16] 0.0, 128
        %7484 = vxpose.xlu0.b32.cont [3/16] 0.0, 128
        %7485 = vxpose.xlu0.b32.cont [4/16] 0.0, 128
        %7486 = vxpose.xlu0.b32.cont [5/16] 0.0, 128
        %7487 = vxpose.xlu0.b32.cont [6/16] 0.0, 128
        %7488 = vxpose.xlu0.b32.cont [7/16] 0.0, 128
        %7489 = vxpose.xlu0.b32.cont [8/16] 0.0, 128
        %7490 = vxpose.xlu0.b32.cont [9/16] 0.0, 128
        %7491 = vxpose.xlu0.b32.cont [10/16] 0.0, 128
        %7492 = vxpose.xlu0.b32.cont [11/16] 0.0, 128
        %7493 = vxpose.xlu0.b32.cont [12/16] 0.0, 128
        %7494 = vxpose.xlu0.b32.cont [13/16] 0.0, 128
        %7495 = vxpose.xlu0.b32.cont [14/16] 0.0, 128
        %7496 = vxpose.xlu0.b32.cont [15/16] 0.0, 128
        %7497 = vxpose.xlu0.b32.end [16/16] 0.0, 128
        %v7498 = vpop.trf.xlu0
        %v7499 = vpop.trf.xlu0
        %v7500 = vpop.trf.xlu0
        %v7501 = vpop.trf.xlu0
        %v7502 = vpop.trf.xlu0
        %v7503 = vpop.trf.xlu0
        %v7504 = vpop.trf.xlu0
        %v7505 = vpop.trf.xlu0
        %v7506 = vpop.trf.xlu0
        %v7507 = vpop.trf.xlu0
        %v7508 = vpop.trf.xlu0
        %v7509 = vpop.trf.xlu0
        %v7510 = vpop.trf.xlu0
        %v7511 = vpop.trf.xlu0
        %v7512 = vpop.trf.xlu0
        %v7513 = vpop.trf.xlu0
        %7514 = vxpose.xlu0.b32.start [1/16] %v6917, 128
        %7515 = vxpose.xlu0.b32.cont [2/16] 0.0, 128
        %7516 = vxpose.xlu0.b32.cont [3/16] 0.0, 128
        %7517 = vxpose.xlu0.b32.cont [4/16] 0.0, 128
        %7518 = vxpose.xlu0.b32.cont [5/16] 0.0, 128
        %7519 = vxpose.xlu0.b32.cont [6/16] 0.0, 128
        %7520 = vxpose.xlu0.b32.cont [7/16] 0.0, 128
        %7521 = vxpose.xlu0.b32.cont [8/16] 0.0, 128
        %7522 = vxpose.xlu0.b32.cont [9/16] 0.0, 128
        %7523 = vxpose.xlu0.b32.cont [10/16] 0.0, 128
        %7524 = vxpose.xlu0.b32.cont [11/16] 0.0, 128
        %7525 = vxpose.xlu0.b32.cont [12/16] 0.0, 128
        %7526 = vxpose.xlu0.b32.cont [13/16] 0.0, 128
        %7527 = vxpose.xlu0.b32.cont [14/16] 0.0, 128
        %7528 = vxpose.xlu0.b32.cont [15/16] 0.0, 128
        %7529 = vxpose.xlu0.b32.end [16/16] 0.0, 128
        %v7530 = vpop.trf.xlu0
        %v7531 = vpop.trf.xlu0
        %v7532 = vpop.trf.xlu0
        %v7533 = vpop.trf.xlu0
        %v7534 = vpop.trf.xlu0
        %v7535 = vpop.trf.xlu0
        %v7536 = vpop.trf.xlu0
        %v7537 = vpop.trf.xlu0
        %v7538 = vpop.trf.xlu0
        %v7539 = vpop.trf.xlu0
        %v7540 = vpop.trf.xlu0
        %v7541 = vpop.trf.xlu0
        %v7542 = vpop.trf.xlu0
        %v7543 = vpop.trf.xlu0
        %v7544 = vpop.trf.xlu0
        %v7545 = vpop.trf.xlu0
        %7546 = vxpose.xlu0.b32.start [1/16] %v6963, 128
        %7547 = vxpose.xlu0.b32.cont [2/16] 0.0, 128
        %7548 = vxpose.xlu0.b32.cont [3/16] 0.0, 128
        %7549 = vxpose.xlu0.b32.cont [4/16] 0.0, 128
        %7550 = vxpose.xlu0.b32.cont [5/16] 0.0, 128
        %7551 = vxpose.xlu0.b32.cont [6/16] 0.0, 128
        %7552 = vxpose.xlu0.b32.cont [7/16] 0.0, 128
        %7553 = vxpose.xlu0.b32.cont [8/16] 0.0, 128
        %7554 = vxpose.xlu0.b32.cont [9/16] 0.0, 128
        %7555 = vxpose.xlu0.b32.cont [10/16] 0.0, 128
        %7556 = vxpose.xlu0.b32.cont [11/16] 0.0, 128
        %7557 = vxpose.xlu0.b32.cont [12/16] 0.0, 128
        %7558 = vxpose.xlu0.b32.cont [13/16] 0.0, 128
        %7559 = vxpose.xlu0.b32.cont [14/16] 0.0, 128
        %7560 = vxpose.xlu0.b32.cont [15/16] 0.0, 128
        %7561 = vxpose.xlu0.b32.end [16/16] 0.0, 128
        %v7562 = vpop.trf.xlu0
        %v7563 = vpop.trf.xlu0
        %v7564 = vpop.trf.xlu0
        %v7565 = vpop.trf.xlu0
        %v7566 = vpop.trf.xlu0
        %v7567 = vpop.trf.xlu0
        %v7568 = vpop.trf.xlu0
        %v7569 = vpop.trf.xlu0
        %v7570 = vpop.trf.xlu0
        %v7571 = vpop.trf.xlu0
        %v7572 = vpop.trf.xlu0
        %v7573 = vpop.trf.xlu0
        %v7574 = vpop.trf.xlu0
        %v7575 = vpop.trf.xlu0
        %v7576 = vpop.trf.xlu0
        %v7577 = vpop.trf.xlu0
        %7578 = vxpose.xlu0.b32.start [1/16] %v7009, 128
        %7579 = vxpose.xlu0.b32.cont [2/16] 0.0, 128
        %7580 = vxpose.xlu0.b32.cont [3/16] 0.0, 128
        %7581 = vxpose.xlu0.b32.cont [4/16] 0.0, 128
        %7582 = vxpose.xlu0.b32.cont [5/16] 0.0, 128
        %7583 = vxpose.xlu0.b32.cont [6/16] 0.0, 128
        %7584 = vxpose.xlu0.b32.cont [7/16] 0.0, 128
        %7585 = vxpose.xlu0.b32.cont [8/16] 0.0, 128
        %7586 = vxpose.xlu0.b32.cont [9/16] 0.0, 128
        %7587 = vxpose.xlu0.b32.cont [10/16] 0.0, 128
        %7588 = vxpose.xlu0.b32.cont [11/16] 0.0, 128
        %7589 = vxpose.xlu0.b32.cont [12/16] 0.0, 128
        %7590 = vxpose.xlu0.b32.cont [13/16] 0.0, 128
        %7591 = vxpose.xlu0.b32.cont [14/16] 0.0, 128
        %7592 = vxpose.xlu0.b32.cont [15/16] 0.0, 128
        %7593 = vxpose.xlu0.b32.end [16/16] 0.0, 128
        %v7594 = vpop.trf.xlu0
        %v7595 = vpop.trf.xlu0
        %v7596 = vpop.trf.xlu0
        %v7597 = vpop.trf.xlu0
        %v7598 = vpop.trf.xlu0
        %v7599 = vpop.trf.xlu0
        %v7600 = vpop.trf.xlu0
        %v7601 = vpop.trf.xlu0
        %v7602 = vpop.trf.xlu0
        %v7603 = vpop.trf.xlu0
        %v7604 = vpop.trf.xlu0
        %v7605 = vpop.trf.xlu0
        %v7606 = vpop.trf.xlu0
        %v7607 = vpop.trf.xlu0
        %v7608 = vpop.trf.xlu0
        %v7609 = vpop.trf.xlu0
        %7610 = vxpose.xlu0.b32.start [1/16] %v7055, 128
        %7611 = vxpose.xlu0.b32.cont [2/16] 0.0, 128
        %7612 = vxpose.xlu0.b32.cont [3/16] 0.0, 128
        %7613 = vxpose.xlu0.b32.cont [4/16] 0.0, 128
        %7614 = vxpose.xlu0.b32.cont [5/16] 0.0, 128
        %7615 = vxpose.xlu0.b32.cont [6/16] 0.0, 128
        %7616 = vxpose.xlu0.b32.cont [7/16] 0.0, 128
        %7617 = vxpose.xlu0.b32.cont [8/16] 0.0, 128
        %7618 = vxpose.xlu0.b32.cont [9/16] 0.0, 128
        %7619 = vxpose.xlu0.b32.cont [10/16] 0.0, 128
        %7620 = vxpose.xlu0.b32.cont [11/16] 0.0, 128
        %7621 = vxpose.xlu0.b32.cont [12/16] 0.0, 128
        %7622 = vxpose.xlu0.b32.cont [13/16] 0.0, 128
        %7623 = vxpose.xlu0.b32.cont [14/16] 0.0, 128
        %7624 = vxpose.xlu0.b32.cont [15/16] 0.0, 128
        %7625 = vxpose.xlu0.b32.end [16/16] 0.0, 128
        %v7626 = vpop.trf.xlu0
        %v7627 = vpop.trf.xlu0
        %v7628 = vpop.trf.xlu0
        %v7629 = vpop.trf.xlu0
        %v7630 = vpop.trf.xlu0
        %v7631 = vpop.trf.xlu0
        %v7632 = vpop.trf.xlu0
        %v7633 = vpop.trf.xlu0
        %v7634 = vpop.trf.xlu0
        %v7635 = vpop.trf.xlu0
        %v7636 = vpop.trf.xlu0
        %v7637 = vpop.trf.xlu0
        %v7638 = vpop.trf.xlu0
        %v7639 = vpop.trf.xlu0
        %v7640 = vpop.trf.xlu0
        %v7641 = vpop.trf.xlu0
        %7642 = vxpose.xlu0.b32.start [1/16] %v7101, 128
        %7643 = vxpose.xlu0.b32.cont [2/16] 0.0, 128
        %7644 = vxpose.xlu0.b32.cont [3/16] 0.0, 128
        %7645 = vxpose.xlu0.b32.cont [4/16] 0.0, 128
        %7646 = vxpose.xlu0.b32.cont [5/16] 0.0, 128
        %7647 = vxpose.xlu0.b32.cont [6/16] 0.0, 128
        %7648 = vxpose.xlu0.b32.cont [7/16] 0.0, 128
        %7649 = vxpose.xlu0.b32.cont [8/16] 0.0, 128
        %7650 = vxpose.xlu0.b32.cont [9/16] 0.0, 128
        %7651 = vxpose.xlu0.b32.cont [10/16] 0.0, 128
        %7652 = vxpose.xlu0.b32.cont [11/16] 0.0, 128
        %7653 = vxpose.xlu0.b32.cont [12/16] 0.0, 128
        %7654 = vxpose.xlu0.b32.cont [13/16] 0.0, 128
        %7655 = vxpose.xlu0.b32.cont [14/16] 0.0, 128
        %7656 = vxpose.xlu0.b32.cont [15/16] 0.0, 128
        %7657 = vxpose.xlu0.b32.end [16/16] 0.0, 128
        %v7658 = vpop.trf.xlu0
        %v7659 = vpop.trf.xlu0
        %v7660 = vpop.trf.xlu0
        %v7661 = vpop.trf.xlu0
        %v7662 = vpop.trf.xlu0
        %v7663 = vpop.trf.xlu0
        %v7664 = vpop.trf.xlu0
        %v7665 = vpop.trf.xlu0
        %v7666 = vpop.trf.xlu0
        %v7667 = vpop.trf.xlu0
        %v7668 = vpop.trf.xlu0
        %v7669 = vpop.trf.xlu0
        %v7670 = vpop.trf.xlu0
        %v7671 = vpop.trf.xlu0
        %v7672 = vpop.trf.xlu0
        %v7673 = vpop.trf.xlu0
        %7674 = vxpose.xlu0.b32.start [1/16] %v7147, 128
        %7675 = vxpose.xlu0.b32.cont [2/16] 0.0, 128
        %7676 = vxpose.xlu0.b32.cont [3/16] 0.0, 128
        %7677 = vxpose.xlu0.b32.cont [4/16] 0.0, 128
        %7678 = vxpose.xlu0.b32.cont [5/16] 0.0, 128
        %7679 = vxpose.xlu0.b32.cont [6/16] 0.0, 128
        %7680 = vxpose.xlu0.b32.cont [7/16] 0.0, 128
        %7681 = vxpose.xlu0.b32.cont [8/16] 0.0, 128
        %7682 = vxpose.xlu0.b32.cont [9/16] 0.0, 128
        %7683 = vxpose.xlu0.b32.cont [10/16] 0.0, 128
        %7684 = vxpose.xlu0.b32.cont [11/16] 0.0, 128
        %7685 = vxpose.xlu0.b32.cont [12/16] 0.0, 128
        %7686 = vxpose.xlu0.b32.cont [13/16] 0.0, 128
        %7687 = vxpose.xlu0.b32.cont [14/16] 0.0, 128
        %7688 = vxpose.xlu0.b32.cont [15/16] 0.0, 128
        %7689 = vxpose.xlu0.b32.end [16/16] 0.0, 128
        %v7690 = vpop.trf.xlu0
        %v7691 = vpop.trf.xlu0
        %v7692 = vpop.trf.xlu0
        %v7693 = vpop.trf.xlu0
        %v7694 = vpop.trf.xlu0
        %v7695 = vpop.trf.xlu0
        %v7696 = vpop.trf.xlu0
        %v7697 = vpop.trf.xlu0
        %v7698 = vpop.trf.xlu0
        %v7699 = vpop.trf.xlu0
        %v7700 = vpop.trf.xlu0
        %v7701 = vpop.trf.xlu0
        %v7702 = vpop.trf.xlu0
        %v7703 = vpop.trf.xlu0
        %v7704 = vpop.trf.xlu0
        %v7705 = vpop.trf.xlu0
        %7706 = vxpose.xlu0.b32.start [1/16] %v7193, 128
        %7707 = vxpose.xlu0.b32.cont [2/16] 0.0, 128
        %7708 = vxpose.xlu0.b32.cont [3/16] 0.0, 128
        %7709 = vxpose.xlu0.b32.cont [4/16] 0.0, 128
        %7710 = vxpose.xlu0.b32.cont [5/16] 0.0, 128
        %7711 = vxpose.xlu0.b32.cont [6/16] 0.0, 128
        %7712 = vxpose.xlu0.b32.cont [7/16] 0.0, 128
        %7713 = vxpose.xlu0.b32.cont [8/16] 0.0, 128
        %7714 = vxpose.xlu0.b32.cont [9/16] 0.0, 128
        %7715 = vxpose.xlu0.b32.cont [10/16] 0.0, 128
        %7716 = vxpose.xlu0.b32.cont [11/16] 0.0, 128
        %7717 = vxpose.xlu0.b32.cont [12/16] 0.0, 128
        %7718 = vxpose.xlu0.b32.cont [13/16] 0.0, 128
        %7719 = vxpose.xlu0.b32.cont [14/16] 0.0, 128
        %7720 = vxpose.xlu0.b32.cont [15/16] 0.0, 128
        %7721 = vxpose.xlu0.b32.end [16/16] 0.0, 128
        %v7722 = vpop.trf.xlu0
        %v7723 = vpop.trf.xlu0
        %v7724 = vpop.trf.xlu0
        %v7725 = vpop.trf.xlu0
        %v7726 = vpop.trf.xlu0
        %v7727 = vpop.trf.xlu0
        %v7728 = vpop.trf.xlu0
        %v7729 = vpop.trf.xlu0
        %v7730 = vpop.trf.xlu0
        %v7731 = vpop.trf.xlu0
        %v7732 = vpop.trf.xlu0
        %v7733 = vpop.trf.xlu0
        %v7734 = vpop.trf.xlu0
        %v7735 = vpop.trf.xlu0
        %v7736 = vpop.trf.xlu0
        %v7737 = vpop.trf.xlu0
        %7738 = vxpose.xlu0.b32.start [1/16] %v7239, 128
        %7739 = vxpose.xlu0.b32.cont [2/16] 0.0, 128
        %7740 = vxpose.xlu0.b32.cont [3/16] 0.0, 128
        %7741 = vxpose.xlu0.b32.cont [4/16] 0.0, 128
        %7742 = vxpose.xlu0.b32.cont [5/16] 0.0, 128
        %7743 = vxpose.xlu0.b32.cont [6/16] 0.0, 128
        %7744 = vxpose.xlu0.b32.cont [7/16] 0.0, 128
        %7745 = vxpose.xlu0.b32.cont [8/16] 0.0, 128
        %7746 = vxpose.xlu0.b32.cont [9/16] 0.0, 128
        %7747 = vxpose.xlu0.b32.cont [10/16] 0.0, 128
        %7748 = vxpose.xlu0.b32.cont [11/16] 0.0, 128
        %7749 = vxpose.xlu0.b32.cont [12/16] 0.0, 128
        %7750 = vxpose.xlu0.b32.cont [13/16] 0.0, 128
        %7751 = vxpose.xlu0.b32.cont [14/16] 0.0, 128
        %7752 = vxpose.xlu0.b32.cont [15/16] 0.0, 128
        %7753 = vxpose.xlu0.b32.end [16/16] 0.0, 128
        %v7754 = vpop.trf.xlu0
        %v7755 = vpop.trf.xlu0
        %v7756 = vpop.trf.xlu0
        %v7757 = vpop.trf.xlu0
        %v7758 = vpop.trf.xlu0
        %v7759 = vpop.trf.xlu0
        %v7760 = vpop.trf.xlu0
        %v7761 = vpop.trf.xlu0
        %v7762 = vpop.trf.xlu0
        %v7763 = vpop.trf.xlu0
        %v7764 = vpop.trf.xlu0
        %v7765 = vpop.trf.xlu0
        %v7766 = vpop.trf.xlu0
        %v7767 = vpop.trf.xlu0
        %v7768 = vpop.trf.xlu0
        %v7769 = vpop.trf.xlu0
        %7770 = vxpose.xlu0.b32.start [1/16] %v7285, 128
        %7771 = vxpose.xlu0.b32.cont [2/16] 0.0, 128
        %7772 = vxpose.xlu0.b32.cont [3/16] 0.0, 128
        %7773 = vxpose.xlu0.b32.cont [4/16] 0.0, 128
        %7774 = vxpose.xlu0.b32.cont [5/16] 0.0, 128
        %7775 = vxpose.xlu0.b32.cont [6/16] 0.0, 128
        %7776 = vxpose.xlu0.b32.cont [7/16] 0.0, 128
        %7777 = vxpose.xlu0.b32.cont [8/16] 0.0, 128
        %7778 = vxpose.xlu0.b32.cont [9/16] 0.0, 128
        %7779 = vxpose.xlu0.b32.cont [10/16] 0.0, 128
        %7780 = vxpose.xlu0.b32.cont [11/16] 0.0, 128
        %7781 = vxpose.xlu0.b32.cont [12/16] 0.0, 128
        %7782 = vxpose.xlu0.b32.cont [13/16] 0.0, 128
        %7783 = vxpose.xlu0.b32.cont [14/16] 0.0, 128
        %7784 = vxpose.xlu0.b32.cont [15/16] 0.0, 128
        %7785 = vxpose.xlu0.b32.end [16/16] 0.0, 128
        %v7786 = vpop.trf.xlu0
        %v7787 = vpop.trf.xlu0
        %v7788 = vpop.trf.xlu0
        %v7789 = vpop.trf.xlu0
        %v7790 = vpop.trf.xlu0
        %v7791 = vpop.trf.xlu0
        %v7792 = vpop.trf.xlu0
        %v7793 = vpop.trf.xlu0
        %v7794 = vpop.trf.xlu0
        %v7795 = vpop.trf.xlu0
        %v7796 = vpop.trf.xlu0
        %v7797 = vpop.trf.xlu0
        %v7798 = vpop.trf.xlu0
        %v7799 = vpop.trf.xlu0
        %v7800 = vpop.trf.xlu0
        %v7801 = vpop.trf.xlu0
        %v7802 = vcombine.low %v7306, %v7370
        %v7803 = vcombine.high %v7306, %v7370
        %v7805 = vunpack.c.l.s4 1983009808
        %v7806 = vunpack.c.0.s8 %v7805
        %v7807 = vlaneseq
        %v7808 = vshrl.u32 %v7807, 7
        %v7809 = vsub.s32 %v7806, %v7808
        %v7810 = vrot.slane %v7802, %v7809
        %v7812 = vunpack.c.l.s4 1983009808
        %v7813 = vunpack.c.0.s8 %v7812
        %v7814 = vlaneseq
        %v7815 = vshrl.u32 %v7814, 7
        %v7816 = vsub.s32 %v7813, %v7815
        %v7817 = vrot.slane %v7803, %v7816
        %v7818 = vcombine.low %v7338, %v7402
        %v7819 = vcombine.high %v7338, %v7402
        %v7821 = vunpack.c.l.s4 1983009808
        %v7822 = vunpack.c.0.s8 %v7821
        %v7823 = vlaneseq
        %v7824 = vshrl.u32 %v7823, 7
        %v7825 = vsub.s32 %v7822, %v7824
        %v7826 = vrot.slane %v7818, %v7825
        %v7828 = vunpack.c.l.s4 1983009808
        %v7829 = vunpack.c.0.s8 %v7828
        %v7830 = vlaneseq
        %v7831 = vshrl.u32 %v7830, 7
        %v7832 = vsub.s32 %v7829, %v7831
        %v7833 = vrot.slane %v7819, %v7832
        %v7834 = vcombine.low %v7434, %v7498
        %v7835 = vcombine.high %v7434, %v7498
        %v7837 = vunpack.c.l.s4 1983009808
        %v7838 = vunpack.c.0.s8 %v7837
        %v7839 = vlaneseq
        %v7840 = vshrl.u32 %v7839, 7
        %v7841 = vsub.s32 %v7838, %v7840
        %v7842 = vrot.slane %v7834, %v7841
        %v7844 = vunpack.c.l.s4 1983009808
        %v7845 = vunpack.c.0.s8 %v7844
        %v7846 = vlaneseq
        %v7847 = vshrl.u32 %v7846, 7
        %v7848 = vsub.s32 %v7845, %v7847
        %v7849 = vrot.slane %v7835, %v7848
        %v7850 = vcombine.low %v7466, %v7530
        %v7851 = vcombine.high %v7466, %v7530
        %v7853 = vunpack.c.l.s4 1983009808
        %v7854 = vunpack.c.0.s8 %v7853
        %v7855 = vlaneseq
        %v7856 = vshrl.u32 %v7855, 7
        %v7857 = vsub.s32 %v7854, %v7856
        %v7858 = vrot.slane %v7850, %v7857
        %v7860 = vunpack.c.l.s4 1983009808
        %v7861 = vunpack.c.0.s8 %v7860
        %v7862 = vlaneseq
        %v7863 = vshrl.u32 %v7862, 7
        %v7864 = vsub.s32 %v7861, %v7863
        %v7865 = vrot.slane %v7851, %v7864
        %v7866 = vcombine.low %v7810, %v7826
        %v7867 = vcombine.high %v7810, %v7826
        %v7869 = vunpack.c.l.s4 1934713408
        %v7870 = vunpack.c.0.s8 %v7869
        %v7871 = vlaneseq
        %v7872 = vshrl.u32 %v7871, 7
        %v7873 = vsub.s32 %v7870, %v7872
        %v7874 = vrot.slane %v7866, %v7873
        %v7876 = vunpack.c.l.s4 1934713408
        %v7877 = vunpack.c.0.s8 %v7876
        %v7878 = vlaneseq
        %v7879 = vshrl.u32 %v7878, 7
        %v7880 = vsub.s32 %v7877, %v7879
        %v7881 = vrot.slane %v7867, %v7880
        %v7882 = vcombine.low %v7817, %v7833
        %v7883 = vcombine.high %v7817, %v7833
        %v7885 = vunpack.c.l.s4 1934713408
        %v7886 = vunpack.c.0.s8 %v7885
        %v7887 = vlaneseq
        %v7888 = vshrl.u32 %v7887, 7
        %v7889 = vsub.s32 %v7886, %v7888
        %v7890 = vrot.slane %v7882, %v7889
        %v7892 = vunpack.c.l.s4 1934713408
        %v7893 = vunpack.c.0.s8 %v7892
        %v7894 = vlaneseq
        %v7895 = vshrl.u32 %v7894, 7
        %v7896 = vsub.s32 %v7893, %v7895
        %v7897 = vrot.slane %v7883, %v7896
        %v7898 = vcombine.low %v7842, %v7858
        %v7899 = vcombine.high %v7842, %v7858
        %v7901 = vunpack.c.l.s4 1934713408
        %v7902 = vunpack.c.0.s8 %v7901
        %v7903 = vlaneseq
        %v7904 = vshrl.u32 %v7903, 7
        %v7905 = vsub.s32 %v7902, %v7904
        %v7906 = vrot.slane %v7898, %v7905
        %v7908 = vunpack.c.l.s4 1934713408
        %v7909 = vunpack.c.0.s8 %v7908
        %v7910 = vlaneseq
        %v7911 = vshrl.u32 %v7910, 7
        %v7912 = vsub.s32 %v7909, %v7911
        %v7913 = vrot.slane %v7899, %v7912
        %v7914 = vcombine.low %v7849, %v7865
        %v7915 = vcombine.high %v7849, %v7865
        %v7917 = vunpack.c.l.s4 1934713408
        %v7918 = vunpack.c.0.s8 %v7917
        %v7919 = vlaneseq
        %v7920 = vshrl.u32 %v7919, 7
        %v7921 = vsub.s32 %v7918, %v7920
        %v7922 = vrot.slane %v7914, %v7921
        %v7924 = vunpack.c.l.s4 1934713408
        %v7925 = vunpack.c.0.s8 %v7924
        %v7926 = vlaneseq
        %v7927 = vshrl.u32 %v7926, 7
        %v7928 = vsub.s32 %v7925, %v7927
        %v7929 = vrot.slane %v7915, %v7928
        %v7930 = vcombine.low %v7874, %v7906
        %v7931 = vcombine.high %v7874, %v7906
        %v7932 = vcombine.low %v7881, %v7913
        %v7933 = vcombine.high %v7881, %v7913
        %v7934 = vcombine.low %v7890, %v7922
        %v7935 = vcombine.high %v7890, %v7922
        %v7936 = vcombine.low %v7897, %v7929
        %v7937 = vcombine.high %v7897, %v7929
        %v7938 = vcombine.low %v7562, %v7626
        %v7939 = vcombine.high %v7562, %v7626
        %v7941 = vunpack.c.l.s4 1983009808
        %v7942 = vunpack.c.0.s8 %v7941
        %v7943 = vlaneseq
        %v7944 = vshrl.u32 %v7943, 7
        %v7945 = vsub.s32 %v7942, %v7944
        %v7946 = vrot.slane %v7938, %v7945
        %v7948 = vunpack.c.l.s4 1983009808
        %v7949 = vunpack.c.0.s8 %v7948
        %v7950 = vlaneseq
        %v7951 = vshrl.u32 %v7950, 7
        %v7952 = vsub.s32 %v7949, %v7951
        %v7953 = vrot.slane %v7939, %v7952
        %v7954 = vcombine.low %v7594, %v7658
        %v7955 = vcombine.high %v7594, %v7658
        %v7957 = vunpack.c.l.s4 1983009808
        %v7958 = vunpack.c.0.s8 %v7957
        %v7959 = vlaneseq
        %v7960 = vshrl.u32 %v7959, 7
        %v7961 = vsub.s32 %v7958, %v7960
        %v7962 = vrot.slane %v7954, %v7961
        %v7964 = vunpack.c.l.s4 1983009808
        %v7965 = vunpack.c.0.s8 %v7964
        %v7966 = vlaneseq
        %v7967 = vshrl.u32 %v7966, 7
        %v7968 = vsub.s32 %v7965, %v7967
        %v7969 = vrot.slane %v7955, %v7968
        %v7970 = vcombine.low %v7690, %v7754
        %v7971 = vcombine.high %v7690, %v7754
        %v7973 = vunpack.c.l.s4 1983009808
        %v7974 = vunpack.c.0.s8 %v7973
        %v7975 = vlaneseq
        %v7976 = vshrl.u32 %v7975, 7
        %v7977 = vsub.s32 %v7974, %v7976
        %v7978 = vrot.slane %v7970, %v7977
        %v7980 = vunpack.c.l.s4 1983009808
        %v7981 = vunpack.c.0.s8 %v7980
        %v7982 = vlaneseq
        %v7983 = vshrl.u32 %v7982, 7
        %v7984 = vsub.s32 %v7981, %v7983
        %v7985 = vrot.slane %v7971, %v7984
        %v7986 = vcombine.low %v7722, %v7786
        %v7987 = vcombine.high %v7722, %v7786
        %v7989 = vunpack.c.l.s4 1983009808
        %v7990 = vunpack.c.0.s8 %v7989
        %v7991 = vlaneseq
        %v7992 = vshrl.u32 %v7991, 7
        %v7993 = vsub.s32 %v7990, %v7992
        %v7994 = vrot.slane %v7986, %v7993
        %v7996 = vunpack.c.l.s4 1983009808
        %v7997 = vunpack.c.0.s8 %v7996
        %v7998 = vlaneseq
        %v7999 = vshrl.u32 %v7998, 7
        %v8000 = vsub.s32 %v7997, %v7999
        %v8001 = vrot.slane %v7987, %v8000
        %v8002 = vcombine.low %v7946, %v7962
        %v8003 = vcombine.high %v7946, %v7962
        %v8005 = vunpack.c.l.s4 1934713408
        %v8006 = vunpack.c.0.s8 %v8005
        %v8007 = vlaneseq
        %v8008 = vshrl.u32 %v8007, 7
        %v8009 = vsub.s32 %v8006, %v8008
        %v8010 = vrot.slane %v8002, %v8009
        %v8012 = vunpack.c.l.s4 1934713408
        %v8013 = vunpack.c.0.s8 %v8012
        %v8014 = vlaneseq
        %v8015 = vshrl.u32 %v8014, 7
        %v8016 = vsub.s32 %v8013, %v8015
        %v8017 = vrot.slane %v8003, %v8016
        %v8018 = vcombine.low %v7953, %v7969
        %v8019 = vcombine.high %v7953, %v7969
        %v8021 = vunpack.c.l.s4 1934713408
        %v8022 = vunpack.c.0.s8 %v8021
        %v8023 = vlaneseq
        %v8024 = vshrl.u32 %v8023, 7
        %v8025 = vsub.s32 %v8022, %v8024
        %v8026 = vrot.slane %v8018, %v8025
        %v8028 = vunpack.c.l.s4 1934713408
        %v8029 = vunpack.c.0.s8 %v8028
        %v8030 = vlaneseq
        %v8031 = vshrl.u32 %v8030, 7
        %v8032 = vsub.s32 %v8029, %v8031
        %v8033 = vrot.slane %v8019, %v8032
        %v8034 = vcombine.low %v7978, %v7994
        %v8035 = vcombine.high %v7978, %v7994
        %v8037 = vunpack.c.l.s4 1934713408
        %v8038 = vunpack.c.0.s8 %v8037
        %v8039 = vlaneseq
        %v8040 = vshrl.u32 %v8039, 7
        %v8041 = vsub.s32 %v8038, %v8040
        %v8042 = vrot.slane %v8034, %v8041
        %v8044 = vunpack.c.l.s4 1934713408
        %v8045 = vunpack.c.0.s8 %v8044
        %v8046 = vlaneseq
        %v8047 = vshrl.u32 %v8046, 7
        %v8048 = vsub.s32 %v8045, %v8047
        %v8049 = vrot.slane %v8035, %v8048
        %v8050 = vcombine.low %v7985, %v8001
        %v8051 = vcombine.high %v7985, %v8001
        %v8053 = vunpack.c.l.s4 1934713408
        %v8054 = vunpack.c.0.s8 %v8053
        %v8055 = vlaneseq
        %v8056 = vshrl.u32 %v8055, 7
        %v8057 = vsub.s32 %v8054, %v8056
        %v8058 = vrot.slane %v8050, %v8057
        %v8060 = vunpack.c.l.s4 1934713408
        %v8061 = vunpack.c.0.s8 %v8060
        %v8062 = vlaneseq
        %v8063 = vshrl.u32 %v8062, 7
        %v8064 = vsub.s32 %v8061, %v8063
        %v8065 = vrot.slane %v8051, %v8064
        %v8066 = vcombine.low %v8010, %v8042
        %v8067 = vcombine.high %v8010, %v8042
        %v8068 = vcombine.low %v8017, %v8049
        %v8069 = vcombine.high %v8017, %v8049
        %v8070 = vcombine.low %v8026, %v8058
        %v8071 = vcombine.high %v8026, %v8058
        %v8072 = vcombine.low %v8033, %v8065
        %v8073 = vcombine.high %v8033, %v8065
        %v8074 = vcombine.low %v7930, %v7932
        %v8075 = vcombine.high %v7930, %v7932
        %v8077 = vunpack.c.l.s4 1983009808
        %v8078 = vunpack.c.0.s8 %v8077
        %v8079 = vlaneseq
        %v8080 = vshrl.u32 %v8079, 7
        %v8081 = vsub.s32 %v8078, %v8080
        %v8082 = vrot.slane %v8074, %v8081
        %v8084 = vunpack.c.l.s4 1983009808
        %v8085 = vunpack.c.0.s8 %v8084
        %v8086 = vlaneseq
        %v8087 = vshrl.u32 %v8086, 7
        %v8088 = vsub.s32 %v8085, %v8087
        %v8089 = vrot.slane %v8075, %v8088
        %v8090 = vcombine.low %v7931, %v7933
        %v8091 = vcombine.high %v7931, %v7933
        %v8093 = vunpack.c.l.s4 1983009808
        %v8094 = vunpack.c.0.s8 %v8093
        %v8095 = vlaneseq
        %v8096 = vshrl.u32 %v8095, 7
        %v8097 = vsub.s32 %v8094, %v8096
        %v8098 = vrot.slane %v8090, %v8097
        %v8100 = vunpack.c.l.s4 1983009808
        %v8101 = vunpack.c.0.s8 %v8100
        %v8102 = vlaneseq
        %v8103 = vshrl.u32 %v8102, 7
        %v8104 = vsub.s32 %v8101, %v8103
        %v8105 = vrot.slane %v8091, %v8104
        %v8106 = vcombine.low %v7934, %v7936
        %v8107 = vcombine.high %v7934, %v7936
        %v8109 = vunpack.c.l.s4 1983009808
        %v8110 = vunpack.c.0.s8 %v8109
        %v8111 = vlaneseq
        %v8112 = vshrl.u32 %v8111, 7
        %v8113 = vsub.s32 %v8110, %v8112
        %v8114 = vrot.slane %v8106, %v8113
        %v8116 = vunpack.c.l.s4 1983009808
        %v8117 = vunpack.c.0.s8 %v8116
        %v8118 = vlaneseq
        %v8119 = vshrl.u32 %v8118, 7
        %v8120 = vsub.s32 %v8117, %v8119
        %v8121 = vrot.slane %v8107, %v8120
        %v8122 = vcombine.low %v7935, %v7937
        %v8123 = vcombine.high %v7935, %v7937
        %v8125 = vunpack.c.l.s4 1983009808
        %v8126 = vunpack.c.0.s8 %v8125
        %v8127 = vlaneseq
        %v8128 = vshrl.u32 %v8127, 7
        %v8129 = vsub.s32 %v8126, %v8128
        %v8130 = vrot.slane %v8122, %v8129
        %v8132 = vunpack.c.l.s4 1983009808
        %v8133 = vunpack.c.0.s8 %v8132
        %v8134 = vlaneseq
        %v8135 = vshrl.u32 %v8134, 7
        %v8136 = vsub.s32 %v8133, %v8135
        %v8137 = vrot.slane %v8123, %v8136
        %v8138 = vcombine.low %v8082, %v8098
        %v8139 = vcombine.high %v8082, %v8098
        %v8141 = vunpack.c.l.s4 1934713408
        %v8142 = vunpack.c.0.s8 %v8141
        %v8143 = vlaneseq
        %v8144 = vshrl.u32 %v8143, 7
        %v8145 = vsub.s32 %v8142, %v8144
        %v8146 = vrot.slane %v8138, %v8145
        %v8148 = vunpack.c.l.s4 1934713408
        %v8149 = vunpack.c.0.s8 %v8148
        %v8150 = vlaneseq
        %v8151 = vshrl.u32 %v8150, 7
        %v8152 = vsub.s32 %v8149, %v8151
        %v8153 = vrot.slane %v8139, %v8152
        %v8154 = vcombine.low %v8089, %v8105
        %v8155 = vcombine.high %v8089, %v8105
        %v8157 = vunpack.c.l.s4 1934713408
        %v8158 = vunpack.c.0.s8 %v8157
        %v8159 = vlaneseq
        %v8160 = vshrl.u32 %v8159, 7
        %v8161 = vsub.s32 %v8158, %v8160
        %v8162 = vrot.slane %v8154, %v8161
        %v8164 = vunpack.c.l.s4 1934713408
        %v8165 = vunpack.c.0.s8 %v8164
        %v8166 = vlaneseq
        %v8167 = vshrl.u32 %v8166, 7
        %v8168 = vsub.s32 %v8165, %v8167
        %v8169 = vrot.slane %v8155, %v8168
        %v8170 = vcombine.low %v8114, %v8130
        %v8171 = vcombine.high %v8114, %v8130
        %v8173 = vunpack.c.l.s4 1934713408
        %v8174 = vunpack.c.0.s8 %v8173
        %v8175 = vlaneseq
        %v8176 = vshrl.u32 %v8175, 7
        %v8177 = vsub.s32 %v8174, %v8176
        %v8178 = vrot.slane %v8170, %v8177
        %v8180 = vunpack.c.l.s4 1934713408
        %v8181 = vunpack.c.0.s8 %v8180
        %v8182 = vlaneseq
        %v8183 = vshrl.u32 %v8182, 7
        %v8184 = vsub.s32 %v8181, %v8183
        %v8185 = vrot.slane %v8171, %v8184
        %v8186 = vcombine.low %v8121, %v8137
        %v8187 = vcombine.high %v8121, %v8137
        %v8189 = vunpack.c.l.s4 1934713408
        %v8190 = vunpack.c.0.s8 %v8189
        %v8191 = vlaneseq
        %v8192 = vshrl.u32 %v8191, 7
        %v8193 = vsub.s32 %v8190, %v8192
        %v8194 = vrot.slane %v8186, %v8193
        %v8196 = vunpack.c.l.s4 1934713408
        %v8197 = vunpack.c.0.s8 %v8196
        %v8198 = vlaneseq
        %v8199 = vshrl.u32 %v8198, 7
        %v8200 = vsub.s32 %v8197, %v8199
        %v8201 = vrot.slane %v8187, %v8200
        %v8202 = vcombine.low %v8146, %v8178
        %v8203 = vcombine.high %v8146, %v8178
        %v8204 = vcombine.low %v8153, %v8185
        %v8205 = vcombine.high %v8153, %v8185
        %v8206 = vcombine.low %v8162, %v8194
        %v8207 = vcombine.high %v8162, %v8194
        %v8208 = vcombine.low %v8169, %v8201
        %v8209 = vcombine.high %v8169, %v8201
        %v8210 = vcombine.low %v8066, %v8068
        %v8211 = vcombine.high %v8066, %v8068
        %v8213 = vunpack.c.l.s4 1983009808
        %v8214 = vunpack.c.0.s8 %v8213
        %v8215 = vlaneseq
        %v8216 = vshrl.u32 %v8215, 7
        %v8217 = vsub.s32 %v8214, %v8216
        %v8218 = vrot.slane %v8210, %v8217
        %v8220 = vunpack.c.l.s4 1983009808
        %v8221 = vunpack.c.0.s8 %v8220
        %v8222 = vlaneseq
        %v8223 = vshrl.u32 %v8222, 7
        %v8224 = vsub.s32 %v8221, %v8223
        %v8225 = vrot.slane %v8211, %v8224
        %v8226 = vcombine.low %v8067, %v8069
        %v8227 = vcombine.high %v8067, %v8069
        %v8229 = vunpack.c.l.s4 1983009808
        %v8230 = vunpack.c.0.s8 %v8229
        %v8231 = vlaneseq
        %v8232 = vshrl.u32 %v8231, 7
        %v8233 = vsub.s32 %v8230, %v8232
        %v8234 = vrot.slane %v8226, %v8233
        %v8236 = vunpack.c.l.s4 1983009808
        %v8237 = vunpack.c.0.s8 %v8236
        %v8238 = vlaneseq
        %v8239 = vshrl.u32 %v8238, 7
        %v8240 = vsub.s32 %v8237, %v8239
        %v8241 = vrot.slane %v8227, %v8240
        %v8242 = vcombine.low %v8070, %v8072
        %v8243 = vcombine.high %v8070, %v8072
        %v8245 = vunpack.c.l.s4 1983009808
        %v8246 = vunpack.c.0.s8 %v8245
        %v8247 = vlaneseq
        %v8248 = vshrl.u32 %v8247, 7
        %v8249 = vsub.s32 %v8246, %v8248
        %v8250 = vrot.slane %v8242, %v8249
        %v8252 = vunpack.c.l.s4 1983009808
        %v8253 = vunpack.c.0.s8 %v8252
        %v8254 = vlaneseq
        %v8255 = vshrl.u32 %v8254, 7
        %v8256 = vsub.s32 %v8253, %v8255
        %v8257 = vrot.slane %v8243, %v8256
        %v8258 = vcombine.low %v8071, %v8073
        %v8259 = vcombine.high %v8071, %v8073
        %v8261 = vunpack.c.l.s4 1983009808
        %v8262 = vunpack.c.0.s8 %v8261
        %v8263 = vlaneseq
        %v8264 = vshrl.u32 %v8263, 7
        %v8265 = vsub.s32 %v8262, %v8264
        %v8266 = vrot.slane %v8258, %v8265
        %v8268 = vunpack.c.l.s4 1983009808
        %v8269 = vunpack.c.0.s8 %v8268
        %v8270 = vlaneseq
        %v8271 = vshrl.u32 %v8270, 7
        %v8272 = vsub.s32 %v8269, %v8271
        %v8273 = vrot.slane %v8259, %v8272
        %v8274 = vcombine.low %v8218, %v8234
        %v8275 = vcombine.high %v8218, %v8234
        %v8277 = vunpack.c.l.s4 1934713408
        %v8278 = vunpack.c.0.s8 %v8277
        %v8279 = vlaneseq
        %v8280 = vshrl.u32 %v8279, 7
        %v8281 = vsub.s32 %v8278, %v8280
        %v8282 = vrot.slane %v8274, %v8281
        %v8284 = vunpack.c.l.s4 1934713408
        %v8285 = vunpack.c.0.s8 %v8284
        %v8286 = vlaneseq
        %v8287 = vshrl.u32 %v8286, 7
        %v8288 = vsub.s32 %v8285, %v8287
        %v8289 = vrot.slane %v8275, %v8288
        %v8290 = vcombine.low %v8225, %v8241
        %v8291 = vcombine.high %v8225, %v8241
        %v8293 = vunpack.c.l.s4 1934713408
        %v8294 = vunpack.c.0.s8 %v8293
        %v8295 = vlaneseq
        %v8296 = vshrl.u32 %v8295, 7
        %v8297 = vsub.s32 %v8294, %v8296
        %v8298 = vrot.slane %v8290, %v8297
        %v8300 = vunpack.c.l.s4 1934713408
        %v8301 = vunpack.c.0.s8 %v8300
        %v8302 = vlaneseq
        %v8303 = vshrl.u32 %v8302, 7
        %v8304 = vsub.s32 %v8301, %v8303
        %v8305 = vrot.slane %v8291, %v8304
        %v8306 = vcombine.low %v8250, %v8266
        %v8307 = vcombine.high %v8250, %v8266
        %v8309 = vunpack.c.l.s4 1934713408
        %v8310 = vunpack.c.0.s8 %v8309
        %v8311 = vlaneseq
        %v8312 = vshrl.u32 %v8311, 7
        %v8313 = vsub.s32 %v8310, %v8312
        %v8314 = vrot.slane %v8306, %v8313
        %v8316 = vunpack.c.l.s4 1934713408
        %v8317 = vunpack.c.0.s8 %v8316
        %v8318 = vlaneseq
        %v8319 = vshrl.u32 %v8318, 7
        %v8320 = vsub.s32 %v8317, %v8319
        %v8321 = vrot.slane %v8307, %v8320
        %v8322 = vcombine.low %v8257, %v8273
        %v8323 = vcombine.high %v8257, %v8273
        %v8325 = vunpack.c.l.s4 1934713408
        %v8326 = vunpack.c.0.s8 %v8325
        %v8327 = vlaneseq
        %v8328 = vshrl.u32 %v8327, 7
        %v8329 = vsub.s32 %v8326, %v8328
        %v8330 = vrot.slane %v8322, %v8329
        %v8332 = vunpack.c.l.s4 1934713408
        %v8333 = vunpack.c.0.s8 %v8332
        %v8334 = vlaneseq
        %v8335 = vshrl.u32 %v8334, 7
        %v8336 = vsub.s32 %v8333, %v8335
        %v8337 = vrot.slane %v8323, %v8336
        %v8338 = vcombine.low %v8282, %v8314
        %v8339 = vcombine.high %v8282, %v8314
        %v8340 = vcombine.low %v8289, %v8321
        %v8341 = vcombine.high %v8289, %v8321
        %v8342 = vcombine.low %v8298, %v8330
        %v8343 = vcombine.high %v8298, %v8330
        %v8344 = vcombine.low %v8305, %v8337
        %v8345 = vcombine.high %v8305, %v8337
        %8347 = vrot.lane.b32.xlu0 %v8203, 8
        %v8348 = vpop.permute.xlu0 %8347
        %8351 = vrot.lane.b32.xlu0 %v8204, 16
        %v8352 = vpop.permute.xlu0 %8351
        %8355 = vrot.lane.b32.xlu0 %v8205, 24
        %v8356 = vpop.permute.xlu0 %8355
        %8359 = vrot.lane.b32.xlu0 %v8206, 32
        %v8360 = vpop.permute.xlu0 %8359
        %8363 = vrot.lane.b32.xlu0 %v8207, 40
        %v8364 = vpop.permute.xlu0 %8363
        %8367 = vrot.lane.b32.xlu0 %v8208, 48
        %v8368 = vpop.permute.xlu0 %8367
        %8371 = vrot.lane.b32.xlu0 %v8209, 56
        %v8372 = vpop.permute.xlu0 %8371
        %8375 = vrot.lane.b32.xlu0 %v8338, 64
        %v8376 = vpop.permute.xlu0 %8375
        %8379 = vrot.lane.b32.xlu0 %v8339, 72
        %v8380 = vpop.permute.xlu0 %8379
        %8383 = vrot.lane.b32.xlu0 %v8340, 80
        %v8384 = vpop.permute.xlu0 %8383
        %8387 = vrot.lane.b32.xlu0 %v8341, 88
        %v8388 = vpop.permute.xlu0 %8387
        %8391 = vrot.lane.b32.xlu0 %v8342, 96
        %v8392 = vpop.permute.xlu0 %8391
        %8395 = vrot.lane.b32.xlu0 %v8343, 104
        %v8396 = vpop.permute.xlu0 %8395
        %8399 = vrot.lane.b32.xlu0 %v8344, 112
        %v8400 = vpop.permute.xlu0 %8399
        %8403 = vrot.lane.b32.xlu0 %v8345, 120
        %v8404 = vpop.permute.xlu0 %8403
        %v8406 = vsel %vm1271, %v8202, %v8348
        %v8407 = vsel %vm4310, %v8406, %v8352
        %v8408 = vsel %vm4312, %v8407, %v8356
        %v8409 = vsel %vm4314, %v8408, %v8360
        %v8410 = vsel %vm4316, %v8409, %v8364
        %v8411 = vsel %vm4318, %v8410, %v8368
        %v8412 = vsel %vm4320, %v8411, %v8372
        %v8413 = vsel %vm4322, %v8412, %v8376
        %v8414 = vsel %vm4324, %v8413, %v8380
        %v8415 = vsel %vm4326, %v8414, %v8384
        %v8416 = vsel %vm4328, %v8415, %v8388
        %v8417 = vsel %vm4330, %v8416, %v8392
        %v8418 = vsel %vm4332, %v8417, %v8396
        %v8419 = vsel %vm4334, %v8418, %v8400
        %v8420 = vsel %vm4336, %v8419, %v8404
        %v8421 = vpack.c.bf16 %v8420, %v8420
        %s8422 = scalar_lea.vmem [#allocation7], 64
        %v8423 = vld [vmem:[%s8422] sm:$0xf]
        %v8424 = vld [vmem:[%s8422 + $0x4] sm:$0xf]
        %v8425 = vld [vmem:[%s8422 + $0x8] sm:$0xf]
        %v8426 = vld [vmem:[%s8422 + $0xc] sm:$0xf]
        %v8427 = vld [vmem:[%s8422 + $0x10] sm:$0xf]
        %v8428 = vld [vmem:[%s8422 + $0x14] sm:$0xf]
        %v8429 = vld [vmem:[%s8422 + $0x18] sm:$0xf]
        %v8430 = vld [vmem:[%s8422 + $0x1c] sm:$0xf]
        %v8431 = vld [vmem:[%s8422 + $0x20] sm:$0xf]
        %v8432 = vld [vmem:[%s8422 + $0x24] sm:$0xf]
        %v8433 = vld [vmem:[%s8422 + $0x28] sm:$0xf]
        %v8434 = vld [vmem:[%s8422 + $0x2c] sm:$0xf]
        %v8435 = vld [vmem:[%s8422 + $0x30] sm:$0xf]
        %v8436 = vld [vmem:[%s8422 + $0x34] sm:$0xf]
        %v8437 = vld [vmem:[%s8422 + $0x38] sm:$0xf]
        %v8438 = vld [vmem:[%s8422 + $0x3c] sm:$0xf]
        %v8439 = vlaneseq
        %v8440 = vshrl.u32 %v8439, 7
        %v8441 = vsub.s32 0, %v8440
        %v8442 = vrot.slane %v4726, %v8441
        %v8459 = vunpack.c.l.b16 %v8423
        %v8460 = vunpack.c.l.b16 %v8424
        %v8461 = vunpack.c.l.b16 %v8425
        %v8462 = vunpack.c.l.b16 %v8426
        %v8463 = vunpack.c.l.b16 %v8427
        %v8464 = vunpack.c.l.b16 %v8428
        %v8465 = vunpack.c.l.b16 %v8429
        %v8466 = vunpack.c.l.b16 %v8430
        %v8467 = vunpack.c.l.b16 %v8431
        %v8468 = vunpack.c.l.b16 %v8432
        %v8469 = vunpack.c.l.b16 %v8433
        %v8470 = vunpack.c.l.b16 %v8434
        %v8471 = vunpack.c.l.b16 %v8435
        %v8472 = vunpack.c.l.b16 %v8436
        %v8473 = vunpack.c.l.b16 %v8437
        %v8474 = vunpack.c.l.b16 %v8438
        %v8475 = vpack.c.b16 %v8460, %v8459
        %v8476 = vpack.c.b16 %v8462, %v8461
        %v8477 = vpack.c.b16 %v8464, %v8463
        %v8478 = vpack.c.b16 %v8466, %v8465
        %v8479 = vpack.c.b16 %v8468, %v8467
        %v8480 = vpack.c.b16 %v8470, %v8469
        %v8481 = vpack.c.b16 %v8472, %v8471
        %v8482 = vpack.c.b16 %v8474, %v8473
        %8491 = vmatprep.subr.bf16.mxu0 0
        %8492 = vmatpush1.bf16.msra.mxu0 %v8475
        %8493 = vmatprep.subr.bf16.mxu0 0
        %8494 = vmatpush1.bf16.msra.mxu0 %v8476
        %8495 = vmatprep.subr.bf16.mxu0 0
        %8496 = vmatpush1.bf16.msra.mxu0 %v8477
        %8497 = vmatprep.subr.bf16.mxu0 0
        %8498 = vmatpush1.bf16.msra.mxu0 %v8478
        %8499 = vmatprep.subr.bf16.mxu0 0
        %8500 = vmatpush1.bf16.msra.mxu0 %v8479
        %8501 = vmatprep.subr.bf16.mxu0 0
        %8502 = vmatpush1.bf16.msra.mxu0 %v8480
        %8503 = vmatprep.subr.bf16.mxu0 0
        %8504 = vmatpush1.bf16.msra.mxu0 %v8481
        %8505 = vmatprep.subr.bf16.mxu0 0
        %8506 = vmatpush1.bf16.msra.mxu0 %v8482
        %8507 = vmatprep.subr.bf16.mxu0 0
        %8508 = vmatpush1.bf16.msra.mxu0 0
        %8509 = vmatprep.subr.bf16.mxu0 0
        %8510 = vmatpush1.bf16.msra.mxu0 0
        %8511 = vmatprep.subr.bf16.mxu0 0
        %8512 = vmatpush1.bf16.msra.mxu0 0
        %8513 = vmatprep.subr.bf16.mxu0 0
        %8514 = vmatpush1.bf16.msra.mxu0 0
        %8515 = vmatprep.subr.bf16.mxu0 0
        %8516 = vmatpush1.bf16.msra.mxu0 0
        %8517 = vmatprep.subr.bf16.mxu0 0
        %8518 = vmatpush1.bf16.msra.mxu0 0
        %8519 = vmatprep.subr.bf16.mxu0 0
        %8520 = vmatpush1.bf16.msra.mxu0 0
        %8521 = vmatprep.subr.bf16.mxu0 0
        %8522 = vmatpush1.bf16.msra.mxu0 0
        %8523 = vmatprep.mubr.bf16.mxu0 0
        %8524 = vmatmul.mubr.bf16.gmra.mrb[0].mxu0 %v8421
        %v8525 = vpop.f32.mrb[0].mxu0
        %v8526 = vadd.f32 %v8442, %v8525
        %v8527 = vpop.f32.mrb[0].mxu0
        %v8528 = vpop.f32.mrb[0].mxu0
        %v8529 = vpop.f32.mrb[0].mxu0
        %8530 = vdwg.mxu0
        %v8531 = vadd.f32 %v4724, %v8526
        %v8532 = vmul.f32 %v8531, %v501
        %8533 = vadd.xlane.f32.xlu0 %v8532
        %v8534 = vpop.xlane.xlu0 %8533
        %v8535 = vmul.f32 %v8534, 0.03125
        %v8536 = vsub.f32 %v8532, %v8535
        %v8537 = vmul.f32 %v8536, %v501
        %v8538 = vmul.f32 %v8537, %v8537
        %8539 = vadd.xlane.f32.xlu0 %v8538
        %v8540 = vpop.xlane.xlu0 %8539
        %v8541 = vmul.f32 %v8540, 0.03125
        %v8542 = vadd.f32 %v8541, 1e-12
        %v8543 = vrsqrt.pop %v8542
        %v8544 = vmul.f32 %v8537, %v8543
        %v8545 = vlaneseq
        %v8546 = vshrl.u32 %v8545, 7
        %v8547 = vsub.s32 2, %v8546
        %v8548 = vrot.slane %v4726, %v8547
        %v8549 = vmul.f32 %v8544, %v8548
        %v8550 = vlaneseq
        %v8551 = vshrl.u32 %v8550, 7
        %v8552 = vsub.s32 3, %v8551
        %v8553 = vrot.slane %v4726, %v8552
        %v8554 = vadd.f32 %v8549, %v8553
        %v8555 = vpack.c.bf16 %v8554, %v8554
        %s8556 = scalar_lea.vmem [#allocation8], 64
        %v8557 = vld [vmem:[%s8556] sm:$0xf]
        %v8558 = vld [vmem:[%s8556 + $0x4] sm:$0xf]
        %v8559 = vld [vmem:[%s8556 + $0x8] sm:$0xf]
        %v8560 = vld [vmem:[%s8556 + $0xc] sm:$0xf]
        %v8561 = vld [vmem:[%s8556 + $0x10] sm:$0xf]
        %v8562 = vld [vmem:[%s8556 + $0x14] sm:$0xf]
        %v8563 = vld [vmem:[%s8556 + $0x18] sm:$0xf]
        %v8564 = vld [vmem:[%s8556 + $0x1c] sm:$0xf]
        %v8565 = vld [vmem:[%s8556 + $0x20] sm:$0xf]
        %v8566 = vld [vmem:[%s8556 + $0x24] sm:$0xf]
        %v8567 = vld [vmem:[%s8556 + $0x28] sm:$0xf]
        %v8568 = vld [vmem:[%s8556 + $0x2c] sm:$0xf]
        %v8569 = vld [vmem:[%s8556 + $0x30] sm:$0xf]
        %v8570 = vld [vmem:[%s8556 + $0x34] sm:$0xf]
        %v8571 = vld [vmem:[%s8556 + $0x38] sm:$0xf]
        %v8572 = vld [vmem:[%s8556 + $0x3c] sm:$0xf]
        %s8573 = scalar_lea.vmem %s9, 1
        %v8574 = vld [vmem:[%s8573] sm:$0x1]
        %v8576 = vlaneseq
        %v8577 = vshrl.u32 %v8576, 7
        %v8578 = vsub.s32 0, %v8577
        %v8579 = vrot.slane %v8574, %v8578
        %v8597 = vunpack.c.l.b16 %v8557
        %v8598 = vunpack.c.l.b16 %v8558
        %v8599 = vunpack.c.l.b16 %v8559
        %v8600 = vunpack.c.l.b16 %v8560
        %v8601 = vunpack.c.l.b16 %v8561
        %v8602 = vunpack.c.l.b16 %v8562
        %v8603 = vunpack.c.l.b16 %v8563
        %v8604 = vunpack.c.l.b16 %v8564
        %v8605 = vunpack.c.l.b16 %v8565
        %v8606 = vunpack.c.l.b16 %v8566
        %v8607 = vunpack.c.l.b16 %v8567
        %v8608 = vunpack.c.l.b16 %v8568
        %v8609 = vunpack.c.l.b16 %v8569
        %v8610 = vunpack.c.l.b16 %v8570
        %v8611 = vunpack.c.l.b16 %v8571
        %v8612 = vunpack.c.l.b16 %v8572
        %v8613 = vpack.c.b16 %v8598, %v8597
        %v8614 = vpack.c.b16 %v8600, %v8599
        %v8615 = vpack.c.b16 %v8602, %v8601
        %v8616 = vpack.c.b16 %v8604, %v8603
        %v8617 = vpack.c.b16 %v8606, %v8605
        %v8618 = vpack.c.b16 %v8608, %v8607
        %v8619 = vpack.c.b16 %v8610, %v8609
        %v8620 = vpack.c.b16 %v8612, %v8611
        %8629 = vmatprep.subr.bf16.mxu0 0
        %8630 = vmatpush1.bf16.msra.mxu0 %v8613
        %8631 = vmatprep.subr.bf16.mxu0 0
        %8632 = vmatpush1.bf16.msra.mxu0 %v8614
        %8633 = vmatprep.subr.bf16.mxu0 0
        %8634 = vmatpush1.bf16.msra.mxu0 %v8615
        %8635 = vmatprep.subr.bf16.mxu0 0
        %8636 = vmatpush1.bf16.msra.mxu0 %v8616
        %8637 = vmatprep.subr.bf16.mxu0 0
        %8638 = vmatpush1.bf16.msra.mxu0 %v8617
        %8639 = vmatprep.subr.bf16.mxu0 0
        %8640 = vmatpush1.bf16.msra.mxu0 %v8618
        %8641 = vmatprep.subr.bf16.mxu0 0
        %8642 = vmatpush1.bf16.msra.mxu0 %v8619
        %8643 = vmatprep.subr.bf16.mxu0 0
        %8644 = vmatpush1.bf16.msra.mxu0 %v8620
        %8645 = vmatprep.subr.bf16.mxu0 0
        %8646 = vmatpush1.bf16.msra.mxu0 0
        %8647 = vmatprep.subr.bf16.mxu0 0
        %8648 = vmatpush1.bf16.msra.mxu0 0
        %8649 = vmatprep.subr.bf16.mxu0 0
        %8650 = vmatpush1.bf16.msra.mxu0 0
        %8651 = vmatprep.subr.bf16.mxu0 0
        %8652 = vmatpush1.bf16.msra.mxu0 0
        %8653 = vmatprep.subr.bf16.mxu0 0
        %8654 = vmatpush1.bf16.msra.mxu0 0
        %8655 = vmatprep.subr.bf16.mxu0 0
        %8656 = vmatpush1.bf16.msra.mxu0 0
        %8657 = vmatprep.subr.bf16.mxu0 0
        %8658 = vmatpush1.bf16.msra.mxu0 0
        %8659 = vmatprep.subr.bf16.mxu0 0
        %8660 = vmatpush1.bf16.msra.mxu0 0
        %8661 = vmatprep.mubr.bf16.mxu0 0
        %8662 = vmatmul.mubr.bf16.gmra.mrb[0].mxu0 %v8555
        %v8663 = vpop.f32.mrb[0].mxu0
        %v8664 = vadd.f32 %v8579, %v8663
        %v8665 = vpop.f32.mrb[0].mxu0
        %v8666 = vpop.f32.mrb[0].mxu0
        %v8667 = vpop.f32.mrb[0].mxu0
        %8668 = vdwg.mxu0
        %v8669 = vmul.f32 %v8664, 0.5
        %v8670 = vmul.f32 %v8664, 0.044715
        %v8671 = vmul.f32 %v8670, %v8664
        %v8672 = vmul.f32 %v8671, %v8664
        %v8673 = vadd.f32 %v8664, %v8672
        %v8674 = vmul.f32 %v8673, 0.7978846
        %v8675 = vtanh.pop %v8674
        %v8676 = vadd.f32 %v8675, 1.0
        %v8677 = vmul.f32 %v8669, %v8676
        %v8678 = vpack.c.bf16 %v8677, %v8677
        %s8679 = scalar_lea.vmem [#allocation10], 64
        %v8680 = vld [vmem:[%s8679] sm:$0xf]
        %v8681 = vld [vmem:[%s8679 + $0x4] sm:$0xf]
        %v8682 = vld [vmem:[%s8679 + $0x8] sm:$0xf]
        %v8683 = vld [vmem:[%s8679 + $0xc] sm:$0xf]
        %v8684 = vld [vmem:[%s8679 + $0x10] sm:$0xf]
        %v8685 = vld [vmem:[%s8679 + $0x14] sm:$0xf]
        %v8686 = vld [vmem:[%s8679 + $0x18] sm:$0xf]
        %v8687 = vld [vmem:[%s8679 + $0x1c] sm:$0xf]
        %v8688 = vld [vmem:[%s8679 + $0x20] sm:$0xf]
        %v8689 = vld [vmem:[%s8679 + $0x24] sm:$0xf]
        %v8690 = vld [vmem:[%s8679 + $0x28] sm:$0xf]
        %v8691 = vld [vmem:[%s8679 + $0x2c] sm:$0xf]
        %v8692 = vld [vmem:[%s8679 + $0x30] sm:$0xf]
        %v8693 = vld [vmem:[%s8679 + $0x34] sm:$0xf]
        %v8694 = vld [vmem:[%s8679 + $0x38] sm:$0xf]
        %v8695 = vld [vmem:[%s8679 + $0x3c] sm:$0xf]
        %v8696 = vlaneseq
        %v8697 = vshrl.u32 %v8696, 7
        %v8698 = vsub.s32 1, %v8697
        %v8699 = vrot.slane %v4726, %v8698
        %v8716 = vunpack.c.l.b16 %v8680
        %v8717 = vunpack.c.l.b16 %v8681
        %v8718 = vunpack.c.l.b16 %v8682
        %v8719 = vunpack.c.l.b16 %v8683
        %v8720 = vunpack.c.l.b16 %v8684
        %v8721 = vunpack.c.l.b16 %v8685
        %v8722 = vunpack.c.l.b16 %v8686
        %v8723 = vunpack.c.l.b16 %v8687
        %v8724 = vunpack.c.l.b16 %v8688
        %v8725 = vunpack.c.l.b16 %v8689
        %v8726 = vunpack.c.l.b16 %v8690
        %v8727 = vunpack.c.l.b16 %v8691
        %v8728 = vunpack.c.l.b16 %v8692
        %v8729 = vunpack.c.l.b16 %v8693
        %v8730 = vunpack.c.l.b16 %v8694
        %v8731 = vunpack.c.l.b16 %v8695
        %v8732 = vpack.c.b16 %v8717, %v8716
        %v8733 = vpack.c.b16 %v8719, %v8718
        %v8734 = vpack.c.b16 %v8721, %v8720
        %v8735 = vpack.c.b16 %v8723, %v8722
        %v8736 = vpack.c.b16 %v8725, %v8724
        %v8737 = vpack.c.b16 %v8727, %v8726
        %v8738 = vpack.c.b16 %v8729, %v8728
        %v8739 = vpack.c.b16 %v8731, %v8730
        %8748 = vmatprep.subr.bf16.mxu0 0
        %8749 = vmatpush1.bf16.msra.mxu0 %v8732
        %8750 = vmatprep.subr.bf16.mxu0 0
        %8751 = vmatpush1.bf16.msra.mxu0 %v8733
        %8752 = vmatprep.subr.bf16.mxu0 0
        %8753 = vmatpush1.bf16.msra.mxu0 %v8734
        %8754 = vmatprep.subr.bf16.mxu0 0
        %8755 = vmatpush1.bf16.msra.mxu0 %v8735
        %8756 = vmatprep.subr.bf16.mxu0 0
        %8757 = vmatpush1.bf16.msra.mxu0 %v8736
        %8758 = vmatprep.subr.bf16.mxu0 0
        %8759 = vmatpush1.bf16.msra.mxu0 %v8737
        %8760 = vmatprep.subr.bf16.mxu0 0
        %8761 = vmatpush1.bf16.msra.mxu0 %v8738
        %8762 = vmatprep.subr.bf16.mxu0 0
        %8763 = vmatpush1.bf16.msra.mxu0 %v8739
        %8764 = vmatprep.subr.bf16.mxu0 0
        %8765 = vmatpush1.bf16.msra.mxu0 0
        %8766 = vmatprep.subr.bf16.mxu0 0
        %8767 = vmatpush1.bf16.msra.mxu0 0
        %8768 = vmatprep.subr.bf16.mxu0 0
        %8769 = vmatpush1.bf16.msra.mxu0 0
        %8770 = vmatprep.subr.bf16.mxu0 0
        %8771 = vmatpush1.bf16.msra.mxu0 0
        %8772 = vmatprep.subr.bf16.mxu0 0
        %8773 = vmatpush1.bf16.msra.mxu0 0
        %8774 = vmatprep.subr.bf16.mxu0 0
        %8775 = vmatpush1.bf16.msra.mxu0 0
        %8776 = vmatprep.subr.bf16.mxu0 0
        %8777 = vmatpush1.bf16.msra.mxu0 0
        %8778 = vmatprep.subr.bf16.mxu0 0
        %8779 = vmatpush1.bf16.msra.mxu0 0
        %8780 = vmatprep.mubr.bf16.mxu0 0
        %8781 = vmatmul.mubr.bf16.gmra.mrb[0].mxu0 %v8678
        %v8782 = vpop.f32.mrb[0].mxu0
        %v8783 = vadd.f32 %v8699, %v8782
        %v8784 = vpop.f32.mrb[0].mxu0
        %v8785 = vpop.f32.mrb[0].mxu0
        %v8786 = vpop.f32.mrb[0].mxu0
        %8787 = vdwg.mxu0
        %v8788 = vadd.f32 %v8554, %v8783
        %v8789 = vmul.f32 %v8788, %v501
        %8790 = vadd.xlane.f32.xlu0 %v8789
        %v8791 = vpop.xlane.xlu0 %8790
        %v8792 = vmul.f32 %v8791, 0.03125
        %v8793 = vsub.f32 %v8789, %v8792
        %v8794 = vmul.f32 %v8793, %v501
        %v8795 = vmul.f32 %v8794, %v8794
        %8796 = vadd.xlane.f32.xlu0 %v8795
        %v8797 = vpop.xlane.xlu0 %8796
        %v8798 = vmul.f32 %v8797, 0.03125
        %v8799 = vadd.f32 %v8798, 1e-12
        %v8800 = vrsqrt.pop %v8799
        %v8801 = vmul.f32 %v8794, %v8800
        %v8802 = vlaneseq
        %v8803 = vshrl.u32 %v8802, 7
        %v8804 = vsub.s32 4, %v8803
        %v8805 = vrot.slane %v4726, %v8804
        %v8806 = vmul.f32 %v8801, %v8805
        %v8807 = vlaneseq
        %v8808 = vshrl.u32 %v8807, 7
        %v8809 = vsub.s32 5, %v8808
        %v8810 = vrot.slane %v4726, %v8809
        %v8811 = vadd.f32 %v8806, %v8810
        %8812 = vst [vmem:[%s488] sm:$0xff] %v8811
        %s8813 = sand.u32 %s299, 1
        %s8814 = scalar_lea.sflag [#allocation4], %s8813
        %s8815 = sand.u32 %s299, 1
        %s8816 = smul.addr %s8815, 8
        %s8817 = scalar_lea.vmem [#allocation11], %s8816
        // Predicated region
        $region89: #{_forward.1} parent=67 // pred_check
          %p8818 = pneg %p309
        $region90: #{_forward.1} parent=67 // pred_check_branch
          %8820 = sbr.rel (%p8818) target = $region92
        $region91: #{_forward.1} parent=67 // pred_region
          %s8822 = ssub.s32 128, 128
          %8823 = vsyncadd %s8814, %s8822
          %s8824 = smul.addr %s29, 128
          %s8825 = scalar_lea.hbm %s12, %s8824
          %s8827 = sshll.u32 %s8817, 4
          %s8828 = int_to_ptr.vmem [resolvable:$true] %s8827
          %8830 = dma.vmem_to_hbm [thread:$0]  %s8828, 128, %s8825, %s8814
        $region92: #{_forward.1} parent=67 // pred_fallthru
          _
      $region68: #{_forward.1} parent=5 // pred_fallthru
        _
      %p8831 = scmp.le.s32.totalorder 2, %s24
      // Predicated region
      $region93: #{_forward.1} parent=5 // pred_check
        %p8832 = pneg %p8831
      $region94: #{_forward.1} parent=5 // pred_check_branch
        %8834 = sbr.rel (%p8832) target = $region96
      $region95: #{_forward.1} parent=5 // pred_region
        %s8835 = ssub.s32 %s24, 2
        // Predicated region
        $region97: #{_forward.1} parent=95 // pred_check
          %p8836 = pneg %p315
        $region98: #{_forward.1} parent=95 // pred_check_branch
          %8838 = sbr.rel (%p8836) target = $region100
        $region99: #{_forward.1} parent=95 // pred_region
          %s8839 = sand.u32 %s300, 1
          %s8840 = scalar_lea.sflag [#allocation4], %s8839
          %s8841 = sand.u32 %s300, 1
          %s8842 = smul.addr %s8841, 8
          %s8843 = scalar_lea.vmem [#allocation11], %s8842
          %8844 = dma.done %s8840, 128
        $region100: #{_forward.1} parent=95 // pred_fallthru
          _
      $region96: #{_forward.1} parent=5 // pred_fallthru
        _
    $region6: #{_forward.1} parent=1 // loop_footer
      %s28 = sadd.s32 1, %s24
    $region7: #{_forward.1} parent=1 // loop_footer_branch
      %23 = sbr.rel target = $region3
    $region8: #{_forward.1} parent=1 // loop_exit
      _
    %8845 = vsyncpa [#allocation3], 1
    %s8846 = scalar_lea.sflag [#allocation3], 1
    %8847 = vsyncpa %s8846, 1
    %8848 = vsyncpa [#allocation6], 1
    %8849 = vsyncpa [#allocation9], 1
    %8850 = vsyncpa [#allocation4], 1
    %s8851 = scalar_lea.sflag [#allocation4], 1
    %8852 = vsyncpa %s8851, 1

</llo_original>
